<compile_context>
chip_gen: v7x
topology: tpu7x:2x2x1
jax: 0.10.0
libtpu: 0.0.40
codegen_flags: <defaults>
</compile_context>

<pallas_src>
import functools

import jax
import jax.numpy as jnp
from jax.experimental import pallas as pl
from jax.experimental.pallas import tpu as pltpu


def skipgram_kernel(tgt_idx_ref, ce_idx_ref,      # scalar prefetch (SMEM)
                    tgt_hbm, ctx_hbm,              # embedding tables (HBM, pl.ANY)
                    out_ref,                       # (TB, OUT_W) packed output block
                    tgt_buf, ce_buf, sem,          # scratch: VMEM rows + DMA sems
                    *, tile_b, num_ce):
    TB = tile_b
    NC = num_ce                                    # K + 1 context/negative rows per example
    D = tgt_buf.shape[1]
    OUT_W = out_ref.shape[1]
    base = pl.program_id(0) * TB

    # --- row-gather DMAs: issue everything, then wait (copies overlap) ------
    for b in range(TB):
        t = tgt_idx_ref[base + b]
        pltpu.make_async_copy(tgt_hbm.at[pl.ds(t, 1), :],
                              tgt_buf.at[pl.ds(b, 1), :], sem.at[0]).start()
    for j in range(NC):
        for b in range(TB):
            c = ce_idx_ref[j, base + b]
            pltpu.make_async_copy(ctx_hbm.at[pl.ds(c, 1), :],
                                  ce_buf.at[pl.ds(j * TB + b, 1), :],
                                  sem.at[1]).start()
    # All copies on a given sem have identical byte counts, so N waits on that
    # sem guarantee all N copies have completed.
    for b in range(TB):
        pltpu.make_async_copy(tgt_hbm.at[pl.ds(0, 1), :],
                              tgt_buf.at[pl.ds(b, 1), :], sem.at[0]).wait()
    for r in range(NC * TB):
        pltpu.make_async_copy(ctx_hbm.at[pl.ds(0, 1), :],
                              ce_buf.at[pl.ds(r, 1), :], sem.at[1]).wait()

    # --- scores: one broadcast multiply + one lane reduce --------------------
    tgt = tgt_buf[...].astype(jnp.float32)                        # (TB, D)
    ce3 = ce_buf[...].astype(jnp.float32).reshape(NC, TB, D)       # j-major rows
    s3 = jnp.sum(ce3 * tgt[None, :, :], axis=-1, keepdims=True)    # (NC, TB, 1)

    # Lane packing: lane 0 = pos score, lanes 1..K = negatives (single-vreg selects).
    lane = jax.lax.broadcasted_iota(jnp.int32, (TB, OUT_W), 1)
    scores = jnp.zeros((TB, OUT_W), jnp.float32)
    for j in range(NC):
        scores = scores + jnp.where(lane == j, s3[j], 0.0)

    # --- SGNS loss: one vectorized, numerically stable log-sigmoid pass ------
    valid = lane < NC
    sign = jnp.where(lane == 0, 1.0, -1.0)            # + for positive pair, - for negatives
    x = sign * scores
    log_sig = -(jnp.maximum(-x, 0.0) + jnp.log1p(jnp.exp(-jnp.abs(x))))   # log(sigmoid(x))
    loss = jnp.sum(jnp.where(valid, -log_sig, 0.0), axis=-1, keepdims=True)  # (TB, 1)

    # Single unmasked lane-dense store: [pos | neg_0..neg_{K-1} | loss | zeros].
    out_ref[...] = scores + jnp.where(lane == NC, loss, 0.0)


def skipgram_forward(target_words, context_words, negative_samples,
                     target_table, context_table, *, tile_b=8, out_width=128):
    """Returns (mean_loss, per_example_loss (B,), pos_score (B,), neg_score (B,K))."""
    B = target_words.shape[0]
    K = negative_samples.shape[1]
    V, D = target_table.shape
    assert B % tile_b == 0 and tile_b % 8 == 0
    assert K + 2 <= out_width and out_width % 128 == 0

    # Clamp indices (matches jnp table[idx] semantics; keeps row DMAs in bounds).
    clamp = lambda a: jnp.clip(a.astype(jnp.int32), 0, V - 1)
    tgt_idx = clamp(target_words)                                       # (B,)
    # j-major: row 0 = context word, rows 1..K = negative samples.
    ce_idx = jnp.concatenate(
        [clamp(context_words).reshape(1, B), clamp(negative_samples).T],
        axis=0)                                                          # (K+1, B)

    kernel = functools.partial(skipgram_kernel, tile_b=tile_b, num_ce=K + 1)
    packed = pl.pallas_call(
        kernel,
        out_shape=jax.ShapeDtypeStruct((B, out_width), jnp.float32),
        grid_spec=pltpu.PrefetchScalarGridSpec(
            num_scalar_prefetch=2,                   # tgt_idx, ce_idx -> SMEM
            grid=(B // tile_b,),
            in_specs=[pl.BlockSpec(memory_space=pl.ANY),    # target table stays in HBM
                      pl.BlockSpec(memory_space=pl.ANY)],   # context table stays in HBM
            out_specs=pl.BlockSpec((tile_b, out_width), lambda i, ti, ci: (i, 0)),
            scratch_shapes=[
                pltpu.VMEM((tile_b, D), target_table.dtype),             # gathered target rows
                pltpu.VMEM(((K + 1) * tile_b, D), context_table.dtype),  # gathered ctx+neg rows
                pltpu.SemaphoreType.DMA((2,)),
            ]),
        compiler_params=pltpu.CompilerParams(
            dimension_semantics=("parallel",),       # batch tiles across TCs (v7x)
            vmem_limit_bytes=32 * 1024 * 1024),
    )(tgt_idx, ce_idx, target_table, context_table)

    pos_score = packed[:, 0]
    neg_score = packed[:, 1:1 + K]
    per_example_loss = packed[:, K + 1]
    # TODO(synk): the batch-mean could be reduced in-kernel, but the batch axis
    # is a "parallel" (megacore) grid dim, so the tiny final mean stays in XLA.
    return jnp.mean(per_example_loss), per_example_loss, pos_score, neg_score


def _reference(target_words, context_words, negative_samples,
               target_table, context_table):
    tgt = target_table[target_words]                                    # (B, D)
    ctx = context_table[context_words]                                  # (B, D)
    pos = jnp.sum(tgt * ctx, axis=-1)                                   # (B,)
    neg_emb = context_table[negative_samples]                           # (B, K, D)
    neg = jnp.sum(neg_emb * tgt[:, None, :], axis=-1)                   # (B, K)
    loss = -(jax.nn.log_sigmoid(pos) +
             jnp.sum(jax.nn.log_sigmoid(-neg), axis=-1))                # (B,)
    return jnp.mean(loss), loss, pos, neg


if __name__ == "__main__":
    VOCAB = 64
    EMB_DIM = 32
    B = 16
    K = 4

    key = jax.random.PRNGKey(0)
    k_tgt, k_ctx, k_tw, k_cw, k_neg = jax.random.split(key, 5)

    # Deterministic "Embedding" weights, matching torch.nn.Embedding's N(0, 1) init.
    target_table = jax.random.normal(k_tgt, (VOCAB, EMB_DIM), jnp.float32)
    context_table = jax.random.normal(k_ctx, (VOCAB, EMB_DIM), jnp.float32)

    target_words = jax.random.randint(k_tw, (B,), 0, VOCAB, jnp.int32)
    context_words = jax.random.randint(k_cw, (B,), 0, VOCAB, jnp.int32)
    negative_samples = jax.random.randint(k_neg, (B, K), 0, VOCAB, jnp.int32)

    mean_loss, loss, pos, neg = skipgram_forward(
        target_words, context_words, negative_samples, target_table, context_table)
    jax.block_until_ready((mean_loss, loss, pos, neg))

    ref_mean, ref_loss, ref_pos, ref_neg = _reference(
        target_words, context_words, negative_samples, target_table, context_table)

    assert jnp.allclose(mean_loss, ref_mean, atol=1e-5, rtol=1e-5)
    assert jnp.allclose(loss, ref_loss, atol=1e-5, rtol=1e-5)
    assert jnp.allclose(pos, ref_pos, atol=1e-5, rtol=1e-5)
    assert jnp.allclose(neg, ref_neg, atol=1e-5, rtol=1e-5)

    print("KERNEL_OK")
</pallas_src>

<mosaic_0001>
module attributes {stable_mosaic.version = 11 : i64} {
  func.func @skipgram_kernel(%arg0: i32, %arg1: memref<16xi32, #tpu.memory_space<smem>>, %arg2: memref<5x16xi32, #tpu.memory_space<smem>>, %arg3: memref<64x32xf32, #tpu.memory_space<any>>, %arg4: memref<64x32xf32, #tpu.memory_space<any>>, %arg5: memref<8x128xf32, #tpu.memory_space<vmem>>, %arg6: memref<8x32xf32, #tpu.memory_space<vmem>>, %arg7: memref<40x32xf32, #tpu.memory_space<vmem>>, %arg8: memref<2x!tpu.dma_semaphore, #tpu.memory_space<semaphore_mem>>) attributes {dimension_semantics = [#tpu.dimension_semantics<parallel>], iteration_bounds = array<i64: 2>, scalar_prefetch = 2 : i64, scratch_operands = 3 : i64, tpu.core_type = #tpu.core_type<tc>, window_params = [{}, {}, {transform_indices = @transform_2, window_bounds = array<i64: 8, 128>}]} {
    %c8_i32 = arith.constant 8 : i32
    %0 = arith.muli %arg0, %c8_i32 : i32
    %c0_i32 = arith.constant 0 : i32
    %1 = arith.addi %0, %c0_i32 : i32
    %2 = arith.index_cast %1 : i32 to index
    %3 = memref.load %arg1[%2] : memref<16xi32, #tpu.memory_space<smem>>
    %c0_i32_0 = arith.constant 0 : i32
    %c0_i32_1 = arith.constant 0 : i32
    %4 = tpu.memref_slice %arg3[%3, %c0_i32_1] : memref<64x32xf32, #tpu.memory_space<any>> -> memref<1x32xf32, #tpu.memory_space<any>>
    %c0_i32_2 = arith.constant 0 : i32
    %c0_i32_3 = arith.constant 0 : i32
    %5 = tpu.memref_slice %arg6[%c0_i32_2, %c0_i32_3] : memref<8x32xf32, #tpu.memory_space<vmem>> -> memref<1x32xf32, #tpu.memory_space<vmem>>
    %6 = tpu.memref_slice %arg8[%c0_i32_0] : memref<2x!tpu.dma_semaphore, #tpu.memory_space<semaphore_mem>> -> memref<1x!tpu.dma_semaphore, #tpu.memory_space<semaphore_mem>>
    %7 = tpu.memref_squeeze %6 : memref<1x!tpu.dma_semaphore, #tpu.memory_space<semaphore_mem>> -> memref<!tpu.dma_semaphore, #tpu.memory_space<semaphore_mem>>
    tpu.enqueue_dma source(%4 : memref<1x32xf32, #tpu.memory_space<any>>) target(%5 : memref<1x32xf32, #tpu.memory_space<vmem>>) target_semaphore(%7 : memref<!tpu.dma_semaphore, #tpu.memory_space<semaphore_mem>>)
    %c1_i32 = arith.constant 1 : i32
    %8 = arith.addi %0, %c1_i32 : i32
    %9 = arith.index_cast %8 : i32 to index
    %10 = memref.load %arg1[%9] : memref<16xi32, #tpu.memory_space<smem>>
    %c0_i32_4 = arith.constant 0 : i32
    %c0_i32_5 = arith.constant 0 : i32
    %11 = tpu.memref_slice %arg3[%10, %c0_i32_5] : memref<64x32xf32, #tpu.memory_space<any>> -> memref<1x32xf32, #tpu.memory_space<any>>
    %c1_i32_6 = arith.constant 1 : i32
    %c0_i32_7 = arith.constant 0 : i32
    %12 = tpu.memref_slice %arg6[%c1_i32_6, %c0_i32_7] : memref<8x32xf32, #tpu.memory_space<vmem>> -> memref<1x32xf32, #tpu.memory_space<vmem>>
    %13 = tpu.memref_slice %arg8[%c0_i32_4] : memref<2x!tpu.dma_semaphore, #tpu.memory_space<semaphore_mem>> -> memref<1x!tpu.dma_semaphore, #tpu.memory_space<semaphore_mem>>
    %14 = tpu.memref_squeeze %13 : memref<1x!tpu.dma_semaphore, #tpu.memory_space<semaphore_mem>> -> memref<!tpu.dma_semaphore, #tpu.memory_space<semaphore_mem>>
    tpu.enqueue_dma source(%11 : memref<1x32xf32, #tpu.memory_space<any>>) target(%12 : memref<1x32xf32, #tpu.memory_space<vmem>>) target_semaphore(%14 : memref<!tpu.dma_semaphore, #tpu.memory_space<semaphore_mem>>)
    %c2_i32 = arith.constant 2 : i32
    %15 = arith.addi %0, %c2_i32 : i32
    %16 = arith.index_cast %15 : i32 to index
    %17 = memref.load %arg1[%16] : memref<16xi32, #tpu.memory_space<smem>>
    %c0_i32_8 = arith.constant 0 : i32
    %c0_i32_9 = arith.constant 0 : i32
    %18 = tpu.memref_slice %arg3[%17, %c0_i32_9] : memref<64x32xf32, #tpu.memory_space<any>> -> memref<1x32xf32, #tpu.memory_space<any>>
    %c2_i32_10 = arith.constant 2 : i32
    %c0_i32_11 = arith.constant 0 : i32
    %19 = tpu.memref_slice %arg6[%c2_i32_10, %c0_i32_11] : memref<8x32xf32, #tpu.memory_space<vmem>> -> memref<1x32xf32, #tpu.memory_space<vmem>>
    %20 = tpu.memref_slice %arg8[%c0_i32_8] : memref<2x!tpu.dma_semaphore, #tpu.memory_space<semaphore_mem>> -> memref<1x!tpu.dma_semaphore, #tpu.memory_space<semaphore_mem>>
    %21 = tpu.memref_squeeze %20 : memref<1x!tpu.dma_semaphore, #tpu.memory_space<semaphore_mem>> -> memref<!tpu.dma_semaphore, #tpu.memory_space<semaphore_mem>>
    tpu.enqueue_dma source(%18 : memref<1x32xf32, #tpu.memory_space<any>>) target(%19 : memref<1x32xf32, #tpu.memory_space<vmem>>) target_semaphore(%21 : memref<!tpu.dma_semaphore, #tpu.memory_space<semaphore_mem>>)
    %c3_i32 = arith.constant 3 : i32
    %22 = arith.addi %0, %c3_i32 : i32
    %23 = arith.index_cast %22 : i32 to index
    %24 = memref.load %arg1[%23] : memref<16xi32, #tpu.memory_space<smem>>
    %c0_i32_12 = arith.constant 0 : i32
    %c0_i32_13 = arith.constant 0 : i32
    %25 = tpu.memref_slice %arg3[%24, %c0_i32_13] : memref<64x32xf32, #tpu.memory_space<any>> -> memref<1x32xf32, #tpu.memory_space<any>>
    %c3_i32_14 = arith.constant 3 : i32
    %c0_i32_15 = arith.constant 0 : i32
    %26 = tpu.memref_slice %arg6[%c3_i32_14, %c0_i32_15] : memref<8x32xf32, #tpu.memory_space<vmem>> -> memref<1x32xf32, #tpu.memory_space<vmem>>
    %27 = tpu.memref_slice %arg8[%c0_i32_12] : memref<2x!tpu.dma_semaphore, #tpu.memory_space<semaphore_mem>> -> memref<1x!tpu.dma_semaphore, #tpu.memory_space<semaphore_mem>>
    %28 = tpu.memref_squeeze %27 : memref<1x!tpu.dma_semaphore, #tpu.memory_space<semaphore_mem>> -> memref<!tpu.dma_semaphore, #tpu.memory_space<semaphore_mem>>
    tpu.enqueue_dma source(%25 : memref<1x32xf32, #tpu.memory_space<any>>) target(%26 : memref<1x32xf32, #tpu.memory_space<vmem>>) target_semaphore(%28 : memref<!tpu.dma_semaphore, #tpu.memory_space<semaphore_mem>>)
    %c4_i32 = arith.constant 4 : i32
    %29 = arith.addi %0, %c4_i32 : i32
    %30 = arith.index_cast %29 : i32 to index
    %31 = memref.load %arg1[%30] : memref<16xi32, #tpu.memory_space<smem>>
    %c0_i32_16 = arith.constant 0 : i32
    %c0_i32_17 = arith.constant 0 : i32
    %32 = tpu.memref_slice %arg3[%31, %c0_i32_17] : memref<64x32xf32, #tpu.memory_space<any>> -> memref<1x32xf32, #tpu.memory_space<any>>
    %c4_i32_18 = arith.constant 4 : i32
    %c0_i32_19 = arith.constant 0 : i32
    %33 = tpu.memref_slice %arg6[%c4_i32_18, %c0_i32_19] : memref<8x32xf32, #tpu.memory_space<vmem>> -> memref<1x32xf32, #tpu.memory_space<vmem>>
    %34 = tpu.memref_slice %arg8[%c0_i32_16] : memref<2x!tpu.dma_semaphore, #tpu.memory_space<semaphore_mem>> -> memref<1x!tpu.dma_semaphore, #tpu.memory_space<semaphore_mem>>
    %35 = tpu.memref_squeeze %34 : memref<1x!tpu.dma_semaphore, #tpu.memory_space<semaphore_mem>> -> memref<!tpu.dma_semaphore, #tpu.memory_space<semaphore_mem>>
    tpu.enqueue_dma source(%32 : memref<1x32xf32, #tpu.memory_space<any>>) target(%33 : memref<1x32xf32, #tpu.memory_space<vmem>>) target_semaphore(%35 : memref<!tpu.dma_semaphore, #tpu.memory_space<semaphore_mem>>)
    %c5_i32 = arith.constant 5 : i32
    %36 = arith.addi %0, %c5_i32 : i32
    %37 = arith.index_cast %36 : i32 to index
    %38 = memref.load %arg1[%37] : memref<16xi32, #tpu.memory_space<smem>>
    %c0_i32_20 = arith.constant 0 : i32
    %c0_i32_21 = arith.constant 0 : i32
    %39 = tpu.memref_slice %arg3[%38, %c0_i32_21] : memref<64x32xf32, #tpu.memory_space<any>> -> memref<1x32xf32, #tpu.memory_space<any>>
    %c5_i32_22 = arith.constant 5 : i32
    %c0_i32_23 = arith.constant 0 : i32
    %40 = tpu.memref_slice %arg6[%c5_i32_22, %c0_i32_23] : memref<8x32xf32, #tpu.memory_space<vmem>> -> memref<1x32xf32, #tpu.memory_space<vmem>>
    %41 = tpu.memref_slice %arg8[%c0_i32_20] : memref<2x!tpu.dma_semaphore, #tpu.memory_space<semaphore_mem>> -> memref<1x!tpu.dma_semaphore, #tpu.memory_space<semaphore_mem>>
    %42 = tpu.memref_squeeze %41 : memref<1x!tpu.dma_semaphore, #tpu.memory_space<semaphore_mem>> -> memref<!tpu.dma_semaphore, #tpu.memory_space<semaphore_mem>>
    tpu.enqueue_dma source(%39 : memref<1x32xf32, #tpu.memory_space<any>>) target(%40 : memref<1x32xf32, #tpu.memory_space<vmem>>) target_semaphore(%42 : memref<!tpu.dma_semaphore, #tpu.memory_space<semaphore_mem>>)
    %c6_i32 = arith.constant 6 : i32
    %43 = arith.addi %0, %c6_i32 : i32
    %44 = arith.index_cast %43 : i32 to index
    %45 = memref.load %arg1[%44] : memref<16xi32, #tpu.memory_space<smem>>
    %c0_i32_24 = arith.constant 0 : i32
    %c0_i32_25 = arith.constant 0 : i32
    %46 = tpu.memref_slice %arg3[%45, %c0_i32_25] : memref<64x32xf32, #tpu.memory_space<any>> -> memref<1x32xf32, #tpu.memory_space<any>>
    %c6_i32_26 = arith.constant 6 : i32
    %c0_i32_27 = arith.constant 0 : i32
    %47 = tpu.memref_slice %arg6[%c6_i32_26, %c0_i32_27] : memref<8x32xf32, #tpu.memory_space<vmem>> -> memref<1x32xf32, #tpu.memory_space<vmem>>
    %48 = tpu.memref_slice %arg8[%c0_i32_24] : memref<2x!tpu.dma_semaphore, #tpu.memory_space<semaphore_mem>> -> memref<1x!tpu.dma_semaphore, #tpu.memory_space<semaphore_mem>>
    %49 = tpu.memref_squeeze %48 : memref<1x!tpu.dma_semaphore, #tpu.memory_space<semaphore_mem>> -> memref<!tpu.dma_semaphore, #tpu.memory_space<semaphore_mem>>
    tpu.enqueue_dma source(%46 : memref<1x32xf32, #tpu.memory_space<any>>) target(%47 : memref<1x32xf32, #tpu.memory_space<vmem>>) target_semaphore(%49 : memref<!tpu.dma_semaphore, #tpu.memory_space<semaphore_mem>>)
    %c7_i32 = arith.constant 7 : i32
    %50 = arith.addi %0, %c7_i32 : i32
    %51 = arith.index_cast %50 : i32 to index
    %52 = memref.load %arg1[%51] : memref<16xi32, #tpu.memory_space<smem>>
    %c0_i32_28 = arith.constant 0 : i32
    %c0_i32_29 = arith.constant 0 : i32
    %53 = tpu.memref_slice %arg3[%52, %c0_i32_29] : memref<64x32xf32, #tpu.memory_space<any>> -> memref<1x32xf32, #tpu.memory_space<any>>
    %c7_i32_30 = arith.constant 7 : i32
    %c0_i32_31 = arith.constant 0 : i32
    %54 = tpu.memref_slice %arg6[%c7_i32_30, %c0_i32_31] : memref<8x32xf32, #tpu.memory_space<vmem>> -> memref<1x32xf32, #tpu.memory_space<vmem>>
    %55 = tpu.memref_slice %arg8[%c0_i32_28] : memref<2x!tpu.dma_semaphore, #tpu.memory_space<semaphore_mem>> -> memref<1x!tpu.dma_semaphore, #tpu.memory_space<semaphore_mem>>
    %56 = tpu.memref_squeeze %55 : memref<1x!tpu.dma_semaphore, #tpu.memory_space<semaphore_mem>> -> memref<!tpu.dma_semaphore, #tpu.memory_space<semaphore_mem>>
    tpu.enqueue_dma source(%53 : memref<1x32xf32, #tpu.memory_space<any>>) target(%54 : memref<1x32xf32, #tpu.memory_space<vmem>>) target_semaphore(%56 : memref<!tpu.dma_semaphore, #tpu.memory_space<semaphore_mem>>)
    %c0_i32_32 = arith.constant 0 : i32
    %57 = arith.addi %0, %c0_i32_32 : i32
    %c0 = arith.constant 0 : index
    %58 = arith.index_cast %57 : i32 to index
    %59 = memref.load %arg2[%c0, %58] : memref<5x16xi32, #tpu.memory_space<smem>>
    %c1_i32_33 = arith.constant 1 : i32
    %c0_i32_34 = arith.constant 0 : i32
    %60 = tpu.memref_slice %arg4[%59, %c0_i32_34] : memref<64x32xf32, #tpu.memory_space<any>> -> memref<1x32xf32, #tpu.memory_space<any>>
    %c0_i32_35 = arith.constant 0 : i32
    %c0_i32_36 = arith.constant 0 : i32
    %61 = tpu.memref_slice %arg7[%c0_i32_35, %c0_i32_36] : memref<40x32xf32, #tpu.memory_space<vmem>> -> memref<1x32xf32, #tpu.memory_space<vmem>>
    %62 = tpu.memref_slice %arg8[%c1_i32_33] : memref<2x!tpu.dma_semaphore, #tpu.memory_space<semaphore_mem>> -> memref<1x!tpu.dma_semaphore, #tpu.memory_space<semaphore_mem>>
    %63 = tpu.memref_squeeze %62 : memref<1x!tpu.dma_semaphore, #tpu.memory_space<semaphore_mem>> -> memref<!tpu.dma_semaphore, #tpu.memory_space<semaphore_mem>>
    tpu.enqueue_dma source(%60 : memref<1x32xf32, #tpu.memory_space<any>>) target(%61 : memref<1x32xf32, #tpu.memory_space<vmem>>) target_semaphore(%63 : memref<!tpu.dma_semaphore, #tpu.memory_space<semaphore_mem>>)
    %c1_i32_37 = arith.constant 1 : i32
    %64 = arith.addi %0, %c1_i32_37 : i32
    %c0_38 = arith.constant 0 : index
    %65 = arith.index_cast %64 : i32 to index
    %66 = memref.load %arg2[%c0_38, %65] : memref<5x16xi32, #tpu.memory_space<smem>>
    %c1_i32_39 = arith.constant 1 : i32
    %c0_i32_40 = arith.constant 0 : i32
    %67 = tpu.memref_slice %arg4[%66, %c0_i32_40] : memref<64x32xf32, #tpu.memory_space<any>> -> memref<1x32xf32, #tpu.memory_space<any>>
    %c1_i32_41 = arith.constant 1 : i32
    %c0_i32_42 = arith.constant 0 : i32
    %68 = tpu.memref_slice %arg7[%c1_i32_41, %c0_i32_42] : memref<40x32xf32, #tpu.memory_space<vmem>> -> memref<1x32xf32, #tpu.memory_space<vmem>>
    %69 = tpu.memref_slice %arg8[%c1_i32_39] : memref<2x!tpu.dma_semaphore, #tpu.memory_space<semaphore_mem>> -> memref<1x!tpu.dma_semaphore, #tpu.memory_space<semaphore_mem>>
    %70 = tpu.memref_squeeze %69 : memref<1x!tpu.dma_semaphore, #tpu.memory_space<semaphore_mem>> -> memref<!tpu.dma_semaphore, #tpu.memory_space<semaphore_mem>>
    tpu.enqueue_dma source(%67 : memref<1x32xf32, #tpu.memory_space<any>>) target(%68 : memref<1x32xf32, #tpu.memory_space<vmem>>) target_semaphore(%70 : memref<!tpu.dma_semaphore, #tpu.memory_space<semaphore_mem>>)
    %c2_i32_43 = arith.constant 2 : i32
    %71 = arith.addi %0, %c2_i32_43 : i32
    %c0_44 = arith.constant 0 : index
    %72 = arith.index_cast %71 : i32 to index
    %73 = memref.load %arg2[%c0_44, %72] : memref<5x16xi32, #tpu.memory_space<smem>>
    %c1_i32_45 = arith.constant 1 : i32
    %c0_i32_46 = arith.constant 0 : i32
    %74 = tpu.memref_slice %arg4[%73, %c0_i32_46] : memref<64x32xf32, #tpu.memory_space<any>> -> memref<1x32xf32, #tpu.memory_space<any>>
    %c2_i32_47 = arith.constant 2 : i32
    %c0_i32_48 = arith.constant 0 : i32
    %75 = tpu.memref_slice %arg7[%c2_i32_47, %c0_i32_48] : memref<40x32xf32, #tpu.memory_space<vmem>> -> memref<1x32xf32, #tpu.memory_space<vmem>>
    %76 = tpu.memref_slice %arg8[%c1_i32_45] : memref<2x!tpu.dma_semaphore, #tpu.memory_space<semaphore_mem>> -> memref<1x!tpu.dma_semaphore, #tpu.memory_space<semaphore_mem>>
    %77 = tpu.memref_squeeze %76 : memref<1x!tpu.dma_semaphore, #tpu.memory_space<semaphore_mem>> -> memref<!tpu.dma_semaphore, #tpu.memory_space<semaphore_mem>>
    tpu.enqueue_dma source(%74 : memref<1x32xf32, #tpu.memory_space<any>>) target(%75 : memref<1x32xf32, #tpu.memory_space<vmem>>) target_semaphore(%77 : memref<!tpu.dma_semaphore, #tpu.memory_space<semaphore_mem>>)
    %c3_i32_49 = arith.constant 3 : i32
    %78 = arith.addi %0, %c3_i32_49 : i32
    %c0_50 = arith.constant 0 : index
    %79 = arith.index_cast %78 : i32 to index
    %80 = memref.load %arg2[%c0_50, %79] : memref<5x16xi32, #tpu.memory_space<smem>>
    %c1_i32_51 = arith.constant 1 : i32
    %c0_i32_52 = arith.constant 0 : i32
    %81 = tpu.memref_slice %arg4[%80, %c0_i32_52] : memref<64x32xf32, #tpu.memory_space<any>> -> memref<1x32xf32, #tpu.memory_space<any>>
    %c3_i32_53 = arith.constant 3 : i32
    %c0_i32_54 = arith.constant 0 : i32
    %82 = tpu.memref_slice %arg7[%c3_i32_53, %c0_i32_54] : memref<40x32xf32, #tpu.memory_space<vmem>> -> memref<1x32xf32, #tpu.memory_space<vmem>>
    %83 = tpu.memref_slice %arg8[%c1_i32_51] : memref<2x!tpu.dma_semaphore, #tpu.memory_space<semaphore_mem>> -> memref<1x!tpu.dma_semaphore, #tpu.memory_space<semaphore_mem>>
    %84 = tpu.memref_squeeze %83 : memref<1x!tpu.dma_semaphore, #tpu.memory_space<semaphore_mem>> -> memref<!tpu.dma_semaphore, #tpu.memory_space<semaphore_mem>>
    tpu.enqueue_dma source(%81 : memref<1x32xf32, #tpu.memory_space<any>>) target(%82 : memref<1x32xf32, #tpu.memory_space<vmem>>) target_semaphore(%84 : memref<!tpu.dma_semaphore, #tpu.memory_space<semaphore_mem>>)
    %c4_i32_55 = arith.constant 4 : i32
    %85 = arith.addi %0, %c4_i32_55 : i32
    %c0_56 = arith.constant 0 : index
    %86 = arith.index_cast %85 : i32 to index
    %87 = memref.load %arg2[%c0_56, %86] : memref<5x16xi32, #tpu.memory_space<smem>>
    %c1_i32_57 = arith.constant 1 : i32
    %c0_i32_58 = arith.constant 0 : i32
    %88 = tpu.memref_slice %arg4[%87, %c0_i32_58] : memref<64x32xf32, #tpu.memory_space<any>> -> memref<1x32xf32, #tpu.memory_space<any>>
    %c4_i32_59 = arith.constant 4 : i32
    %c0_i32_60 = arith.constant 0 : i32
    %89 = tpu.memref_slice %arg7[%c4_i32_59, %c0_i32_60] : memref<40x32xf32, #tpu.memory_space<vmem>> -> memref<1x32xf32, #tpu.memory_space<vmem>>
    %90 = tpu.memref_slice %arg8[%c1_i32_57] : memref<2x!tpu.dma_semaphore, #tpu.memory_space<semaphore_mem>> -> memref<1x!tpu.dma_semaphore, #tpu.memory_space<semaphore_mem>>
    %91 = tpu.memref_squeeze %90 : memref<1x!tpu.dma_semaphore, #tpu.memory_space<semaphore_mem>> -> memref<!tpu.dma_semaphore, #tpu.memory_space<semaphore_mem>>
    tpu.enqueue_dma source(%88 : memref<1x32xf32, #tpu.memory_space<any>>) target(%89 : memref<1x32xf32, #tpu.memory_space<vmem>>) target_semaphore(%91 : memref<!tpu.dma_semaphore, #tpu.memory_space<semaphore_mem>>)
    %c5_i32_61 = arith.constant 5 : i32
    %92 = arith.addi %0, %c5_i32_61 : i32
    %c0_62 = arith.constant 0 : index
    %93 = arith.index_cast %92 : i32 to index
    %94 = memref.load %arg2[%c0_62, %93] : memref<5x16xi32, #tpu.memory_space<smem>>
    %c1_i32_63 = arith.constant 1 : i32
    %c0_i32_64 = arith.constant 0 : i32
    %95 = tpu.memref_slice %arg4[%94, %c0_i32_64] : memref<64x32xf32, #tpu.memory_space<any>> -> memref<1x32xf32, #tpu.memory_space<any>>
    %c5_i32_65 = arith.constant 5 : i32
    %c0_i32_66 = arith.constant 0 : i32
    %96 = tpu.memref_slice %arg7[%c5_i32_65, %c0_i32_66] : memref<40x32xf32, #tpu.memory_space<vmem>> -> memref<1x32xf32, #tpu.memory_space<vmem>>
    %97 = tpu.memref_slice %arg8[%c1_i32_63] : memref<2x!tpu.dma_semaphore, #tpu.memory_space<semaphore_mem>> -> memref<1x!tpu.dma_semaphore, #tpu.memory_space<semaphore_mem>>
    %98 = tpu.memref_squeeze %97 : memref<1x!tpu.dma_semaphore, #tpu.memory_space<semaphore_mem>> -> memref<!tpu.dma_semaphore, #tpu.memory_space<semaphore_mem>>
    tpu.enqueue_dma source(%95 : memref<1x32xf32, #tpu.memory_space<any>>) target(%96 : memref<1x32xf32, #tpu.memory_space<vmem>>) target_semaphore(%98 : memref<!tpu.dma_semaphore, #tpu.memory_space<semaphore_mem>>)
    %c6_i32_67 = arith.constant 6 : i32
    %99 = arith.addi %0, %c6_i32_67 : i32
    %c0_68 = arith.constant 0 : index
    %100 = arith.index_cast %99 : i32 to index
    %101 = memref.load %arg2[%c0_68, %100] : memref<5x16xi32, #tpu.memory_space<smem>>
    %c1_i32_69 = arith.constant 1 : i32
    %c0_i32_70 = arith.constant 0 : i32
    %102 = tpu.memref_slice %arg4[%101, %c0_i32_70] : memref<64x32xf32, #tpu.memory_space<any>> -> memref<1x32xf32, #tpu.memory_space<any>>
    %c6_i32_71 = arith.constant 6 : i32
    %c0_i32_72 = arith.constant 0 : i32
    %103 = tpu.memref_slice %arg7[%c6_i32_71, %c0_i32_72] : memref<40x32xf32, #tpu.memory_space<vmem>> -> memref<1x32xf32, #tpu.memory_space<vmem>>
    %104 = tpu.memref_slice %arg8[%c1_i32_69] : memref<2x!tpu.dma_semaphore, #tpu.memory_space<semaphore_mem>> -> memref<1x!tpu.dma_semaphore, #tpu.memory_space<semaphore_mem>>
    %105 = tpu.memref_squeeze %104 : memref<1x!tpu.dma_semaphore, #tpu.memory_space<semaphore_mem>> -> memref<!tpu.dma_semaphore, #tpu.memory_space<semaphore_mem>>
    tpu.enqueue_dma source(%102 : memref<1x32xf32, #tpu.memory_space<any>>) target(%103 : memref<1x32xf32, #tpu.memory_space<vmem>>) target_semaphore(%105 : memref<!tpu.dma_semaphore, #tpu.memory_space<semaphore_mem>>)
    %c7_i32_73 = arith.constant 7 : i32
    %106 = arith.addi %0, %c7_i32_73 : i32
    %c0_74 = arith.constant 0 : index
    %107 = arith.index_cast %106 : i32 to index
    %108 = memref.load %arg2[%c0_74, %107] : memref<5x16xi32, #tpu.memory_space<smem>>
    %c1_i32_75 = arith.constant 1 : i32
    %c0_i32_76 = arith.constant 0 : i32
    %109 = tpu.memref_slice %arg4[%108, %c0_i32_76] : memref<64x32xf32, #tpu.memory_space<any>> -> memref<1x32xf32, #tpu.memory_space<any>>
    %c7_i32_77 = arith.constant 7 : i32
    %c0_i32_78 = arith.constant 0 : i32
    %110 = tpu.memref_slice %arg7[%c7_i32_77, %c0_i32_78] : memref<40x32xf32, #tpu.memory_space<vmem>> -> memref<1x32xf32, #tpu.memory_space<vmem>>
    %111 = tpu.memref_slice %arg8[%c1_i32_75] : memref<2x!tpu.dma_semaphore, #tpu.memory_space<semaphore_mem>> -> memref<1x!tpu.dma_semaphore, #tpu.memory_space<semaphore_mem>>
    %112 = tpu.memref_squeeze %111 : memref<1x!tpu.dma_semaphore, #tpu.memory_space<semaphore_mem>> -> memref<!tpu.dma_semaphore, #tpu.memory_space<semaphore_mem>>
    tpu.enqueue_dma source(%109 : memref<1x32xf32, #tpu.memory_space<any>>) target(%110 : memref<1x32xf32, #tpu.memory_space<vmem>>) target_semaphore(%112 : memref<!tpu.dma_semaphore, #tpu.memory_space<semaphore_mem>>)
    %c0_i32_79 = arith.constant 0 : i32
    %113 = arith.addi %0, %c0_i32_79 : i32
    %c1 = arith.constant 1 : index
    %114 = arith.index_cast %113 : i32 to index
    %115 = memref.load %arg2[%c1, %114] : memref<5x16xi32, #tpu.memory_space<smem>>
    %c1_i32_80 = arith.constant 1 : i32
    %c0_i32_81 = arith.constant 0 : i32
    %116 = tpu.memref_slice %arg4[%115, %c0_i32_81] : memref<64x32xf32, #tpu.memory_space<any>> -> memref<1x32xf32, #tpu.memory_space<any>>
    %c8_i32_82 = arith.constant 8 : i32
    %c0_i32_83 = arith.constant 0 : i32
    %117 = tpu.memref_slice %arg7[%c8_i32_82, %c0_i32_83] : memref<40x32xf32, #tpu.memory_space<vmem>> -> memref<1x32xf32, #tpu.memory_space<vmem>>
    %118 = tpu.memref_slice %arg8[%c1_i32_80] : memref<2x!tpu.dma_semaphore, #tpu.memory_space<semaphore_mem>> -> memref<1x!tpu.dma_semaphore, #tpu.memory_space<semaphore_mem>>
    %119 = tpu.memref_squeeze %118 : memref<1x!tpu.dma_semaphore, #tpu.memory_space<semaphore_mem>> -> memref<!tpu.dma_semaphore, #tpu.memory_space<semaphore_mem>>
    tpu.enqueue_dma source(%116 : memref<1x32xf32, #tpu.memory_space<any>>) target(%117 : memref<1x32xf32, #tpu.memory_space<vmem>>) target_semaphore(%119 : memref<!tpu.dma_semaphore, #tpu.memory_space<semaphore_mem>>)
    %c1_i32_84 = arith.constant 1 : i32
    %120 = arith.addi %0, %c1_i32_84 : i32
    %c1_85 = arith.constant 1 : index
    %121 = arith.index_cast %120 : i32 to index
    %122 = memref.load %arg2[%c1_85, %121] : memref<5x16xi32, #tpu.memory_space<smem>>
    %c1_i32_86 = arith.constant 1 : i32
    %c0_i32_87 = arith.constant 0 : i32
    %123 = tpu.memref_slice %arg4[%122, %c0_i32_87] : memref<64x32xf32, #tpu.memory_space<any>> -> memref<1x32xf32, #tpu.memory_space<any>>
    %c9_i32 = arith.constant 9 : i32
    %c0_i32_88 = arith.constant 0 : i32
    %124 = tpu.memref_slice %arg7[%c9_i32, %c0_i32_88] : memref<40x32xf32, #tpu.memory_space<vmem>> -> memref<1x32xf32, #tpu.memory_space<vmem>>
    %125 = tpu.memref_slice %arg8[%c1_i32_86] : memref<2x!tpu.dma_semaphore, #tpu.memory_space<semaphore_mem>> -> memref<1x!tpu.dma_semaphore, #tpu.memory_space<semaphore_mem>>
    %126 = tpu.memref_squeeze %125 : memref<1x!tpu.dma_semaphore, #tpu.memory_space<semaphore_mem>> -> memref<!tpu.dma_semaphore, #tpu.memory_space<semaphore_mem>>
    tpu.enqueue_dma source(%123 : memref<1x32xf32, #tpu.memory_space<any>>) target(%124 : memref<1x32xf32, #tpu.memory_space<vmem>>) target_semaphore(%126 : memref<!tpu.dma_semaphore, #tpu.memory_space<semaphore_mem>>)
    %c2_i32_89 = arith.constant 2 : i32
    %127 = arith.addi %0, %c2_i32_89 : i32
    %c1_90 = arith.constant 1 : index
    %128 = arith.index_cast %127 : i32 to index
    %129 = memref.load %arg2[%c1_90, %128] : memref<5x16xi32, #tpu.memory_space<smem>>
    %c1_i32_91 = arith.constant 1 : i32
    %c0_i32_92 = arith.constant 0 : i32
    %130 = tpu.memref_slice %arg4[%129, %c0_i32_92] : memref<64x32xf32, #tpu.memory_space<any>> -> memref<1x32xf32, #tpu.memory_space<any>>
    %c10_i32 = arith.constant 10 : i32
    %c0_i32_93 = arith.constant 0 : i32
    %131 = tpu.memref_slice %arg7[%c10_i32, %c0_i32_93] : memref<40x32xf32, #tpu.memory_space<vmem>> -> memref<1x32xf32, #tpu.memory_space<vmem>>
    %132 = tpu.memref_slice %arg8[%c1_i32_91] : memref<2x!tpu.dma_semaphore, #tpu.memory_space<semaphore_mem>> -> memref<1x!tpu.dma_semaphore, #tpu.memory_space<semaphore_mem>>
    %133 = tpu.memref_squeeze %132 : memref<1x!tpu.dma_semaphore, #tpu.memory_space<semaphore_mem>> -> memref<!tpu.dma_semaphore, #tpu.memory_space<semaphore_mem>>
    tpu.enqueue_dma source(%130 : memref<1x32xf32, #tpu.memory_space<any>>) target(%131 : memref<1x32xf32, #tpu.memory_space<vmem>>) target_semaphore(%133 : memref<!tpu.dma_semaphore, #tpu.memory_space<semaphore_mem>>)
    %c3_i32_94 = arith.constant 3 : i32
    %134 = arith.addi %0, %c3_i32_94 : i32
    %c1_95 = arith.constant 1 : index
    %135 = arith.index_cast %134 : i32 to index
    %136 = memref.load %arg2[%c1_95, %135] : memref<5x16xi32, #tpu.memory_space<smem>>
    %c1_i32_96 = arith.constant 1 : i32
    %c0_i32_97 = arith.constant 0 : i32
    %137 = tpu.memref_slice %arg4[%136, %c0_i32_97] : memref<64x32xf32, #tpu.memory_space<any>> -> memref<1x32xf32, #tpu.memory_space<any>>
    %c11_i32 = arith.constant 11 : i32
    %c0_i32_98 = arith.constant 0 : i32
    %138 = tpu.memref_slice %arg7[%c11_i32, %c0_i32_98] : memref<40x32xf32, #tpu.memory_space<vmem>> -> memref<1x32xf32, #tpu.memory_space<vmem>>
    %139 = tpu.memref_slice %arg8[%c1_i32_96] : memref<2x!tpu.dma_semaphore, #tpu.memory_space<semaphore_mem>> -> memref<1x!tpu.dma_semaphore, #tpu.memory_space<semaphore_mem>>
    %140 = tpu.memref_squeeze %139 : memref<1x!tpu.dma_semaphore, #tpu.memory_space<semaphore_mem>> -> memref<!tpu.dma_semaphore, #tpu.memory_space<semaphore_mem>>
    tpu.enqueue_dma source(%137 : memref<1x32xf32, #tpu.memory_space<any>>) target(%138 : memref<1x32xf32, #tpu.memory_space<vmem>>) target_semaphore(%140 : memref<!tpu.dma_semaphore, #tpu.memory_space<semaphore_mem>>)
    %c4_i32_99 = arith.constant 4 : i32
    %141 = arith.addi %0, %c4_i32_99 : i32
    %c1_100 = arith.constant 1 : index
    %142 = arith.index_cast %141 : i32 to index
    %143 = memref.load %arg2[%c1_100, %142] : memref<5x16xi32, #tpu.memory_space<smem>>
    %c1_i32_101 = arith.constant 1 : i32
    %c0_i32_102 = arith.constant 0 : i32
    %144 = tpu.memref_slice %arg4[%143, %c0_i32_102] : memref<64x32xf32, #tpu.memory_space<any>> -> memref<1x32xf32, #tpu.memory_space<any>>
    %c12_i32 = arith.constant 12 : i32
    %c0_i32_103 = arith.constant 0 : i32
    %145 = tpu.memref_slice %arg7[%c12_i32, %c0_i32_103] : memref<40x32xf32, #tpu.memory_space<vmem>> -> memref<1x32xf32, #tpu.memory_space<vmem>>
    %146 = tpu.memref_slice %arg8[%c1_i32_101] : memref<2x!tpu.dma_semaphore, #tpu.memory_space<semaphore_mem>> -> memref<1x!tpu.dma_semaphore, #tpu.memory_space<semaphore_mem>>
    %147 = tpu.memref_squeeze %146 : memref<1x!tpu.dma_semaphore, #tpu.memory_space<semaphore_mem>> -> memref<!tpu.dma_semaphore, #tpu.memory_space<semaphore_mem>>
    tpu.enqueue_dma source(%144 : memref<1x32xf32, #tpu.memory_space<any>>) target(%145 : memref<1x32xf32, #tpu.memory_space<vmem>>) target_semaphore(%147 : memref<!tpu.dma_semaphore, #tpu.memory_space<semaphore_mem>>)
    %c5_i32_104 = arith.constant 5 : i32
    %148 = arith.addi %0, %c5_i32_104 : i32
    %c1_105 = arith.constant 1 : index
    %149 = arith.index_cast %148 : i32 to index
    %150 = memref.load %arg2[%c1_105, %149] : memref<5x16xi32, #tpu.memory_space<smem>>
    %c1_i32_106 = arith.constant 1 : i32
    %c0_i32_107 = arith.constant 0 : i32
    %151 = tpu.memref_slice %arg4[%150, %c0_i32_107] : memref<64x32xf32, #tpu.memory_space<any>> -> memref<1x32xf32, #tpu.memory_space<any>>
    %c13_i32 = arith.constant 13 : i32
    %c0_i32_108 = arith.constant 0 : i32
    %152 = tpu.memref_slice %arg7[%c13_i32, %c0_i32_108] : memref<40x32xf32, #tpu.memory_space<vmem>> -> memref<1x32xf32, #tpu.memory_space<vmem>>
    %153 = tpu.memref_slice %arg8[%c1_i32_106] : memref<2x!tpu.dma_semaphore, #tpu.memory_space<semaphore_mem>> -> memref<1x!tpu.dma_semaphore, #tpu.memory_space<semaphore_mem>>
    %154 = tpu.memref_squeeze %153 : memref<1x!tpu.dma_semaphore, #tpu.memory_space<semaphore_mem>> -> memref<!tpu.dma_semaphore, #tpu.memory_space<semaphore_mem>>
    tpu.enqueue_dma source(%151 : memref<1x32xf32, #tpu.memory_space<any>>) target(%152 : memref<1x32xf32, #tpu.memory_space<vmem>>) target_semaphore(%154 : memref<!tpu.dma_semaphore, #tpu.memory_space<semaphore_mem>>)
    %c6_i32_109 = arith.constant 6 : i32
    %155 = arith.addi %0, %c6_i32_109 : i32
    %c1_110 = arith.constant 1 : index
    %156 = arith.index_cast %155 : i32 to index
    %157 = memref.load %arg2[%c1_110, %156] : memref<5x16xi32, #tpu.memory_space<smem>>
    %c1_i32_111 = arith.constant 1 : i32
    %c0_i32_112 = arith.constant 0 : i32
    %158 = tpu.memref_slice %arg4[%157, %c0_i32_112] : memref<64x32xf32, #tpu.memory_space<any>> -> memref<1x32xf32, #tpu.memory_space<any>>
    %c14_i32 = arith.constant 14 : i32
    %c0_i32_113 = arith.constant 0 : i32
    %159 = tpu.memref_slice %arg7[%c14_i32, %c0_i32_113] : memref<40x32xf32, #tpu.memory_space<vmem>> -> memref<1x32xf32, #tpu.memory_space<vmem>>
    %160 = tpu.memref_slice %arg8[%c1_i32_111] : memref<2x!tpu.dma_semaphore, #tpu.memory_space<semaphore_mem>> -> memref<1x!tpu.dma_semaphore, #tpu.memory_space<semaphore_mem>>
    %161 = tpu.memref_squeeze %160 : memref<1x!tpu.dma_semaphore, #tpu.memory_space<semaphore_mem>> -> memref<!tpu.dma_semaphore, #tpu.memory_space<semaphore_mem>>
    tpu.enqueue_dma source(%158 : memref<1x32xf32, #tpu.memory_space<any>>) target(%159 : memref<1x32xf32, #tpu.memory_space<vmem>>) target_semaphore(%161 : memref<!tpu.dma_semaphore, #tpu.memory_space<semaphore_mem>>)
    %c7_i32_114 = arith.constant 7 : i32
    %162 = arith.addi %0, %c7_i32_114 : i32
    %c1_115 = arith.constant 1 : index
    %163 = arith.index_cast %162 : i32 to index
    %164 = memref.load %arg2[%c1_115, %163] : memref<5x16xi32, #tpu.memory_space<smem>>
    %c1_i32_116 = arith.constant 1 : i32
    %c0_i32_117 = arith.constant 0 : i32
    %165 = tpu.memref_slice %arg4[%164, %c0_i32_117] : memref<64x32xf32, #tpu.memory_space<any>> -> memref<1x32xf32, #tpu.memory_space<any>>
    %c15_i32 = arith.constant 15 : i32
    %c0_i32_118 = arith.constant 0 : i32
    %166 = tpu.memref_slice %arg7[%c15_i32, %c0_i32_118] : memref<40x32xf32, #tpu.memory_space<vmem>> -> memref<1x32xf32, #tpu.memory_space<vmem>>
    %167 = tpu.memref_slice %arg8[%c1_i32_116] : memref<2x!tpu.dma_semaphore, #tpu.memory_space<semaphore_mem>> -> memref<1x!tpu.dma_semaphore, #tpu.memory_space<semaphore_mem>>
    %168 = tpu.memref_squeeze %167 : memref<1x!tpu.dma_semaphore, #tpu.memory_space<semaphore_mem>> -> memref<!tpu.dma_semaphore, #tpu.memory_space<semaphore_mem>>
    tpu.enqueue_dma source(%165 : memref<1x32xf32, #tpu.memory_space<any>>) target(%166 : memref<1x32xf32, #tpu.memory_space<vmem>>) target_semaphore(%168 : memref<!tpu.dma_semaphore, #tpu.memory_space<semaphore_mem>>)
    %c0_i32_119 = arith.constant 0 : i32
    %169 = arith.addi %0, %c0_i32_119 : i32
    %c2 = arith.constant 2 : index
    %170 = arith.index_cast %169 : i32 to index
    %171 = memref.load %arg2[%c2, %170] : memref<5x16xi32, #tpu.memory_space<smem>>
    %c1_i32_120 = arith.constant 1 : i32
    %c0_i32_121 = arith.constant 0 : i32
    %172 = tpu.memref_slice %arg4[%171, %c0_i32_121] : memref<64x32xf32, #tpu.memory_space<any>> -> memref<1x32xf32, #tpu.memory_space<any>>
    %c16_i32 = arith.constant 16 : i32
    %c0_i32_122 = arith.constant 0 : i32
    %173 = tpu.memref_slice %arg7[%c16_i32, %c0_i32_122] : memref<40x32xf32, #tpu.memory_space<vmem>> -> memref<1x32xf32, #tpu.memory_space<vmem>>
    %174 = tpu.memref_slice %arg8[%c1_i32_120] : memref<2x!tpu.dma_semaphore, #tpu.memory_space<semaphore_mem>> -> memref<1x!tpu.dma_semaphore, #tpu.memory_space<semaphore_mem>>
    %175 = tpu.memref_squeeze %174 : memref<1x!tpu.dma_semaphore, #tpu.memory_space<semaphore_mem>> -> memref<!tpu.dma_semaphore, #tpu.memory_space<semaphore_mem>>
    tpu.enqueue_dma source(%172 : memref<1x32xf32, #tpu.memory_space<any>>) target(%173 : memref<1x32xf32, #tpu.memory_space<vmem>>) target_semaphore(%175 : memref<!tpu.dma_semaphore, #tpu.memory_space<semaphore_mem>>)
    %c1_i32_123 = arith.constant 1 : i32
    %176 = arith.addi %0, %c1_i32_123 : i32
    %c2_124 = arith.constant 2 : index
    %177 = arith.index_cast %176 : i32 to index
    %178 = memref.load %arg2[%c2_124, %177] : memref<5x16xi32, #tpu.memory_space<smem>>
    %c1_i32_125 = arith.constant 1 : i32
    %c0_i32_126 = arith.constant 0 : i32
    %179 = tpu.memref_slice %arg4[%178, %c0_i32_126] : memref<64x32xf32, #tpu.memory_space<any>> -> memref<1x32xf32, #tpu.memory_space<any>>
    %c17_i32 = arith.constant 17 : i32
    %c0_i32_127 = arith.constant 0 : i32
    %180 = tpu.memref_slice %arg7[%c17_i32, %c0_i32_127] : memref<40x32xf32, #tpu.memory_space<vmem>> -> memref<1x32xf32, #tpu.memory_space<vmem>>
    %181 = tpu.memref_slice %arg8[%c1_i32_125] : memref<2x!tpu.dma_semaphore, #tpu.memory_space<semaphore_mem>> -> memref<1x!tpu.dma_semaphore, #tpu.memory_space<semaphore_mem>>
    %182 = tpu.memref_squeeze %181 : memref<1x!tpu.dma_semaphore, #tpu.memory_space<semaphore_mem>> -> memref<!tpu.dma_semaphore, #tpu.memory_space<semaphore_mem>>
    tpu.enqueue_dma source(%179 : memref<1x32xf32, #tpu.memory_space<any>>) target(%180 : memref<1x32xf32, #tpu.memory_space<vmem>>) target_semaphore(%182 : memref<!tpu.dma_semaphore, #tpu.memory_space<semaphore_mem>>)
    %c2_i32_128 = arith.constant 2 : i32
    %183 = arith.addi %0, %c2_i32_128 : i32
    %c2_129 = arith.constant 2 : index
    %184 = arith.index_cast %183 : i32 to index
    %185 = memref.load %arg2[%c2_129, %184] : memref<5x16xi32, #tpu.memory_space<smem>>
    %c1_i32_130 = arith.constant 1 : i32
    %c0_i32_131 = arith.constant 0 : i32
    %186 = tpu.memref_slice %arg4[%185, %c0_i32_131] : memref<64x32xf32, #tpu.memory_space<any>> -> memref<1x32xf32, #tpu.memory_space<any>>
    %c18_i32 = arith.constant 18 : i32
    %c0_i32_132 = arith.constant 0 : i32
    %187 = tpu.memref_slice %arg7[%c18_i32, %c0_i32_132] : memref<40x32xf32, #tpu.memory_space<vmem>> -> memref<1x32xf32, #tpu.memory_space<vmem>>
    %188 = tpu.memref_slice %arg8[%c1_i32_130] : memref<2x!tpu.dma_semaphore, #tpu.memory_space<semaphore_mem>> -> memref<1x!tpu.dma_semaphore, #tpu.memory_space<semaphore_mem>>
    %189 = tpu.memref_squeeze %188 : memref<1x!tpu.dma_semaphore, #tpu.memory_space<semaphore_mem>> -> memref<!tpu.dma_semaphore, #tpu.memory_space<semaphore_mem>>
    tpu.enqueue_dma source(%186 : memref<1x32xf32, #tpu.memory_space<any>>) target(%187 : memref<1x32xf32, #tpu.memory_space<vmem>>) target_semaphore(%189 : memref<!tpu.dma_semaphore, #tpu.memory_space<semaphore_mem>>)
    %c3_i32_133 = arith.constant 3 : i32
    %190 = arith.addi %0, %c3_i32_133 : i32
    %c2_134 = arith.constant 2 : index
    %191 = arith.index_cast %190 : i32 to index
    %192 = memref.load %arg2[%c2_134, %191] : memref<5x16xi32, #tpu.memory_space<smem>>
    %c1_i32_135 = arith.constant 1 : i32
    %c0_i32_136 = arith.constant 0 : i32
    %193 = tpu.memref_slice %arg4[%192, %c0_i32_136] : memref<64x32xf32, #tpu.memory_space<any>> -> memref<1x32xf32, #tpu.memory_space<any>>
    %c19_i32 = arith.constant 19 : i32
    %c0_i32_137 = arith.constant 0 : i32
    %194 = tpu.memref_slice %arg7[%c19_i32, %c0_i32_137] : memref<40x32xf32, #tpu.memory_space<vmem>> -> memref<1x32xf32, #tpu.memory_space<vmem>>
    %195 = tpu.memref_slice %arg8[%c1_i32_135] : memref<2x!tpu.dma_semaphore, #tpu.memory_space<semaphore_mem>> -> memref<1x!tpu.dma_semaphore, #tpu.memory_space<semaphore_mem>>
    %196 = tpu.memref_squeeze %195 : memref<1x!tpu.dma_semaphore, #tpu.memory_space<semaphore_mem>> -> memref<!tpu.dma_semaphore, #tpu.memory_space<semaphore_mem>>
    tpu.enqueue_dma source(%193 : memref<1x32xf32, #tpu.memory_space<any>>) target(%194 : memref<1x32xf32, #tpu.memory_space<vmem>>) target_semaphore(%196 : memref<!tpu.dma_semaphore, #tpu.memory_space<semaphore_mem>>)
    %c4_i32_138 = arith.constant 4 : i32
    %197 = arith.addi %0, %c4_i32_138 : i32
    %c2_139 = arith.constant 2 : index
    %198 = arith.index_cast %197 : i32 to index
    %199 = memref.load %arg2[%c2_139, %198] : memref<5x16xi32, #tpu.memory_space<smem>>
    %c1_i32_140 = arith.constant 1 : i32
    %c0_i32_141 = arith.constant 0 : i32
    %200 = tpu.memref_slice %arg4[%199, %c0_i32_141] : memref<64x32xf32, #tpu.memory_space<any>> -> memref<1x32xf32, #tpu.memory_space<any>>
    %c20_i32 = arith.constant 20 : i32
    %c0_i32_142 = arith.constant 0 : i32
    %201 = tpu.memref_slice %arg7[%c20_i32, %c0_i32_142] : memref<40x32xf32, #tpu.memory_space<vmem>> -> memref<1x32xf32, #tpu.memory_space<vmem>>
    %202 = tpu.memref_slice %arg8[%c1_i32_140] : memref<2x!tpu.dma_semaphore, #tpu.memory_space<semaphore_mem>> -> memref<1x!tpu.dma_semaphore, #tpu.memory_space<semaphore_mem>>
    %203 = tpu.memref_squeeze %202 : memref<1x!tpu.dma_semaphore, #tpu.memory_space<semaphore_mem>> -> memref<!tpu.dma_semaphore, #tpu.memory_space<semaphore_mem>>
    tpu.enqueue_dma source(%200 : memref<1x32xf32, #tpu.memory_space<any>>) target(%201 : memref<1x32xf32, #tpu.memory_space<vmem>>) target_semaphore(%203 : memref<!tpu.dma_semaphore, #tpu.memory_space<semaphore_mem>>)
    %c5_i32_143 = arith.constant 5 : i32
    %204 = arith.addi %0, %c5_i32_143 : i32
    %c2_144 = arith.constant 2 : index
    %205 = arith.index_cast %204 : i32 to index
    %206 = memref.load %arg2[%c2_144, %205] : memref<5x16xi32, #tpu.memory_space<smem>>
    %c1_i32_145 = arith.constant 1 : i32
    %c0_i32_146 = arith.constant 0 : i32
    %207 = tpu.memref_slice %arg4[%206, %c0_i32_146] : memref<64x32xf32, #tpu.memory_space<any>> -> memref<1x32xf32, #tpu.memory_space<any>>
    %c21_i32 = arith.constant 21 : i32
    %c0_i32_147 = arith.constant 0 : i32
    %208 = tpu.memref_slice %arg7[%c21_i32, %c0_i32_147] : memref<40x32xf32, #tpu.memory_space<vmem>> -> memref<1x32xf32, #tpu.memory_space<vmem>>
    %209 = tpu.memref_slice %arg8[%c1_i32_145] : memref<2x!tpu.dma_semaphore, #tpu.memory_space<semaphore_mem>> -> memref<1x!tpu.dma_semaphore, #tpu.memory_space<semaphore_mem>>
    %210 = tpu.memref_squeeze %209 : memref<1x!tpu.dma_semaphore, #tpu.memory_space<semaphore_mem>> -> memref<!tpu.dma_semaphore, #tpu.memory_space<semaphore_mem>>
    tpu.enqueue_dma source(%207 : memref<1x32xf32, #tpu.memory_space<any>>) target(%208 : memref<1x32xf32, #tpu.memory_space<vmem>>) target_semaphore(%210 : memref<!tpu.dma_semaphore, #tpu.memory_space<semaphore_mem>>)
    %c6_i32_148 = arith.constant 6 : i32
    %211 = arith.addi %0, %c6_i32_148 : i32
    %c2_149 = arith.constant 2 : index
    %212 = arith.index_cast %211 : i32 to index
    %213 = memref.load %arg2[%c2_149, %212] : memref<5x16xi32, #tpu.memory_space<smem>>
    %c1_i32_150 = arith.constant 1 : i32
    %c0_i32_151 = arith.constant 0 : i32
    %214 = tpu.memref_slice %arg4[%213, %c0_i32_151] : memref<64x32xf32, #tpu.memory_space<any>> -> memref<1x32xf32, #tpu.memory_space<any>>
    %c22_i32 = arith.constant 22 : i32
    %c0_i32_152 = arith.constant 0 : i32
    %215 = tpu.memref_slice %arg7[%c22_i32, %c0_i32_152] : memref<40x32xf32, #tpu.memory_space<vmem>> -> memref<1x32xf32, #tpu.memory_space<vmem>>
    %216 = tpu.memref_slice %arg8[%c1_i32_150] : memref<2x!tpu.dma_semaphore, #tpu.memory_space<semaphore_mem>> -> memref<1x!tpu.dma_semaphore, #tpu.memory_space<semaphore_mem>>
    %217 = tpu.memref_squeeze %216 : memref<1x!tpu.dma_semaphore, #tpu.memory_space<semaphore_mem>> -> memref<!tpu.dma_semaphore, #tpu.memory_space<semaphore_mem>>
    tpu.enqueue_dma source(%214 : memref<1x32xf32, #tpu.memory_space<any>>) target(%215 : memref<1x32xf32, #tpu.memory_space<vmem>>) target_semaphore(%217 : memref<!tpu.dma_semaphore, #tpu.memory_space<semaphore_mem>>)
    %c7_i32_153 = arith.constant 7 : i32
    %218 = arith.addi %0, %c7_i32_153 : i32
    %c2_154 = arith.constant 2 : index
    %219 = arith.index_cast %218 : i32 to index
    %220 = memref.load %arg2[%c2_154, %219] : memref<5x16xi32, #tpu.memory_space<smem>>
    %c1_i32_155 = arith.constant 1 : i32
    %c0_i32_156 = arith.constant 0 : i32
    %221 = tpu.memref_slice %arg4[%220, %c0_i32_156] : memref<64x32xf32, #tpu.memory_space<any>> -> memref<1x32xf32, #tpu.memory_space<any>>
    %c23_i32 = arith.constant 23 : i32
    %c0_i32_157 = arith.constant 0 : i32
    %222 = tpu.memref_slice %arg7[%c23_i32, %c0_i32_157] : memref<40x32xf32, #tpu.memory_space<vmem>> -> memref<1x32xf32, #tpu.memory_space<vmem>>
    %223 = tpu.memref_slice %arg8[%c1_i32_155] : memref<2x!tpu.dma_semaphore, #tpu.memory_space<semaphore_mem>> -> memref<1x!tpu.dma_semaphore, #tpu.memory_space<semaphore_mem>>
    %224 = tpu.memref_squeeze %223 : memref<1x!tpu.dma_semaphore, #tpu.memory_space<semaphore_mem>> -> memref<!tpu.dma_semaphore, #tpu.memory_space<semaphore_mem>>
    tpu.enqueue_dma source(%221 : memref<1x32xf32, #tpu.memory_space<any>>) target(%222 : memref<1x32xf32, #tpu.memory_space<vmem>>) target_semaphore(%224 : memref<!tpu.dma_semaphore, #tpu.memory_space<semaphore_mem>>)
    %c0_i32_158 = arith.constant 0 : i32
    %225 = arith.addi %0, %c0_i32_158 : i32
    %c3 = arith.constant 3 : index
    %226 = arith.index_cast %225 : i32 to index
    %227 = memref.load %arg2[%c3, %226] : memref<5x16xi32, #tpu.memory_space<smem>>
    %c1_i32_159 = arith.constant 1 : i32
    %c0_i32_160 = arith.constant 0 : i32
    %228 = tpu.memref_slice %arg4[%227, %c0_i32_160] : memref<64x32xf32, #tpu.memory_space<any>> -> memref<1x32xf32, #tpu.memory_space<any>>
    %c24_i32 = arith.constant 24 : i32
    %c0_i32_161 = arith.constant 0 : i32
    %229 = tpu.memref_slice %arg7[%c24_i32, %c0_i32_161] : memref<40x32xf32, #tpu.memory_space<vmem>> -> memref<1x32xf32, #tpu.memory_space<vmem>>
    %230 = tpu.memref_slice %arg8[%c1_i32_159] : memref<2x!tpu.dma_semaphore, #tpu.memory_space<semaphore_mem>> -> memref<1x!tpu.dma_semaphore, #tpu.memory_space<semaphore_mem>>
    %231 = tpu.memref_squeeze %230 : memref<1x!tpu.dma_semaphore, #tpu.memory_space<semaphore_mem>> -> memref<!tpu.dma_semaphore, #tpu.memory_space<semaphore_mem>>
    tpu.enqueue_dma source(%228 : memref<1x32xf32, #tpu.memory_space<any>>) target(%229 : memref<1x32xf32, #tpu.memory_space<vmem>>) target_semaphore(%231 : memref<!tpu.dma_semaphore, #tpu.memory_space<semaphore_mem>>)
    %c1_i32_162 = arith.constant 1 : i32
    %232 = arith.addi %0, %c1_i32_162 : i32
    %c3_163 = arith.constant 3 : index
    %233 = arith.index_cast %232 : i32 to index
    %234 = memref.load %arg2[%c3_163, %233] : memref<5x16xi32, #tpu.memory_space<smem>>
    %c1_i32_164 = arith.constant 1 : i32
    %c0_i32_165 = arith.constant 0 : i32
    %235 = tpu.memref_slice %arg4[%234, %c0_i32_165] : memref<64x32xf32, #tpu.memory_space<any>> -> memref<1x32xf32, #tpu.memory_space<any>>
    %c25_i32 = arith.constant 25 : i32
    %c0_i32_166 = arith.constant 0 : i32
    %236 = tpu.memref_slice %arg7[%c25_i32, %c0_i32_166] : memref<40x32xf32, #tpu.memory_space<vmem>> -> memref<1x32xf32, #tpu.memory_space<vmem>>
    %237 = tpu.memref_slice %arg8[%c1_i32_164] : memref<2x!tpu.dma_semaphore, #tpu.memory_space<semaphore_mem>> -> memref<1x!tpu.dma_semaphore, #tpu.memory_space<semaphore_mem>>
    %238 = tpu.memref_squeeze %237 : memref<1x!tpu.dma_semaphore, #tpu.memory_space<semaphore_mem>> -> memref<!tpu.dma_semaphore, #tpu.memory_space<semaphore_mem>>
    tpu.enqueue_dma source(%235 : memref<1x32xf32, #tpu.memory_space<any>>) target(%236 : memref<1x32xf32, #tpu.memory_space<vmem>>) target_semaphore(%238 : memref<!tpu.dma_semaphore, #tpu.memory_space<semaphore_mem>>)
    %c2_i32_167 = arith.constant 2 : i32
    %239 = arith.addi %0, %c2_i32_167 : i32
    %c3_168 = arith.constant 3 : index
    %240 = arith.index_cast %239 : i32 to index
    %241 = memref.load %arg2[%c3_168, %240] : memref<5x16xi32, #tpu.memory_space<smem>>
    %c1_i32_169 = arith.constant 1 : i32
    %c0_i32_170 = arith.constant 0 : i32
    %242 = tpu.memref_slice %arg4[%241, %c0_i32_170] : memref<64x32xf32, #tpu.memory_space<any>> -> memref<1x32xf32, #tpu.memory_space<any>>
    %c26_i32 = arith.constant 26 : i32
    %c0_i32_171 = arith.constant 0 : i32
    %243 = tpu.memref_slice %arg7[%c26_i32, %c0_i32_171] : memref<40x32xf32, #tpu.memory_space<vmem>> -> memref<1x32xf32, #tpu.memory_space<vmem>>
    %244 = tpu.memref_slice %arg8[%c1_i32_169] : memref<2x!tpu.dma_semaphore, #tpu.memory_space<semaphore_mem>> -> memref<1x!tpu.dma_semaphore, #tpu.memory_space<semaphore_mem>>
    %245 = tpu.memref_squeeze %244 : memref<1x!tpu.dma_semaphore, #tpu.memory_space<semaphore_mem>> -> memref<!tpu.dma_semaphore, #tpu.memory_space<semaphore_mem>>
    tpu.enqueue_dma source(%242 : memref<1x32xf32, #tpu.memory_space<any>>) target(%243 : memref<1x32xf32, #tpu.memory_space<vmem>>) target_semaphore(%245 : memref<!tpu.dma_semaphore, #tpu.memory_space<semaphore_mem>>)
    %c3_i32_172 = arith.constant 3 : i32
    %246 = arith.addi %0, %c3_i32_172 : i32
    %c3_173 = arith.constant 3 : index
    %247 = arith.index_cast %246 : i32 to index
    %248 = memref.load %arg2[%c3_173, %247] : memref<5x16xi32, #tpu.memory_space<smem>>
    %c1_i32_174 = arith.constant 1 : i32
    %c0_i32_175 = arith.constant 0 : i32
    %249 = tpu.memref_slice %arg4[%248, %c0_i32_175] : memref<64x32xf32, #tpu.memory_space<any>> -> memref<1x32xf32, #tpu.memory_space<any>>
    %c27_i32 = arith.constant 27 : i32
    %c0_i32_176 = arith.constant 0 : i32
    %250 = tpu.memref_slice %arg7[%c27_i32, %c0_i32_176] : memref<40x32xf32, #tpu.memory_space<vmem>> -> memref<1x32xf32, #tpu.memory_space<vmem>>
    %251 = tpu.memref_slice %arg8[%c1_i32_174] : memref<2x!tpu.dma_semaphore, #tpu.memory_space<semaphore_mem>> -> memref<1x!tpu.dma_semaphore, #tpu.memory_space<semaphore_mem>>
    %252 = tpu.memref_squeeze %251 : memref<1x!tpu.dma_semaphore, #tpu.memory_space<semaphore_mem>> -> memref<!tpu.dma_semaphore, #tpu.memory_space<semaphore_mem>>
    tpu.enqueue_dma source(%249 : memref<1x32xf32, #tpu.memory_space<any>>) target(%250 : memref<1x32xf32, #tpu.memory_space<vmem>>) target_semaphore(%252 : memref<!tpu.dma_semaphore, #tpu.memory_space<semaphore_mem>>)
    %c4_i32_177 = arith.constant 4 : i32
    %253 = arith.addi %0, %c4_i32_177 : i32
    %c3_178 = arith.constant 3 : index
    %254 = arith.index_cast %253 : i32 to index
    %255 = memref.load %arg2[%c3_178, %254] : memref<5x16xi32, #tpu.memory_space<smem>>
    %c1_i32_179 = arith.constant 1 : i32
    %c0_i32_180 = arith.constant 0 : i32
    %256 = tpu.memref_slice %arg4[%255, %c0_i32_180] : memref<64x32xf32, #tpu.memory_space<any>> -> memref<1x32xf32, #tpu.memory_space<any>>
    %c28_i32 = arith.constant 28 : i32
    %c0_i32_181 = arith.constant 0 : i32
    %257 = tpu.memref_slice %arg7[%c28_i32, %c0_i32_181] : memref<40x32xf32, #tpu.memory_space<vmem>> -> memref<1x32xf32, #tpu.memory_space<vmem>>
    %258 = tpu.memref_slice %arg8[%c1_i32_179] : memref<2x!tpu.dma_semaphore, #tpu.memory_space<semaphore_mem>> -> memref<1x!tpu.dma_semaphore, #tpu.memory_space<semaphore_mem>>
    %259 = tpu.memref_squeeze %258 : memref<1x!tpu.dma_semaphore, #tpu.memory_space<semaphore_mem>> -> memref<!tpu.dma_semaphore, #tpu.memory_space<semaphore_mem>>
    tpu.enqueue_dma source(%256 : memref<1x32xf32, #tpu.memory_space<any>>) target(%257 : memref<1x32xf32, #tpu.memory_space<vmem>>) target_semaphore(%259 : memref<!tpu.dma_semaphore, #tpu.memory_space<semaphore_mem>>)
    %c5_i32_182 = arith.constant 5 : i32
    %260 = arith.addi %0, %c5_i32_182 : i32
    %c3_183 = arith.constant 3 : index
    %261 = arith.index_cast %260 : i32 to index
    %262 = memref.load %arg2[%c3_183, %261] : memref<5x16xi32, #tpu.memory_space<smem>>
    %c1_i32_184 = arith.constant 1 : i32
    %c0_i32_185 = arith.constant 0 : i32
    %263 = tpu.memref_slice %arg4[%262, %c0_i32_185] : memref<64x32xf32, #tpu.memory_space<any>> -> memref<1x32xf32, #tpu.memory_space<any>>
    %c29_i32 = arith.constant 29 : i32
    %c0_i32_186 = arith.constant 0 : i32
    %264 = tpu.memref_slice %arg7[%c29_i32, %c0_i32_186] : memref<40x32xf32, #tpu.memory_space<vmem>> -> memref<1x32xf32, #tpu.memory_space<vmem>>
    %265 = tpu.memref_slice %arg8[%c1_i32_184] : memref<2x!tpu.dma_semaphore, #tpu.memory_space<semaphore_mem>> -> memref<1x!tpu.dma_semaphore, #tpu.memory_space<semaphore_mem>>
    %266 = tpu.memref_squeeze %265 : memref<1x!tpu.dma_semaphore, #tpu.memory_space<semaphore_mem>> -> memref<!tpu.dma_semaphore, #tpu.memory_space<semaphore_mem>>
    tpu.enqueue_dma source(%263 : memref<1x32xf32, #tpu.memory_space<any>>) target(%264 : memref<1x32xf32, #tpu.memory_space<vmem>>) target_semaphore(%266 : memref<!tpu.dma_semaphore, #tpu.memory_space<semaphore_mem>>)
    %c6_i32_187 = arith.constant 6 : i32
    %267 = arith.addi %0, %c6_i32_187 : i32
    %c3_188 = arith.constant 3 : index
    %268 = arith.index_cast %267 : i32 to index
    %269 = memref.load %arg2[%c3_188, %268] : memref<5x16xi32, #tpu.memory_space<smem>>
    %c1_i32_189 = arith.constant 1 : i32
    %c0_i32_190 = arith.constant 0 : i32
    %270 = tpu.memref_slice %arg4[%269, %c0_i32_190] : memref<64x32xf32, #tpu.memory_space<any>> -> memref<1x32xf32, #tpu.memory_space<any>>
    %c30_i32 = arith.constant 30 : i32
    %c0_i32_191 = arith.constant 0 : i32
    %271 = tpu.memref_slice %arg7[%c30_i32, %c0_i32_191] : memref<40x32xf32, #tpu.memory_space<vmem>> -> memref<1x32xf32, #tpu.memory_space<vmem>>
    %272 = tpu.memref_slice %arg8[%c1_i32_189] : memref<2x!tpu.dma_semaphore, #tpu.memory_space<semaphore_mem>> -> memref<1x!tpu.dma_semaphore, #tpu.memory_space<semaphore_mem>>
    %273 = tpu.memref_squeeze %272 : memref<1x!tpu.dma_semaphore, #tpu.memory_space<semaphore_mem>> -> memref<!tpu.dma_semaphore, #tpu.memory_space<semaphore_mem>>
    tpu.enqueue_dma source(%270 : memref<1x32xf32, #tpu.memory_space<any>>) target(%271 : memref<1x32xf32, #tpu.memory_space<vmem>>) target_semaphore(%273 : memref<!tpu.dma_semaphore, #tpu.memory_space<semaphore_mem>>)
    %c7_i32_192 = arith.constant 7 : i32
    %274 = arith.addi %0, %c7_i32_192 : i32
    %c3_193 = arith.constant 3 : index
    %275 = arith.index_cast %274 : i32 to index
    %276 = memref.load %arg2[%c3_193, %275] : memref<5x16xi32, #tpu.memory_space<smem>>
    %c1_i32_194 = arith.constant 1 : i32
    %c0_i32_195 = arith.constant 0 : i32
    %277 = tpu.memref_slice %arg4[%276, %c0_i32_195] : memref<64x32xf32, #tpu.memory_space<any>> -> memref<1x32xf32, #tpu.memory_space<any>>
    %c31_i32 = arith.constant 31 : i32
    %c0_i32_196 = arith.constant 0 : i32
    %278 = tpu.memref_slice %arg7[%c31_i32, %c0_i32_196] : memref<40x32xf32, #tpu.memory_space<vmem>> -> memref<1x32xf32, #tpu.memory_space<vmem>>
    %279 = tpu.memref_slice %arg8[%c1_i32_194] : memref<2x!tpu.dma_semaphore, #tpu.memory_space<semaphore_mem>> -> memref<1x!tpu.dma_semaphore, #tpu.memory_space<semaphore_mem>>
    %280 = tpu.memref_squeeze %279 : memref<1x!tpu.dma_semaphore, #tpu.memory_space<semaphore_mem>> -> memref<!tpu.dma_semaphore, #tpu.memory_space<semaphore_mem>>
    tpu.enqueue_dma source(%277 : memref<1x32xf32, #tpu.memory_space<any>>) target(%278 : memref<1x32xf32, #tpu.memory_space<vmem>>) target_semaphore(%280 : memref<!tpu.dma_semaphore, #tpu.memory_space<semaphore_mem>>)
    %c0_i32_197 = arith.constant 0 : i32
    %281 = arith.addi %0, %c0_i32_197 : i32
    %c4 = arith.constant 4 : index
    %282 = arith.index_cast %281 : i32 to index
    %283 = memref.load %arg2[%c4, %282] : memref<5x16xi32, #tpu.memory_space<smem>>
    %c1_i32_198 = arith.constant 1 : i32
    %c0_i32_199 = arith.constant 0 : i32
    %284 = tpu.memref_slice %arg4[%283, %c0_i32_199] : memref<64x32xf32, #tpu.memory_space<any>> -> memref<1x32xf32, #tpu.memory_space<any>>
    %c32_i32 = arith.constant 32 : i32
    %c0_i32_200 = arith.constant 0 : i32
    %285 = tpu.memref_slice %arg7[%c32_i32, %c0_i32_200] : memref<40x32xf32, #tpu.memory_space<vmem>> -> memref<1x32xf32, #tpu.memory_space<vmem>>
    %286 = tpu.memref_slice %arg8[%c1_i32_198] : memref<2x!tpu.dma_semaphore, #tpu.memory_space<semaphore_mem>> -> memref<1x!tpu.dma_semaphore, #tpu.memory_space<semaphore_mem>>
    %287 = tpu.memref_squeeze %286 : memref<1x!tpu.dma_semaphore, #tpu.memory_space<semaphore_mem>> -> memref<!tpu.dma_semaphore, #tpu.memory_space<semaphore_mem>>
    tpu.enqueue_dma source(%284 : memref<1x32xf32, #tpu.memory_space<any>>) target(%285 : memref<1x32xf32, #tpu.memory_space<vmem>>) target_semaphore(%287 : memref<!tpu.dma_semaphore, #tpu.memory_space<semaphore_mem>>)
    %c1_i32_201 = arith.constant 1 : i32
    %288 = arith.addi %0, %c1_i32_201 : i32
    %c4_202 = arith.constant 4 : index
    %289 = arith.index_cast %288 : i32 to index
    %290 = memref.load %arg2[%c4_202, %289] : memref<5x16xi32, #tpu.memory_space<smem>>
    %c1_i32_203 = arith.constant 1 : i32
    %c0_i32_204 = arith.constant 0 : i32
    %291 = tpu.memref_slice %arg4[%290, %c0_i32_204] : memref<64x32xf32, #tpu.memory_space<any>> -> memref<1x32xf32, #tpu.memory_space<any>>
    %c33_i32 = arith.constant 33 : i32
    %c0_i32_205 = arith.constant 0 : i32
    %292 = tpu.memref_slice %arg7[%c33_i32, %c0_i32_205] : memref<40x32xf32, #tpu.memory_space<vmem>> -> memref<1x32xf32, #tpu.memory_space<vmem>>
    %293 = tpu.memref_slice %arg8[%c1_i32_203] : memref<2x!tpu.dma_semaphore, #tpu.memory_space<semaphore_mem>> -> memref<1x!tpu.dma_semaphore, #tpu.memory_space<semaphore_mem>>
    %294 = tpu.memref_squeeze %293 : memref<1x!tpu.dma_semaphore, #tpu.memory_space<semaphore_mem>> -> memref<!tpu.dma_semaphore, #tpu.memory_space<semaphore_mem>>
    tpu.enqueue_dma source(%291 : memref<1x32xf32, #tpu.memory_space<any>>) target(%292 : memref<1x32xf32, #tpu.memory_space<vmem>>) target_semaphore(%294 : memref<!tpu.dma_semaphore, #tpu.memory_space<semaphore_mem>>)
    %c2_i32_206 = arith.constant 2 : i32
    %295 = arith.addi %0, %c2_i32_206 : i32
    %c4_207 = arith.constant 4 : index
    %296 = arith.index_cast %295 : i32 to index
    %297 = memref.load %arg2[%c4_207, %296] : memref<5x16xi32, #tpu.memory_space<smem>>
    %c1_i32_208 = arith.constant 1 : i32
    %c0_i32_209 = arith.constant 0 : i32
    %298 = tpu.memref_slice %arg4[%297, %c0_i32_209] : memref<64x32xf32, #tpu.memory_space<any>> -> memref<1x32xf32, #tpu.memory_space<any>>
    %c34_i32 = arith.constant 34 : i32
    %c0_i32_210 = arith.constant 0 : i32
    %299 = tpu.memref_slice %arg7[%c34_i32, %c0_i32_210] : memref<40x32xf32, #tpu.memory_space<vmem>> -> memref<1x32xf32, #tpu.memory_space<vmem>>
    %300 = tpu.memref_slice %arg8[%c1_i32_208] : memref<2x!tpu.dma_semaphore, #tpu.memory_space<semaphore_mem>> -> memref<1x!tpu.dma_semaphore, #tpu.memory_space<semaphore_mem>>
    %301 = tpu.memref_squeeze %300 : memref<1x!tpu.dma_semaphore, #tpu.memory_space<semaphore_mem>> -> memref<!tpu.dma_semaphore, #tpu.memory_space<semaphore_mem>>
    tpu.enqueue_dma source(%298 : memref<1x32xf32, #tpu.memory_space<any>>) target(%299 : memref<1x32xf32, #tpu.memory_space<vmem>>) target_semaphore(%301 : memref<!tpu.dma_semaphore, #tpu.memory_space<semaphore_mem>>)
    %c3_i32_211 = arith.constant 3 : i32
    %302 = arith.addi %0, %c3_i32_211 : i32
    %c4_212 = arith.constant 4 : index
    %303 = arith.index_cast %302 : i32 to index
    %304 = memref.load %arg2[%c4_212, %303] : memref<5x16xi32, #tpu.memory_space<smem>>
    %c1_i32_213 = arith.constant 1 : i32
    %c0_i32_214 = arith.constant 0 : i32
    %305 = tpu.memref_slice %arg4[%304, %c0_i32_214] : memref<64x32xf32, #tpu.memory_space<any>> -> memref<1x32xf32, #tpu.memory_space<any>>
    %c35_i32 = arith.constant 35 : i32
    %c0_i32_215 = arith.constant 0 : i32
    %306 = tpu.memref_slice %arg7[%c35_i32, %c0_i32_215] : memref<40x32xf32, #tpu.memory_space<vmem>> -> memref<1x32xf32, #tpu.memory_space<vmem>>
    %307 = tpu.memref_slice %arg8[%c1_i32_213] : memref<2x!tpu.dma_semaphore, #tpu.memory_space<semaphore_mem>> -> memref<1x!tpu.dma_semaphore, #tpu.memory_space<semaphore_mem>>
    %308 = tpu.memref_squeeze %307 : memref<1x!tpu.dma_semaphore, #tpu.memory_space<semaphore_mem>> -> memref<!tpu.dma_semaphore, #tpu.memory_space<semaphore_mem>>
    tpu.enqueue_dma source(%305 : memref<1x32xf32, #tpu.memory_space<any>>) target(%306 : memref<1x32xf32, #tpu.memory_space<vmem>>) target_semaphore(%308 : memref<!tpu.dma_semaphore, #tpu.memory_space<semaphore_mem>>)
    %c4_i32_216 = arith.constant 4 : i32
    %309 = arith.addi %0, %c4_i32_216 : i32
    %c4_217 = arith.constant 4 : index
    %310 = arith.index_cast %309 : i32 to index
    %311 = memref.load %arg2[%c4_217, %310] : memref<5x16xi32, #tpu.memory_space<smem>>
    %c1_i32_218 = arith.constant 1 : i32
    %c0_i32_219 = arith.constant 0 : i32
    %312 = tpu.memref_slice %arg4[%311, %c0_i32_219] : memref<64x32xf32, #tpu.memory_space<any>> -> memref<1x32xf32, #tpu.memory_space<any>>
    %c36_i32 = arith.constant 36 : i32
    %c0_i32_220 = arith.constant 0 : i32
    %313 = tpu.memref_slice %arg7[%c36_i32, %c0_i32_220] : memref<40x32xf32, #tpu.memory_space<vmem>> -> memref<1x32xf32, #tpu.memory_space<vmem>>
    %314 = tpu.memref_slice %arg8[%c1_i32_218] : memref<2x!tpu.dma_semaphore, #tpu.memory_space<semaphore_mem>> -> memref<1x!tpu.dma_semaphore, #tpu.memory_space<semaphore_mem>>
    %315 = tpu.memref_squeeze %314 : memref<1x!tpu.dma_semaphore, #tpu.memory_space<semaphore_mem>> -> memref<!tpu.dma_semaphore, #tpu.memory_space<semaphore_mem>>
    tpu.enqueue_dma source(%312 : memref<1x32xf32, #tpu.memory_space<any>>) target(%313 : memref<1x32xf32, #tpu.memory_space<vmem>>) target_semaphore(%315 : memref<!tpu.dma_semaphore, #tpu.memory_space<semaphore_mem>>)
    %c5_i32_221 = arith.constant 5 : i32
    %316 = arith.addi %0, %c5_i32_221 : i32
    %c4_222 = arith.constant 4 : index
    %317 = arith.index_cast %316 : i32 to index
    %318 = memref.load %arg2[%c4_222, %317] : memref<5x16xi32, #tpu.memory_space<smem>>
    %c1_i32_223 = arith.constant 1 : i32
    %c0_i32_224 = arith.constant 0 : i32
    %319 = tpu.memref_slice %arg4[%318, %c0_i32_224] : memref<64x32xf32, #tpu.memory_space<any>> -> memref<1x32xf32, #tpu.memory_space<any>>
    %c37_i32 = arith.constant 37 : i32
    %c0_i32_225 = arith.constant 0 : i32
    %320 = tpu.memref_slice %arg7[%c37_i32, %c0_i32_225] : memref<40x32xf32, #tpu.memory_space<vmem>> -> memref<1x32xf32, #tpu.memory_space<vmem>>
    %321 = tpu.memref_slice %arg8[%c1_i32_223] : memref<2x!tpu.dma_semaphore, #tpu.memory_space<semaphore_mem>> -> memref<1x!tpu.dma_semaphore, #tpu.memory_space<semaphore_mem>>
    %322 = tpu.memref_squeeze %321 : memref<1x!tpu.dma_semaphore, #tpu.memory_space<semaphore_mem>> -> memref<!tpu.dma_semaphore, #tpu.memory_space<semaphore_mem>>
    tpu.enqueue_dma source(%319 : memref<1x32xf32, #tpu.memory_space<any>>) target(%320 : memref<1x32xf32, #tpu.memory_space<vmem>>) target_semaphore(%322 : memref<!tpu.dma_semaphore, #tpu.memory_space<semaphore_mem>>)
    %c6_i32_226 = arith.constant 6 : i32
    %323 = arith.addi %0, %c6_i32_226 : i32
    %c4_227 = arith.constant 4 : index
    %324 = arith.index_cast %323 : i32 to index
    %325 = memref.load %arg2[%c4_227, %324] : memref<5x16xi32, #tpu.memory_space<smem>>
    %c1_i32_228 = arith.constant 1 : i32
    %c0_i32_229 = arith.constant 0 : i32
    %326 = tpu.memref_slice %arg4[%325, %c0_i32_229] : memref<64x32xf32, #tpu.memory_space<any>> -> memref<1x32xf32, #tpu.memory_space<any>>
    %c38_i32 = arith.constant 38 : i32
    %c0_i32_230 = arith.constant 0 : i32
    %327 = tpu.memref_slice %arg7[%c38_i32, %c0_i32_230] : memref<40x32xf32, #tpu.memory_space<vmem>> -> memref<1x32xf32, #tpu.memory_space<vmem>>
    %328 = tpu.memref_slice %arg8[%c1_i32_228] : memref<2x!tpu.dma_semaphore, #tpu.memory_space<semaphore_mem>> -> memref<1x!tpu.dma_semaphore, #tpu.memory_space<semaphore_mem>>
    %329 = tpu.memref_squeeze %328 : memref<1x!tpu.dma_semaphore, #tpu.memory_space<semaphore_mem>> -> memref<!tpu.dma_semaphore, #tpu.memory_space<semaphore_mem>>
    tpu.enqueue_dma source(%326 : memref<1x32xf32, #tpu.memory_space<any>>) target(%327 : memref<1x32xf32, #tpu.memory_space<vmem>>) target_semaphore(%329 : memref<!tpu.dma_semaphore, #tpu.memory_space<semaphore_mem>>)
    %c7_i32_231 = arith.constant 7 : i32
    %330 = arith.addi %0, %c7_i32_231 : i32
    %c4_232 = arith.constant 4 : index
    %331 = arith.index_cast %330 : i32 to index
    %332 = memref.load %arg2[%c4_232, %331] : memref<5x16xi32, #tpu.memory_space<smem>>
    %c1_i32_233 = arith.constant 1 : i32
    %c0_i32_234 = arith.constant 0 : i32
    %333 = tpu.memref_slice %arg4[%332, %c0_i32_234] : memref<64x32xf32, #tpu.memory_space<any>> -> memref<1x32xf32, #tpu.memory_space<any>>
    %c39_i32 = arith.constant 39 : i32
    %c0_i32_235 = arith.constant 0 : i32
    %334 = tpu.memref_slice %arg7[%c39_i32, %c0_i32_235] : memref<40x32xf32, #tpu.memory_space<vmem>> -> memref<1x32xf32, #tpu.memory_space<vmem>>
    %335 = tpu.memref_slice %arg8[%c1_i32_233] : memref<2x!tpu.dma_semaphore, #tpu.memory_space<semaphore_mem>> -> memref<1x!tpu.dma_semaphore, #tpu.memory_space<semaphore_mem>>
    %336 = tpu.memref_squeeze %335 : memref<1x!tpu.dma_semaphore, #tpu.memory_space<semaphore_mem>> -> memref<!tpu.dma_semaphore, #tpu.memory_space<semaphore_mem>>
    tpu.enqueue_dma source(%333 : memref<1x32xf32, #tpu.memory_space<any>>) target(%334 : memref<1x32xf32, #tpu.memory_space<vmem>>) target_semaphore(%336 : memref<!tpu.dma_semaphore, #tpu.memory_space<semaphore_mem>>)
    %c0_i32_236 = arith.constant 0 : i32
    %c0_i32_237 = arith.constant 0 : i32
    %c0_i32_238 = arith.constant 0 : i32
    %337 = tpu.memref_slice %arg3[%c0_i32_237, %c0_i32_238] : memref<64x32xf32, #tpu.memory_space<any>> -> memref<1x32xf32, #tpu.memory_space<any>>
    %c0_i32_239 = arith.constant 0 : i32
    %c0_i32_240 = arith.constant 0 : i32
    %338 = tpu.memref_slice %arg6[%c0_i32_239, %c0_i32_240] : memref<8x32xf32, #tpu.memory_space<vmem>> -> memref<1x32xf32, #tpu.memory_space<vmem>>
    %339 = tpu.memref_slice %arg8[%c0_i32_236] : memref<2x!tpu.dma_semaphore, #tpu.memory_space<semaphore_mem>> -> memref<1x!tpu.dma_semaphore, #tpu.memory_space<semaphore_mem>>
    %340 = tpu.memref_squeeze %339 : memref<1x!tpu.dma_semaphore, #tpu.memory_space<semaphore_mem>> -> memref<!tpu.dma_semaphore, #tpu.memory_space<semaphore_mem>>
    tpu.wait_dma2 semaphore(%340 : memref<!tpu.dma_semaphore, #tpu.memory_space<semaphore_mem>>) src(%337 : memref<1x32xf32, #tpu.memory_space<any>>) dst(%338 : memref<1x32xf32, #tpu.memory_space<vmem>>)
    %c0_i32_241 = arith.constant 0 : i32
    %c0_i32_242 = arith.constant 0 : i32
    %c0_i32_243 = arith.constant 0 : i32
    %341 = tpu.memref_slice %arg3[%c0_i32_242, %c0_i32_243] : memref<64x32xf32, #tpu.memory_space<any>> -> memref<1x32xf32, #tpu.memory_space<any>>
    %c1_i32_244 = arith.constant 1 : i32
    %c0_i32_245 = arith.constant 0 : i32
    %342 = tpu.memref_slice %arg6[%c1_i32_244, %c0_i32_245] : memref<8x32xf32, #tpu.memory_space<vmem>> -> memref<1x32xf32, #tpu.memory_space<vmem>>
    %343 = tpu.memref_slice %arg8[%c0_i32_241] : memref<2x!tpu.dma_semaphore, #tpu.memory_space<semaphore_mem>> -> memref<1x!tpu.dma_semaphore, #tpu.memory_space<semaphore_mem>>
    %344 = tpu.memref_squeeze %343 : memref<1x!tpu.dma_semaphore, #tpu.memory_space<semaphore_mem>> -> memref<!tpu.dma_semaphore, #tpu.memory_space<semaphore_mem>>
    tpu.wait_dma2 semaphore(%344 : memref<!tpu.dma_semaphore, #tpu.memory_space<semaphore_mem>>) src(%341 : memref<1x32xf32, #tpu.memory_space<any>>) dst(%342 : memref<1x32xf32, #tpu.memory_space<vmem>>)
    %c0_i32_246 = arith.constant 0 : i32
    %c0_i32_247 = arith.constant 0 : i32
    %c0_i32_248 = arith.constant 0 : i32
    %345 = tpu.memref_slice %arg3[%c0_i32_247, %c0_i32_248] : memref<64x32xf32, #tpu.memory_space<any>> -> memref<1x32xf32, #tpu.memory_space<any>>
    %c2_i32_249 = arith.constant 2 : i32
    %c0_i32_250 = arith.constant 0 : i32
    %346 = tpu.memref_slice %arg6[%c2_i32_249, %c0_i32_250] : memref<8x32xf32, #tpu.memory_space<vmem>> -> memref<1x32xf32, #tpu.memory_space<vmem>>
    %347 = tpu.memref_slice %arg8[%c0_i32_246] : memref<2x!tpu.dma_semaphore, #tpu.memory_space<semaphore_mem>> -> memref<1x!tpu.dma_semaphore, #tpu.memory_space<semaphore_mem>>
    %348 = tpu.memref_squeeze %347 : memref<1x!tpu.dma_semaphore, #tpu.memory_space<semaphore_mem>> -> memref<!tpu.dma_semaphore, #tpu.memory_space<semaphore_mem>>
    tpu.wait_dma2 semaphore(%348 : memref<!tpu.dma_semaphore, #tpu.memory_space<semaphore_mem>>) src(%345 : memref<1x32xf32, #tpu.memory_space<any>>) dst(%346 : memref<1x32xf32, #tpu.memory_space<vmem>>)
    %c0_i32_251 = arith.constant 0 : i32
    %c0_i32_252 = arith.constant 0 : i32
    %c0_i32_253 = arith.constant 0 : i32
    %349 = tpu.memref_slice %arg3[%c0_i32_252, %c0_i32_253] : memref<64x32xf32, #tpu.memory_space<any>> -> memref<1x32xf32, #tpu.memory_space<any>>
    %c3_i32_254 = arith.constant 3 : i32
    %c0_i32_255 = arith.constant 0 : i32
    %350 = tpu.memref_slice %arg6[%c3_i32_254, %c0_i32_255] : memref<8x32xf32, #tpu.memory_space<vmem>> -> memref<1x32xf32, #tpu.memory_space<vmem>>
    %351 = tpu.memref_slice %arg8[%c0_i32_251] : memref<2x!tpu.dma_semaphore, #tpu.memory_space<semaphore_mem>> -> memref<1x!tpu.dma_semaphore, #tpu.memory_space<semaphore_mem>>
    %352 = tpu.memref_squeeze %351 : memref<1x!tpu.dma_semaphore, #tpu.memory_space<semaphore_mem>> -> memref<!tpu.dma_semaphore, #tpu.memory_space<semaphore_mem>>
    tpu.wait_dma2 semaphore(%352 : memref<!tpu.dma_semaphore, #tpu.memory_space<semaphore_mem>>) src(%349 : memref<1x32xf32, #tpu.memory_space<any>>) dst(%350 : memref<1x32xf32, #tpu.memory_space<vmem>>)
    %c0_i32_256 = arith.constant 0 : i32
    %c0_i32_257 = arith.constant 0 : i32
    %c0_i32_258 = arith.constant 0 : i32
    %353 = tpu.memref_slice %arg3[%c0_i32_257, %c0_i32_258] : memref<64x32xf32, #tpu.memory_space<any>> -> memref<1x32xf32, #tpu.memory_space<any>>
    %c4_i32_259 = arith.constant 4 : i32
    %c0_i32_260 = arith.constant 0 : i32
    %354 = tpu.memref_slice %arg6[%c4_i32_259, %c0_i32_260] : memref<8x32xf32, #tpu.memory_space<vmem>> -> memref<1x32xf32, #tpu.memory_space<vmem>>
    %355 = tpu.memref_slice %arg8[%c0_i32_256] : memref<2x!tpu.dma_semaphore, #tpu.memory_space<semaphore_mem>> -> memref<1x!tpu.dma_semaphore, #tpu.memory_space<semaphore_mem>>
    %356 = tpu.memref_squeeze %355 : memref<1x!tpu.dma_semaphore, #tpu.memory_space<semaphore_mem>> -> memref<!tpu.dma_semaphore, #tpu.memory_space<semaphore_mem>>
    tpu.wait_dma2 semaphore(%356 : memref<!tpu.dma_semaphore, #tpu.memory_space<semaphore_mem>>) src(%353 : memref<1x32xf32, #tpu.memory_space<any>>) dst(%354 : memref<1x32xf32, #tpu.memory_space<vmem>>)
    %c0_i32_261 = arith.constant 0 : i32
    %c0_i32_262 = arith.constant 0 : i32
    %c0_i32_263 = arith.constant 0 : i32
    %357 = tpu.memref_slice %arg3[%c0_i32_262, %c0_i32_263] : memref<64x32xf32, #tpu.memory_space<any>> -> memref<1x32xf32, #tpu.memory_space<any>>
    %c5_i32_264 = arith.constant 5 : i32
    %c0_i32_265 = arith.constant 0 : i32
    %358 = tpu.memref_slice %arg6[%c5_i32_264, %c0_i32_265] : memref<8x32xf32, #tpu.memory_space<vmem>> -> memref<1x32xf32, #tpu.memory_space<vmem>>
    %359 = tpu.memref_slice %arg8[%c0_i32_261] : memref<2x!tpu.dma_semaphore, #tpu.memory_space<semaphore_mem>> -> memref<1x!tpu.dma_semaphore, #tpu.memory_space<semaphore_mem>>
    %360 = tpu.memref_squeeze %359 : memref<1x!tpu.dma_semaphore, #tpu.memory_space<semaphore_mem>> -> memref<!tpu.dma_semaphore, #tpu.memory_space<semaphore_mem>>
    tpu.wait_dma2 semaphore(%360 : memref<!tpu.dma_semaphore, #tpu.memory_space<semaphore_mem>>) src(%357 : memref<1x32xf32, #tpu.memory_space<any>>) dst(%358 : memref<1x32xf32, #tpu.memory_space<vmem>>)
    %c0_i32_266 = arith.constant 0 : i32
    %c0_i32_267 = arith.constant 0 : i32
    %c0_i32_268 = arith.constant 0 : i32
    %361 = tpu.memref_slice %arg3[%c0_i32_267, %c0_i32_268] : memref<64x32xf32, #tpu.memory_space<any>> -> memref<1x32xf32, #tpu.memory_space<any>>
    %c6_i32_269 = arith.constant 6 : i32
    %c0_i32_270 = arith.constant 0 : i32
    %362 = tpu.memref_slice %arg6[%c6_i32_269, %c0_i32_270] : memref<8x32xf32, #tpu.memory_space<vmem>> -> memref<1x32xf32, #tpu.memory_space<vmem>>
    %363 = tpu.memref_slice %arg8[%c0_i32_266] : memref<2x!tpu.dma_semaphore, #tpu.memory_space<semaphore_mem>> -> memref<1x!tpu.dma_semaphore, #tpu.memory_space<semaphore_mem>>
    %364 = tpu.memref_squeeze %363 : memref<1x!tpu.dma_semaphore, #tpu.memory_space<semaphore_mem>> -> memref<!tpu.dma_semaphore, #tpu.memory_space<semaphore_mem>>
    tpu.wait_dma2 semaphore(%364 : memref<!tpu.dma_semaphore, #tpu.memory_space<semaphore_mem>>) src(%361 : memref<1x32xf32, #tpu.memory_space<any>>) dst(%362 : memref<1x32xf32, #tpu.memory_space<vmem>>)
    %c0_i32_271 = arith.constant 0 : i32
    %c0_i32_272 = arith.constant 0 : i32
    %c0_i32_273 = arith.constant 0 : i32
    %365 = tpu.memref_slice %arg3[%c0_i32_272, %c0_i32_273] : memref<64x32xf32, #tpu.memory_space<any>> -> memref<1x32xf32, #tpu.memory_space<any>>
    %c7_i32_274 = arith.constant 7 : i32
    %c0_i32_275 = arith.constant 0 : i32
    %366 = tpu.memref_slice %arg6[%c7_i32_274, %c0_i32_275] : memref<8x32xf32, #tpu.memory_space<vmem>> -> memref<1x32xf32, #tpu.memory_space<vmem>>
    %367 = tpu.memref_slice %arg8[%c0_i32_271] : memref<2x!tpu.dma_semaphore, #tpu.memory_space<semaphore_mem>> -> memref<1x!tpu.dma_semaphore, #tpu.memory_space<semaphore_mem>>
    %368 = tpu.memref_squeeze %367 : memref<1x!tpu.dma_semaphore, #tpu.memory_space<semaphore_mem>> -> memref<!tpu.dma_semaphore, #tpu.memory_space<semaphore_mem>>
    tpu.wait_dma2 semaphore(%368 : memref<!tpu.dma_semaphore, #tpu.memory_space<semaphore_mem>>) src(%365 : memref<1x32xf32, #tpu.memory_space<any>>) dst(%366 : memref<1x32xf32, #tpu.memory_space<vmem>>)
    %c1_i32_276 = arith.constant 1 : i32
    %c0_i32_277 = arith.constant 0 : i32
    %c0_i32_278 = arith.constant 0 : i32
    %369 = tpu.memref_slice %arg4[%c0_i32_277, %c0_i32_278] : memref<64x32xf32, #tpu.memory_space<any>> -> memref<1x32xf32, #tpu.memory_space<any>>
    %c0_i32_279 = arith.constant 0 : i32
    %c0_i32_280 = arith.constant 0 : i32
    %370 = tpu.memref_slice %arg7[%c0_i32_279, %c0_i32_280] : memref<40x32xf32, #tpu.memory_space<vmem>> -> memref<1x32xf32, #tpu.memory_space<vmem>>
    %371 = tpu.memref_slice %arg8[%c1_i32_276] : memref<2x!tpu.dma_semaphore, #tpu.memory_space<semaphore_mem>> -> memref<1x!tpu.dma_semaphore, #tpu.memory_space<semaphore_mem>>
    %372 = tpu.memref_squeeze %371 : memref<1x!tpu.dma_semaphore, #tpu.memory_space<semaphore_mem>> -> memref<!tpu.dma_semaphore, #tpu.memory_space<semaphore_mem>>
    tpu.wait_dma2 semaphore(%372 : memref<!tpu.dma_semaphore, #tpu.memory_space<semaphore_mem>>) src(%369 : memref<1x32xf32, #tpu.memory_space<any>>) dst(%370 : memref<1x32xf32, #tpu.memory_space<vmem>>)
    %c1_i32_281 = arith.constant 1 : i32
    %c0_i32_282 = arith.constant 0 : i32
    %c0_i32_283 = arith.constant 0 : i32
    %373 = tpu.memref_slice %arg4[%c0_i32_282, %c0_i32_283] : memref<64x32xf32, #tpu.memory_space<any>> -> memref<1x32xf32, #tpu.memory_space<any>>
    %c1_i32_284 = arith.constant 1 : i32
    %c0_i32_285 = arith.constant 0 : i32
    %374 = tpu.memref_slice %arg7[%c1_i32_284, %c0_i32_285] : memref<40x32xf32, #tpu.memory_space<vmem>> -> memref<1x32xf32, #tpu.memory_space<vmem>>
    %375 = tpu.memref_slice %arg8[%c1_i32_281] : memref<2x!tpu.dma_semaphore, #tpu.memory_space<semaphore_mem>> -> memref<1x!tpu.dma_semaphore, #tpu.memory_space<semaphore_mem>>
    %376 = tpu.memref_squeeze %375 : memref<1x!tpu.dma_semaphore, #tpu.memory_space<semaphore_mem>> -> memref<!tpu.dma_semaphore, #tpu.memory_space<semaphore_mem>>
    tpu.wait_dma2 semaphore(%376 : memref<!tpu.dma_semaphore, #tpu.memory_space<semaphore_mem>>) src(%373 : memref<1x32xf32, #tpu.memory_space<any>>) dst(%374 : memref<1x32xf32, #tpu.memory_space<vmem>>)
    %c1_i32_286 = arith.constant 1 : i32
    %c0_i32_287 = arith.constant 0 : i32
    %c0_i32_288 = arith.constant 0 : i32
    %377 = tpu.memref_slice %arg4[%c0_i32_287, %c0_i32_288] : memref<64x32xf32, #tpu.memory_space<any>> -> memref<1x32xf32, #tpu.memory_space<any>>
    %c2_i32_289 = arith.constant 2 : i32
    %c0_i32_290 = arith.constant 0 : i32
    %378 = tpu.memref_slice %arg7[%c2_i32_289, %c0_i32_290] : memref<40x32xf32, #tpu.memory_space<vmem>> -> memref<1x32xf32, #tpu.memory_space<vmem>>
    %379 = tpu.memref_slice %arg8[%c1_i32_286] : memref<2x!tpu.dma_semaphore, #tpu.memory_space<semaphore_mem>> -> memref<1x!tpu.dma_semaphore, #tpu.memory_space<semaphore_mem>>
    %380 = tpu.memref_squeeze %379 : memref<1x!tpu.dma_semaphore, #tpu.memory_space<semaphore_mem>> -> memref<!tpu.dma_semaphore, #tpu.memory_space<semaphore_mem>>
    tpu.wait_dma2 semaphore(%380 : memref<!tpu.dma_semaphore, #tpu.memory_space<semaphore_mem>>) src(%377 : memref<1x32xf32, #tpu.memory_space<any>>) dst(%378 : memref<1x32xf32, #tpu.memory_space<vmem>>)
    %c1_i32_291 = arith.constant 1 : i32
    %c0_i32_292 = arith.constant 0 : i32
    %c0_i32_293 = arith.constant 0 : i32
    %381 = tpu.memref_slice %arg4[%c0_i32_292, %c0_i32_293] : memref<64x32xf32, #tpu.memory_space<any>> -> memref<1x32xf32, #tpu.memory_space<any>>
    %c3_i32_294 = arith.constant 3 : i32
    %c0_i32_295 = arith.constant 0 : i32
    %382 = tpu.memref_slice %arg7[%c3_i32_294, %c0_i32_295] : memref<40x32xf32, #tpu.memory_space<vmem>> -> memref<1x32xf32, #tpu.memory_space<vmem>>
    %383 = tpu.memref_slice %arg8[%c1_i32_291] : memref<2x!tpu.dma_semaphore, #tpu.memory_space<semaphore_mem>> -> memref<1x!tpu.dma_semaphore, #tpu.memory_space<semaphore_mem>>
    %384 = tpu.memref_squeeze %383 : memref<1x!tpu.dma_semaphore, #tpu.memory_space<semaphore_mem>> -> memref<!tpu.dma_semaphore, #tpu.memory_space<semaphore_mem>>
    tpu.wait_dma2 semaphore(%384 : memref<!tpu.dma_semaphore, #tpu.memory_space<semaphore_mem>>) src(%381 : memref<1x32xf32, #tpu.memory_space<any>>) dst(%382 : memref<1x32xf32, #tpu.memory_space<vmem>>)
    %c1_i32_296 = arith.constant 1 : i32
    %c0_i32_297 = arith.constant 0 : i32
    %c0_i32_298 = arith.constant 0 : i32
    %385 = tpu.memref_slice %arg4[%c0_i32_297, %c0_i32_298] : memref<64x32xf32, #tpu.memory_space<any>> -> memref<1x32xf32, #tpu.memory_space<any>>
    %c4_i32_299 = arith.constant 4 : i32
    %c0_i32_300 = arith.constant 0 : i32
    %386 = tpu.memref_slice %arg7[%c4_i32_299, %c0_i32_300] : memref<40x32xf32, #tpu.memory_space<vmem>> -> memref<1x32xf32, #tpu.memory_space<vmem>>
    %387 = tpu.memref_slice %arg8[%c1_i32_296] : memref<2x!tpu.dma_semaphore, #tpu.memory_space<semaphore_mem>> -> memref<1x!tpu.dma_semaphore, #tpu.memory_space<semaphore_mem>>
    %388 = tpu.memref_squeeze %387 : memref<1x!tpu.dma_semaphore, #tpu.memory_space<semaphore_mem>> -> memref<!tpu.dma_semaphore, #tpu.memory_space<semaphore_mem>>
    tpu.wait_dma2 semaphore(%388 : memref<!tpu.dma_semaphore, #tpu.memory_space<semaphore_mem>>) src(%385 : memref<1x32xf32, #tpu.memory_space<any>>) dst(%386 : memref<1x32xf32, #tpu.memory_space<vmem>>)
    %c1_i32_301 = arith.constant 1 : i32
    %c0_i32_302 = arith.constant 0 : i32
    %c0_i32_303 = arith.constant 0 : i32
    %389 = tpu.memref_slice %arg4[%c0_i32_302, %c0_i32_303] : memref<64x32xf32, #tpu.memory_space<any>> -> memref<1x32xf32, #tpu.memory_space<any>>
    %c5_i32_304 = arith.constant 5 : i32
    %c0_i32_305 = arith.constant 0 : i32
    %390 = tpu.memref_slice %arg7[%c5_i32_304, %c0_i32_305] : memref<40x32xf32, #tpu.memory_space<vmem>> -> memref<1x32xf32, #tpu.memory_space<vmem>>
    %391 = tpu.memref_slice %arg8[%c1_i32_301] : memref<2x!tpu.dma_semaphore, #tpu.memory_space<semaphore_mem>> -> memref<1x!tpu.dma_semaphore, #tpu.memory_space<semaphore_mem>>
    %392 = tpu.memref_squeeze %391 : memref<1x!tpu.dma_semaphore, #tpu.memory_space<semaphore_mem>> -> memref<!tpu.dma_semaphore, #tpu.memory_space<semaphore_mem>>
    tpu.wait_dma2 semaphore(%392 : memref<!tpu.dma_semaphore, #tpu.memory_space<semaphore_mem>>) src(%389 : memref<1x32xf32, #tpu.memory_space<any>>) dst(%390 : memref<1x32xf32, #tpu.memory_space<vmem>>)
    %c1_i32_306 = arith.constant 1 : i32
    %c0_i32_307 = arith.constant 0 : i32
    %c0_i32_308 = arith.constant 0 : i32
    %393 = tpu.memref_slice %arg4[%c0_i32_307, %c0_i32_308] : memref<64x32xf32, #tpu.memory_space<any>> -> memref<1x32xf32, #tpu.memory_space<any>>
    %c6_i32_309 = arith.constant 6 : i32
    %c0_i32_310 = arith.constant 0 : i32
    %394 = tpu.memref_slice %arg7[%c6_i32_309, %c0_i32_310] : memref<40x32xf32, #tpu.memory_space<vmem>> -> memref<1x32xf32, #tpu.memory_space<vmem>>
    %395 = tpu.memref_slice %arg8[%c1_i32_306] : memref<2x!tpu.dma_semaphore, #tpu.memory_space<semaphore_mem>> -> memref<1x!tpu.dma_semaphore, #tpu.memory_space<semaphore_mem>>
    %396 = tpu.memref_squeeze %395 : memref<1x!tpu.dma_semaphore, #tpu.memory_space<semaphore_mem>> -> memref<!tpu.dma_semaphore, #tpu.memory_space<semaphore_mem>>
    tpu.wait_dma2 semaphore(%396 : memref<!tpu.dma_semaphore, #tpu.memory_space<semaphore_mem>>) src(%393 : memref<1x32xf32, #tpu.memory_space<any>>) dst(%394 : memref<1x32xf32, #tpu.memory_space<vmem>>)
    %c1_i32_311 = arith.constant 1 : i32
    %c0_i32_312 = arith.constant 0 : i32
    %c0_i32_313 = arith.constant 0 : i32
    %397 = tpu.memref_slice %arg4[%c0_i32_312, %c0_i32_313] : memref<64x32xf32, #tpu.memory_space<any>> -> memref<1x32xf32, #tpu.memory_space<any>>
    %c7_i32_314 = arith.constant 7 : i32
    %c0_i32_315 = arith.constant 0 : i32
    %398 = tpu.memref_slice %arg7[%c7_i32_314, %c0_i32_315] : memref<40x32xf32, #tpu.memory_space<vmem>> -> memref<1x32xf32, #tpu.memory_space<vmem>>
    %399 = tpu.memref_slice %arg8[%c1_i32_311] : memref<2x!tpu.dma_semaphore, #tpu.memory_space<semaphore_mem>> -> memref<1x!tpu.dma_semaphore, #tpu.memory_space<semaphore_mem>>
    %400 = tpu.memref_squeeze %399 : memref<1x!tpu.dma_semaphore, #tpu.memory_space<semaphore_mem>> -> memref<!tpu.dma_semaphore, #tpu.memory_space<semaphore_mem>>
    tpu.wait_dma2 semaphore(%400 : memref<!tpu.dma_semaphore, #tpu.memory_space<semaphore_mem>>) src(%397 : memref<1x32xf32, #tpu.memory_space<any>>) dst(%398 : memref<1x32xf32, #tpu.memory_space<vmem>>)
    %c1_i32_316 = arith.constant 1 : i32
    %c0_i32_317 = arith.constant 0 : i32
    %c0_i32_318 = arith.constant 0 : i32
    %401 = tpu.memref_slice %arg4[%c0_i32_317, %c0_i32_318] : memref<64x32xf32, #tpu.memory_space<any>> -> memref<1x32xf32, #tpu.memory_space<any>>
    %c8_i32_319 = arith.constant 8 : i32
    %c0_i32_320 = arith.constant 0 : i32
    %402 = tpu.memref_slice %arg7[%c8_i32_319, %c0_i32_320] : memref<40x32xf32, #tpu.memory_space<vmem>> -> memref<1x32xf32, #tpu.memory_space<vmem>>
    %403 = tpu.memref_slice %arg8[%c1_i32_316] : memref<2x!tpu.dma_semaphore, #tpu.memory_space<semaphore_mem>> -> memref<1x!tpu.dma_semaphore, #tpu.memory_space<semaphore_mem>>
    %404 = tpu.memref_squeeze %403 : memref<1x!tpu.dma_semaphore, #tpu.memory_space<semaphore_mem>> -> memref<!tpu.dma_semaphore, #tpu.memory_space<semaphore_mem>>
    tpu.wait_dma2 semaphore(%404 : memref<!tpu.dma_semaphore, #tpu.memory_space<semaphore_mem>>) src(%401 : memref<1x32xf32, #tpu.memory_space<any>>) dst(%402 : memref<1x32xf32, #tpu.memory_space<vmem>>)
    %c1_i32_321 = arith.constant 1 : i32
    %c0_i32_322 = arith.constant 0 : i32
    %c0_i32_323 = arith.constant 0 : i32
    %405 = tpu.memref_slice %arg4[%c0_i32_322, %c0_i32_323] : memref<64x32xf32, #tpu.memory_space<any>> -> memref<1x32xf32, #tpu.memory_space<any>>
    %c9_i32_324 = arith.constant 9 : i32
    %c0_i32_325 = arith.constant 0 : i32
    %406 = tpu.memref_slice %arg7[%c9_i32_324, %c0_i32_325] : memref<40x32xf32, #tpu.memory_space<vmem>> -> memref<1x32xf32, #tpu.memory_space<vmem>>
    %407 = tpu.memref_slice %arg8[%c1_i32_321] : memref<2x!tpu.dma_semaphore, #tpu.memory_space<semaphore_mem>> -> memref<1x!tpu.dma_semaphore, #tpu.memory_space<semaphore_mem>>
    %408 = tpu.memref_squeeze %407 : memref<1x!tpu.dma_semaphore, #tpu.memory_space<semaphore_mem>> -> memref<!tpu.dma_semaphore, #tpu.memory_space<semaphore_mem>>
    tpu.wait_dma2 semaphore(%408 : memref<!tpu.dma_semaphore, #tpu.memory_space<semaphore_mem>>) src(%405 : memref<1x32xf32, #tpu.memory_space<any>>) dst(%406 : memref<1x32xf32, #tpu.memory_space<vmem>>)
    %c1_i32_326 = arith.constant 1 : i32
    %c0_i32_327 = arith.constant 0 : i32
    %c0_i32_328 = arith.constant 0 : i32
    %409 = tpu.memref_slice %arg4[%c0_i32_327, %c0_i32_328] : memref<64x32xf32, #tpu.memory_space<any>> -> memref<1x32xf32, #tpu.memory_space<any>>
    %c10_i32_329 = arith.constant 10 : i32
    %c0_i32_330 = arith.constant 0 : i32
    %410 = tpu.memref_slice %arg7[%c10_i32_329, %c0_i32_330] : memref<40x32xf32, #tpu.memory_space<vmem>> -> memref<1x32xf32, #tpu.memory_space<vmem>>
    %411 = tpu.memref_slice %arg8[%c1_i32_326] : memref<2x!tpu.dma_semaphore, #tpu.memory_space<semaphore_mem>> -> memref<1x!tpu.dma_semaphore, #tpu.memory_space<semaphore_mem>>
    %412 = tpu.memref_squeeze %411 : memref<1x!tpu.dma_semaphore, #tpu.memory_space<semaphore_mem>> -> memref<!tpu.dma_semaphore, #tpu.memory_space<semaphore_mem>>
    tpu.wait_dma2 semaphore(%412 : memref<!tpu.dma_semaphore, #tpu.memory_space<semaphore_mem>>) src(%409 : memref<1x32xf32, #tpu.memory_space<any>>) dst(%410 : memref<1x32xf32, #tpu.memory_space<vmem>>)
    %c1_i32_331 = arith.constant 1 : i32
    %c0_i32_332 = arith.constant 0 : i32
    %c0_i32_333 = arith.constant 0 : i32
    %413 = tpu.memref_slice %arg4[%c0_i32_332, %c0_i32_333] : memref<64x32xf32, #tpu.memory_space<any>> -> memref<1x32xf32, #tpu.memory_space<any>>
    %c11_i32_334 = arith.constant 11 : i32
    %c0_i32_335 = arith.constant 0 : i32
    %414 = tpu.memref_slice %arg7[%c11_i32_334, %c0_i32_335] : memref<40x32xf32, #tpu.memory_space<vmem>> -> memref<1x32xf32, #tpu.memory_space<vmem>>
    %415 = tpu.memref_slice %arg8[%c1_i32_331] : memref<2x!tpu.dma_semaphore, #tpu.memory_space<semaphore_mem>> -> memref<1x!tpu.dma_semaphore, #tpu.memory_space<semaphore_mem>>
    %416 = tpu.memref_squeeze %415 : memref<1x!tpu.dma_semaphore, #tpu.memory_space<semaphore_mem>> -> memref<!tpu.dma_semaphore, #tpu.memory_space<semaphore_mem>>
    tpu.wait_dma2 semaphore(%416 : memref<!tpu.dma_semaphore, #tpu.memory_space<semaphore_mem>>) src(%413 : memref<1x32xf32, #tpu.memory_space<any>>) dst(%414 : memref<1x32xf32, #tpu.memory_space<vmem>>)
    %c1_i32_336 = arith.constant 1 : i32
    %c0_i32_337 = arith.constant 0 : i32
    %c0_i32_338 = arith.constant 0 : i32
    %417 = tpu.memref_slice %arg4[%c0_i32_337, %c0_i32_338] : memref<64x32xf32, #tpu.memory_space<any>> -> memref<1x32xf32, #tpu.memory_space<any>>
    %c12_i32_339 = arith.constant 12 : i32
    %c0_i32_340 = arith.constant 0 : i32
    %418 = tpu.memref_slice %arg7[%c12_i32_339, %c0_i32_340] : memref<40x32xf32, #tpu.memory_space<vmem>> -> memref<1x32xf32, #tpu.memory_space<vmem>>
    %419 = tpu.memref_slice %arg8[%c1_i32_336] : memref<2x!tpu.dma_semaphore, #tpu.memory_space<semaphore_mem>> -> memref<1x!tpu.dma_semaphore, #tpu.memory_space<semaphore_mem>>
    %420 = tpu.memref_squeeze %419 : memref<1x!tpu.dma_semaphore, #tpu.memory_space<semaphore_mem>> -> memref<!tpu.dma_semaphore, #tpu.memory_space<semaphore_mem>>
    tpu.wait_dma2 semaphore(%420 : memref<!tpu.dma_semaphore, #tpu.memory_space<semaphore_mem>>) src(%417 : memref<1x32xf32, #tpu.memory_space<any>>) dst(%418 : memref<1x32xf32, #tpu.memory_space<vmem>>)
    %c1_i32_341 = arith.constant 1 : i32
    %c0_i32_342 = arith.constant 0 : i32
    %c0_i32_343 = arith.constant 0 : i32
    %421 = tpu.memref_slice %arg4[%c0_i32_342, %c0_i32_343] : memref<64x32xf32, #tpu.memory_space<any>> -> memref<1x32xf32, #tpu.memory_space<any>>
    %c13_i32_344 = arith.constant 13 : i32
    %c0_i32_345 = arith.constant 0 : i32
    %422 = tpu.memref_slice %arg7[%c13_i32_344, %c0_i32_345] : memref<40x32xf32, #tpu.memory_space<vmem>> -> memref<1x32xf32, #tpu.memory_space<vmem>>
    %423 = tpu.memref_slice %arg8[%c1_i32_341] : memref<2x!tpu.dma_semaphore, #tpu.memory_space<semaphore_mem>> -> memref<1x!tpu.dma_semaphore, #tpu.memory_space<semaphore_mem>>
    %424 = tpu.memref_squeeze %423 : memref<1x!tpu.dma_semaphore, #tpu.memory_space<semaphore_mem>> -> memref<!tpu.dma_semaphore, #tpu.memory_space<semaphore_mem>>
    tpu.wait_dma2 semaphore(%424 : memref<!tpu.dma_semaphore, #tpu.memory_space<semaphore_mem>>) src(%421 : memref<1x32xf32, #tpu.memory_space<any>>) dst(%422 : memref<1x32xf32, #tpu.memory_space<vmem>>)
    %c1_i32_346 = arith.constant 1 : i32
    %c0_i32_347 = arith.constant 0 : i32
    %c0_i32_348 = arith.constant 0 : i32
    %425 = tpu.memref_slice %arg4[%c0_i32_347, %c0_i32_348] : memref<64x32xf32, #tpu.memory_space<any>> -> memref<1x32xf32, #tpu.memory_space<any>>
    %c14_i32_349 = arith.constant 14 : i32
    %c0_i32_350 = arith.constant 0 : i32
    %426 = tpu.memref_slice %arg7[%c14_i32_349, %c0_i32_350] : memref<40x32xf32, #tpu.memory_space<vmem>> -> memref<1x32xf32, #tpu.memory_space<vmem>>
    %427 = tpu.memref_slice %arg8[%c1_i32_346] : memref<2x!tpu.dma_semaphore, #tpu.memory_space<semaphore_mem>> -> memref<1x!tpu.dma_semaphore, #tpu.memory_space<semaphore_mem>>
    %428 = tpu.memref_squeeze %427 : memref<1x!tpu.dma_semaphore, #tpu.memory_space<semaphore_mem>> -> memref<!tpu.dma_semaphore, #tpu.memory_space<semaphore_mem>>
    tpu.wait_dma2 semaphore(%428 : memref<!tpu.dma_semaphore, #tpu.memory_space<semaphore_mem>>) src(%425 : memref<1x32xf32, #tpu.memory_space<any>>) dst(%426 : memref<1x32xf32, #tpu.memory_space<vmem>>)
    %c1_i32_351 = arith.constant 1 : i32
    %c0_i32_352 = arith.constant 0 : i32
    %c0_i32_353 = arith.constant 0 : i32
    %429 = tpu.memref_slice %arg4[%c0_i32_352, %c0_i32_353] : memref<64x32xf32, #tpu.memory_space<any>> -> memref<1x32xf32, #tpu.memory_space<any>>
    %c15_i32_354 = arith.constant 15 : i32
    %c0_i32_355 = arith.constant 0 : i32
    %430 = tpu.memref_slice %arg7[%c15_i32_354, %c0_i32_355] : memref<40x32xf32, #tpu.memory_space<vmem>> -> memref<1x32xf32, #tpu.memory_space<vmem>>
    %431 = tpu.memref_slice %arg8[%c1_i32_351] : memref<2x!tpu.dma_semaphore, #tpu.memory_space<semaphore_mem>> -> memref<1x!tpu.dma_semaphore, #tpu.memory_space<semaphore_mem>>
    %432 = tpu.memref_squeeze %431 : memref<1x!tpu.dma_semaphore, #tpu.memory_space<semaphore_mem>> -> memref<!tpu.dma_semaphore, #tpu.memory_space<semaphore_mem>>
    tpu.wait_dma2 semaphore(%432 : memref<!tpu.dma_semaphore, #tpu.memory_space<semaphore_mem>>) src(%429 : memref<1x32xf32, #tpu.memory_space<any>>) dst(%430 : memref<1x32xf32, #tpu.memory_space<vmem>>)
    %c1_i32_356 = arith.constant 1 : i32
    %c0_i32_357 = arith.constant 0 : i32
    %c0_i32_358 = arith.constant 0 : i32
    %433 = tpu.memref_slice %arg4[%c0_i32_357, %c0_i32_358] : memref<64x32xf32, #tpu.memory_space<any>> -> memref<1x32xf32, #tpu.memory_space<any>>
    %c16_i32_359 = arith.constant 16 : i32
    %c0_i32_360 = arith.constant 0 : i32
    %434 = tpu.memref_slice %arg7[%c16_i32_359, %c0_i32_360] : memref<40x32xf32, #tpu.memory_space<vmem>> -> memref<1x32xf32, #tpu.memory_space<vmem>>
    %435 = tpu.memref_slice %arg8[%c1_i32_356] : memref<2x!tpu.dma_semaphore, #tpu.memory_space<semaphore_mem>> -> memref<1x!tpu.dma_semaphore, #tpu.memory_space<semaphore_mem>>
    %436 = tpu.memref_squeeze %435 : memref<1x!tpu.dma_semaphore, #tpu.memory_space<semaphore_mem>> -> memref<!tpu.dma_semaphore, #tpu.memory_space<semaphore_mem>>
    tpu.wait_dma2 semaphore(%436 : memref<!tpu.dma_semaphore, #tpu.memory_space<semaphore_mem>>) src(%433 : memref<1x32xf32, #tpu.memory_space<any>>) dst(%434 : memref<1x32xf32, #tpu.memory_space<vmem>>)
    %c1_i32_361 = arith.constant 1 : i32
    %c0_i32_362 = arith.constant 0 : i32
    %c0_i32_363 = arith.constant 0 : i32
    %437 = tpu.memref_slice %arg4[%c0_i32_362, %c0_i32_363] : memref<64x32xf32, #tpu.memory_space<any>> -> memref<1x32xf32, #tpu.memory_space<any>>
    %c17_i32_364 = arith.constant 17 : i32
    %c0_i32_365 = arith.constant 0 : i32
    %438 = tpu.memref_slice %arg7[%c17_i32_364, %c0_i32_365] : memref<40x32xf32, #tpu.memory_space<vmem>> -> memref<1x32xf32, #tpu.memory_space<vmem>>
    %439 = tpu.memref_slice %arg8[%c1_i32_361] : memref<2x!tpu.dma_semaphore, #tpu.memory_space<semaphore_mem>> -> memref<1x!tpu.dma_semaphore, #tpu.memory_space<semaphore_mem>>
    %440 = tpu.memref_squeeze %439 : memref<1x!tpu.dma_semaphore, #tpu.memory_space<semaphore_mem>> -> memref<!tpu.dma_semaphore, #tpu.memory_space<semaphore_mem>>
    tpu.wait_dma2 semaphore(%440 : memref<!tpu.dma_semaphore, #tpu.memory_space<semaphore_mem>>) src(%437 : memref<1x32xf32, #tpu.memory_space<any>>) dst(%438 : memref<1x32xf32, #tpu.memory_space<vmem>>)
    %c1_i32_366 = arith.constant 1 : i32
    %c0_i32_367 = arith.constant 0 : i32
    %c0_i32_368 = arith.constant 0 : i32
    %441 = tpu.memref_slice %arg4[%c0_i32_367, %c0_i32_368] : memref<64x32xf32, #tpu.memory_space<any>> -> memref<1x32xf32, #tpu.memory_space<any>>
    %c18_i32_369 = arith.constant 18 : i32
    %c0_i32_370 = arith.constant 0 : i32
    %442 = tpu.memref_slice %arg7[%c18_i32_369, %c0_i32_370] : memref<40x32xf32, #tpu.memory_space<vmem>> -> memref<1x32xf32, #tpu.memory_space<vmem>>
    %443 = tpu.memref_slice %arg8[%c1_i32_366] : memref<2x!tpu.dma_semaphore, #tpu.memory_space<semaphore_mem>> -> memref<1x!tpu.dma_semaphore, #tpu.memory_space<semaphore_mem>>
    %444 = tpu.memref_squeeze %443 : memref<1x!tpu.dma_semaphore, #tpu.memory_space<semaphore_mem>> -> memref<!tpu.dma_semaphore, #tpu.memory_space<semaphore_mem>>
    tpu.wait_dma2 semaphore(%444 : memref<!tpu.dma_semaphore, #tpu.memory_space<semaphore_mem>>) src(%441 : memref<1x32xf32, #tpu.memory_space<any>>) dst(%442 : memref<1x32xf32, #tpu.memory_space<vmem>>)
    %c1_i32_371 = arith.constant 1 : i32
    %c0_i32_372 = arith.constant 0 : i32
    %c0_i32_373 = arith.constant 0 : i32
    %445 = tpu.memref_slice %arg4[%c0_i32_372, %c0_i32_373] : memref<64x32xf32, #tpu.memory_space<any>> -> memref<1x32xf32, #tpu.memory_space<any>>
    %c19_i32_374 = arith.constant 19 : i32
    %c0_i32_375 = arith.constant 0 : i32
    %446 = tpu.memref_slice %arg7[%c19_i32_374, %c0_i32_375] : memref<40x32xf32, #tpu.memory_space<vmem>> -> memref<1x32xf32, #tpu.memory_space<vmem>>
    %447 = tpu.memref_slice %arg8[%c1_i32_371] : memref<2x!tpu.dma_semaphore, #tpu.memory_space<semaphore_mem>> -> memref<1x!tpu.dma_semaphore, #tpu.memory_space<semaphore_mem>>
    %448 = tpu.memref_squeeze %447 : memref<1x!tpu.dma_semaphore, #tpu.memory_space<semaphore_mem>> -> memref<!tpu.dma_semaphore, #tpu.memory_space<semaphore_mem>>
    tpu.wait_dma2 semaphore(%448 : memref<!tpu.dma_semaphore, #tpu.memory_space<semaphore_mem>>) src(%445 : memref<1x32xf32, #tpu.memory_space<any>>) dst(%446 : memref<1x32xf32, #tpu.memory_space<vmem>>)
    %c1_i32_376 = arith.constant 1 : i32
    %c0_i32_377 = arith.constant 0 : i32
    %c0_i32_378 = arith.constant 0 : i32
    %449 = tpu.memref_slice %arg4[%c0_i32_377, %c0_i32_378] : memref<64x32xf32, #tpu.memory_space<any>> -> memref<1x32xf32, #tpu.memory_space<any>>
    %c20_i32_379 = arith.constant 20 : i32
    %c0_i32_380 = arith.constant 0 : i32
    %450 = tpu.memref_slice %arg7[%c20_i32_379, %c0_i32_380] : memref<40x32xf32, #tpu.memory_space<vmem>> -> memref<1x32xf32, #tpu.memory_space<vmem>>
    %451 = tpu.memref_slice %arg8[%c1_i32_376] : memref<2x!tpu.dma_semaphore, #tpu.memory_space<semaphore_mem>> -> memref<1x!tpu.dma_semaphore, #tpu.memory_space<semaphore_mem>>
    %452 = tpu.memref_squeeze %451 : memref<1x!tpu.dma_semaphore, #tpu.memory_space<semaphore_mem>> -> memref<!tpu.dma_semaphore, #tpu.memory_space<semaphore_mem>>
    tpu.wait_dma2 semaphore(%452 : memref<!tpu.dma_semaphore, #tpu.memory_space<semaphore_mem>>) src(%449 : memref<1x32xf32, #tpu.memory_space<any>>) dst(%450 : memref<1x32xf32, #tpu.memory_space<vmem>>)
    %c1_i32_381 = arith.constant 1 : i32
    %c0_i32_382 = arith.constant 0 : i32
    %c0_i32_383 = arith.constant 0 : i32
    %453 = tpu.memref_slice %arg4[%c0_i32_382, %c0_i32_383] : memref<64x32xf32, #tpu.memory_space<any>> -> memref<1x32xf32, #tpu.memory_space<any>>
    %c21_i32_384 = arith.constant 21 : i32
    %c0_i32_385 = arith.constant 0 : i32
    %454 = tpu.memref_slice %arg7[%c21_i32_384, %c0_i32_385] : memref<40x32xf32, #tpu.memory_space<vmem>> -> memref<1x32xf32, #tpu.memory_space<vmem>>
    %455 = tpu.memref_slice %arg8[%c1_i32_381] : memref<2x!tpu.dma_semaphore, #tpu.memory_space<semaphore_mem>> -> memref<1x!tpu.dma_semaphore, #tpu.memory_space<semaphore_mem>>
    %456 = tpu.memref_squeeze %455 : memref<1x!tpu.dma_semaphore, #tpu.memory_space<semaphore_mem>> -> memref<!tpu.dma_semaphore, #tpu.memory_space<semaphore_mem>>
    tpu.wait_dma2 semaphore(%456 : memref<!tpu.dma_semaphore, #tpu.memory_space<semaphore_mem>>) src(%453 : memref<1x32xf32, #tpu.memory_space<any>>) dst(%454 : memref<1x32xf32, #tpu.memory_space<vmem>>)
    %c1_i32_386 = arith.constant 1 : i32
    %c0_i32_387 = arith.constant 0 : i32
    %c0_i32_388 = arith.constant 0 : i32
    %457 = tpu.memref_slice %arg4[%c0_i32_387, %c0_i32_388] : memref<64x32xf32, #tpu.memory_space<any>> -> memref<1x32xf32, #tpu.memory_space<any>>
    %c22_i32_389 = arith.constant 22 : i32
    %c0_i32_390 = arith.constant 0 : i32
    %458 = tpu.memref_slice %arg7[%c22_i32_389, %c0_i32_390] : memref<40x32xf32, #tpu.memory_space<vmem>> -> memref<1x32xf32, #tpu.memory_space<vmem>>
    %459 = tpu.memref_slice %arg8[%c1_i32_386] : memref<2x!tpu.dma_semaphore, #tpu.memory_space<semaphore_mem>> -> memref<1x!tpu.dma_semaphore, #tpu.memory_space<semaphore_mem>>
    %460 = tpu.memref_squeeze %459 : memref<1x!tpu.dma_semaphore, #tpu.memory_space<semaphore_mem>> -> memref<!tpu.dma_semaphore, #tpu.memory_space<semaphore_mem>>
    tpu.wait_dma2 semaphore(%460 : memref<!tpu.dma_semaphore, #tpu.memory_space<semaphore_mem>>) src(%457 : memref<1x32xf32, #tpu.memory_space<any>>) dst(%458 : memref<1x32xf32, #tpu.memory_space<vmem>>)
    %c1_i32_391 = arith.constant 1 : i32
    %c0_i32_392 = arith.constant 0 : i32
    %c0_i32_393 = arith.constant 0 : i32
    %461 = tpu.memref_slice %arg4[%c0_i32_392, %c0_i32_393] : memref<64x32xf32, #tpu.memory_space<any>> -> memref<1x32xf32, #tpu.memory_space<any>>
    %c23_i32_394 = arith.constant 23 : i32
    %c0_i32_395 = arith.constant 0 : i32
    %462 = tpu.memref_slice %arg7[%c23_i32_394, %c0_i32_395] : memref<40x32xf32, #tpu.memory_space<vmem>> -> memref<1x32xf32, #tpu.memory_space<vmem>>
    %463 = tpu.memref_slice %arg8[%c1_i32_391] : memref<2x!tpu.dma_semaphore, #tpu.memory_space<semaphore_mem>> -> memref<1x!tpu.dma_semaphore, #tpu.memory_space<semaphore_mem>>
    %464 = tpu.memref_squeeze %463 : memref<1x!tpu.dma_semaphore, #tpu.memory_space<semaphore_mem>> -> memref<!tpu.dma_semaphore, #tpu.memory_space<semaphore_mem>>
    tpu.wait_dma2 semaphore(%464 : memref<!tpu.dma_semaphore, #tpu.memory_space<semaphore_mem>>) src(%461 : memref<1x32xf32, #tpu.memory_space<any>>) dst(%462 : memref<1x32xf32, #tpu.memory_space<vmem>>)
    %c1_i32_396 = arith.constant 1 : i32
    %c0_i32_397 = arith.constant 0 : i32
    %c0_i32_398 = arith.constant 0 : i32
    %465 = tpu.memref_slice %arg4[%c0_i32_397, %c0_i32_398] : memref<64x32xf32, #tpu.memory_space<any>> -> memref<1x32xf32, #tpu.memory_space<any>>
    %c24_i32_399 = arith.constant 24 : i32
    %c0_i32_400 = arith.constant 0 : i32
    %466 = tpu.memref_slice %arg7[%c24_i32_399, %c0_i32_400] : memref<40x32xf32, #tpu.memory_space<vmem>> -> memref<1x32xf32, #tpu.memory_space<vmem>>
    %467 = tpu.memref_slice %arg8[%c1_i32_396] : memref<2x!tpu.dma_semaphore, #tpu.memory_space<semaphore_mem>> -> memref<1x!tpu.dma_semaphore, #tpu.memory_space<semaphore_mem>>
    %468 = tpu.memref_squeeze %467 : memref<1x!tpu.dma_semaphore, #tpu.memory_space<semaphore_mem>> -> memref<!tpu.dma_semaphore, #tpu.memory_space<semaphore_mem>>
    tpu.wait_dma2 semaphore(%468 : memref<!tpu.dma_semaphore, #tpu.memory_space<semaphore_mem>>) src(%465 : memref<1x32xf32, #tpu.memory_space<any>>) dst(%466 : memref<1x32xf32, #tpu.memory_space<vmem>>)
    %c1_i32_401 = arith.constant 1 : i32
    %c0_i32_402 = arith.constant 0 : i32
    %c0_i32_403 = arith.constant 0 : i32
    %469 = tpu.memref_slice %arg4[%c0_i32_402, %c0_i32_403] : memref<64x32xf32, #tpu.memory_space<any>> -> memref<1x32xf32, #tpu.memory_space<any>>
    %c25_i32_404 = arith.constant 25 : i32
    %c0_i32_405 = arith.constant 0 : i32
    %470 = tpu.memref_slice %arg7[%c25_i32_404, %c0_i32_405] : memref<40x32xf32, #tpu.memory_space<vmem>> -> memref<1x32xf32, #tpu.memory_space<vmem>>
    %471 = tpu.memref_slice %arg8[%c1_i32_401] : memref<2x!tpu.dma_semaphore, #tpu.memory_space<semaphore_mem>> -> memref<1x!tpu.dma_semaphore, #tpu.memory_space<semaphore_mem>>
    %472 = tpu.memref_squeeze %471 : memref<1x!tpu.dma_semaphore, #tpu.memory_space<semaphore_mem>> -> memref<!tpu.dma_semaphore, #tpu.memory_space<semaphore_mem>>
    tpu.wait_dma2 semaphore(%472 : memref<!tpu.dma_semaphore, #tpu.memory_space<semaphore_mem>>) src(%469 : memref<1x32xf32, #tpu.memory_space<any>>) dst(%470 : memref<1x32xf32, #tpu.memory_space<vmem>>)
    %c1_i32_406 = arith.constant 1 : i32
    %c0_i32_407 = arith.constant 0 : i32
    %c0_i32_408 = arith.constant 0 : i32
    %473 = tpu.memref_slice %arg4[%c0_i32_407, %c0_i32_408] : memref<64x32xf32, #tpu.memory_space<any>> -> memref<1x32xf32, #tpu.memory_space<any>>
    %c26_i32_409 = arith.constant 26 : i32
    %c0_i32_410 = arith.constant 0 : i32
    %474 = tpu.memref_slice %arg7[%c26_i32_409, %c0_i32_410] : memref<40x32xf32, #tpu.memory_space<vmem>> -> memref<1x32xf32, #tpu.memory_space<vmem>>
    %475 = tpu.memref_slice %arg8[%c1_i32_406] : memref<2x!tpu.dma_semaphore, #tpu.memory_space<semaphore_mem>> -> memref<1x!tpu.dma_semaphore, #tpu.memory_space<semaphore_mem>>
    %476 = tpu.memref_squeeze %475 : memref<1x!tpu.dma_semaphore, #tpu.memory_space<semaphore_mem>> -> memref<!tpu.dma_semaphore, #tpu.memory_space<semaphore_mem>>
    tpu.wait_dma2 semaphore(%476 : memref<!tpu.dma_semaphore, #tpu.memory_space<semaphore_mem>>) src(%473 : memref<1x32xf32, #tpu.memory_space<any>>) dst(%474 : memref<1x32xf32, #tpu.memory_space<vmem>>)
    %c1_i32_411 = arith.constant 1 : i32
    %c0_i32_412 = arith.constant 0 : i32
    %c0_i32_413 = arith.constant 0 : i32
    %477 = tpu.memref_slice %arg4[%c0_i32_412, %c0_i32_413] : memref<64x32xf32, #tpu.memory_space<any>> -> memref<1x32xf32, #tpu.memory_space<any>>
    %c27_i32_414 = arith.constant 27 : i32
    %c0_i32_415 = arith.constant 0 : i32
    %478 = tpu.memref_slice %arg7[%c27_i32_414, %c0_i32_415] : memref<40x32xf32, #tpu.memory_space<vmem>> -> memref<1x32xf32, #tpu.memory_space<vmem>>
    %479 = tpu.memref_slice %arg8[%c1_i32_411] : memref<2x!tpu.dma_semaphore, #tpu.memory_space<semaphore_mem>> -> memref<1x!tpu.dma_semaphore, #tpu.memory_space<semaphore_mem>>
    %480 = tpu.memref_squeeze %479 : memref<1x!tpu.dma_semaphore, #tpu.memory_space<semaphore_mem>> -> memref<!tpu.dma_semaphore, #tpu.memory_space<semaphore_mem>>
    tpu.wait_dma2 semaphore(%480 : memref<!tpu.dma_semaphore, #tpu.memory_space<semaphore_mem>>) src(%477 : memref<1x32xf32, #tpu.memory_space<any>>) dst(%478 : memref<1x32xf32, #tpu.memory_space<vmem>>)
    %c1_i32_416 = arith.constant 1 : i32
    %c0_i32_417 = arith.constant 0 : i32
    %c0_i32_418 = arith.constant 0 : i32
    %481 = tpu.memref_slice %arg4[%c0_i32_417, %c0_i32_418] : memref<64x32xf32, #tpu.memory_space<any>> -> memref<1x32xf32, #tpu.memory_space<any>>
    %c28_i32_419 = arith.constant 28 : i32
    %c0_i32_420 = arith.constant 0 : i32
    %482 = tpu.memref_slice %arg7[%c28_i32_419, %c0_i32_420] : memref<40x32xf32, #tpu.memory_space<vmem>> -> memref<1x32xf32, #tpu.memory_space<vmem>>
    %483 = tpu.memref_slice %arg8[%c1_i32_416] : memref<2x!tpu.dma_semaphore, #tpu.memory_space<semaphore_mem>> -> memref<1x!tpu.dma_semaphore, #tpu.memory_space<semaphore_mem>>
    %484 = tpu.memref_squeeze %483 : memref<1x!tpu.dma_semaphore, #tpu.memory_space<semaphore_mem>> -> memref<!tpu.dma_semaphore, #tpu.memory_space<semaphore_mem>>
    tpu.wait_dma2 semaphore(%484 : memref<!tpu.dma_semaphore, #tpu.memory_space<semaphore_mem>>) src(%481 : memref<1x32xf32, #tpu.memory_space<any>>) dst(%482 : memref<1x32xf32, #tpu.memory_space<vmem>>)
    %c1_i32_421 = arith.constant 1 : i32
    %c0_i32_422 = arith.constant 0 : i32
    %c0_i32_423 = arith.constant 0 : i32
    %485 = tpu.memref_slice %arg4[%c0_i32_422, %c0_i32_423] : memref<64x32xf32, #tpu.memory_space<any>> -> memref<1x32xf32, #tpu.memory_space<any>>
    %c29_i32_424 = arith.constant 29 : i32
    %c0_i32_425 = arith.constant 0 : i32
    %486 = tpu.memref_slice %arg7[%c29_i32_424, %c0_i32_425] : memref<40x32xf32, #tpu.memory_space<vmem>> -> memref<1x32xf32, #tpu.memory_space<vmem>>
    %487 = tpu.memref_slice %arg8[%c1_i32_421] : memref<2x!tpu.dma_semaphore, #tpu.memory_space<semaphore_mem>> -> memref<1x!tpu.dma_semaphore, #tpu.memory_space<semaphore_mem>>
    %488 = tpu.memref_squeeze %487 : memref<1x!tpu.dma_semaphore, #tpu.memory_space<semaphore_mem>> -> memref<!tpu.dma_semaphore, #tpu.memory_space<semaphore_mem>>
    tpu.wait_dma2 semaphore(%488 : memref<!tpu.dma_semaphore, #tpu.memory_space<semaphore_mem>>) src(%485 : memref<1x32xf32, #tpu.memory_space<any>>) dst(%486 : memref<1x32xf32, #tpu.memory_space<vmem>>)
    %c1_i32_426 = arith.constant 1 : i32
    %c0_i32_427 = arith.constant 0 : i32
    %c0_i32_428 = arith.constant 0 : i32
    %489 = tpu.memref_slice %arg4[%c0_i32_427, %c0_i32_428] : memref<64x32xf32, #tpu.memory_space<any>> -> memref<1x32xf32, #tpu.memory_space<any>>
    %c30_i32_429 = arith.constant 30 : i32
    %c0_i32_430 = arith.constant 0 : i32
    %490 = tpu.memref_slice %arg7[%c30_i32_429, %c0_i32_430] : memref<40x32xf32, #tpu.memory_space<vmem>> -> memref<1x32xf32, #tpu.memory_space<vmem>>
    %491 = tpu.memref_slice %arg8[%c1_i32_426] : memref<2x!tpu.dma_semaphore, #tpu.memory_space<semaphore_mem>> -> memref<1x!tpu.dma_semaphore, #tpu.memory_space<semaphore_mem>>
    %492 = tpu.memref_squeeze %491 : memref<1x!tpu.dma_semaphore, #tpu.memory_space<semaphore_mem>> -> memref<!tpu.dma_semaphore, #tpu.memory_space<semaphore_mem>>
    tpu.wait_dma2 semaphore(%492 : memref<!tpu.dma_semaphore, #tpu.memory_space<semaphore_mem>>) src(%489 : memref<1x32xf32, #tpu.memory_space<any>>) dst(%490 : memref<1x32xf32, #tpu.memory_space<vmem>>)
    %c1_i32_431 = arith.constant 1 : i32
    %c0_i32_432 = arith.constant 0 : i32
    %c0_i32_433 = arith.constant 0 : i32
    %493 = tpu.memref_slice %arg4[%c0_i32_432, %c0_i32_433] : memref<64x32xf32, #tpu.memory_space<any>> -> memref<1x32xf32, #tpu.memory_space<any>>
    %c31_i32_434 = arith.constant 31 : i32
    %c0_i32_435 = arith.constant 0 : i32
    %494 = tpu.memref_slice %arg7[%c31_i32_434, %c0_i32_435] : memref<40x32xf32, #tpu.memory_space<vmem>> -> memref<1x32xf32, #tpu.memory_space<vmem>>
    %495 = tpu.memref_slice %arg8[%c1_i32_431] : memref<2x!tpu.dma_semaphore, #tpu.memory_space<semaphore_mem>> -> memref<1x!tpu.dma_semaphore, #tpu.memory_space<semaphore_mem>>
    %496 = tpu.memref_squeeze %495 : memref<1x!tpu.dma_semaphore, #tpu.memory_space<semaphore_mem>> -> memref<!tpu.dma_semaphore, #tpu.memory_space<semaphore_mem>>
    tpu.wait_dma2 semaphore(%496 : memref<!tpu.dma_semaphore, #tpu.memory_space<semaphore_mem>>) src(%493 : memref<1x32xf32, #tpu.memory_space<any>>) dst(%494 : memref<1x32xf32, #tpu.memory_space<vmem>>)
    %c1_i32_436 = arith.constant 1 : i32
    %c0_i32_437 = arith.constant 0 : i32
    %c0_i32_438 = arith.constant 0 : i32
    %497 = tpu.memref_slice %arg4[%c0_i32_437, %c0_i32_438] : memref<64x32xf32, #tpu.memory_space<any>> -> memref<1x32xf32, #tpu.memory_space<any>>
    %c32_i32_439 = arith.constant 32 : i32
    %c0_i32_440 = arith.constant 0 : i32
    %498 = tpu.memref_slice %arg7[%c32_i32_439, %c0_i32_440] : memref<40x32xf32, #tpu.memory_space<vmem>> -> memref<1x32xf32, #tpu.memory_space<vmem>>
    %499 = tpu.memref_slice %arg8[%c1_i32_436] : memref<2x!tpu.dma_semaphore, #tpu.memory_space<semaphore_mem>> -> memref<1x!tpu.dma_semaphore, #tpu.memory_space<semaphore_mem>>
    %500 = tpu.memref_squeeze %499 : memref<1x!tpu.dma_semaphore, #tpu.memory_space<semaphore_mem>> -> memref<!tpu.dma_semaphore, #tpu.memory_space<semaphore_mem>>
    tpu.wait_dma2 semaphore(%500 : memref<!tpu.dma_semaphore, #tpu.memory_space<semaphore_mem>>) src(%497 : memref<1x32xf32, #tpu.memory_space<any>>) dst(%498 : memref<1x32xf32, #tpu.memory_space<vmem>>)
    %c1_i32_441 = arith.constant 1 : i32
    %c0_i32_442 = arith.constant 0 : i32
    %c0_i32_443 = arith.constant 0 : i32
    %501 = tpu.memref_slice %arg4[%c0_i32_442, %c0_i32_443] : memref<64x32xf32, #tpu.memory_space<any>> -> memref<1x32xf32, #tpu.memory_space<any>>
    %c33_i32_444 = arith.constant 33 : i32
    %c0_i32_445 = arith.constant 0 : i32
    %502 = tpu.memref_slice %arg7[%c33_i32_444, %c0_i32_445] : memref<40x32xf32, #tpu.memory_space<vmem>> -> memref<1x32xf32, #tpu.memory_space<vmem>>
    %503 = tpu.memref_slice %arg8[%c1_i32_441] : memref<2x!tpu.dma_semaphore, #tpu.memory_space<semaphore_mem>> -> memref<1x!tpu.dma_semaphore, #tpu.memory_space<semaphore_mem>>
    %504 = tpu.memref_squeeze %503 : memref<1x!tpu.dma_semaphore, #tpu.memory_space<semaphore_mem>> -> memref<!tpu.dma_semaphore, #tpu.memory_space<semaphore_mem>>
    tpu.wait_dma2 semaphore(%504 : memref<!tpu.dma_semaphore, #tpu.memory_space<semaphore_mem>>) src(%501 : memref<1x32xf32, #tpu.memory_space<any>>) dst(%502 : memref<1x32xf32, #tpu.memory_space<vmem>>)
    %c1_i32_446 = arith.constant 1 : i32
    %c0_i32_447 = arith.constant 0 : i32
    %c0_i32_448 = arith.constant 0 : i32
    %505 = tpu.memref_slice %arg4[%c0_i32_447, %c0_i32_448] : memref<64x32xf32, #tpu.memory_space<any>> -> memref<1x32xf32, #tpu.memory_space<any>>
    %c34_i32_449 = arith.constant 34 : i32
    %c0_i32_450 = arith.constant 0 : i32
    %506 = tpu.memref_slice %arg7[%c34_i32_449, %c0_i32_450] : memref<40x32xf32, #tpu.memory_space<vmem>> -> memref<1x32xf32, #tpu.memory_space<vmem>>
    %507 = tpu.memref_slice %arg8[%c1_i32_446] : memref<2x!tpu.dma_semaphore, #tpu.memory_space<semaphore_mem>> -> memref<1x!tpu.dma_semaphore, #tpu.memory_space<semaphore_mem>>
    %508 = tpu.memref_squeeze %507 : memref<1x!tpu.dma_semaphore, #tpu.memory_space<semaphore_mem>> -> memref<!tpu.dma_semaphore, #tpu.memory_space<semaphore_mem>>
    tpu.wait_dma2 semaphore(%508 : memref<!tpu.dma_semaphore, #tpu.memory_space<semaphore_mem>>) src(%505 : memref<1x32xf32, #tpu.memory_space<any>>) dst(%506 : memref<1x32xf32, #tpu.memory_space<vmem>>)
    %c1_i32_451 = arith.constant 1 : i32
    %c0_i32_452 = arith.constant 0 : i32
    %c0_i32_453 = arith.constant 0 : i32
    %509 = tpu.memref_slice %arg4[%c0_i32_452, %c0_i32_453] : memref<64x32xf32, #tpu.memory_space<any>> -> memref<1x32xf32, #tpu.memory_space<any>>
    %c35_i32_454 = arith.constant 35 : i32
    %c0_i32_455 = arith.constant 0 : i32
    %510 = tpu.memref_slice %arg7[%c35_i32_454, %c0_i32_455] : memref<40x32xf32, #tpu.memory_space<vmem>> -> memref<1x32xf32, #tpu.memory_space<vmem>>
    %511 = tpu.memref_slice %arg8[%c1_i32_451] : memref<2x!tpu.dma_semaphore, #tpu.memory_space<semaphore_mem>> -> memref<1x!tpu.dma_semaphore, #tpu.memory_space<semaphore_mem>>
    %512 = tpu.memref_squeeze %511 : memref<1x!tpu.dma_semaphore, #tpu.memory_space<semaphore_mem>> -> memref<!tpu.dma_semaphore, #tpu.memory_space<semaphore_mem>>
    tpu.wait_dma2 semaphore(%512 : memref<!tpu.dma_semaphore, #tpu.memory_space<semaphore_mem>>) src(%509 : memref<1x32xf32, #tpu.memory_space<any>>) dst(%510 : memref<1x32xf32, #tpu.memory_space<vmem>>)
    %c1_i32_456 = arith.constant 1 : i32
    %c0_i32_457 = arith.constant 0 : i32
    %c0_i32_458 = arith.constant 0 : i32
    %513 = tpu.memref_slice %arg4[%c0_i32_457, %c0_i32_458] : memref<64x32xf32, #tpu.memory_space<any>> -> memref<1x32xf32, #tpu.memory_space<any>>
    %c36_i32_459 = arith.constant 36 : i32
    %c0_i32_460 = arith.constant 0 : i32
    %514 = tpu.memref_slice %arg7[%c36_i32_459, %c0_i32_460] : memref<40x32xf32, #tpu.memory_space<vmem>> -> memref<1x32xf32, #tpu.memory_space<vmem>>
    %515 = tpu.memref_slice %arg8[%c1_i32_456] : memref<2x!tpu.dma_semaphore, #tpu.memory_space<semaphore_mem>> -> memref<1x!tpu.dma_semaphore, #tpu.memory_space<semaphore_mem>>
    %516 = tpu.memref_squeeze %515 : memref<1x!tpu.dma_semaphore, #tpu.memory_space<semaphore_mem>> -> memref<!tpu.dma_semaphore, #tpu.memory_space<semaphore_mem>>
    tpu.wait_dma2 semaphore(%516 : memref<!tpu.dma_semaphore, #tpu.memory_space<semaphore_mem>>) src(%513 : memref<1x32xf32, #tpu.memory_space<any>>) dst(%514 : memref<1x32xf32, #tpu.memory_space<vmem>>)
    %c1_i32_461 = arith.constant 1 : i32
    %c0_i32_462 = arith.constant 0 : i32
    %c0_i32_463 = arith.constant 0 : i32
    %517 = tpu.memref_slice %arg4[%c0_i32_462, %c0_i32_463] : memref<64x32xf32, #tpu.memory_space<any>> -> memref<1x32xf32, #tpu.memory_space<any>>
    %c37_i32_464 = arith.constant 37 : i32
    %c0_i32_465 = arith.constant 0 : i32
    %518 = tpu.memref_slice %arg7[%c37_i32_464, %c0_i32_465] : memref<40x32xf32, #tpu.memory_space<vmem>> -> memref<1x32xf32, #tpu.memory_space<vmem>>
    %519 = tpu.memref_slice %arg8[%c1_i32_461] : memref<2x!tpu.dma_semaphore, #tpu.memory_space<semaphore_mem>> -> memref<1x!tpu.dma_semaphore, #tpu.memory_space<semaphore_mem>>
    %520 = tpu.memref_squeeze %519 : memref<1x!tpu.dma_semaphore, #tpu.memory_space<semaphore_mem>> -> memref<!tpu.dma_semaphore, #tpu.memory_space<semaphore_mem>>
    tpu.wait_dma2 semaphore(%520 : memref<!tpu.dma_semaphore, #tpu.memory_space<semaphore_mem>>) src(%517 : memref<1x32xf32, #tpu.memory_space<any>>) dst(%518 : memref<1x32xf32, #tpu.memory_space<vmem>>)
    %c1_i32_466 = arith.constant 1 : i32
    %c0_i32_467 = arith.constant 0 : i32
    %c0_i32_468 = arith.constant 0 : i32
    %521 = tpu.memref_slice %arg4[%c0_i32_467, %c0_i32_468] : memref<64x32xf32, #tpu.memory_space<any>> -> memref<1x32xf32, #tpu.memory_space<any>>
    %c38_i32_469 = arith.constant 38 : i32
    %c0_i32_470 = arith.constant 0 : i32
    %522 = tpu.memref_slice %arg7[%c38_i32_469, %c0_i32_470] : memref<40x32xf32, #tpu.memory_space<vmem>> -> memref<1x32xf32, #tpu.memory_space<vmem>>
    %523 = tpu.memref_slice %arg8[%c1_i32_466] : memref<2x!tpu.dma_semaphore, #tpu.memory_space<semaphore_mem>> -> memref<1x!tpu.dma_semaphore, #tpu.memory_space<semaphore_mem>>
    %524 = tpu.memref_squeeze %523 : memref<1x!tpu.dma_semaphore, #tpu.memory_space<semaphore_mem>> -> memref<!tpu.dma_semaphore, #tpu.memory_space<semaphore_mem>>
    tpu.wait_dma2 semaphore(%524 : memref<!tpu.dma_semaphore, #tpu.memory_space<semaphore_mem>>) src(%521 : memref<1x32xf32, #tpu.memory_space<any>>) dst(%522 : memref<1x32xf32, #tpu.memory_space<vmem>>)
    %c1_i32_471 = arith.constant 1 : i32
    %c0_i32_472 = arith.constant 0 : i32
    %c0_i32_473 = arith.constant 0 : i32
    %525 = tpu.memref_slice %arg4[%c0_i32_472, %c0_i32_473] : memref<64x32xf32, #tpu.memory_space<any>> -> memref<1x32xf32, #tpu.memory_space<any>>
    %c39_i32_474 = arith.constant 39 : i32
    %c0_i32_475 = arith.constant 0 : i32
    %526 = tpu.memref_slice %arg7[%c39_i32_474, %c0_i32_475] : memref<40x32xf32, #tpu.memory_space<vmem>> -> memref<1x32xf32, #tpu.memory_space<vmem>>
    %527 = tpu.memref_slice %arg8[%c1_i32_471] : memref<2x!tpu.dma_semaphore, #tpu.memory_space<semaphore_mem>> -> memref<1x!tpu.dma_semaphore, #tpu.memory_space<semaphore_mem>>
    %528 = tpu.memref_squeeze %527 : memref<1x!tpu.dma_semaphore, #tpu.memory_space<semaphore_mem>> -> memref<!tpu.dma_semaphore, #tpu.memory_space<semaphore_mem>>
    tpu.wait_dma2 semaphore(%528 : memref<!tpu.dma_semaphore, #tpu.memory_space<semaphore_mem>>) src(%525 : memref<1x32xf32, #tpu.memory_space<any>>) dst(%526 : memref<1x32xf32, #tpu.memory_space<vmem>>)
    %c0_476 = arith.constant 0 : index
    %c0_477 = arith.constant 0 : index
    %529 = vector.load %arg6[%c0_476, %c0_477] : memref<8x32xf32, #tpu.memory_space<vmem>>, vector<8x32xf32>
    %c0_478 = arith.constant 0 : index
    %c0_479 = arith.constant 0 : index
    %530 = vector.load %arg7[%c0_478, %c0_479] : memref<40x32xf32, #tpu.memory_space<vmem>>, vector<40x32xf32>
    %531 = vector.shape_cast %530 : vector<40x32xf32> to vector<5x8x32xf32>
    %532 = vector.shape_cast %529 : vector<8x32xf32> to vector<1x8x32xf32>
    %533 = vector.broadcast %532 : vector<1x8x32xf32> to vector<5x8x32xf32>
    %534 = arith.mulf %531, %533 : vector<5x8x32xf32>
    %cst = arith.constant dense<0.000000e+00> : vector<5x8xf32>
    %535 = vector.multi_reduction <add>, %534, %cst [2] : vector<5x8x32xf32> to vector<5x8xf32>
    %536 = vector.shape_cast %535 : vector<5x8xf32> to vector<5x8x1xf32>
    %537 = tpu.iota {dimensions = array<i32: 1>} : vector<8x128xi32>
    %cst_480 = arith.constant 0.000000e+00 : f32
    %538 = vector.broadcast %cst_480 : f32 to vector<8x128xf32>
    %c0_i32_481 = arith.constant 0 : i32
    %539 = vector.broadcast %c0_i32_481 : i32 to vector<8x128xi32>
    %540 = arith.cmpi eq, %537, %539 : vector<8x128xi32>
    %541 = vector.extract_strided_slice %536 {offsets = [0, 0, 0], sizes = [1, 8, 1], strides = [1, 1, 1]} : vector<5x8x1xf32> to vector<1x8x1xf32>
    %542 = vector.shape_cast %541 : vector<1x8x1xf32> to vector<8x1xf32>
    %cst_482 = arith.constant 0.000000e+00 : f32
    %543 = vector.shape_cast %542 : vector<8x1xf32> to vector<8x1xf32>
    %544 = vector.broadcast %543 : vector<8x1xf32> to vector<8x128xf32>
    %545 = vector.broadcast %cst_482 : f32 to vector<8x128xf32>
    %546 = arith.select %540, %544, %545 : vector<8x128xi1>, vector<8x128xf32>
    %547 = arith.addf %538, %546 : vector<8x128xf32>
    %c1_i32_483 = arith.constant 1 : i32
    %548 = vector.broadcast %c1_i32_483 : i32 to vector<8x128xi32>
    %549 = arith.cmpi eq, %537, %548 : vector<8x128xi32>
    %550 = vector.extract_strided_slice %536 {offsets = [1, 0, 0], sizes = [1, 8, 1], strides = [1, 1, 1]} : vector<5x8x1xf32> to vector<1x8x1xf32>
    %551 = vector.shape_cast %550 : vector<1x8x1xf32> to vector<8x1xf32>
    %cst_484 = arith.constant 0.000000e+00 : f32
    %552 = vector.shape_cast %551 : vector<8x1xf32> to vector<8x1xf32>
    %553 = vector.broadcast %552 : vector<8x1xf32> to vector<8x128xf32>
    %554 = vector.broadcast %cst_484 : f32 to vector<8x128xf32>
    %555 = arith.select %549, %553, %554 : vector<8x128xi1>, vector<8x128xf32>
    %556 = arith.addf %547, %555 : vector<8x128xf32>
    %c2_i32_485 = arith.constant 2 : i32
    %557 = vector.broadcast %c2_i32_485 : i32 to vector<8x128xi32>
    %558 = arith.cmpi eq, %537, %557 : vector<8x128xi32>
    %559 = vector.extract_strided_slice %536 {offsets = [2, 0, 0], sizes = [1, 8, 1], strides = [1, 1, 1]} : vector<5x8x1xf32> to vector<1x8x1xf32>
    %560 = vector.shape_cast %559 : vector<1x8x1xf32> to vector<8x1xf32>
    %cst_486 = arith.constant 0.000000e+00 : f32
    %561 = vector.shape_cast %560 : vector<8x1xf32> to vector<8x1xf32>
    %562 = vector.broadcast %561 : vector<8x1xf32> to vector<8x128xf32>
    %563 = vector.broadcast %cst_486 : f32 to vector<8x128xf32>
    %564 = arith.select %558, %562, %563 : vector<8x128xi1>, vector<8x128xf32>
    %565 = arith.addf %556, %564 : vector<8x128xf32>
    %c3_i32_487 = arith.constant 3 : i32
    %566 = vector.broadcast %c3_i32_487 : i32 to vector<8x128xi32>
    %567 = arith.cmpi eq, %537, %566 : vector<8x128xi32>
    %568 = vector.extract_strided_slice %536 {offsets = [3, 0, 0], sizes = [1, 8, 1], strides = [1, 1, 1]} : vector<5x8x1xf32> to vector<1x8x1xf32>
    %569 = vector.shape_cast %568 : vector<1x8x1xf32> to vector<8x1xf32>
    %cst_488 = arith.constant 0.000000e+00 : f32
    %570 = vector.shape_cast %569 : vector<8x1xf32> to vector<8x1xf32>
    %571 = vector.broadcast %570 : vector<8x1xf32> to vector<8x128xf32>
    %572 = vector.broadcast %cst_488 : f32 to vector<8x128xf32>
    %573 = arith.select %567, %571, %572 : vector<8x128xi1>, vector<8x128xf32>
    %574 = arith.addf %565, %573 : vector<8x128xf32>
    %c4_i32_489 = arith.constant 4 : i32
    %575 = vector.broadcast %c4_i32_489 : i32 to vector<8x128xi32>
    %576 = arith.cmpi eq, %537, %575 : vector<8x128xi32>
    %577 = vector.extract_strided_slice %536 {offsets = [4, 0, 0], sizes = [1, 8, 1], strides = [1, 1, 1]} : vector<5x8x1xf32> to vector<1x8x1xf32>
    %578 = vector.shape_cast %577 : vector<1x8x1xf32> to vector<8x1xf32>
    %cst_490 = arith.constant 0.000000e+00 : f32
    %579 = vector.shape_cast %578 : vector<8x1xf32> to vector<8x1xf32>
    %580 = vector.broadcast %579 : vector<8x1xf32> to vector<8x128xf32>
    %581 = vector.broadcast %cst_490 : f32 to vector<8x128xf32>
    %582 = arith.select %576, %580, %581 : vector<8x128xi1>, vector<8x128xf32>
    %583 = arith.addf %574, %582 : vector<8x128xf32>
    %c5_i32_491 = arith.constant 5 : i32
    %584 = vector.broadcast %c5_i32_491 : i32 to vector<8x128xi32>
    %585 = arith.cmpi slt, %537, %584 : vector<8x128xi32>
    %c0_i32_492 = arith.constant 0 : i32
    %586 = vector.broadcast %c0_i32_492 : i32 to vector<8x128xi32>
    %587 = arith.cmpi eq, %537, %586 : vector<8x128xi32>
    %cst_493 = arith.constant 1.000000e+00 : f32
    %cst_494 = arith.constant -1.000000e+00 : f32
    %588 = vector.broadcast %cst_493 : f32 to vector<8x128xf32>
    %589 = vector.broadcast %cst_494 : f32 to vector<8x128xf32>
    %590 = arith.select %587, %588, %589 : vector<8x128xi1>, vector<8x128xf32>
    %591 = arith.mulf %590, %583 : vector<8x128xf32>
    %cst_495 = arith.constant 0.000000e+00 : f32
    %592 = vector.broadcast %cst_495 : f32 to vector<8x128xf32>
    %593 = arith.subf %592, %591 : vector<8x128xf32>
    %cst_496 = arith.constant 0.000000e+00 : f32
    %594 = vector.broadcast %cst_496 : f32 to vector<8x128xf32>
    %595 = arith.maximumf %593, %594 : vector<8x128xf32>
    %596 = math.absf %591 : vector<8x128xf32>
    %cst_497 = arith.constant 0.000000e+00 : f32
    %597 = vector.broadcast %cst_497 : f32 to vector<8x128xf32>
    %598 = arith.subf %597, %596 : vector<8x128xf32>
    %599 = math.exp %598 : vector<8x128xf32>
    %600 = math.log1p %599 : vector<8x128xf32>
    %601 = arith.addf %595, %600 : vector<8x128xf32>
    %cst_498 = arith.constant 0.000000e+00 : f32
    %602 = vector.broadcast %cst_498 : f32 to vector<8x128xf32>
    %603 = arith.subf %602, %601 : vector<8x128xf32>
    %cst_499 = arith.constant 0.000000e+00 : f32
    %604 = vector.broadcast %cst_499 : f32 to vector<8x128xf32>
    %605 = arith.subf %604, %603 : vector<8x128xf32>
    %cst_500 = arith.constant 0.000000e+00 : f32
    %606 = vector.broadcast %cst_500 : f32 to vector<8x128xf32>
    %607 = arith.select %585, %605, %606 : vector<8x128xi1>, vector<8x128xf32>
    %cst_501 = arith.constant dense<0.000000e+00> : vector<8xf32>
    %608 = vector.multi_reduction <add>, %607, %cst_501 [1] : vector<8x128xf32> to vector<8xf32>
    %609 = vector.shape_cast %608 : vector<8xf32> to vector<8x1xf32>
    %c5_i32_502 = arith.constant 5 : i32
    %610 = vector.broadcast %c5_i32_502 : i32 to vector<8x128xi32>
    %611 = arith.cmpi eq, %537, %610 : vector<8x128xi32>
    %cst_503 = arith.constant 0.000000e+00 : f32
    %612 = vector.shape_cast %609 : vector<8x1xf32> to vector<8x1xf32>
    %613 = vector.broadcast %612 : vector<8x1xf32> to vector<8x128xf32>
    %614 = vector.broadcast %cst_503 : f32 to vector<8x128xf32>
    %615 = arith.select %611, %613, %614 : vector<8x128xi1>, vector<8x128xf32>
    %616 = arith.addf %583, %615 : vector<8x128xf32>
    %c0_504 = arith.constant 0 : index
    %c0_505 = arith.constant 0 : index
    %617 = vector.load %arg5[%c0_504, %c0_505] : memref<8x128xf32, #tpu.memory_space<vmem>>, vector<8x128xf32>
    tpu.vector_store %arg5[%c0_504, %c0_505], %616 {strides = array<i32>} : memref<8x128xf32, #tpu.memory_space<vmem>>, vector<8x128xf32>,
    return
  }
  func.func @transform_2(%arg0: i32, %arg1: memref<16xi32, #tpu.memory_space<smem>>, %arg2: memref<5x16xi32, #tpu.memory_space<smem>>) -> (i32, i32) {
    %c0_i32 = arith.constant 0 : i32
    %c0_i32_0 = arith.constant 0 : i32
    return %arg0, %c0_i32 : i32, i32
  }
}

</mosaic_0001>

<llo_original>
// kernel: tpu_custom_call.1
$region0: #{tpu_custom_call.1}
  #allocation0 [shape = 'u32[]', space=smem, size = 0x4, offset = 0x4, fixed_abs, tag = 'smem constant byte address 0x4 - core index']
  #allocation1 [shape = 'u32[144,128]{1,0:T(1,128)}', space=vmem, size = 0x12000, scoped, tag = 'internal scratch']
  #allocation2 [shape = 'f32[8,32]{1,0:T(8,128)}', space=vmem, size = 0x1000, scoped, tag = 'scratch operand']
  #allocation3 [shape = 'f32[40,32]{1,0:T(8,128)}', space=vmem, size = 0x5000, scoped, tag = 'scratch operand']
  #allocation4 [shape = 's32[2]{0}', space=sflag, size = 0x8, scoped, tag = 'scratch operand']
  #allocation5 [shape = 's32[1]{0}', space=sflag, size = 0x4, scoped, tag = 'scoped memory for tpu_custom_call.1']
  #allocation6 [shape = 'u8[512]{0}', space=smem, size = 0x200, scoped, tag = 'prefetched SMEM operand 0']
  #allocation7 [shape = 'u8[4096]{0}', space=smem, size = 0x1000, scoped, tag = 'prefetched SMEM operand 1']
  #allocation10 [shape = 's32[]', space=sflag, size = 0x4, offset = 0, fixed_abs, tag = 'sflag constant byte address 0x0 - dummy sync flag']
  #allocation11 [shape = 's32[]', space=sflag, size = 0x4, offset = 0, fixed_abs, tag = 'sflag constant byte address 0x0 - dummy sync flag']
  #allocation12 [shape = 's32[]', space=sflag, size = 0x4, offset = 0, fixed_abs, tag = 'sflag constant byte address 0x0 - dummy sync flag']
  #allocation13 [shape = 's32[]', space=sflag, size = 0x4, offset = 0, fixed_abs, tag = 'sflag constant byte address 0x0 - dummy sync flag']
  #allocation14 [shape = 's32[]', space=sflag, size = 0x4, offset = 0, fixed_abs, tag = 'sflag constant byte address 0x0 - dummy sync flag']
  #allocation15 [shape = 's32[]', space=sflag, size = 0x4, offset = 0, fixed_abs, tag = 'sflag constant byte address 0x0 - dummy sync flag']
  #allocation16 [shape = 's32[]', space=sflag, size = 0x4, offset = 0, fixed_abs, tag = 'sflag constant byte address 0x0 - dummy sync flag']
  #allocation17 [shape = 's32[]', space=sflag, size = 0x4, offset = 0, fixed_abs, tag = 'sflag constant byte address 0x0 - dummy sync flag']
  #allocation18 [shape = 's32[]', space=sflag, size = 0x4, offset = 0, fixed_abs, tag = 'sflag constant byte address 0x0 - dummy sync flag']
  #allocation19 [shape = 's32[]', space=sflag, size = 0x4, offset = 0, fixed_abs, tag = 'sflag constant byte address 0x0 - dummy sync flag']
  #allocation20 [shape = 's32[]', space=sflag, size = 0x4, offset = 0, fixed_abs, tag = 'sflag constant byte address 0x0 - dummy sync flag']
  #allocation21 [shape = 's32[]', space=sflag, size = 0x4, offset = 0, fixed_abs, tag = 'sflag constant byte address 0x0 - dummy sync flag']
  #allocation22 [shape = 's32[]', space=sflag, size = 0x4, offset = 0, fixed_abs, tag = 'sflag constant byte address 0x0 - dummy sync flag']
  #allocation23 [shape = 's32[]', space=sflag, size = 0x4, offset = 0, fixed_abs, tag = 'sflag constant byte address 0x0 - dummy sync flag']
  #allocation24 [shape = 's32[]', space=sflag, size = 0x4, offset = 0, fixed_abs, tag = 'sflag constant byte address 0x0 - dummy sync flag']
  #allocation25 [shape = 's32[]', space=sflag, size = 0x4, offset = 0, fixed_abs, tag = 'sflag constant byte address 0x0 - dummy sync flag']
  #allocation26 [shape = 's32[]', space=sflag, size = 0x4, offset = 0, fixed_abs, tag = 'sflag constant byte address 0x0 - dummy sync flag']
  #allocation27 [shape = 's32[]', space=sflag, size = 0x4, offset = 0, fixed_abs, tag = 'sflag constant byte address 0x0 - dummy sync flag']
  #allocation28 [shape = 's32[]', space=sflag, size = 0x4, offset = 0, fixed_abs, tag = 'sflag constant byte address 0x0 - dummy sync flag']
  #allocation29 [shape = 's32[]', space=sflag, size = 0x4, offset = 0, fixed_abs, tag = 'sflag constant byte address 0x0 - dummy sync flag']
  #allocation30 [shape = 's32[]', space=sflag, size = 0x4, offset = 0, fixed_abs, tag = 'sflag constant byte address 0x0 - dummy sync flag']
  #allocation31 [shape = 's32[]', space=sflag, size = 0x4, offset = 0, fixed_abs, tag = 'sflag constant byte address 0x0 - dummy sync flag']
  #allocation32 [shape = 's32[]', space=sflag, size = 0x4, offset = 0, fixed_abs, tag = 'sflag constant byte address 0x0 - dummy sync flag']
  #allocation33 [shape = 's32[]', space=sflag, size = 0x4, offset = 0, fixed_abs, tag = 'sflag constant byte address 0x0 - dummy sync flag']
  #allocation34 [shape = 's32[]', space=sflag, size = 0x4, offset = 0, fixed_abs, tag = 'sflag constant byte address 0x0 - dummy sync flag']
  #allocation35 [shape = 's32[]', space=sflag, size = 0x4, offset = 0, fixed_abs, tag = 'sflag constant byte address 0x0 - dummy sync flag']
  #allocation36 [shape = 's32[]', space=sflag, size = 0x4, offset = 0, fixed_abs, tag = 'sflag constant byte address 0x0 - dummy sync flag']
  #allocation37 [shape = 's32[]', space=sflag, size = 0x4, offset = 0, fixed_abs, tag = 'sflag constant byte address 0x0 - dummy sync flag']
  #allocation38 [shape = 's32[]', space=sflag, size = 0x4, offset = 0, fixed_abs, tag = 'sflag constant byte address 0x0 - dummy sync flag']
  #allocation39 [shape = 's32[]', space=sflag, size = 0x4, offset = 0, fixed_abs, tag = 'sflag constant byte address 0x0 - dummy sync flag']
  #allocation40 [shape = 's32[]', space=sflag, size = 0x4, offset = 0, fixed_abs, tag = 'sflag constant byte address 0x0 - dummy sync flag']
  #allocation41 [shape = 's32[]', space=sflag, size = 0x4, offset = 0, fixed_abs, tag = 'sflag constant byte address 0x0 - dummy sync flag']
  #allocation42 [shape = 's32[]', space=sflag, size = 0x4, offset = 0, fixed_abs, tag = 'sflag constant byte address 0x0 - dummy sync flag']
  #allocation43 [shape = 's32[]', space=sflag, size = 0x4, offset = 0, fixed_abs, tag = 'sflag constant byte address 0x0 - dummy sync flag']
  #allocation44 [shape = 's32[]', space=sflag, size = 0x4, offset = 0, fixed_abs, tag = 'sflag constant byte address 0x0 - dummy sync flag']
  #allocation45 [shape = 's32[]', space=sflag, size = 0x4, offset = 0, fixed_abs, tag = 'sflag constant byte address 0x0 - dummy sync flag']
  #allocation46 [shape = 's32[]', space=sflag, size = 0x4, offset = 0, fixed_abs, tag = 'sflag constant byte address 0x0 - dummy sync flag']
  #allocation47 [shape = 's32[]', space=sflag, size = 0x4, offset = 0, fixed_abs, tag = 'sflag constant byte address 0x0 - dummy sync flag']
  #allocation48 [shape = 's32[]', space=sflag, size = 0x4, offset = 0, fixed_abs, tag = 'sflag constant byte address 0x0 - dummy sync flag']
  #allocation49 [shape = 's32[]', space=sflag, size = 0x4, offset = 0, fixed_abs, tag = 'sflag constant byte address 0x0 - dummy sync flag']
  #allocation50 [shape = 's32[]', space=sflag, size = 0x4, offset = 0, fixed_abs, tag = 'sflag constant byte address 0x0 - dummy sync flag']
  #allocation51 [shape = 's32[]', space=sflag, size = 0x4, offset = 0, fixed_abs, tag = 'sflag constant byte address 0x0 - dummy sync flag']
  #allocation52 [shape = 's32[]', space=sflag, size = 0x4, offset = 0, fixed_abs, tag = 'sflag constant byte address 0x0 - dummy sync flag']
  #allocation53 [shape = 's32[]', space=sflag, size = 0x4, offset = 0, fixed_abs, tag = 'sflag constant byte address 0x0 - dummy sync flag']
  #allocation54 [shape = 's32[]', space=sflag, size = 0x4, offset = 0, fixed_abs, tag = 'sflag constant byte address 0x0 - dummy sync flag']
  #allocation55 [shape = 's32[]', space=sflag, size = 0x4, offset = 0, fixed_abs, tag = 'sflag constant byte address 0x0 - dummy sync flag']
  #allocation56 [shape = 's32[]', space=sflag, size = 0x4, offset = 0, fixed_abs, tag = 'sflag constant byte address 0x0 - dummy sync flag']
  #allocation57 [shape = 's32[]', space=sflag, size = 0x4, offset = 0, fixed_abs, tag = 'sflag constant byte address 0x0 - dummy sync flag']
  %s0 = inlined_call_operand.vmem [shape: s32[16], index: 0, kind: input, shape index: {}]
  %s1 = inlined_call_operand.vmem [shape: s32[5,16], index: 1, kind: input, shape index: {}]
  %s2 = inlined_call_operand.vmem [shape: f32[64,32], index: 2, kind: input, shape index: {}]
  %s3 = inlined_call_operand.vmem [shape: f32[64,32], index: 3, kind: input, shape index: {}]
  %s4 = inlined_call_operand.hbm [shape: f32[16,128], index: 4, kind: output, shape index: {}]
  %s5 = sld [smem:[#allocation0]]
  $region1465: #{tpu_custom_call.1} parent=0
    _
  %s7 = ssub.s32 1, %s5
  %s8 = scalar_select 0, %s7, %s5
  %s9 = sshll.u32 %s0, 4
  %s10 = int_to_ptr.vmem [resolvable:$true] %s9
  %12 = dma.vmem_to_smem %s10, 16, [#allocation6], [#allocation5]
  %s13 = sshll.u32 %s1, 4
  %s14 = int_to_ptr.vmem [resolvable:$true] %s13
  %16 = dma.vmem_to_smem %s14, 128, [#allocation7], [#allocation5]
  %17 = dma.done [#allocation5], 144
  %18 = sfence
  $region1: #{tpu_custom_call.1} parent=0
    #allocation8 [shape = 'u8[8192]{0}', space=vmem, size = 0x2000, scoped, tag = 'output window, operand 0']
    #allocation9 [shape = 's32[2]{0}', space=sflag, size = 0x8, scoped, tag = 'scoped memory for tpu_custom_call.1']
    %19 = vsyncpa [#allocation9], 0
    %s20 = scalar_lea.sflag [#allocation9], 1
    %21 = vsyncpa %s20, 0
    loop: start=0, step=1, limit=3
    $region2: #{tpu_custom_call.1} parent=1 // loop_pre_header
      _
    $region3: #{tpu_custom_call.1} parent=1 // loop_header
      %s23 = sphi 0, %s27
      %p24 = scmp.ge.s32.totalorder %s23, 3
      %s32 = sphi 0, %s34
      %s35 = sphi 0, %s32
      %s45 = sphi 0, %s35
    $region4: #{tpu_custom_call.1} parent=1 // loop_header_branch
      %26 = sbr.rel (%p24) target = $region8
    $region5: #{tpu_custom_call.1} parent=1 // loop_body
      %s28 = ssub.s32 %s23, 1
      %s29 = sadd.s32 %s23, 1
      %s30 = ssub.s32 %s23, %s29
      %p31 = scmp.eq.s32.totalorder %s30, 0
      %s33 = sadd.s32 %s32, 1
      %s34 = scalar_select %p31, %s32, %s33
      %p36 = pneg %p31
      %p37 = scmp.eq.s32.totalorder %s23, 1
      %p38 = por %p36, %p37
      %p39 = scmp.ne.s32.totalorder %s32, %s35
      %p40 = scmp.eq.s32.totalorder %s23, 0
      %p41 = por %p39, %p40
      %p42 = scmp.ne.s32.totalorder %s32, %s35
      %p43 = scmp.eq.s32.totalorder %s28, 1
      %p44 = por %p42, %p43
      %p46 = scmp.ne.s32.totalorder %s35, %s45
      %p47 = scmp.eq.s32.totalorder %s28, 0
      %p48 = por %p46, %p47
      %p49 = scmp.lt.s32.totalorder %s23, 2
      // Predicated region
      $region9: #{tpu_custom_call.1} parent=5 // pred_check
        %p50 = pneg %p49
      $region10: #{tpu_custom_call.1} parent=5 // pred_check_branch
        %52 = sbr.rel (%p50) target = $region12
      $region11: #{tpu_custom_call.1} parent=5 // pred_region
        %p53 = pneg %p41
        %p54 = pneg %p38
        %s55 = sand.u32 %s32, 1
        %s56 = scalar_lea.sflag [#allocation9], %s55
        %s57 = sand.u32 %s32, 1
        %s58 = smul.addr %s57, 8
        %s59 = scalar_lea.vmem [#allocation8], %s58
        %s60 = smul.u32 %s23, 8
        %s61 = sld [smem:[#allocation6 + %s60]]
        %s62 = scalar_lea.vmem %s2, %s61
        %p64 = scmp.lt.u32.totalorder 1, 8
        %p65 = pneg %p64
        // Predicated region
        $region13: #{tpu_custom_call.1} parent=11 // pred_check
          _
        $region14: #{tpu_custom_call.1} parent=11 // pred_check_branch
          %67 = sbr.rel (%p64) target = $region16
        $region15: #{tpu_custom_call.1} parent=11 // pred_region
          %s82 = sand.u32 1, 7
          %p83 = scmp.eq.s32.totalorder %s82, 0
          %p84 = pneg %p83
          // Predicated region
          $region28: #{tpu_custom_call.1} parent=15 // pred_check
            _
          $region29: #{tpu_custom_call.1} parent=15 // pred_check_branch
            %86 = sbr.rel (%p83) target = $region31
          $region30: #{tpu_custom_call.1} parent=15 // pred_region
            %s87 = sand.u32 1, 7
            %s88 = ssub.s32 1, %s87
            %s89 = scalar_lea.vmem %s62, %s88
            %s90 = ssub.s32 1, %s87
            %s91 = scalar_lea.vmem [#allocation2], %s90
            %s92 = sshllo.u32 0, %s87
            loop: start=0, step=1, limit=1
            $region32: #{tpu_custom_call.1} parent=30 // loop_pre_header
              _
            $region33: #{tpu_custom_call.1} parent=30 // loop_header
              %s94 = sphi 0, %s98
              %p95 = scmp.ge.s32.totalorder %s94, 1
              %s99 = sphi %s89, %s89
              %s100 = sphi %s91, %s91
            $region34: #{tpu_custom_call.1} parent=30 // loop_header_branch
              %97 = sbr.rel (%p95) target = $region38
            $region35: #{tpu_custom_call.1} parent=30 // loop_body
              %v101 = vld [vmem:[%s99] sm:%s92]
              %102 = vst [vmem:[%s100] sm:%s92] %v101
            $region36: #{tpu_custom_call.1} parent=30 // loop_footer
              %s98 = sadd.s32 1, %s94
            $region37: #{tpu_custom_call.1} parent=30 // loop_footer_branch
              %93 = sbr.rel target = $region33
            $region38: #{tpu_custom_call.1} parent=30 // loop_exit
              _
          $region31: #{tpu_custom_call.1} parent=15 // pred_fallthru
            _
        $region16: #{tpu_custom_call.1} parent=11 // pred_fallthru
          _
        // Predicated region
        $region17: #{tpu_custom_call.1} parent=11 // pred_check
          %p68 = pneg %p64
        $region18: #{tpu_custom_call.1} parent=11 // pred_check_branch
          %70 = sbr.rel (%p68) target = $region20
        $region19: #{tpu_custom_call.1} parent=11 // pred_region
          %s71 = sshllo.u32 0, 1
          loop: start=0, step=1, limit=1
          $region21: #{tpu_custom_call.1} parent=19 // loop_pre_header
            _
          $region22: #{tpu_custom_call.1} parent=19 // loop_header
            %s73 = sphi 0, %s77
            %p74 = scmp.ge.s32.totalorder %s73, 1
            %s78 = sphi %s62, %s62
            %s79 = sphi [#allocation2], [#allocation2]
          $region23: #{tpu_custom_call.1} parent=19 // loop_header_branch
            %76 = sbr.rel (%p74) target = $region27
          $region24: #{tpu_custom_call.1} parent=19 // loop_body
            %v80 = vld [vmem:[%s78] sm:%s71]
            %81 = vst [vmem:[%s79] sm:%s71] %v80
          $region25: #{tpu_custom_call.1} parent=19 // loop_footer
            %s77 = sadd.s32 1, %s73
          $region26: #{tpu_custom_call.1} parent=19 // loop_footer_branch
            %72 = sbr.rel target = $region22
          $region27: #{tpu_custom_call.1} parent=19 // loop_exit
            _
        $region20: #{tpu_custom_call.1} parent=11 // pred_fallthru
          _
        // Predicated region
        $region39: #{tpu_custom_call.1} parent=11 // pred_check
          _
        $region40: #{tpu_custom_call.1} parent=11 // pred_check_branch
          %105 = sbr.rel (0) target = $region42
        $region41: #{tpu_custom_call.1} parent=11 // pred_region
          %106 = vsyncadd [#allocation4], 16
        $region42: #{tpu_custom_call.1} parent=11 // pred_fallthru
          _
        %s107 = sadd.s32 %s60, 1
        %s108 = sld [smem:[#allocation6 + %s107]]
        %s109 = scalar_lea.vmem %s2, %s108
        %s110 = scalar_lea.vmem [#allocation2], 1
        %p112 = scmp.lt.u32.totalorder 1, 8
        %p113 = pneg %p112
        // Predicated region
        $region43: #{tpu_custom_call.1} parent=11 // pred_check
          _
        $region44: #{tpu_custom_call.1} parent=11 // pred_check_branch
          %115 = sbr.rel (%p112) target = $region46
        $region45: #{tpu_custom_call.1} parent=11 // pred_region
          %s130 = sand.u32 1, 7
          %p131 = scmp.eq.s32.totalorder %s130, 0
          %p132 = pneg %p131
          // Predicated region
          $region58: #{tpu_custom_call.1} parent=45 // pred_check
            _
          $region59: #{tpu_custom_call.1} parent=45 // pred_check_branch
            %134 = sbr.rel (%p131) target = $region61
          $region60: #{tpu_custom_call.1} parent=45 // pred_region
            %s135 = sand.u32 1, 7
            %s136 = ssub.s32 1, %s135
            %s137 = scalar_lea.vmem %s109, %s136
            %s138 = ssub.s32 1, %s135
            %s139 = scalar_lea.vmem %s110, %s138 [#allocation2]
            %s140 = sshllo.u32 0, %s135
            loop: start=0, step=1, limit=1
            $region62: #{tpu_custom_call.1} parent=60 // loop_pre_header
              _
            $region63: #{tpu_custom_call.1} parent=60 // loop_header
              %s142 = sphi 0, %s146
              %p143 = scmp.ge.s32.totalorder %s142, 1
              %s147 = sphi %s137, %s137
              %s148 = sphi %s139, %s139
            $region64: #{tpu_custom_call.1} parent=60 // loop_header_branch
              %145 = sbr.rel (%p143) target = $region68
            $region65: #{tpu_custom_call.1} parent=60 // loop_body
              %v149 = vld [vmem:[%s147] sm:%s140]
              %150 = vst [vmem:[%s148] sm:%s140] %v149
            $region66: #{tpu_custom_call.1} parent=60 // loop_footer
              %s146 = sadd.s32 1, %s142
            $region67: #{tpu_custom_call.1} parent=60 // loop_footer_branch
              %141 = sbr.rel target = $region63
            $region68: #{tpu_custom_call.1} parent=60 // loop_exit
              _
          $region61: #{tpu_custom_call.1} parent=45 // pred_fallthru
            _
        $region46: #{tpu_custom_call.1} parent=11 // pred_fallthru
          _
        // Predicated region
        $region47: #{tpu_custom_call.1} parent=11 // pred_check
          %p116 = pneg %p112
        $region48: #{tpu_custom_call.1} parent=11 // pred_check_branch
          %118 = sbr.rel (%p116) target = $region50
        $region49: #{tpu_custom_call.1} parent=11 // pred_region
          %s119 = sshllo.u32 0, 1
          loop: start=0, step=1, limit=1
          $region51: #{tpu_custom_call.1} parent=49 // loop_pre_header
            _
          $region52: #{tpu_custom_call.1} parent=49 // loop_header
            %s121 = sphi 0, %s125
            %p122 = scmp.ge.s32.totalorder %s121, 1
            %s126 = sphi %s109, %s109
            %s127 = sphi %s110, %s110
          $region53: #{tpu_custom_call.1} parent=49 // loop_header_branch
            %124 = sbr.rel (%p122) target = $region57
          $region54: #{tpu_custom_call.1} parent=49 // loop_body
            %v128 = vld [vmem:[%s126] sm:%s119]
            %129 = vst [vmem:[%s127] sm:%s119] %v128
          $region55: #{tpu_custom_call.1} parent=49 // loop_footer
            %s125 = sadd.s32 1, %s121
          $region56: #{tpu_custom_call.1} parent=49 // loop_footer_branch
            %120 = sbr.rel target = $region52
          $region57: #{tpu_custom_call.1} parent=49 // loop_exit
            _
        $region50: #{tpu_custom_call.1} parent=11 // pred_fallthru
          _
        // Predicated region
        $region69: #{tpu_custom_call.1} parent=11 // pred_check
          _
        $region70: #{tpu_custom_call.1} parent=11 // pred_check_branch
          %153 = sbr.rel (0) target = $region72
        $region71: #{tpu_custom_call.1} parent=11 // pred_region
          %154 = vsyncadd [#allocation4], 16
        $region72: #{tpu_custom_call.1} parent=11 // pred_fallthru
          _
        %s155 = sadd.s32 %s60, 2
        %s156 = sld [smem:[#allocation6 + %s155]]
        %s157 = scalar_lea.vmem %s2, %s156
        %s158 = scalar_lea.vmem [#allocation2], 2
        %p160 = scmp.lt.u32.totalorder 1, 8
        %p161 = pneg %p160
        // Predicated region
        $region73: #{tpu_custom_call.1} parent=11 // pred_check
          _
        $region74: #{tpu_custom_call.1} parent=11 // pred_check_branch
          %163 = sbr.rel (%p160) target = $region76
        $region75: #{tpu_custom_call.1} parent=11 // pred_region
          %s178 = sand.u32 1, 7
          %p179 = scmp.eq.s32.totalorder %s178, 0
          %p180 = pneg %p179
          // Predicated region
          $region88: #{tpu_custom_call.1} parent=75 // pred_check
            _
          $region89: #{tpu_custom_call.1} parent=75 // pred_check_branch
            %182 = sbr.rel (%p179) target = $region91
          $region90: #{tpu_custom_call.1} parent=75 // pred_region
            %s183 = sand.u32 1, 7
            %s184 = ssub.s32 1, %s183
            %s185 = scalar_lea.vmem %s157, %s184
            %s186 = ssub.s32 1, %s183
            %s187 = scalar_lea.vmem %s158, %s186 [#allocation2]
            %s188 = sshllo.u32 0, %s183
            loop: start=0, step=1, limit=1
            $region92: #{tpu_custom_call.1} parent=90 // loop_pre_header
              _
            $region93: #{tpu_custom_call.1} parent=90 // loop_header
              %s190 = sphi 0, %s194
              %p191 = scmp.ge.s32.totalorder %s190, 1
              %s195 = sphi %s185, %s185
              %s196 = sphi %s187, %s187
            $region94: #{tpu_custom_call.1} parent=90 // loop_header_branch
              %193 = sbr.rel (%p191) target = $region98
            $region95: #{tpu_custom_call.1} parent=90 // loop_body
              %v197 = vld [vmem:[%s195] sm:%s188]
              %198 = vst [vmem:[%s196] sm:%s188] %v197
            $region96: #{tpu_custom_call.1} parent=90 // loop_footer
              %s194 = sadd.s32 1, %s190
            $region97: #{tpu_custom_call.1} parent=90 // loop_footer_branch
              %189 = sbr.rel target = $region93
            $region98: #{tpu_custom_call.1} parent=90 // loop_exit
              _
          $region91: #{tpu_custom_call.1} parent=75 // pred_fallthru
            _
        $region76: #{tpu_custom_call.1} parent=11 // pred_fallthru
          _
        // Predicated region
        $region77: #{tpu_custom_call.1} parent=11 // pred_check
          %p164 = pneg %p160
        $region78: #{tpu_custom_call.1} parent=11 // pred_check_branch
          %166 = sbr.rel (%p164) target = $region80
        $region79: #{tpu_custom_call.1} parent=11 // pred_region
          %s167 = sshllo.u32 0, 1
          loop: start=0, step=1, limit=1
          $region81: #{tpu_custom_call.1} parent=79 // loop_pre_header
            _
          $region82: #{tpu_custom_call.1} parent=79 // loop_header
            %s169 = sphi 0, %s173
            %p170 = scmp.ge.s32.totalorder %s169, 1
            %s174 = sphi %s157, %s157
            %s175 = sphi %s158, %s158
          $region83: #{tpu_custom_call.1} parent=79 // loop_header_branch
            %172 = sbr.rel (%p170) target = $region87
          $region84: #{tpu_custom_call.1} parent=79 // loop_body
            %v176 = vld [vmem:[%s174] sm:%s167]
            %177 = vst [vmem:[%s175] sm:%s167] %v176
          $region85: #{tpu_custom_call.1} parent=79 // loop_footer
            %s173 = sadd.s32 1, %s169
          $region86: #{tpu_custom_call.1} parent=79 // loop_footer_branch
            %168 = sbr.rel target = $region82
          $region87: #{tpu_custom_call.1} parent=79 // loop_exit
            _
        $region80: #{tpu_custom_call.1} parent=11 // pred_fallthru
          _
        // Predicated region
        $region99: #{tpu_custom_call.1} parent=11 // pred_check
          _
        $region100: #{tpu_custom_call.1} parent=11 // pred_check_branch
          %201 = sbr.rel (0) target = $region102
        $region101: #{tpu_custom_call.1} parent=11 // pred_region
          %202 = vsyncadd [#allocation4], 16
        $region102: #{tpu_custom_call.1} parent=11 // pred_fallthru
          _
        %s203 = sadd.s32 %s60, 3
        %s204 = sld [smem:[#allocation6 + %s203]]
        %s205 = scalar_lea.vmem %s2, %s204
        %s206 = scalar_lea.vmem [#allocation2], 3
        %p208 = scmp.lt.u32.totalorder 1, 8
        %p209 = pneg %p208
        // Predicated region
        $region103: #{tpu_custom_call.1} parent=11 // pred_check
          _
        $region104: #{tpu_custom_call.1} parent=11 // pred_check_branch
          %211 = sbr.rel (%p208) target = $region106
        $region105: #{tpu_custom_call.1} parent=11 // pred_region
          %s226 = sand.u32 1, 7
          %p227 = scmp.eq.s32.totalorder %s226, 0
          %p228 = pneg %p227
          // Predicated region
          $region118: #{tpu_custom_call.1} parent=105 // pred_check
            _
          $region119: #{tpu_custom_call.1} parent=105 // pred_check_branch
            %230 = sbr.rel (%p227) target = $region121
          $region120: #{tpu_custom_call.1} parent=105 // pred_region
            %s231 = sand.u32 1, 7
            %s232 = ssub.s32 1, %s231
            %s233 = scalar_lea.vmem %s205, %s232
            %s234 = ssub.s32 1, %s231
            %s235 = scalar_lea.vmem %s206, %s234 [#allocation2]
            %s236 = sshllo.u32 0, %s231
            loop: start=0, step=1, limit=1
            $region122: #{tpu_custom_call.1} parent=120 // loop_pre_header
              _
            $region123: #{tpu_custom_call.1} parent=120 // loop_header
              %s238 = sphi 0, %s242
              %p239 = scmp.ge.s32.totalorder %s238, 1
              %s243 = sphi %s233, %s233
              %s244 = sphi %s235, %s235
            $region124: #{tpu_custom_call.1} parent=120 // loop_header_branch
              %241 = sbr.rel (%p239) target = $region128
            $region125: #{tpu_custom_call.1} parent=120 // loop_body
              %v245 = vld [vmem:[%s243] sm:%s236]
              %246 = vst [vmem:[%s244] sm:%s236] %v245
            $region126: #{tpu_custom_call.1} parent=120 // loop_footer
              %s242 = sadd.s32 1, %s238
            $region127: #{tpu_custom_call.1} parent=120 // loop_footer_branch
              %237 = sbr.rel target = $region123
            $region128: #{tpu_custom_call.1} parent=120 // loop_exit
              _
          $region121: #{tpu_custom_call.1} parent=105 // pred_fallthru
            _
        $region106: #{tpu_custom_call.1} parent=11 // pred_fallthru
          _
        // Predicated region
        $region107: #{tpu_custom_call.1} parent=11 // pred_check
          %p212 = pneg %p208
        $region108: #{tpu_custom_call.1} parent=11 // pred_check_branch
          %214 = sbr.rel (%p212) target = $region110
        $region109: #{tpu_custom_call.1} parent=11 // pred_region
          %s215 = sshllo.u32 0, 1
          loop: start=0, step=1, limit=1
          $region111: #{tpu_custom_call.1} parent=109 // loop_pre_header
            _
          $region112: #{tpu_custom_call.1} parent=109 // loop_header
            %s217 = sphi 0, %s221
            %p218 = scmp.ge.s32.totalorder %s217, 1
            %s222 = sphi %s205, %s205
            %s223 = sphi %s206, %s206
          $region113: #{tpu_custom_call.1} parent=109 // loop_header_branch
            %220 = sbr.rel (%p218) target = $region117
          $region114: #{tpu_custom_call.1} parent=109 // loop_body
            %v224 = vld [vmem:[%s222] sm:%s215]
            %225 = vst [vmem:[%s223] sm:%s215] %v224
          $region115: #{tpu_custom_call.1} parent=109 // loop_footer
            %s221 = sadd.s32 1, %s217
          $region116: #{tpu_custom_call.1} parent=109 // loop_footer_branch
            %216 = sbr.rel target = $region112
          $region117: #{tpu_custom_call.1} parent=109 // loop_exit
            _
        $region110: #{tpu_custom_call.1} parent=11 // pred_fallthru
          _
        // Predicated region
        $region129: #{tpu_custom_call.1} parent=11 // pred_check
          _
        $region130: #{tpu_custom_call.1} parent=11 // pred_check_branch
          %249 = sbr.rel (0) target = $region132
        $region131: #{tpu_custom_call.1} parent=11 // pred_region
          %250 = vsyncadd [#allocation4], 16
        $region132: #{tpu_custom_call.1} parent=11 // pred_fallthru
          _
        %s251 = sadd.s32 %s60, 4
        %s252 = sld [smem:[#allocation6 + %s251]]
        %s253 = scalar_lea.vmem %s2, %s252
        %s254 = scalar_lea.vmem [#allocation2], 4
        %p256 = scmp.lt.u32.totalorder 1, 8
        %p257 = pneg %p256
        // Predicated region
        $region133: #{tpu_custom_call.1} parent=11 // pred_check
          _
        $region134: #{tpu_custom_call.1} parent=11 // pred_check_branch
          %259 = sbr.rel (%p256) target = $region136
        $region135: #{tpu_custom_call.1} parent=11 // pred_region
          %s274 = sand.u32 1, 7
          %p275 = scmp.eq.s32.totalorder %s274, 0
          %p276 = pneg %p275
          // Predicated region
          $region148: #{tpu_custom_call.1} parent=135 // pred_check
            _
          $region149: #{tpu_custom_call.1} parent=135 // pred_check_branch
            %278 = sbr.rel (%p275) target = $region151
          $region150: #{tpu_custom_call.1} parent=135 // pred_region
            %s279 = sand.u32 1, 7
            %s280 = ssub.s32 1, %s279
            %s281 = scalar_lea.vmem %s253, %s280
            %s282 = ssub.s32 1, %s279
            %s283 = scalar_lea.vmem %s254, %s282 [#allocation2]
            %s284 = sshllo.u32 0, %s279
            loop: start=0, step=1, limit=1
            $region152: #{tpu_custom_call.1} parent=150 // loop_pre_header
              _
            $region153: #{tpu_custom_call.1} parent=150 // loop_header
              %s286 = sphi 0, %s290
              %p287 = scmp.ge.s32.totalorder %s286, 1
              %s291 = sphi %s281, %s281
              %s292 = sphi %s283, %s283
            $region154: #{tpu_custom_call.1} parent=150 // loop_header_branch
              %289 = sbr.rel (%p287) target = $region158
            $region155: #{tpu_custom_call.1} parent=150 // loop_body
              %v293 = vld [vmem:[%s291] sm:%s284]
              %294 = vst [vmem:[%s292] sm:%s284] %v293
            $region156: #{tpu_custom_call.1} parent=150 // loop_footer
              %s290 = sadd.s32 1, %s286
            $region157: #{tpu_custom_call.1} parent=150 // loop_footer_branch
              %285 = sbr.rel target = $region153
            $region158: #{tpu_custom_call.1} parent=150 // loop_exit
              _
          $region151: #{tpu_custom_call.1} parent=135 // pred_fallthru
            _
        $region136: #{tpu_custom_call.1} parent=11 // pred_fallthru
          _
        // Predicated region
        $region137: #{tpu_custom_call.1} parent=11 // pred_check
          %p260 = pneg %p256
        $region138: #{tpu_custom_call.1} parent=11 // pred_check_branch
          %262 = sbr.rel (%p260) target = $region140
        $region139: #{tpu_custom_call.1} parent=11 // pred_region
          %s263 = sshllo.u32 0, 1
          loop: start=0, step=1, limit=1
          $region141: #{tpu_custom_call.1} parent=139 // loop_pre_header
            _
          $region142: #{tpu_custom_call.1} parent=139 // loop_header
            %s265 = sphi 0, %s269
            %p266 = scmp.ge.s32.totalorder %s265, 1
            %s270 = sphi %s253, %s253
            %s271 = sphi %s254, %s254
          $region143: #{tpu_custom_call.1} parent=139 // loop_header_branch
            %268 = sbr.rel (%p266) target = $region147
          $region144: #{tpu_custom_call.1} parent=139 // loop_body
            %v272 = vld [vmem:[%s270] sm:%s263]
            %273 = vst [vmem:[%s271] sm:%s263] %v272
          $region145: #{tpu_custom_call.1} parent=139 // loop_footer
            %s269 = sadd.s32 1, %s265
          $region146: #{tpu_custom_call.1} parent=139 // loop_footer_branch
            %264 = sbr.rel target = $region142
          $region147: #{tpu_custom_call.1} parent=139 // loop_exit
            _
        $region140: #{tpu_custom_call.1} parent=11 // pred_fallthru
          _
        // Predicated region
        $region159: #{tpu_custom_call.1} parent=11 // pred_check
          _
        $region160: #{tpu_custom_call.1} parent=11 // pred_check_branch
          %297 = sbr.rel (0) target = $region162
        $region161: #{tpu_custom_call.1} parent=11 // pred_region
          %298 = vsyncadd [#allocation4], 16
        $region162: #{tpu_custom_call.1} parent=11 // pred_fallthru
          _
        %s299 = sadd.s32 %s60, 5
        %s300 = sld [smem:[#allocation6 + %s299]]
        %s301 = scalar_lea.vmem %s2, %s300
        %s302 = scalar_lea.vmem [#allocation2], 5
        %p304 = scmp.lt.u32.totalorder 1, 8
        %p305 = pneg %p304
        // Predicated region
        $region163: #{tpu_custom_call.1} parent=11 // pred_check
          _
        $region164: #{tpu_custom_call.1} parent=11 // pred_check_branch
          %307 = sbr.rel (%p304) target = $region166
        $region165: #{tpu_custom_call.1} parent=11 // pred_region
          %s322 = sand.u32 1, 7
          %p323 = scmp.eq.s32.totalorder %s322, 0
          %p324 = pneg %p323
          // Predicated region
          $region178: #{tpu_custom_call.1} parent=165 // pred_check
            _
          $region179: #{tpu_custom_call.1} parent=165 // pred_check_branch
            %326 = sbr.rel (%p323) target = $region181
          $region180: #{tpu_custom_call.1} parent=165 // pred_region
            %s327 = sand.u32 1, 7
            %s328 = ssub.s32 1, %s327
            %s329 = scalar_lea.vmem %s301, %s328
            %s330 = ssub.s32 1, %s327
            %s331 = scalar_lea.vmem %s302, %s330 [#allocation2]
            %s332 = sshllo.u32 0, %s327
            loop: start=0, step=1, limit=1
            $region182: #{tpu_custom_call.1} parent=180 // loop_pre_header
              _
            $region183: #{tpu_custom_call.1} parent=180 // loop_header
              %s334 = sphi 0, %s338
              %p335 = scmp.ge.s32.totalorder %s334, 1
              %s339 = sphi %s329, %s329
              %s340 = sphi %s331, %s331
            $region184: #{tpu_custom_call.1} parent=180 // loop_header_branch
              %337 = sbr.rel (%p335) target = $region188
            $region185: #{tpu_custom_call.1} parent=180 // loop_body
              %v341 = vld [vmem:[%s339] sm:%s332]
              %342 = vst [vmem:[%s340] sm:%s332] %v341
            $region186: #{tpu_custom_call.1} parent=180 // loop_footer
              %s338 = sadd.s32 1, %s334
            $region187: #{tpu_custom_call.1} parent=180 // loop_footer_branch
              %333 = sbr.rel target = $region183
            $region188: #{tpu_custom_call.1} parent=180 // loop_exit
              _
          $region181: #{tpu_custom_call.1} parent=165 // pred_fallthru
            _
        $region166: #{tpu_custom_call.1} parent=11 // pred_fallthru
          _
        // Predicated region
        $region167: #{tpu_custom_call.1} parent=11 // pred_check
          %p308 = pneg %p304
        $region168: #{tpu_custom_call.1} parent=11 // pred_check_branch
          %310 = sbr.rel (%p308) target = $region170
        $region169: #{tpu_custom_call.1} parent=11 // pred_region
          %s311 = sshllo.u32 0, 1
          loop: start=0, step=1, limit=1
          $region171: #{tpu_custom_call.1} parent=169 // loop_pre_header
            _
          $region172: #{tpu_custom_call.1} parent=169 // loop_header
            %s313 = sphi 0, %s317
            %p314 = scmp.ge.s32.totalorder %s313, 1
            %s318 = sphi %s301, %s301
            %s319 = sphi %s302, %s302
          $region173: #{tpu_custom_call.1} parent=169 // loop_header_branch
            %316 = sbr.rel (%p314) target = $region177
          $region174: #{tpu_custom_call.1} parent=169 // loop_body
            %v320 = vld [vmem:[%s318] sm:%s311]
            %321 = vst [vmem:[%s319] sm:%s311] %v320
          $region175: #{tpu_custom_call.1} parent=169 // loop_footer
            %s317 = sadd.s32 1, %s313
          $region176: #{tpu_custom_call.1} parent=169 // loop_footer_branch
            %312 = sbr.rel target = $region172
          $region177: #{tpu_custom_call.1} parent=169 // loop_exit
            _
        $region170: #{tpu_custom_call.1} parent=11 // pred_fallthru
          _
        // Predicated region
        $region189: #{tpu_custom_call.1} parent=11 // pred_check
          _
        $region190: #{tpu_custom_call.1} parent=11 // pred_check_branch
          %345 = sbr.rel (0) target = $region192
        $region191: #{tpu_custom_call.1} parent=11 // pred_region
          %346 = vsyncadd [#allocation4], 16
        $region192: #{tpu_custom_call.1} parent=11 // pred_fallthru
          _
        %s347 = sadd.s32 %s60, 6
        %s348 = sld [smem:[#allocation6 + %s347]]
        %s349 = scalar_lea.vmem %s2, %s348
        %s350 = scalar_lea.vmem [#allocation2], 6
        %p352 = scmp.lt.u32.totalorder 1, 8
        %p353 = pneg %p352
        // Predicated region
        $region193: #{tpu_custom_call.1} parent=11 // pred_check
          _
        $region194: #{tpu_custom_call.1} parent=11 // pred_check_branch
          %355 = sbr.rel (%p352) target = $region196
        $region195: #{tpu_custom_call.1} parent=11 // pred_region
          %s370 = sand.u32 1, 7
          %p371 = scmp.eq.s32.totalorder %s370, 0
          %p372 = pneg %p371
          // Predicated region
          $region208: #{tpu_custom_call.1} parent=195 // pred_check
            _
          $region209: #{tpu_custom_call.1} parent=195 // pred_check_branch
            %374 = sbr.rel (%p371) target = $region211
          $region210: #{tpu_custom_call.1} parent=195 // pred_region
            %s375 = sand.u32 1, 7
            %s376 = ssub.s32 1, %s375
            %s377 = scalar_lea.vmem %s349, %s376
            %s378 = ssub.s32 1, %s375
            %s379 = scalar_lea.vmem %s350, %s378 [#allocation2]
            %s380 = sshllo.u32 0, %s375
            loop: start=0, step=1, limit=1
            $region212: #{tpu_custom_call.1} parent=210 // loop_pre_header
              _
            $region213: #{tpu_custom_call.1} parent=210 // loop_header
              %s382 = sphi 0, %s386
              %p383 = scmp.ge.s32.totalorder %s382, 1
              %s387 = sphi %s377, %s377
              %s388 = sphi %s379, %s379
            $region214: #{tpu_custom_call.1} parent=210 // loop_header_branch
              %385 = sbr.rel (%p383) target = $region218
            $region215: #{tpu_custom_call.1} parent=210 // loop_body
              %v389 = vld [vmem:[%s387] sm:%s380]
              %390 = vst [vmem:[%s388] sm:%s380] %v389
            $region216: #{tpu_custom_call.1} parent=210 // loop_footer
              %s386 = sadd.s32 1, %s382
            $region217: #{tpu_custom_call.1} parent=210 // loop_footer_branch
              %381 = sbr.rel target = $region213
            $region218: #{tpu_custom_call.1} parent=210 // loop_exit
              _
          $region211: #{tpu_custom_call.1} parent=195 // pred_fallthru
            _
        $region196: #{tpu_custom_call.1} parent=11 // pred_fallthru
          _
        // Predicated region
        $region197: #{tpu_custom_call.1} parent=11 // pred_check
          %p356 = pneg %p352
        $region198: #{tpu_custom_call.1} parent=11 // pred_check_branch
          %358 = sbr.rel (%p356) target = $region200
        $region199: #{tpu_custom_call.1} parent=11 // pred_region
          %s359 = sshllo.u32 0, 1
          loop: start=0, step=1, limit=1
          $region201: #{tpu_custom_call.1} parent=199 // loop_pre_header
            _
          $region202: #{tpu_custom_call.1} parent=199 // loop_header
            %s361 = sphi 0, %s365
            %p362 = scmp.ge.s32.totalorder %s361, 1
            %s366 = sphi %s349, %s349
            %s367 = sphi %s350, %s350
          $region203: #{tpu_custom_call.1} parent=199 // loop_header_branch
            %364 = sbr.rel (%p362) target = $region207
          $region204: #{tpu_custom_call.1} parent=199 // loop_body
            %v368 = vld [vmem:[%s366] sm:%s359]
            %369 = vst [vmem:[%s367] sm:%s359] %v368
          $region205: #{tpu_custom_call.1} parent=199 // loop_footer
            %s365 = sadd.s32 1, %s361
          $region206: #{tpu_custom_call.1} parent=199 // loop_footer_branch
            %360 = sbr.rel target = $region202
          $region207: #{tpu_custom_call.1} parent=199 // loop_exit
            _
        $region200: #{tpu_custom_call.1} parent=11 // pred_fallthru
          _
        // Predicated region
        $region219: #{tpu_custom_call.1} parent=11 // pred_check
          _
        $region220: #{tpu_custom_call.1} parent=11 // pred_check_branch
          %393 = sbr.rel (0) target = $region222
        $region221: #{tpu_custom_call.1} parent=11 // pred_region
          %394 = vsyncadd [#allocation4], 16
        $region222: #{tpu_custom_call.1} parent=11 // pred_fallthru
          _
        %s395 = sadd.s32 %s60, 7
        %s396 = sld [smem:[#allocation6 + %s395]]
        %s397 = scalar_lea.vmem %s2, %s396
        %s398 = scalar_lea.vmem [#allocation2], 7
        %p400 = scmp.lt.u32.totalorder 1, 8
        %p401 = pneg %p400
        // Predicated region
        $region223: #{tpu_custom_call.1} parent=11 // pred_check
          _
        $region224: #{tpu_custom_call.1} parent=11 // pred_check_branch
          %403 = sbr.rel (%p400) target = $region226
        $region225: #{tpu_custom_call.1} parent=11 // pred_region
          %s418 = sand.u32 1, 7
          %p419 = scmp.eq.s32.totalorder %s418, 0
          %p420 = pneg %p419
          // Predicated region
          $region238: #{tpu_custom_call.1} parent=225 // pred_check
            _
          $region239: #{tpu_custom_call.1} parent=225 // pred_check_branch
            %422 = sbr.rel (%p419) target = $region241
          $region240: #{tpu_custom_call.1} parent=225 // pred_region
            %s423 = sand.u32 1, 7
            %s424 = ssub.s32 1, %s423
            %s425 = scalar_lea.vmem %s397, %s424
            %s426 = ssub.s32 1, %s423
            %s427 = scalar_lea.vmem %s398, %s426 [#allocation2]
            %s428 = sshllo.u32 0, %s423
            loop: start=0, step=1, limit=1
            $region242: #{tpu_custom_call.1} parent=240 // loop_pre_header
              _
            $region243: #{tpu_custom_call.1} parent=240 // loop_header
              %s430 = sphi 0, %s434
              %p431 = scmp.ge.s32.totalorder %s430, 1
              %s435 = sphi %s425, %s425
              %s436 = sphi %s427, %s427
            $region244: #{tpu_custom_call.1} parent=240 // loop_header_branch
              %433 = sbr.rel (%p431) target = $region248
            $region245: #{tpu_custom_call.1} parent=240 // loop_body
              %v437 = vld [vmem:[%s435] sm:%s428]
              %438 = vst [vmem:[%s436] sm:%s428] %v437
            $region246: #{tpu_custom_call.1} parent=240 // loop_footer
              %s434 = sadd.s32 1, %s430
            $region247: #{tpu_custom_call.1} parent=240 // loop_footer_branch
              %429 = sbr.rel target = $region243
            $region248: #{tpu_custom_call.1} parent=240 // loop_exit
              _
          $region241: #{tpu_custom_call.1} parent=225 // pred_fallthru
            _
        $region226: #{tpu_custom_call.1} parent=11 // pred_fallthru
          _
        // Predicated region
        $region227: #{tpu_custom_call.1} parent=11 // pred_check
          %p404 = pneg %p400
        $region228: #{tpu_custom_call.1} parent=11 // pred_check_branch
          %406 = sbr.rel (%p404) target = $region230
        $region229: #{tpu_custom_call.1} parent=11 // pred_region
          %s407 = sshllo.u32 0, 1
          loop: start=0, step=1, limit=1
          $region231: #{tpu_custom_call.1} parent=229 // loop_pre_header
            _
          $region232: #{tpu_custom_call.1} parent=229 // loop_header
            %s409 = sphi 0, %s413
            %p410 = scmp.ge.s32.totalorder %s409, 1
            %s414 = sphi %s397, %s397
            %s415 = sphi %s398, %s398
          $region233: #{tpu_custom_call.1} parent=229 // loop_header_branch
            %412 = sbr.rel (%p410) target = $region237
          $region234: #{tpu_custom_call.1} parent=229 // loop_body
            %v416 = vld [vmem:[%s414] sm:%s407]
            %417 = vst [vmem:[%s415] sm:%s407] %v416
          $region235: #{tpu_custom_call.1} parent=229 // loop_footer
            %s413 = sadd.s32 1, %s409
          $region236: #{tpu_custom_call.1} parent=229 // loop_footer_branch
            %408 = sbr.rel target = $region232
          $region237: #{tpu_custom_call.1} parent=229 // loop_exit
            _
        $region230: #{tpu_custom_call.1} parent=11 // pred_fallthru
          _
        // Predicated region
        $region249: #{tpu_custom_call.1} parent=11 // pred_check
          _
        $region250: #{tpu_custom_call.1} parent=11 // pred_check_branch
          %441 = sbr.rel (0) target = $region252
        $region251: #{tpu_custom_call.1} parent=11 // pred_region
          %442 = vsyncadd [#allocation4], 16
        $region252: #{tpu_custom_call.1} parent=11 // pred_fallthru
          _
        %s443 = sld [smem:[#allocation7 + %s60]]
        %s444 = scalar_lea.vmem %s3, %s443
        %s445 = scalar_lea.sflag [#allocation4], 1
        %p447 = scmp.lt.u32.totalorder 1, 8
        %p448 = pneg %p447
        // Predicated region
        $region253: #{tpu_custom_call.1} parent=11 // pred_check
          _
        $region254: #{tpu_custom_call.1} parent=11 // pred_check_branch
          %450 = sbr.rel (%p447) target = $region256
        $region255: #{tpu_custom_call.1} parent=11 // pred_region
          %s465 = sand.u32 1, 7
          %p466 = scmp.eq.s32.totalorder %s465, 0
          %p467 = pneg %p466
          // Predicated region
          $region268: #{tpu_custom_call.1} parent=255 // pred_check
            _
          $region269: #{tpu_custom_call.1} parent=255 // pred_check_branch
            %469 = sbr.rel (%p466) target = $region271
          $region270: #{tpu_custom_call.1} parent=255 // pred_region
            %s470 = sand.u32 1, 7
            %s471 = ssub.s32 1, %s470
            %s472 = scalar_lea.vmem %s444, %s471
            %s473 = ssub.s32 1, %s470
            %s474 = scalar_lea.vmem [#allocation3], %s473
            %s475 = sshllo.u32 0, %s470
            loop: start=0, step=1, limit=1
            $region272: #{tpu_custom_call.1} parent=270 // loop_pre_header
              _
            $region273: #{tpu_custom_call.1} parent=270 // loop_header
              %s477 = sphi 0, %s481
              %p478 = scmp.ge.s32.totalorder %s477, 1
              %s482 = sphi %s472, %s472
              %s483 = sphi %s474, %s474
            $region274: #{tpu_custom_call.1} parent=270 // loop_header_branch
              %480 = sbr.rel (%p478) target = $region278
            $region275: #{tpu_custom_call.1} parent=270 // loop_body
              %v484 = vld [vmem:[%s482] sm:%s475]
              %485 = vst [vmem:[%s483] sm:%s475] %v484
            $region276: #{tpu_custom_call.1} parent=270 // loop_footer
              %s481 = sadd.s32 1, %s477
            $region277: #{tpu_custom_call.1} parent=270 // loop_footer_branch
              %476 = sbr.rel target = $region273
            $region278: #{tpu_custom_call.1} parent=270 // loop_exit
              _
          $region271: #{tpu_custom_call.1} parent=255 // pred_fallthru
            _
        $region256: #{tpu_custom_call.1} parent=11 // pred_fallthru
          _
        // Predicated region
        $region257: #{tpu_custom_call.1} parent=11 // pred_check
          %p451 = pneg %p447
        $region258: #{tpu_custom_call.1} parent=11 // pred_check_branch
          %453 = sbr.rel (%p451) target = $region260
        $region259: #{tpu_custom_call.1} parent=11 // pred_region
          %s454 = sshllo.u32 0, 1
          loop: start=0, step=1, limit=1
          $region261: #{tpu_custom_call.1} parent=259 // loop_pre_header
            _
          $region262: #{tpu_custom_call.1} parent=259 // loop_header
            %s456 = sphi 0, %s460
            %p457 = scmp.ge.s32.totalorder %s456, 1
            %s461 = sphi %s444, %s444
            %s462 = sphi [#allocation3], [#allocation3]
          $region263: #{tpu_custom_call.1} parent=259 // loop_header_branch
            %459 = sbr.rel (%p457) target = $region267
          $region264: #{tpu_custom_call.1} parent=259 // loop_body
            %v463 = vld [vmem:[%s461] sm:%s454]
            %464 = vst [vmem:[%s462] sm:%s454] %v463
          $region265: #{tpu_custom_call.1} parent=259 // loop_footer
            %s460 = sadd.s32 1, %s456
          $region266: #{tpu_custom_call.1} parent=259 // loop_footer_branch
            %455 = sbr.rel target = $region262
          $region267: #{tpu_custom_call.1} parent=259 // loop_exit
            _
        $region260: #{tpu_custom_call.1} parent=11 // pred_fallthru
          _
        // Predicated region
        $region279: #{tpu_custom_call.1} parent=11 // pred_check
          _
        $region280: #{tpu_custom_call.1} parent=11 // pred_check_branch
          %488 = sbr.rel (0) target = $region282
        $region281: #{tpu_custom_call.1} parent=11 // pred_region
          %489 = vsyncadd %s445, 16
        $region282: #{tpu_custom_call.1} parent=11 // pred_fallthru
          _
        %s490 = sld [smem:[#allocation7 + %s107]]
        %s491 = scalar_lea.vmem %s3, %s490
        %s492 = scalar_lea.vmem [#allocation3], 1
        %p494 = scmp.lt.u32.totalorder 1, 8
        %p495 = pneg %p494
        // Predicated region
        $region283: #{tpu_custom_call.1} parent=11 // pred_check
          _
        $region284: #{tpu_custom_call.1} parent=11 // pred_check_branch
          %497 = sbr.rel (%p494) target = $region286
        $region285: #{tpu_custom_call.1} parent=11 // pred_region
          %s512 = sand.u32 1, 7
          %p513 = scmp.eq.s32.totalorder %s512, 0
          %p514 = pneg %p513
          // Predicated region
          $region298: #{tpu_custom_call.1} parent=285 // pred_check
            _
          $region299: #{tpu_custom_call.1} parent=285 // pred_check_branch
            %516 = sbr.rel (%p513) target = $region301
          $region300: #{tpu_custom_call.1} parent=285 // pred_region
            %s517 = sand.u32 1, 7
            %s518 = ssub.s32 1, %s517
            %s519 = scalar_lea.vmem %s491, %s518
            %s520 = ssub.s32 1, %s517
            %s521 = scalar_lea.vmem %s492, %s520 [#allocation3]
            %s522 = sshllo.u32 0, %s517
            loop: start=0, step=1, limit=1
            $region302: #{tpu_custom_call.1} parent=300 // loop_pre_header
              _
            $region303: #{tpu_custom_call.1} parent=300 // loop_header
              %s524 = sphi 0, %s528
              %p525 = scmp.ge.s32.totalorder %s524, 1
              %s529 = sphi %s519, %s519
              %s530 = sphi %s521, %s521
            $region304: #{tpu_custom_call.1} parent=300 // loop_header_branch
              %527 = sbr.rel (%p525) target = $region308
            $region305: #{tpu_custom_call.1} parent=300 // loop_body
              %v531 = vld [vmem:[%s529] sm:%s522]
              %532 = vst [vmem:[%s530] sm:%s522] %v531
            $region306: #{tpu_custom_call.1} parent=300 // loop_footer
              %s528 = sadd.s32 1, %s524
            $region307: #{tpu_custom_call.1} parent=300 // loop_footer_branch
              %523 = sbr.rel target = $region303
            $region308: #{tpu_custom_call.1} parent=300 // loop_exit
              _
          $region301: #{tpu_custom_call.1} parent=285 // pred_fallthru
            _
        $region286: #{tpu_custom_call.1} parent=11 // pred_fallthru
          _
        // Predicated region
        $region287: #{tpu_custom_call.1} parent=11 // pred_check
          %p498 = pneg %p494
        $region288: #{tpu_custom_call.1} parent=11 // pred_check_branch
          %500 = sbr.rel (%p498) target = $region290
        $region289: #{tpu_custom_call.1} parent=11 // pred_region
          %s501 = sshllo.u32 0, 1
          loop: start=0, step=1, limit=1
          $region291: #{tpu_custom_call.1} parent=289 // loop_pre_header
            _
          $region292: #{tpu_custom_call.1} parent=289 // loop_header
            %s503 = sphi 0, %s507
            %p504 = scmp.ge.s32.totalorder %s503, 1
            %s508 = sphi %s491, %s491
            %s509 = sphi %s492, %s492
          $region293: #{tpu_custom_call.1} parent=289 // loop_header_branch
            %506 = sbr.rel (%p504) target = $region297
          $region294: #{tpu_custom_call.1} parent=289 // loop_body
            %v510 = vld [vmem:[%s508] sm:%s501]
            %511 = vst [vmem:[%s509] sm:%s501] %v510
          $region295: #{tpu_custom_call.1} parent=289 // loop_footer
            %s507 = sadd.s32 1, %s503
          $region296: #{tpu_custom_call.1} parent=289 // loop_footer_branch
            %502 = sbr.rel target = $region292
          $region297: #{tpu_custom_call.1} parent=289 // loop_exit
            _
        $region290: #{tpu_custom_call.1} parent=11 // pred_fallthru
          _
        // Predicated region
        $region309: #{tpu_custom_call.1} parent=11 // pred_check
          _
        $region310: #{tpu_custom_call.1} parent=11 // pred_check_branch
          %535 = sbr.rel (0) target = $region312
        $region311: #{tpu_custom_call.1} parent=11 // pred_region
          %536 = vsyncadd %s445, 16
        $region312: #{tpu_custom_call.1} parent=11 // pred_fallthru
          _
        %s537 = sld [smem:[#allocation7 + %s155]]
        %s538 = scalar_lea.vmem %s3, %s537
        %s539 = scalar_lea.vmem [#allocation3], 2
        %p541 = scmp.lt.u32.totalorder 1, 8
        %p542 = pneg %p541
        // Predicated region
        $region313: #{tpu_custom_call.1} parent=11 // pred_check
          _
        $region314: #{tpu_custom_call.1} parent=11 // pred_check_branch
          %544 = sbr.rel (%p541) target = $region316
        $region315: #{tpu_custom_call.1} parent=11 // pred_region
          %s559 = sand.u32 1, 7
          %p560 = scmp.eq.s32.totalorder %s559, 0
          %p561 = pneg %p560
          // Predicated region
          $region328: #{tpu_custom_call.1} parent=315 // pred_check
            _
          $region329: #{tpu_custom_call.1} parent=315 // pred_check_branch
            %563 = sbr.rel (%p560) target = $region331
          $region330: #{tpu_custom_call.1} parent=315 // pred_region
            %s564 = sand.u32 1, 7
            %s565 = ssub.s32 1, %s564
            %s566 = scalar_lea.vmem %s538, %s565
            %s567 = ssub.s32 1, %s564
            %s568 = scalar_lea.vmem %s539, %s567 [#allocation3]
            %s569 = sshllo.u32 0, %s564
            loop: start=0, step=1, limit=1
            $region332: #{tpu_custom_call.1} parent=330 // loop_pre_header
              _
            $region333: #{tpu_custom_call.1} parent=330 // loop_header
              %s571 = sphi 0, %s575
              %p572 = scmp.ge.s32.totalorder %s571, 1
              %s576 = sphi %s566, %s566
              %s577 = sphi %s568, %s568
            $region334: #{tpu_custom_call.1} parent=330 // loop_header_branch
              %574 = sbr.rel (%p572) target = $region338
            $region335: #{tpu_custom_call.1} parent=330 // loop_body
              %v578 = vld [vmem:[%s576] sm:%s569]
              %579 = vst [vmem:[%s577] sm:%s569] %v578
            $region336: #{tpu_custom_call.1} parent=330 // loop_footer
              %s575 = sadd.s32 1, %s571
            $region337: #{tpu_custom_call.1} parent=330 // loop_footer_branch
              %570 = sbr.rel target = $region333
            $region338: #{tpu_custom_call.1} parent=330 // loop_exit
              _
          $region331: #{tpu_custom_call.1} parent=315 // pred_fallthru
            _
        $region316: #{tpu_custom_call.1} parent=11 // pred_fallthru
          _
        // Predicated region
        $region317: #{tpu_custom_call.1} parent=11 // pred_check
          %p545 = pneg %p541
        $region318: #{tpu_custom_call.1} parent=11 // pred_check_branch
          %547 = sbr.rel (%p545) target = $region320
        $region319: #{tpu_custom_call.1} parent=11 // pred_region
          %s548 = sshllo.u32 0, 1
          loop: start=0, step=1, limit=1
          $region321: #{tpu_custom_call.1} parent=319 // loop_pre_header
            _
          $region322: #{tpu_custom_call.1} parent=319 // loop_header
            %s550 = sphi 0, %s554
            %p551 = scmp.ge.s32.totalorder %s550, 1
            %s555 = sphi %s538, %s538
            %s556 = sphi %s539, %s539
          $region323: #{tpu_custom_call.1} parent=319 // loop_header_branch
            %553 = sbr.rel (%p551) target = $region327
          $region324: #{tpu_custom_call.1} parent=319 // loop_body
            %v557 = vld [vmem:[%s555] sm:%s548]
            %558 = vst [vmem:[%s556] sm:%s548] %v557
          $region325: #{tpu_custom_call.1} parent=319 // loop_footer
            %s554 = sadd.s32 1, %s550
          $region326: #{tpu_custom_call.1} parent=319 // loop_footer_branch
            %549 = sbr.rel target = $region322
          $region327: #{tpu_custom_call.1} parent=319 // loop_exit
            _
        $region320: #{tpu_custom_call.1} parent=11 // pred_fallthru
          _
        // Predicated region
        $region339: #{tpu_custom_call.1} parent=11 // pred_check
          _
        $region340: #{tpu_custom_call.1} parent=11 // pred_check_branch
          %582 = sbr.rel (0) target = $region342
        $region341: #{tpu_custom_call.1} parent=11 // pred_region
          %583 = vsyncadd %s445, 16
        $region342: #{tpu_custom_call.1} parent=11 // pred_fallthru
          _
        %s584 = sld [smem:[#allocation7 + %s203]]
        %s585 = scalar_lea.vmem %s3, %s584
        %s586 = scalar_lea.vmem [#allocation3], 3
        %p588 = scmp.lt.u32.totalorder 1, 8
        %p589 = pneg %p588
        // Predicated region
        $region343: #{tpu_custom_call.1} parent=11 // pred_check
          _
        $region344: #{tpu_custom_call.1} parent=11 // pred_check_branch
          %591 = sbr.rel (%p588) target = $region346
        $region345: #{tpu_custom_call.1} parent=11 // pred_region
          %s606 = sand.u32 1, 7
          %p607 = scmp.eq.s32.totalorder %s606, 0
          %p608 = pneg %p607
          // Predicated region
          $region358: #{tpu_custom_call.1} parent=345 // pred_check
            _
          $region359: #{tpu_custom_call.1} parent=345 // pred_check_branch
            %610 = sbr.rel (%p607) target = $region361
          $region360: #{tpu_custom_call.1} parent=345 // pred_region
            %s611 = sand.u32 1, 7
            %s612 = ssub.s32 1, %s611
            %s613 = scalar_lea.vmem %s585, %s612
            %s614 = ssub.s32 1, %s611
            %s615 = scalar_lea.vmem %s586, %s614 [#allocation3]
            %s616 = sshllo.u32 0, %s611
            loop: start=0, step=1, limit=1
            $region362: #{tpu_custom_call.1} parent=360 // loop_pre_header
              _
            $region363: #{tpu_custom_call.1} parent=360 // loop_header
              %s618 = sphi 0, %s622
              %p619 = scmp.ge.s32.totalorder %s618, 1
              %s623 = sphi %s613, %s613
              %s624 = sphi %s615, %s615
            $region364: #{tpu_custom_call.1} parent=360 // loop_header_branch
              %621 = sbr.rel (%p619) target = $region368
            $region365: #{tpu_custom_call.1} parent=360 // loop_body
              %v625 = vld [vmem:[%s623] sm:%s616]
              %626 = vst [vmem:[%s624] sm:%s616] %v625
            $region366: #{tpu_custom_call.1} parent=360 // loop_footer
              %s622 = sadd.s32 1, %s618
            $region367: #{tpu_custom_call.1} parent=360 // loop_footer_branch
              %617 = sbr.rel target = $region363
            $region368: #{tpu_custom_call.1} parent=360 // loop_exit
              _
          $region361: #{tpu_custom_call.1} parent=345 // pred_fallthru
            _
        $region346: #{tpu_custom_call.1} parent=11 // pred_fallthru
          _
        // Predicated region
        $region347: #{tpu_custom_call.1} parent=11 // pred_check
          %p592 = pneg %p588
        $region348: #{tpu_custom_call.1} parent=11 // pred_check_branch
          %594 = sbr.rel (%p592) target = $region350
        $region349: #{tpu_custom_call.1} parent=11 // pred_region
          %s595 = sshllo.u32 0, 1
          loop: start=0, step=1, limit=1
          $region351: #{tpu_custom_call.1} parent=349 // loop_pre_header
            _
          $region352: #{tpu_custom_call.1} parent=349 // loop_header
            %s597 = sphi 0, %s601
            %p598 = scmp.ge.s32.totalorder %s597, 1
            %s602 = sphi %s585, %s585
            %s603 = sphi %s586, %s586
          $region353: #{tpu_custom_call.1} parent=349 // loop_header_branch
            %600 = sbr.rel (%p598) target = $region357
          $region354: #{tpu_custom_call.1} parent=349 // loop_body
            %v604 = vld [vmem:[%s602] sm:%s595]
            %605 = vst [vmem:[%s603] sm:%s595] %v604
          $region355: #{tpu_custom_call.1} parent=349 // loop_footer
            %s601 = sadd.s32 1, %s597
          $region356: #{tpu_custom_call.1} parent=349 // loop_footer_branch
            %596 = sbr.rel target = $region352
          $region357: #{tpu_custom_call.1} parent=349 // loop_exit
            _
        $region350: #{tpu_custom_call.1} parent=11 // pred_fallthru
          _
        // Predicated region
        $region369: #{tpu_custom_call.1} parent=11 // pred_check
          _
        $region370: #{tpu_custom_call.1} parent=11 // pred_check_branch
          %629 = sbr.rel (0) target = $region372
        $region371: #{tpu_custom_call.1} parent=11 // pred_region
          %630 = vsyncadd %s445, 16
        $region372: #{tpu_custom_call.1} parent=11 // pred_fallthru
          _
        %s631 = sld [smem:[#allocation7 + %s251]]
        %s632 = scalar_lea.vmem %s3, %s631
        %s633 = scalar_lea.vmem [#allocation3], 4
        %p635 = scmp.lt.u32.totalorder 1, 8
        %p636 = pneg %p635
        // Predicated region
        $region373: #{tpu_custom_call.1} parent=11 // pred_check
          _
        $region374: #{tpu_custom_call.1} parent=11 // pred_check_branch
          %638 = sbr.rel (%p635) target = $region376
        $region375: #{tpu_custom_call.1} parent=11 // pred_region
          %s653 = sand.u32 1, 7
          %p654 = scmp.eq.s32.totalorder %s653, 0
          %p655 = pneg %p654
          // Predicated region
          $region388: #{tpu_custom_call.1} parent=375 // pred_check
            _
          $region389: #{tpu_custom_call.1} parent=375 // pred_check_branch
            %657 = sbr.rel (%p654) target = $region391
          $region390: #{tpu_custom_call.1} parent=375 // pred_region
            %s658 = sand.u32 1, 7
            %s659 = ssub.s32 1, %s658
            %s660 = scalar_lea.vmem %s632, %s659
            %s661 = ssub.s32 1, %s658
            %s662 = scalar_lea.vmem %s633, %s661 [#allocation3]
            %s663 = sshllo.u32 0, %s658
            loop: start=0, step=1, limit=1
            $region392: #{tpu_custom_call.1} parent=390 // loop_pre_header
              _
            $region393: #{tpu_custom_call.1} parent=390 // loop_header
              %s665 = sphi 0, %s669
              %p666 = scmp.ge.s32.totalorder %s665, 1
              %s670 = sphi %s660, %s660
              %s671 = sphi %s662, %s662
            $region394: #{tpu_custom_call.1} parent=390 // loop_header_branch
              %668 = sbr.rel (%p666) target = $region398
            $region395: #{tpu_custom_call.1} parent=390 // loop_body
              %v672 = vld [vmem:[%s670] sm:%s663]
              %673 = vst [vmem:[%s671] sm:%s663] %v672
            $region396: #{tpu_custom_call.1} parent=390 // loop_footer
              %s669 = sadd.s32 1, %s665
            $region397: #{tpu_custom_call.1} parent=390 // loop_footer_branch
              %664 = sbr.rel target = $region393
            $region398: #{tpu_custom_call.1} parent=390 // loop_exit
              _
          $region391: #{tpu_custom_call.1} parent=375 // pred_fallthru
            _
        $region376: #{tpu_custom_call.1} parent=11 // pred_fallthru
          _
        // Predicated region
        $region377: #{tpu_custom_call.1} parent=11 // pred_check
          %p639 = pneg %p635
        $region378: #{tpu_custom_call.1} parent=11 // pred_check_branch
          %641 = sbr.rel (%p639) target = $region380
        $region379: #{tpu_custom_call.1} parent=11 // pred_region
          %s642 = sshllo.u32 0, 1
          loop: start=0, step=1, limit=1
          $region381: #{tpu_custom_call.1} parent=379 // loop_pre_header
            _
          $region382: #{tpu_custom_call.1} parent=379 // loop_header
            %s644 = sphi 0, %s648
            %p645 = scmp.ge.s32.totalorder %s644, 1
            %s649 = sphi %s632, %s632
            %s650 = sphi %s633, %s633
          $region383: #{tpu_custom_call.1} parent=379 // loop_header_branch
            %647 = sbr.rel (%p645) target = $region387
          $region384: #{tpu_custom_call.1} parent=379 // loop_body
            %v651 = vld [vmem:[%s649] sm:%s642]
            %652 = vst [vmem:[%s650] sm:%s642] %v651
          $region385: #{tpu_custom_call.1} parent=379 // loop_footer
            %s648 = sadd.s32 1, %s644
          $region386: #{tpu_custom_call.1} parent=379 // loop_footer_branch
            %643 = sbr.rel target = $region382
          $region387: #{tpu_custom_call.1} parent=379 // loop_exit
            _
        $region380: #{tpu_custom_call.1} parent=11 // pred_fallthru
          _
        // Predicated region
        $region399: #{tpu_custom_call.1} parent=11 // pred_check
          _
        $region400: #{tpu_custom_call.1} parent=11 // pred_check_branch
          %676 = sbr.rel (0) target = $region402
        $region401: #{tpu_custom_call.1} parent=11 // pred_region
          %677 = vsyncadd %s445, 16
        $region402: #{tpu_custom_call.1} parent=11 // pred_fallthru
          _
        %s678 = sld [smem:[#allocation7 + %s299]]
        %s679 = scalar_lea.vmem %s3, %s678
        %s680 = scalar_lea.vmem [#allocation3], 5
        %p682 = scmp.lt.u32.totalorder 1, 8
        %p683 = pneg %p682
        // Predicated region
        $region403: #{tpu_custom_call.1} parent=11 // pred_check
          _
        $region404: #{tpu_custom_call.1} parent=11 // pred_check_branch
          %685 = sbr.rel (%p682) target = $region406
        $region405: #{tpu_custom_call.1} parent=11 // pred_region
          %s700 = sand.u32 1, 7
          %p701 = scmp.eq.s32.totalorder %s700, 0
          %p702 = pneg %p701
          // Predicated region
          $region418: #{tpu_custom_call.1} parent=405 // pred_check
            _
          $region419: #{tpu_custom_call.1} parent=405 // pred_check_branch
            %704 = sbr.rel (%p701) target = $region421
          $region420: #{tpu_custom_call.1} parent=405 // pred_region
            %s705 = sand.u32 1, 7
            %s706 = ssub.s32 1, %s705
            %s707 = scalar_lea.vmem %s679, %s706
            %s708 = ssub.s32 1, %s705
            %s709 = scalar_lea.vmem %s680, %s708 [#allocation3]
            %s710 = sshllo.u32 0, %s705
            loop: start=0, step=1, limit=1
            $region422: #{tpu_custom_call.1} parent=420 // loop_pre_header
              _
            $region423: #{tpu_custom_call.1} parent=420 // loop_header
              %s712 = sphi 0, %s716
              %p713 = scmp.ge.s32.totalorder %s712, 1
              %s717 = sphi %s707, %s707
              %s718 = sphi %s709, %s709
            $region424: #{tpu_custom_call.1} parent=420 // loop_header_branch
              %715 = sbr.rel (%p713) target = $region428
            $region425: #{tpu_custom_call.1} parent=420 // loop_body
              %v719 = vld [vmem:[%s717] sm:%s710]
              %720 = vst [vmem:[%s718] sm:%s710] %v719
            $region426: #{tpu_custom_call.1} parent=420 // loop_footer
              %s716 = sadd.s32 1, %s712
            $region427: #{tpu_custom_call.1} parent=420 // loop_footer_branch
              %711 = sbr.rel target = $region423
            $region428: #{tpu_custom_call.1} parent=420 // loop_exit
              _
          $region421: #{tpu_custom_call.1} parent=405 // pred_fallthru
            _
        $region406: #{tpu_custom_call.1} parent=11 // pred_fallthru
          _
        // Predicated region
        $region407: #{tpu_custom_call.1} parent=11 // pred_check
          %p686 = pneg %p682
        $region408: #{tpu_custom_call.1} parent=11 // pred_check_branch
          %688 = sbr.rel (%p686) target = $region410
        $region409: #{tpu_custom_call.1} parent=11 // pred_region
          %s689 = sshllo.u32 0, 1
          loop: start=0, step=1, limit=1
          $region411: #{tpu_custom_call.1} parent=409 // loop_pre_header
            _
          $region412: #{tpu_custom_call.1} parent=409 // loop_header
            %s691 = sphi 0, %s695
            %p692 = scmp.ge.s32.totalorder %s691, 1
            %s696 = sphi %s679, %s679
            %s697 = sphi %s680, %s680
          $region413: #{tpu_custom_call.1} parent=409 // loop_header_branch
            %694 = sbr.rel (%p692) target = $region417
          $region414: #{tpu_custom_call.1} parent=409 // loop_body
            %v698 = vld [vmem:[%s696] sm:%s689]
            %699 = vst [vmem:[%s697] sm:%s689] %v698
          $region415: #{tpu_custom_call.1} parent=409 // loop_footer
            %s695 = sadd.s32 1, %s691
          $region416: #{tpu_custom_call.1} parent=409 // loop_footer_branch
            %690 = sbr.rel target = $region412
          $region417: #{tpu_custom_call.1} parent=409 // loop_exit
            _
        $region410: #{tpu_custom_call.1} parent=11 // pred_fallthru
          _
        // Predicated region
        $region429: #{tpu_custom_call.1} parent=11 // pred_check
          _
        $region430: #{tpu_custom_call.1} parent=11 // pred_check_branch
          %723 = sbr.rel (0) target = $region432
        $region431: #{tpu_custom_call.1} parent=11 // pred_region
          %724 = vsyncadd %s445, 16
        $region432: #{tpu_custom_call.1} parent=11 // pred_fallthru
          _
        %s725 = sld [smem:[#allocation7 + %s347]]
        %s726 = scalar_lea.vmem %s3, %s725
        %s727 = scalar_lea.vmem [#allocation3], 6
        %p729 = scmp.lt.u32.totalorder 1, 8
        %p730 = pneg %p729
        // Predicated region
        $region433: #{tpu_custom_call.1} parent=11 // pred_check
          _
        $region434: #{tpu_custom_call.1} parent=11 // pred_check_branch
          %732 = sbr.rel (%p729) target = $region436
        $region435: #{tpu_custom_call.1} parent=11 // pred_region
          %s747 = sand.u32 1, 7
          %p748 = scmp.eq.s32.totalorder %s747, 0
          %p749 = pneg %p748
          // Predicated region
          $region448: #{tpu_custom_call.1} parent=435 // pred_check
            _
          $region449: #{tpu_custom_call.1} parent=435 // pred_check_branch
            %751 = sbr.rel (%p748) target = $region451
          $region450: #{tpu_custom_call.1} parent=435 // pred_region
            %s752 = sand.u32 1, 7
            %s753 = ssub.s32 1, %s752
            %s754 = scalar_lea.vmem %s726, %s753
            %s755 = ssub.s32 1, %s752
            %s756 = scalar_lea.vmem %s727, %s755 [#allocation3]
            %s757 = sshllo.u32 0, %s752
            loop: start=0, step=1, limit=1
            $region452: #{tpu_custom_call.1} parent=450 // loop_pre_header
              _
            $region453: #{tpu_custom_call.1} parent=450 // loop_header
              %s759 = sphi 0, %s763
              %p760 = scmp.ge.s32.totalorder %s759, 1
              %s764 = sphi %s754, %s754
              %s765 = sphi %s756, %s756
            $region454: #{tpu_custom_call.1} parent=450 // loop_header_branch
              %762 = sbr.rel (%p760) target = $region458
            $region455: #{tpu_custom_call.1} parent=450 // loop_body
              %v766 = vld [vmem:[%s764] sm:%s757]
              %767 = vst [vmem:[%s765] sm:%s757] %v766
            $region456: #{tpu_custom_call.1} parent=450 // loop_footer
              %s763 = sadd.s32 1, %s759
            $region457: #{tpu_custom_call.1} parent=450 // loop_footer_branch
              %758 = sbr.rel target = $region453
            $region458: #{tpu_custom_call.1} parent=450 // loop_exit
              _
          $region451: #{tpu_custom_call.1} parent=435 // pred_fallthru
            _
        $region436: #{tpu_custom_call.1} parent=11 // pred_fallthru
          _
        // Predicated region
        $region437: #{tpu_custom_call.1} parent=11 // pred_check
          %p733 = pneg %p729
        $region438: #{tpu_custom_call.1} parent=11 // pred_check_branch
          %735 = sbr.rel (%p733) target = $region440
        $region439: #{tpu_custom_call.1} parent=11 // pred_region
          %s736 = sshllo.u32 0, 1
          loop: start=0, step=1, limit=1
          $region441: #{tpu_custom_call.1} parent=439 // loop_pre_header
            _
          $region442: #{tpu_custom_call.1} parent=439 // loop_header
            %s738 = sphi 0, %s742
            %p739 = scmp.ge.s32.totalorder %s738, 1
            %s743 = sphi %s726, %s726
            %s744 = sphi %s727, %s727
          $region443: #{tpu_custom_call.1} parent=439 // loop_header_branch
            %741 = sbr.rel (%p739) target = $region447
          $region444: #{tpu_custom_call.1} parent=439 // loop_body
            %v745 = vld [vmem:[%s743] sm:%s736]
            %746 = vst [vmem:[%s744] sm:%s736] %v745
          $region445: #{tpu_custom_call.1} parent=439 // loop_footer
            %s742 = sadd.s32 1, %s738
          $region446: #{tpu_custom_call.1} parent=439 // loop_footer_branch
            %737 = sbr.rel target = $region442
          $region447: #{tpu_custom_call.1} parent=439 // loop_exit
            _
        $region440: #{tpu_custom_call.1} parent=11 // pred_fallthru
          _
        // Predicated region
        $region459: #{tpu_custom_call.1} parent=11 // pred_check
          _
        $region460: #{tpu_custom_call.1} parent=11 // pred_check_branch
          %770 = sbr.rel (0) target = $region462
        $region461: #{tpu_custom_call.1} parent=11 // pred_region
          %771 = vsyncadd %s445, 16
        $region462: #{tpu_custom_call.1} parent=11 // pred_fallthru
          _
        %s772 = sld [smem:[#allocation7 + %s395]]
        %s773 = scalar_lea.vmem %s3, %s772
        %s774 = scalar_lea.vmem [#allocation3], 7
        %p776 = scmp.lt.u32.totalorder 1, 8
        %p777 = pneg %p776
        // Predicated region
        $region463: #{tpu_custom_call.1} parent=11 // pred_check
          _
        $region464: #{tpu_custom_call.1} parent=11 // pred_check_branch
          %779 = sbr.rel (%p776) target = $region466
        $region465: #{tpu_custom_call.1} parent=11 // pred_region
          %s794 = sand.u32 1, 7
          %p795 = scmp.eq.s32.totalorder %s794, 0
          %p796 = pneg %p795
          // Predicated region
          $region478: #{tpu_custom_call.1} parent=465 // pred_check
            _
          $region479: #{tpu_custom_call.1} parent=465 // pred_check_branch
            %798 = sbr.rel (%p795) target = $region481
          $region480: #{tpu_custom_call.1} parent=465 // pred_region
            %s799 = sand.u32 1, 7
            %s800 = ssub.s32 1, %s799
            %s801 = scalar_lea.vmem %s773, %s800
            %s802 = ssub.s32 1, %s799
            %s803 = scalar_lea.vmem %s774, %s802 [#allocation3]
            %s804 = sshllo.u32 0, %s799
            loop: start=0, step=1, limit=1
            $region482: #{tpu_custom_call.1} parent=480 // loop_pre_header
              _
            $region483: #{tpu_custom_call.1} parent=480 // loop_header
              %s806 = sphi 0, %s810
              %p807 = scmp.ge.s32.totalorder %s806, 1
              %s811 = sphi %s801, %s801
              %s812 = sphi %s803, %s803
            $region484: #{tpu_custom_call.1} parent=480 // loop_header_branch
              %809 = sbr.rel (%p807) target = $region488
            $region485: #{tpu_custom_call.1} parent=480 // loop_body
              %v813 = vld [vmem:[%s811] sm:%s804]
              %814 = vst [vmem:[%s812] sm:%s804] %v813
            $region486: #{tpu_custom_call.1} parent=480 // loop_footer
              %s810 = sadd.s32 1, %s806
            $region487: #{tpu_custom_call.1} parent=480 // loop_footer_branch
              %805 = sbr.rel target = $region483
            $region488: #{tpu_custom_call.1} parent=480 // loop_exit
              _
          $region481: #{tpu_custom_call.1} parent=465 // pred_fallthru
            _
        $region466: #{tpu_custom_call.1} parent=11 // pred_fallthru
          _
        // Predicated region
        $region467: #{tpu_custom_call.1} parent=11 // pred_check
          %p780 = pneg %p776
        $region468: #{tpu_custom_call.1} parent=11 // pred_check_branch
          %782 = sbr.rel (%p780) target = $region470
        $region469: #{tpu_custom_call.1} parent=11 // pred_region
          %s783 = sshllo.u32 0, 1
          loop: start=0, step=1, limit=1
          $region471: #{tpu_custom_call.1} parent=469 // loop_pre_header
            _
          $region472: #{tpu_custom_call.1} parent=469 // loop_header
            %s785 = sphi 0, %s789
            %p786 = scmp.ge.s32.totalorder %s785, 1
            %s790 = sphi %s773, %s773
            %s791 = sphi %s774, %s774
          $region473: #{tpu_custom_call.1} parent=469 // loop_header_branch
            %788 = sbr.rel (%p786) target = $region477
          $region474: #{tpu_custom_call.1} parent=469 // loop_body
            %v792 = vld [vmem:[%s790] sm:%s783]
            %793 = vst [vmem:[%s791] sm:%s783] %v792
          $region475: #{tpu_custom_call.1} parent=469 // loop_footer
            %s789 = sadd.s32 1, %s785
          $region476: #{tpu_custom_call.1} parent=469 // loop_footer_branch
            %784 = sbr.rel target = $region472
          $region477: #{tpu_custom_call.1} parent=469 // loop_exit
            _
        $region470: #{tpu_custom_call.1} parent=11 // pred_fallthru
          _
        // Predicated region
        $region489: #{tpu_custom_call.1} parent=11 // pred_check
          _
        $region490: #{tpu_custom_call.1} parent=11 // pred_check_branch
          %817 = sbr.rel (0) target = $region492
        $region491: #{tpu_custom_call.1} parent=11 // pred_region
          %818 = vsyncadd %s445, 16
        $region492: #{tpu_custom_call.1} parent=11 // pred_fallthru
          _
        %s819 = sshra.s32 %s60, 7
        %s820 = sand.u32 %s60, 127
        %s821 = sadd.s32 %s819, 1
        %s822 = smul.u32 %s821, 128
        %s823 = sshra.s32 %s60, 7
        %s824 = sand.u32 %s60, 127
        %s825 = sadd.s32 %s822, %s824
        %s826 = sld [smem:[#allocation7 + %s825]]
        %s827 = scalar_lea.vmem %s3, %s826
        %s828 = scalar_lea.vmem [#allocation3], 8
        %p830 = scmp.lt.u32.totalorder 1, 8
        %p831 = pneg %p830
        // Predicated region
        $region493: #{tpu_custom_call.1} parent=11 // pred_check
          _
        $region494: #{tpu_custom_call.1} parent=11 // pred_check_branch
          %833 = sbr.rel (%p830) target = $region496
        $region495: #{tpu_custom_call.1} parent=11 // pred_region
          %s848 = sand.u32 1, 7
          %p849 = scmp.eq.s32.totalorder %s848, 0
          %p850 = pneg %p849
          // Predicated region
          $region508: #{tpu_custom_call.1} parent=495 // pred_check
            _
          $region509: #{tpu_custom_call.1} parent=495 // pred_check_branch
            %852 = sbr.rel (%p849) target = $region511
          $region510: #{tpu_custom_call.1} parent=495 // pred_region
            %s853 = sand.u32 1, 7
            %s854 = ssub.s32 1, %s853
            %s855 = scalar_lea.vmem %s827, %s854
            %s856 = ssub.s32 1, %s853
            %s857 = scalar_lea.vmem %s828, %s856 [#allocation3]
            %s858 = sshllo.u32 0, %s853
            loop: start=0, step=1, limit=1
            $region512: #{tpu_custom_call.1} parent=510 // loop_pre_header
              _
            $region513: #{tpu_custom_call.1} parent=510 // loop_header
              %s860 = sphi 0, %s864
              %p861 = scmp.ge.s32.totalorder %s860, 1
              %s865 = sphi %s855, %s855
              %s866 = sphi %s857, %s857
            $region514: #{tpu_custom_call.1} parent=510 // loop_header_branch
              %863 = sbr.rel (%p861) target = $region518
            $region515: #{tpu_custom_call.1} parent=510 // loop_body
              %v867 = vld [vmem:[%s865] sm:%s858]
              %868 = vst [vmem:[%s866] sm:%s858] %v867
            $region516: #{tpu_custom_call.1} parent=510 // loop_footer
              %s864 = sadd.s32 1, %s860
            $region517: #{tpu_custom_call.1} parent=510 // loop_footer_branch
              %859 = sbr.rel target = $region513
            $region518: #{tpu_custom_call.1} parent=510 // loop_exit
              _
          $region511: #{tpu_custom_call.1} parent=495 // pred_fallthru
            _
        $region496: #{tpu_custom_call.1} parent=11 // pred_fallthru
          _
        // Predicated region
        $region497: #{tpu_custom_call.1} parent=11 // pred_check
          %p834 = pneg %p830
        $region498: #{tpu_custom_call.1} parent=11 // pred_check_branch
          %836 = sbr.rel (%p834) target = $region500
        $region499: #{tpu_custom_call.1} parent=11 // pred_region
          %s837 = sshllo.u32 0, 1
          loop: start=0, step=1, limit=1
          $region501: #{tpu_custom_call.1} parent=499 // loop_pre_header
            _
          $region502: #{tpu_custom_call.1} parent=499 // loop_header
            %s839 = sphi 0, %s843
            %p840 = scmp.ge.s32.totalorder %s839, 1
            %s844 = sphi %s827, %s827
            %s845 = sphi %s828, %s828
          $region503: #{tpu_custom_call.1} parent=499 // loop_header_branch
            %842 = sbr.rel (%p840) target = $region507
          $region504: #{tpu_custom_call.1} parent=499 // loop_body
            %v846 = vld [vmem:[%s844] sm:%s837]
            %847 = vst [vmem:[%s845] sm:%s837] %v846
          $region505: #{tpu_custom_call.1} parent=499 // loop_footer
            %s843 = sadd.s32 1, %s839
          $region506: #{tpu_custom_call.1} parent=499 // loop_footer_branch
            %838 = sbr.rel target = $region502
          $region507: #{tpu_custom_call.1} parent=499 // loop_exit
            _
        $region500: #{tpu_custom_call.1} parent=11 // pred_fallthru
          _
        // Predicated region
        $region519: #{tpu_custom_call.1} parent=11 // pred_check
          _
        $region520: #{tpu_custom_call.1} parent=11 // pred_check_branch
          %871 = sbr.rel (0) target = $region522
        $region521: #{tpu_custom_call.1} parent=11 // pred_region
          %872 = vsyncadd %s445, 16
        $region522: #{tpu_custom_call.1} parent=11 // pred_fallthru
          _
        %s873 = sshra.s32 %s107, 7
        %s874 = sand.u32 %s107, 127
        %s875 = sadd.s32 %s873, 1
        %s876 = smul.u32 %s875, 128
        %s877 = sshra.s32 %s107, 7
        %s878 = sand.u32 %s107, 127
        %s879 = sadd.s32 %s876, %s878
        %s880 = sld [smem:[#allocation7 + %s879]]
        %s881 = scalar_lea.vmem %s3, %s880
        %s882 = scalar_lea.vmem [#allocation3], 9
        %p884 = scmp.lt.u32.totalorder 1, 8
        %p885 = pneg %p884
        // Predicated region
        $region523: #{tpu_custom_call.1} parent=11 // pred_check
          _
        $region524: #{tpu_custom_call.1} parent=11 // pred_check_branch
          %887 = sbr.rel (%p884) target = $region526
        $region525: #{tpu_custom_call.1} parent=11 // pred_region
          %s902 = sand.u32 1, 7
          %p903 = scmp.eq.s32.totalorder %s902, 0
          %p904 = pneg %p903
          // Predicated region
          $region538: #{tpu_custom_call.1} parent=525 // pred_check
            _
          $region539: #{tpu_custom_call.1} parent=525 // pred_check_branch
            %906 = sbr.rel (%p903) target = $region541
          $region540: #{tpu_custom_call.1} parent=525 // pred_region
            %s907 = sand.u32 1, 7
            %s908 = ssub.s32 1, %s907
            %s909 = scalar_lea.vmem %s881, %s908
            %s910 = ssub.s32 1, %s907
            %s911 = scalar_lea.vmem %s882, %s910 [#allocation3]
            %s912 = sshllo.u32 0, %s907
            loop: start=0, step=1, limit=1
            $region542: #{tpu_custom_call.1} parent=540 // loop_pre_header
              _
            $region543: #{tpu_custom_call.1} parent=540 // loop_header
              %s914 = sphi 0, %s918
              %p915 = scmp.ge.s32.totalorder %s914, 1
              %s919 = sphi %s909, %s909
              %s920 = sphi %s911, %s911
            $region544: #{tpu_custom_call.1} parent=540 // loop_header_branch
              %917 = sbr.rel (%p915) target = $region548
            $region545: #{tpu_custom_call.1} parent=540 // loop_body
              %v921 = vld [vmem:[%s919] sm:%s912]
              %922 = vst [vmem:[%s920] sm:%s912] %v921
            $region546: #{tpu_custom_call.1} parent=540 // loop_footer
              %s918 = sadd.s32 1, %s914
            $region547: #{tpu_custom_call.1} parent=540 // loop_footer_branch
              %913 = sbr.rel target = $region543
            $region548: #{tpu_custom_call.1} parent=540 // loop_exit
              _
          $region541: #{tpu_custom_call.1} parent=525 // pred_fallthru
            _
        $region526: #{tpu_custom_call.1} parent=11 // pred_fallthru
          _
        // Predicated region
        $region527: #{tpu_custom_call.1} parent=11 // pred_check
          %p888 = pneg %p884
        $region528: #{tpu_custom_call.1} parent=11 // pred_check_branch
          %890 = sbr.rel (%p888) target = $region530
        $region529: #{tpu_custom_call.1} parent=11 // pred_region
          %s891 = sshllo.u32 0, 1
          loop: start=0, step=1, limit=1
          $region531: #{tpu_custom_call.1} parent=529 // loop_pre_header
            _
          $region532: #{tpu_custom_call.1} parent=529 // loop_header
            %s893 = sphi 0, %s897
            %p894 = scmp.ge.s32.totalorder %s893, 1
            %s898 = sphi %s881, %s881
            %s899 = sphi %s882, %s882
          $region533: #{tpu_custom_call.1} parent=529 // loop_header_branch
            %896 = sbr.rel (%p894) target = $region537
          $region534: #{tpu_custom_call.1} parent=529 // loop_body
            %v900 = vld [vmem:[%s898] sm:%s891]
            %901 = vst [vmem:[%s899] sm:%s891] %v900
          $region535: #{tpu_custom_call.1} parent=529 // loop_footer
            %s897 = sadd.s32 1, %s893
          $region536: #{tpu_custom_call.1} parent=529 // loop_footer_branch
            %892 = sbr.rel target = $region532
          $region537: #{tpu_custom_call.1} parent=529 // loop_exit
            _
        $region530: #{tpu_custom_call.1} parent=11 // pred_fallthru
          _
        // Predicated region
        $region549: #{tpu_custom_call.1} parent=11 // pred_check
          _
        $region550: #{tpu_custom_call.1} parent=11 // pred_check_branch
          %925 = sbr.rel (0) target = $region552
        $region551: #{tpu_custom_call.1} parent=11 // pred_region
          %926 = vsyncadd %s445, 16
        $region552: #{tpu_custom_call.1} parent=11 // pred_fallthru
          _
        %s927 = sshra.s32 %s155, 7
        %s928 = sand.u32 %s155, 127
        %s929 = sadd.s32 %s927, 1
        %s930 = smul.u32 %s929, 128
        %s931 = sshra.s32 %s155, 7
        %s932 = sand.u32 %s155, 127
        %s933 = sadd.s32 %s930, %s932
        %s934 = sld [smem:[#allocation7 + %s933]]
        %s935 = scalar_lea.vmem %s3, %s934
        %s936 = scalar_lea.vmem [#allocation3], 10
        %p938 = scmp.lt.u32.totalorder 1, 8
        %p939 = pneg %p938
        // Predicated region
        $region553: #{tpu_custom_call.1} parent=11 // pred_check
          _
        $region554: #{tpu_custom_call.1} parent=11 // pred_check_branch
          %941 = sbr.rel (%p938) target = $region556
        $region555: #{tpu_custom_call.1} parent=11 // pred_region
          %s956 = sand.u32 1, 7
          %p957 = scmp.eq.s32.totalorder %s956, 0
          %p958 = pneg %p957
          // Predicated region
          $region568: #{tpu_custom_call.1} parent=555 // pred_check
            _
          $region569: #{tpu_custom_call.1} parent=555 // pred_check_branch
            %960 = sbr.rel (%p957) target = $region571
          $region570: #{tpu_custom_call.1} parent=555 // pred_region
            %s961 = sand.u32 1, 7
            %s962 = ssub.s32 1, %s961
            %s963 = scalar_lea.vmem %s935, %s962
            %s964 = ssub.s32 1, %s961
            %s965 = scalar_lea.vmem %s936, %s964 [#allocation3]
            %s966 = sshllo.u32 0, %s961
            loop: start=0, step=1, limit=1
            $region572: #{tpu_custom_call.1} parent=570 // loop_pre_header
              _
            $region573: #{tpu_custom_call.1} parent=570 // loop_header
              %s968 = sphi 0, %s972
              %p969 = scmp.ge.s32.totalorder %s968, 1
              %s973 = sphi %s963, %s963
              %s974 = sphi %s965, %s965
            $region574: #{tpu_custom_call.1} parent=570 // loop_header_branch
              %971 = sbr.rel (%p969) target = $region578
            $region575: #{tpu_custom_call.1} parent=570 // loop_body
              %v975 = vld [vmem:[%s973] sm:%s966]
              %976 = vst [vmem:[%s974] sm:%s966] %v975
            $region576: #{tpu_custom_call.1} parent=570 // loop_footer
              %s972 = sadd.s32 1, %s968
            $region577: #{tpu_custom_call.1} parent=570 // loop_footer_branch
              %967 = sbr.rel target = $region573
            $region578: #{tpu_custom_call.1} parent=570 // loop_exit
              _
          $region571: #{tpu_custom_call.1} parent=555 // pred_fallthru
            _
        $region556: #{tpu_custom_call.1} parent=11 // pred_fallthru
          _
        // Predicated region
        $region557: #{tpu_custom_call.1} parent=11 // pred_check
          %p942 = pneg %p938
        $region558: #{tpu_custom_call.1} parent=11 // pred_check_branch
          %944 = sbr.rel (%p942) target = $region560
        $region559: #{tpu_custom_call.1} parent=11 // pred_region
          %s945 = sshllo.u32 0, 1
          loop: start=0, step=1, limit=1
          $region561: #{tpu_custom_call.1} parent=559 // loop_pre_header
            _
          $region562: #{tpu_custom_call.1} parent=559 // loop_header
            %s947 = sphi 0, %s951
            %p948 = scmp.ge.s32.totalorder %s947, 1
            %s952 = sphi %s935, %s935
            %s953 = sphi %s936, %s936
          $region563: #{tpu_custom_call.1} parent=559 // loop_header_branch
            %950 = sbr.rel (%p948) target = $region567
          $region564: #{tpu_custom_call.1} parent=559 // loop_body
            %v954 = vld [vmem:[%s952] sm:%s945]
            %955 = vst [vmem:[%s953] sm:%s945] %v954
          $region565: #{tpu_custom_call.1} parent=559 // loop_footer
            %s951 = sadd.s32 1, %s947
          $region566: #{tpu_custom_call.1} parent=559 // loop_footer_branch
            %946 = sbr.rel target = $region562
          $region567: #{tpu_custom_call.1} parent=559 // loop_exit
            _
        $region560: #{tpu_custom_call.1} parent=11 // pred_fallthru
          _
        // Predicated region
        $region579: #{tpu_custom_call.1} parent=11 // pred_check
          _
        $region580: #{tpu_custom_call.1} parent=11 // pred_check_branch
          %979 = sbr.rel (0) target = $region582
        $region581: #{tpu_custom_call.1} parent=11 // pred_region
          %980 = vsyncadd %s445, 16
        $region582: #{tpu_custom_call.1} parent=11 // pred_fallthru
          _
        %s981 = sshra.s32 %s203, 7
        %s982 = sand.u32 %s203, 127
        %s983 = sadd.s32 %s981, 1
        %s984 = smul.u32 %s983, 128
        %s985 = sshra.s32 %s203, 7
        %s986 = sand.u32 %s203, 127
        %s987 = sadd.s32 %s984, %s986
        %s988 = sld [smem:[#allocation7 + %s987]]
        %s989 = scalar_lea.vmem %s3, %s988
        %s990 = scalar_lea.vmem [#allocation3], 11
        %p992 = scmp.lt.u32.totalorder 1, 8
        %p993 = pneg %p992
        // Predicated region
        $region583: #{tpu_custom_call.1} parent=11 // pred_check
          _
        $region584: #{tpu_custom_call.1} parent=11 // pred_check_branch
          %995 = sbr.rel (%p992) target = $region586
        $region585: #{tpu_custom_call.1} parent=11 // pred_region
          %s1010 = sand.u32 1, 7
          %p1011 = scmp.eq.s32.totalorder %s1010, 0
          %p1012 = pneg %p1011
          // Predicated region
          $region598: #{tpu_custom_call.1} parent=585 // pred_check
            _
          $region599: #{tpu_custom_call.1} parent=585 // pred_check_branch
            %1014 = sbr.rel (%p1011) target = $region601
          $region600: #{tpu_custom_call.1} parent=585 // pred_region
            %s1015 = sand.u32 1, 7
            %s1016 = ssub.s32 1, %s1015
            %s1017 = scalar_lea.vmem %s989, %s1016
            %s1018 = ssub.s32 1, %s1015
            %s1019 = scalar_lea.vmem %s990, %s1018 [#allocation3]
            %s1020 = sshllo.u32 0, %s1015
            loop: start=0, step=1, limit=1
            $region602: #{tpu_custom_call.1} parent=600 // loop_pre_header
              _
            $region603: #{tpu_custom_call.1} parent=600 // loop_header
              %s1022 = sphi 0, %s1026
              %p1023 = scmp.ge.s32.totalorder %s1022, 1
              %s1027 = sphi %s1017, %s1017
              %s1028 = sphi %s1019, %s1019
            $region604: #{tpu_custom_call.1} parent=600 // loop_header_branch
              %1025 = sbr.rel (%p1023) target = $region608
            $region605: #{tpu_custom_call.1} parent=600 // loop_body
              %v1029 = vld [vmem:[%s1027] sm:%s1020]
              %1030 = vst [vmem:[%s1028] sm:%s1020] %v1029
            $region606: #{tpu_custom_call.1} parent=600 // loop_footer
              %s1026 = sadd.s32 1, %s1022
            $region607: #{tpu_custom_call.1} parent=600 // loop_footer_branch
              %1021 = sbr.rel target = $region603
            $region608: #{tpu_custom_call.1} parent=600 // loop_exit
              _
          $region601: #{tpu_custom_call.1} parent=585 // pred_fallthru
            _
        $region586: #{tpu_custom_call.1} parent=11 // pred_fallthru
          _
        // Predicated region
        $region587: #{tpu_custom_call.1} parent=11 // pred_check
          %p996 = pneg %p992
        $region588: #{tpu_custom_call.1} parent=11 // pred_check_branch
          %998 = sbr.rel (%p996) target = $region590
        $region589: #{tpu_custom_call.1} parent=11 // pred_region
          %s999 = sshllo.u32 0, 1
          loop: start=0, step=1, limit=1
          $region591: #{tpu_custom_call.1} parent=589 // loop_pre_header
            _
          $region592: #{tpu_custom_call.1} parent=589 // loop_header
            %s1001 = sphi 0, %s1005
            %p1002 = scmp.ge.s32.totalorder %s1001, 1
            %s1006 = sphi %s989, %s989
            %s1007 = sphi %s990, %s990
          $region593: #{tpu_custom_call.1} parent=589 // loop_header_branch
            %1004 = sbr.rel (%p1002) target = $region597
          $region594: #{tpu_custom_call.1} parent=589 // loop_body
            %v1008 = vld [vmem:[%s1006] sm:%s999]
            %1009 = vst [vmem:[%s1007] sm:%s999] %v1008
          $region595: #{tpu_custom_call.1} parent=589 // loop_footer
            %s1005 = sadd.s32 1, %s1001
          $region596: #{tpu_custom_call.1} parent=589 // loop_footer_branch
            %1000 = sbr.rel target = $region592
          $region597: #{tpu_custom_call.1} parent=589 // loop_exit
            _
        $region590: #{tpu_custom_call.1} parent=11 // pred_fallthru
          _
        // Predicated region
        $region609: #{tpu_custom_call.1} parent=11 // pred_check
          _
        $region610: #{tpu_custom_call.1} parent=11 // pred_check_branch
          %1033 = sbr.rel (0) target = $region612
        $region611: #{tpu_custom_call.1} parent=11 // pred_region
          %1034 = vsyncadd %s445, 16
        $region612: #{tpu_custom_call.1} parent=11 // pred_fallthru
          _
        %s1035 = sshra.s32 %s251, 7
        %s1036 = sand.u32 %s251, 127
        %s1037 = sadd.s32 %s1035, 1
        %s1038 = smul.u32 %s1037, 128
        %s1039 = sshra.s32 %s251, 7
        %s1040 = sand.u32 %s251, 127
        %s1041 = sadd.s32 %s1038, %s1040
        %s1042 = sld [smem:[#allocation7 + %s1041]]
        %s1043 = scalar_lea.vmem %s3, %s1042
        %s1044 = scalar_lea.vmem [#allocation3], 12
        %p1046 = scmp.lt.u32.totalorder 1, 8
        %p1047 = pneg %p1046
        // Predicated region
        $region613: #{tpu_custom_call.1} parent=11 // pred_check
          _
        $region614: #{tpu_custom_call.1} parent=11 // pred_check_branch
          %1049 = sbr.rel (%p1046) target = $region616
        $region615: #{tpu_custom_call.1} parent=11 // pred_region
          %s1064 = sand.u32 1, 7
          %p1065 = scmp.eq.s32.totalorder %s1064, 0
          %p1066 = pneg %p1065
          // Predicated region
          $region628: #{tpu_custom_call.1} parent=615 // pred_check
            _
          $region629: #{tpu_custom_call.1} parent=615 // pred_check_branch
            %1068 = sbr.rel (%p1065) target = $region631
          $region630: #{tpu_custom_call.1} parent=615 // pred_region
            %s1069 = sand.u32 1, 7
            %s1070 = ssub.s32 1, %s1069
            %s1071 = scalar_lea.vmem %s1043, %s1070
            %s1072 = ssub.s32 1, %s1069
            %s1073 = scalar_lea.vmem %s1044, %s1072 [#allocation3]
            %s1074 = sshllo.u32 0, %s1069
            loop: start=0, step=1, limit=1
            $region632: #{tpu_custom_call.1} parent=630 // loop_pre_header
              _
            $region633: #{tpu_custom_call.1} parent=630 // loop_header
              %s1076 = sphi 0, %s1080
              %p1077 = scmp.ge.s32.totalorder %s1076, 1
              %s1081 = sphi %s1071, %s1071
              %s1082 = sphi %s1073, %s1073
            $region634: #{tpu_custom_call.1} parent=630 // loop_header_branch
              %1079 = sbr.rel (%p1077) target = $region638
            $region635: #{tpu_custom_call.1} parent=630 // loop_body
              %v1083 = vld [vmem:[%s1081] sm:%s1074]
              %1084 = vst [vmem:[%s1082] sm:%s1074] %v1083
            $region636: #{tpu_custom_call.1} parent=630 // loop_footer
              %s1080 = sadd.s32 1, %s1076
            $region637: #{tpu_custom_call.1} parent=630 // loop_footer_branch
              %1075 = sbr.rel target = $region633
            $region638: #{tpu_custom_call.1} parent=630 // loop_exit
              _
          $region631: #{tpu_custom_call.1} parent=615 // pred_fallthru
            _
        $region616: #{tpu_custom_call.1} parent=11 // pred_fallthru
          _
        // Predicated region
        $region617: #{tpu_custom_call.1} parent=11 // pred_check
          %p1050 = pneg %p1046
        $region618: #{tpu_custom_call.1} parent=11 // pred_check_branch
          %1052 = sbr.rel (%p1050) target = $region620
        $region619: #{tpu_custom_call.1} parent=11 // pred_region
          %s1053 = sshllo.u32 0, 1
          loop: start=0, step=1, limit=1
          $region621: #{tpu_custom_call.1} parent=619 // loop_pre_header
            _
          $region622: #{tpu_custom_call.1} parent=619 // loop_header
            %s1055 = sphi 0, %s1059
            %p1056 = scmp.ge.s32.totalorder %s1055, 1
            %s1060 = sphi %s1043, %s1043
            %s1061 = sphi %s1044, %s1044
          $region623: #{tpu_custom_call.1} parent=619 // loop_header_branch
            %1058 = sbr.rel (%p1056) target = $region627
          $region624: #{tpu_custom_call.1} parent=619 // loop_body
            %v1062 = vld [vmem:[%s1060] sm:%s1053]
            %1063 = vst [vmem:[%s1061] sm:%s1053] %v1062
          $region625: #{tpu_custom_call.1} parent=619 // loop_footer
            %s1059 = sadd.s32 1, %s1055
          $region626: #{tpu_custom_call.1} parent=619 // loop_footer_branch
            %1054 = sbr.rel target = $region622
          $region627: #{tpu_custom_call.1} parent=619 // loop_exit
            _
        $region620: #{tpu_custom_call.1} parent=11 // pred_fallthru
          _
        // Predicated region
        $region639: #{tpu_custom_call.1} parent=11 // pred_check
          _
        $region640: #{tpu_custom_call.1} parent=11 // pred_check_branch
          %1087 = sbr.rel (0) target = $region642
        $region641: #{tpu_custom_call.1} parent=11 // pred_region
          %1088 = vsyncadd %s445, 16
        $region642: #{tpu_custom_call.1} parent=11 // pred_fallthru
          _
        %s1089 = sshra.s32 %s299, 7
        %s1090 = sand.u32 %s299, 127
        %s1091 = sadd.s32 %s1089, 1
        %s1092 = smul.u32 %s1091, 128
        %s1093 = sshra.s32 %s299, 7
        %s1094 = sand.u32 %s299, 127
        %s1095 = sadd.s32 %s1092, %s1094
        %s1096 = sld [smem:[#allocation7 + %s1095]]
        %s1097 = scalar_lea.vmem %s3, %s1096
        %s1098 = scalar_lea.vmem [#allocation3], 13
        %p1100 = scmp.lt.u32.totalorder 1, 8
        %p1101 = pneg %p1100
        // Predicated region
        $region643: #{tpu_custom_call.1} parent=11 // pred_check
          _
        $region644: #{tpu_custom_call.1} parent=11 // pred_check_branch
          %1103 = sbr.rel (%p1100) target = $region646
        $region645: #{tpu_custom_call.1} parent=11 // pred_region
          %s1118 = sand.u32 1, 7
          %p1119 = scmp.eq.s32.totalorder %s1118, 0
          %p1120 = pneg %p1119
          // Predicated region
          $region658: #{tpu_custom_call.1} parent=645 // pred_check
            _
          $region659: #{tpu_custom_call.1} parent=645 // pred_check_branch
            %1122 = sbr.rel (%p1119) target = $region661
          $region660: #{tpu_custom_call.1} parent=645 // pred_region
            %s1123 = sand.u32 1, 7
            %s1124 = ssub.s32 1, %s1123
            %s1125 = scalar_lea.vmem %s1097, %s1124
            %s1126 = ssub.s32 1, %s1123
            %s1127 = scalar_lea.vmem %s1098, %s1126 [#allocation3]
            %s1128 = sshllo.u32 0, %s1123
            loop: start=0, step=1, limit=1
            $region662: #{tpu_custom_call.1} parent=660 // loop_pre_header
              _
            $region663: #{tpu_custom_call.1} parent=660 // loop_header
              %s1130 = sphi 0, %s1134
              %p1131 = scmp.ge.s32.totalorder %s1130, 1
              %s1135 = sphi %s1125, %s1125
              %s1136 = sphi %s1127, %s1127
            $region664: #{tpu_custom_call.1} parent=660 // loop_header_branch
              %1133 = sbr.rel (%p1131) target = $region668
            $region665: #{tpu_custom_call.1} parent=660 // loop_body
              %v1137 = vld [vmem:[%s1135] sm:%s1128]
              %1138 = vst [vmem:[%s1136] sm:%s1128] %v1137
            $region666: #{tpu_custom_call.1} parent=660 // loop_footer
              %s1134 = sadd.s32 1, %s1130
            $region667: #{tpu_custom_call.1} parent=660 // loop_footer_branch
              %1129 = sbr.rel target = $region663
            $region668: #{tpu_custom_call.1} parent=660 // loop_exit
              _
          $region661: #{tpu_custom_call.1} parent=645 // pred_fallthru
            _
        $region646: #{tpu_custom_call.1} parent=11 // pred_fallthru
          _
        // Predicated region
        $region647: #{tpu_custom_call.1} parent=11 // pred_check
          %p1104 = pneg %p1100
        $region648: #{tpu_custom_call.1} parent=11 // pred_check_branch
          %1106 = sbr.rel (%p1104) target = $region650
        $region649: #{tpu_custom_call.1} parent=11 // pred_region
          %s1107 = sshllo.u32 0, 1
          loop: start=0, step=1, limit=1
          $region651: #{tpu_custom_call.1} parent=649 // loop_pre_header
            _
          $region652: #{tpu_custom_call.1} parent=649 // loop_header
            %s1109 = sphi 0, %s1113
            %p1110 = scmp.ge.s32.totalorder %s1109, 1
            %s1114 = sphi %s1097, %s1097
            %s1115 = sphi %s1098, %s1098
          $region653: #{tpu_custom_call.1} parent=649 // loop_header_branch
            %1112 = sbr.rel (%p1110) target = $region657
          $region654: #{tpu_custom_call.1} parent=649 // loop_body
            %v1116 = vld [vmem:[%s1114] sm:%s1107]
            %1117 = vst [vmem:[%s1115] sm:%s1107] %v1116
          $region655: #{tpu_custom_call.1} parent=649 // loop_footer
            %s1113 = sadd.s32 1, %s1109
          $region656: #{tpu_custom_call.1} parent=649 // loop_footer_branch
            %1108 = sbr.rel target = $region652
          $region657: #{tpu_custom_call.1} parent=649 // loop_exit
            _
        $region650: #{tpu_custom_call.1} parent=11 // pred_fallthru
          _
        // Predicated region
        $region669: #{tpu_custom_call.1} parent=11 // pred_check
          _
        $region670: #{tpu_custom_call.1} parent=11 // pred_check_branch
          %1141 = sbr.rel (0) target = $region672
        $region671: #{tpu_custom_call.1} parent=11 // pred_region
          %1142 = vsyncadd %s445, 16
        $region672: #{tpu_custom_call.1} parent=11 // pred_fallthru
          _
        %s1143 = sshra.s32 %s347, 7
        %s1144 = sand.u32 %s347, 127
        %s1145 = sadd.s32 %s1143, 1
        %s1146 = smul.u32 %s1145, 128
        %s1147 = sshra.s32 %s347, 7
        %s1148 = sand.u32 %s347, 127
        %s1149 = sadd.s32 %s1146, %s1148
        %s1150 = sld [smem:[#allocation7 + %s1149]]
        %s1151 = scalar_lea.vmem %s3, %s1150
        %s1152 = scalar_lea.vmem [#allocation3], 14
        %p1154 = scmp.lt.u32.totalorder 1, 8
        %p1155 = pneg %p1154
        // Predicated region
        $region673: #{tpu_custom_call.1} parent=11 // pred_check
          _
        $region674: #{tpu_custom_call.1} parent=11 // pred_check_branch
          %1157 = sbr.rel (%p1154) target = $region676
        $region675: #{tpu_custom_call.1} parent=11 // pred_region
          %s1172 = sand.u32 1, 7
          %p1173 = scmp.eq.s32.totalorder %s1172, 0
          %p1174 = pneg %p1173
          // Predicated region
          $region688: #{tpu_custom_call.1} parent=675 // pred_check
            _
          $region689: #{tpu_custom_call.1} parent=675 // pred_check_branch
            %1176 = sbr.rel (%p1173) target = $region691
          $region690: #{tpu_custom_call.1} parent=675 // pred_region
            %s1177 = sand.u32 1, 7
            %s1178 = ssub.s32 1, %s1177
            %s1179 = scalar_lea.vmem %s1151, %s1178
            %s1180 = ssub.s32 1, %s1177
            %s1181 = scalar_lea.vmem %s1152, %s1180 [#allocation3]
            %s1182 = sshllo.u32 0, %s1177
            loop: start=0, step=1, limit=1
            $region692: #{tpu_custom_call.1} parent=690 // loop_pre_header
              _
            $region693: #{tpu_custom_call.1} parent=690 // loop_header
              %s1184 = sphi 0, %s1188
              %p1185 = scmp.ge.s32.totalorder %s1184, 1
              %s1189 = sphi %s1179, %s1179
              %s1190 = sphi %s1181, %s1181
            $region694: #{tpu_custom_call.1} parent=690 // loop_header_branch
              %1187 = sbr.rel (%p1185) target = $region698
            $region695: #{tpu_custom_call.1} parent=690 // loop_body
              %v1191 = vld [vmem:[%s1189] sm:%s1182]
              %1192 = vst [vmem:[%s1190] sm:%s1182] %v1191
            $region696: #{tpu_custom_call.1} parent=690 // loop_footer
              %s1188 = sadd.s32 1, %s1184
            $region697: #{tpu_custom_call.1} parent=690 // loop_footer_branch
              %1183 = sbr.rel target = $region693
            $region698: #{tpu_custom_call.1} parent=690 // loop_exit
              _
          $region691: #{tpu_custom_call.1} parent=675 // pred_fallthru
            _
        $region676: #{tpu_custom_call.1} parent=11 // pred_fallthru
          _
        // Predicated region
        $region677: #{tpu_custom_call.1} parent=11 // pred_check
          %p1158 = pneg %p1154
        $region678: #{tpu_custom_call.1} parent=11 // pred_check_branch
          %1160 = sbr.rel (%p1158) target = $region680
        $region679: #{tpu_custom_call.1} parent=11 // pred_region
          %s1161 = sshllo.u32 0, 1
          loop: start=0, step=1, limit=1
          $region681: #{tpu_custom_call.1} parent=679 // loop_pre_header
            _
          $region682: #{tpu_custom_call.1} parent=679 // loop_header
            %s1163 = sphi 0, %s1167
            %p1164 = scmp.ge.s32.totalorder %s1163, 1
            %s1168 = sphi %s1151, %s1151
            %s1169 = sphi %s1152, %s1152
          $region683: #{tpu_custom_call.1} parent=679 // loop_header_branch
            %1166 = sbr.rel (%p1164) target = $region687
          $region684: #{tpu_custom_call.1} parent=679 // loop_body
            %v1170 = vld [vmem:[%s1168] sm:%s1161]
            %1171 = vst [vmem:[%s1169] sm:%s1161] %v1170
          $region685: #{tpu_custom_call.1} parent=679 // loop_footer
            %s1167 = sadd.s32 1, %s1163
          $region686: #{tpu_custom_call.1} parent=679 // loop_footer_branch
            %1162 = sbr.rel target = $region682
          $region687: #{tpu_custom_call.1} parent=679 // loop_exit
            _
        $region680: #{tpu_custom_call.1} parent=11 // pred_fallthru
          _
        // Predicated region
        $region699: #{tpu_custom_call.1} parent=11 // pred_check
          _
        $region700: #{tpu_custom_call.1} parent=11 // pred_check_branch
          %1195 = sbr.rel (0) target = $region702
        $region701: #{tpu_custom_call.1} parent=11 // pred_region
          %1196 = vsyncadd %s445, 16
        $region702: #{tpu_custom_call.1} parent=11 // pred_fallthru
          _
        %s1197 = sshra.s32 %s395, 7
        %s1198 = sand.u32 %s395, 127
        %s1199 = sadd.s32 %s1197, 1
        %s1200 = smul.u32 %s1199, 128
        %s1201 = sshra.s32 %s395, 7
        %s1202 = sand.u32 %s395, 127
        %s1203 = sadd.s32 %s1200, %s1202
        %s1204 = sld [smem:[#allocation7 + %s1203]]
        %s1205 = scalar_lea.vmem %s3, %s1204
        %s1206 = scalar_lea.vmem [#allocation3], 15
        %p1208 = scmp.lt.u32.totalorder 1, 8
        %p1209 = pneg %p1208
        // Predicated region
        $region703: #{tpu_custom_call.1} parent=11 // pred_check
          _
        $region704: #{tpu_custom_call.1} parent=11 // pred_check_branch
          %1211 = sbr.rel (%p1208) target = $region706
        $region705: #{tpu_custom_call.1} parent=11 // pred_region
          %s1226 = sand.u32 1, 7
          %p1227 = scmp.eq.s32.totalorder %s1226, 0
          %p1228 = pneg %p1227
          // Predicated region
          $region718: #{tpu_custom_call.1} parent=705 // pred_check
            _
          $region719: #{tpu_custom_call.1} parent=705 // pred_check_branch
            %1230 = sbr.rel (%p1227) target = $region721
          $region720: #{tpu_custom_call.1} parent=705 // pred_region
            %s1231 = sand.u32 1, 7
            %s1232 = ssub.s32 1, %s1231
            %s1233 = scalar_lea.vmem %s1205, %s1232
            %s1234 = ssub.s32 1, %s1231
            %s1235 = scalar_lea.vmem %s1206, %s1234 [#allocation3]
            %s1236 = sshllo.u32 0, %s1231
            loop: start=0, step=1, limit=1
            $region722: #{tpu_custom_call.1} parent=720 // loop_pre_header
              _
            $region723: #{tpu_custom_call.1} parent=720 // loop_header
              %s1238 = sphi 0, %s1242
              %p1239 = scmp.ge.s32.totalorder %s1238, 1
              %s1243 = sphi %s1233, %s1233
              %s1244 = sphi %s1235, %s1235
            $region724: #{tpu_custom_call.1} parent=720 // loop_header_branch
              %1241 = sbr.rel (%p1239) target = $region728
            $region725: #{tpu_custom_call.1} parent=720 // loop_body
              %v1245 = vld [vmem:[%s1243] sm:%s1236]
              %1246 = vst [vmem:[%s1244] sm:%s1236] %v1245
            $region726: #{tpu_custom_call.1} parent=720 // loop_footer
              %s1242 = sadd.s32 1, %s1238
            $region727: #{tpu_custom_call.1} parent=720 // loop_footer_branch
              %1237 = sbr.rel target = $region723
            $region728: #{tpu_custom_call.1} parent=720 // loop_exit
              _
          $region721: #{tpu_custom_call.1} parent=705 // pred_fallthru
            _
        $region706: #{tpu_custom_call.1} parent=11 // pred_fallthru
          _
        // Predicated region
        $region707: #{tpu_custom_call.1} parent=11 // pred_check
          %p1212 = pneg %p1208
        $region708: #{tpu_custom_call.1} parent=11 // pred_check_branch
          %1214 = sbr.rel (%p1212) target = $region710
        $region709: #{tpu_custom_call.1} parent=11 // pred_region
          %s1215 = sshllo.u32 0, 1
          loop: start=0, step=1, limit=1
          $region711: #{tpu_custom_call.1} parent=709 // loop_pre_header
            _
          $region712: #{tpu_custom_call.1} parent=709 // loop_header
            %s1217 = sphi 0, %s1221
            %p1218 = scmp.ge.s32.totalorder %s1217, 1
            %s1222 = sphi %s1205, %s1205
            %s1223 = sphi %s1206, %s1206
          $region713: #{tpu_custom_call.1} parent=709 // loop_header_branch
            %1220 = sbr.rel (%p1218) target = $region717
          $region714: #{tpu_custom_call.1} parent=709 // loop_body
            %v1224 = vld [vmem:[%s1222] sm:%s1215]
            %1225 = vst [vmem:[%s1223] sm:%s1215] %v1224
          $region715: #{tpu_custom_call.1} parent=709 // loop_footer
            %s1221 = sadd.s32 1, %s1217
          $region716: #{tpu_custom_call.1} parent=709 // loop_footer_branch
            %1216 = sbr.rel target = $region712
          $region717: #{tpu_custom_call.1} parent=709 // loop_exit
            _
        $region710: #{tpu_custom_call.1} parent=11 // pred_fallthru
          _
        // Predicated region
        $region729: #{tpu_custom_call.1} parent=11 // pred_check
          _
        $region730: #{tpu_custom_call.1} parent=11 // pred_check_branch
          %1249 = sbr.rel (0) target = $region732
        $region731: #{tpu_custom_call.1} parent=11 // pred_region
          %1250 = vsyncadd %s445, 16
        $region732: #{tpu_custom_call.1} parent=11 // pred_fallthru
          _
        %s1251 = sadd.s32 %s819, 2
        %s1252 = smul.u32 %s1251, 128
        %s1253 = sadd.s32 %s1252, %s824
        %s1254 = sld [smem:[#allocation7 + %s1253]]
        %s1255 = scalar_lea.vmem %s3, %s1254
        %s1256 = scalar_lea.vmem [#allocation3], 16
        %p1258 = scmp.lt.u32.totalorder 1, 8
        %p1259 = pneg %p1258
        // Predicated region
        $region733: #{tpu_custom_call.1} parent=11 // pred_check
          _
        $region734: #{tpu_custom_call.1} parent=11 // pred_check_branch
          %1261 = sbr.rel (%p1258) target = $region736
        $region735: #{tpu_custom_call.1} parent=11 // pred_region
          %s1276 = sand.u32 1, 7
          %p1277 = scmp.eq.s32.totalorder %s1276, 0
          %p1278 = pneg %p1277
          // Predicated region
          $region748: #{tpu_custom_call.1} parent=735 // pred_check
            _
          $region749: #{tpu_custom_call.1} parent=735 // pred_check_branch
            %1280 = sbr.rel (%p1277) target = $region751
          $region750: #{tpu_custom_call.1} parent=735 // pred_region
            %s1281 = sand.u32 1, 7
            %s1282 = ssub.s32 1, %s1281
            %s1283 = scalar_lea.vmem %s1255, %s1282
            %s1284 = ssub.s32 1, %s1281
            %s1285 = scalar_lea.vmem %s1256, %s1284 [#allocation3]
            %s1286 = sshllo.u32 0, %s1281
            loop: start=0, step=1, limit=1
            $region752: #{tpu_custom_call.1} parent=750 // loop_pre_header
              _
            $region753: #{tpu_custom_call.1} parent=750 // loop_header
              %s1288 = sphi 0, %s1292
              %p1289 = scmp.ge.s32.totalorder %s1288, 1
              %s1293 = sphi %s1283, %s1283
              %s1294 = sphi %s1285, %s1285
            $region754: #{tpu_custom_call.1} parent=750 // loop_header_branch
              %1291 = sbr.rel (%p1289) target = $region758
            $region755: #{tpu_custom_call.1} parent=750 // loop_body
              %v1295 = vld [vmem:[%s1293] sm:%s1286]
              %1296 = vst [vmem:[%s1294] sm:%s1286] %v1295
            $region756: #{tpu_custom_call.1} parent=750 // loop_footer
              %s1292 = sadd.s32 1, %s1288
            $region757: #{tpu_custom_call.1} parent=750 // loop_footer_branch
              %1287 = sbr.rel target = $region753
            $region758: #{tpu_custom_call.1} parent=750 // loop_exit
              _
          $region751: #{tpu_custom_call.1} parent=735 // pred_fallthru
            _
        $region736: #{tpu_custom_call.1} parent=11 // pred_fallthru
          _
        // Predicated region
        $region737: #{tpu_custom_call.1} parent=11 // pred_check
          %p1262 = pneg %p1258
        $region738: #{tpu_custom_call.1} parent=11 // pred_check_branch
          %1264 = sbr.rel (%p1262) target = $region740
        $region739: #{tpu_custom_call.1} parent=11 // pred_region
          %s1265 = sshllo.u32 0, 1
          loop: start=0, step=1, limit=1
          $region741: #{tpu_custom_call.1} parent=739 // loop_pre_header
            _
          $region742: #{tpu_custom_call.1} parent=739 // loop_header
            %s1267 = sphi 0, %s1271
            %p1268 = scmp.ge.s32.totalorder %s1267, 1
            %s1272 = sphi %s1255, %s1255
            %s1273 = sphi %s1256, %s1256
          $region743: #{tpu_custom_call.1} parent=739 // loop_header_branch
            %1270 = sbr.rel (%p1268) target = $region747
          $region744: #{tpu_custom_call.1} parent=739 // loop_body
            %v1274 = vld [vmem:[%s1272] sm:%s1265]
            %1275 = vst [vmem:[%s1273] sm:%s1265] %v1274
          $region745: #{tpu_custom_call.1} parent=739 // loop_footer
            %s1271 = sadd.s32 1, %s1267
          $region746: #{tpu_custom_call.1} parent=739 // loop_footer_branch
            %1266 = sbr.rel target = $region742
          $region747: #{tpu_custom_call.1} parent=739 // loop_exit
            _
        $region740: #{tpu_custom_call.1} parent=11 // pred_fallthru
          _
        // Predicated region
        $region759: #{tpu_custom_call.1} parent=11 // pred_check
          _
        $region760: #{tpu_custom_call.1} parent=11 // pred_check_branch
          %1299 = sbr.rel (0) target = $region762
        $region761: #{tpu_custom_call.1} parent=11 // pred_region
          %1300 = vsyncadd %s445, 16
        $region762: #{tpu_custom_call.1} parent=11 // pred_fallthru
          _
        %s1301 = sadd.s32 %s873, 2
        %s1302 = smul.u32 %s1301, 128
        %s1303 = sadd.s32 %s1302, %s878
        %s1304 = sld [smem:[#allocation7 + %s1303]]
        %s1305 = scalar_lea.vmem %s3, %s1304
        %s1306 = scalar_lea.vmem [#allocation3], 17
        %p1308 = scmp.lt.u32.totalorder 1, 8
        %p1309 = pneg %p1308
        // Predicated region
        $region763: #{tpu_custom_call.1} parent=11 // pred_check
          _
        $region764: #{tpu_custom_call.1} parent=11 // pred_check_branch
          %1311 = sbr.rel (%p1308) target = $region766
        $region765: #{tpu_custom_call.1} parent=11 // pred_region
          %s1326 = sand.u32 1, 7
          %p1327 = scmp.eq.s32.totalorder %s1326, 0
          %p1328 = pneg %p1327
          // Predicated region
          $region778: #{tpu_custom_call.1} parent=765 // pred_check
            _
          $region779: #{tpu_custom_call.1} parent=765 // pred_check_branch
            %1330 = sbr.rel (%p1327) target = $region781
          $region780: #{tpu_custom_call.1} parent=765 // pred_region
            %s1331 = sand.u32 1, 7
            %s1332 = ssub.s32 1, %s1331
            %s1333 = scalar_lea.vmem %s1305, %s1332
            %s1334 = ssub.s32 1, %s1331
            %s1335 = scalar_lea.vmem %s1306, %s1334 [#allocation3]
            %s1336 = sshllo.u32 0, %s1331
            loop: start=0, step=1, limit=1
            $region782: #{tpu_custom_call.1} parent=780 // loop_pre_header
              _
            $region783: #{tpu_custom_call.1} parent=780 // loop_header
              %s1338 = sphi 0, %s1342
              %p1339 = scmp.ge.s32.totalorder %s1338, 1
              %s1343 = sphi %s1333, %s1333
              %s1344 = sphi %s1335, %s1335
            $region784: #{tpu_custom_call.1} parent=780 // loop_header_branch
              %1341 = sbr.rel (%p1339) target = $region788
            $region785: #{tpu_custom_call.1} parent=780 // loop_body
              %v1345 = vld [vmem:[%s1343] sm:%s1336]
              %1346 = vst [vmem:[%s1344] sm:%s1336] %v1345
            $region786: #{tpu_custom_call.1} parent=780 // loop_footer
              %s1342 = sadd.s32 1, %s1338
            $region787: #{tpu_custom_call.1} parent=780 // loop_footer_branch
              %1337 = sbr.rel target = $region783
            $region788: #{tpu_custom_call.1} parent=780 // loop_exit
              _
          $region781: #{tpu_custom_call.1} parent=765 // pred_fallthru
            _
        $region766: #{tpu_custom_call.1} parent=11 // pred_fallthru
          _
        // Predicated region
        $region767: #{tpu_custom_call.1} parent=11 // pred_check
          %p1312 = pneg %p1308
        $region768: #{tpu_custom_call.1} parent=11 // pred_check_branch
          %1314 = sbr.rel (%p1312) target = $region770
        $region769: #{tpu_custom_call.1} parent=11 // pred_region
          %s1315 = sshllo.u32 0, 1
          loop: start=0, step=1, limit=1
          $region771: #{tpu_custom_call.1} parent=769 // loop_pre_header
            _
          $region772: #{tpu_custom_call.1} parent=769 // loop_header
            %s1317 = sphi 0, %s1321
            %p1318 = scmp.ge.s32.totalorder %s1317, 1
            %s1322 = sphi %s1305, %s1305
            %s1323 = sphi %s1306, %s1306
          $region773: #{tpu_custom_call.1} parent=769 // loop_header_branch
            %1320 = sbr.rel (%p1318) target = $region777
          $region774: #{tpu_custom_call.1} parent=769 // loop_body
            %v1324 = vld [vmem:[%s1322] sm:%s1315]
            %1325 = vst [vmem:[%s1323] sm:%s1315] %v1324
          $region775: #{tpu_custom_call.1} parent=769 // loop_footer
            %s1321 = sadd.s32 1, %s1317
          $region776: #{tpu_custom_call.1} parent=769 // loop_footer_branch
            %1316 = sbr.rel target = $region772
          $region777: #{tpu_custom_call.1} parent=769 // loop_exit
            _
        $region770: #{tpu_custom_call.1} parent=11 // pred_fallthru
          _
        // Predicated region
        $region789: #{tpu_custom_call.1} parent=11 // pred_check
          _
        $region790: #{tpu_custom_call.1} parent=11 // pred_check_branch
          %1349 = sbr.rel (0) target = $region792
        $region791: #{tpu_custom_call.1} parent=11 // pred_region
          %1350 = vsyncadd %s445, 16
        $region792: #{tpu_custom_call.1} parent=11 // pred_fallthru
          _
        %s1351 = sadd.s32 %s927, 2
        %s1352 = smul.u32 %s1351, 128
        %s1353 = sadd.s32 %s1352, %s932
        %s1354 = sld [smem:[#allocation7 + %s1353]]
        %s1355 = scalar_lea.vmem %s3, %s1354
        %s1356 = scalar_lea.vmem [#allocation3], 18
        %p1358 = scmp.lt.u32.totalorder 1, 8
        %p1359 = pneg %p1358
        // Predicated region
        $region793: #{tpu_custom_call.1} parent=11 // pred_check
          _
        $region794: #{tpu_custom_call.1} parent=11 // pred_check_branch
          %1361 = sbr.rel (%p1358) target = $region796
        $region795: #{tpu_custom_call.1} parent=11 // pred_region
          %s1376 = sand.u32 1, 7
          %p1377 = scmp.eq.s32.totalorder %s1376, 0
          %p1378 = pneg %p1377
          // Predicated region
          $region808: #{tpu_custom_call.1} parent=795 // pred_check
            _
          $region809: #{tpu_custom_call.1} parent=795 // pred_check_branch
            %1380 = sbr.rel (%p1377) target = $region811
          $region810: #{tpu_custom_call.1} parent=795 // pred_region
            %s1381 = sand.u32 1, 7
            %s1382 = ssub.s32 1, %s1381
            %s1383 = scalar_lea.vmem %s1355, %s1382
            %s1384 = ssub.s32 1, %s1381
            %s1385 = scalar_lea.vmem %s1356, %s1384 [#allocation3]
            %s1386 = sshllo.u32 0, %s1381
            loop: start=0, step=1, limit=1
            $region812: #{tpu_custom_call.1} parent=810 // loop_pre_header
              _
            $region813: #{tpu_custom_call.1} parent=810 // loop_header
              %s1388 = sphi 0, %s1392
              %p1389 = scmp.ge.s32.totalorder %s1388, 1
              %s1393 = sphi %s1383, %s1383
              %s1394 = sphi %s1385, %s1385
            $region814: #{tpu_custom_call.1} parent=810 // loop_header_branch
              %1391 = sbr.rel (%p1389) target = $region818
            $region815: #{tpu_custom_call.1} parent=810 // loop_body
              %v1395 = vld [vmem:[%s1393] sm:%s1386]
              %1396 = vst [vmem:[%s1394] sm:%s1386] %v1395
            $region816: #{tpu_custom_call.1} parent=810 // loop_footer
              %s1392 = sadd.s32 1, %s1388
            $region817: #{tpu_custom_call.1} parent=810 // loop_footer_branch
              %1387 = sbr.rel target = $region813
            $region818: #{tpu_custom_call.1} parent=810 // loop_exit
              _
          $region811: #{tpu_custom_call.1} parent=795 // pred_fallthru
            _
        $region796: #{tpu_custom_call.1} parent=11 // pred_fallthru
          _
        // Predicated region
        $region797: #{tpu_custom_call.1} parent=11 // pred_check
          %p1362 = pneg %p1358
        $region798: #{tpu_custom_call.1} parent=11 // pred_check_branch
          %1364 = sbr.rel (%p1362) target = $region800
        $region799: #{tpu_custom_call.1} parent=11 // pred_region
          %s1365 = sshllo.u32 0, 1
          loop: start=0, step=1, limit=1
          $region801: #{tpu_custom_call.1} parent=799 // loop_pre_header
            _
          $region802: #{tpu_custom_call.1} parent=799 // loop_header
            %s1367 = sphi 0, %s1371
            %p1368 = scmp.ge.s32.totalorder %s1367, 1
            %s1372 = sphi %s1355, %s1355
            %s1373 = sphi %s1356, %s1356
          $region803: #{tpu_custom_call.1} parent=799 // loop_header_branch
            %1370 = sbr.rel (%p1368) target = $region807
          $region804: #{tpu_custom_call.1} parent=799 // loop_body
            %v1374 = vld [vmem:[%s1372] sm:%s1365]
            %1375 = vst [vmem:[%s1373] sm:%s1365] %v1374
          $region805: #{tpu_custom_call.1} parent=799 // loop_footer
            %s1371 = sadd.s32 1, %s1367
          $region806: #{tpu_custom_call.1} parent=799 // loop_footer_branch
            %1366 = sbr.rel target = $region802
          $region807: #{tpu_custom_call.1} parent=799 // loop_exit
            _
        $region800: #{tpu_custom_call.1} parent=11 // pred_fallthru
          _
        // Predicated region
        $region819: #{tpu_custom_call.1} parent=11 // pred_check
          _
        $region820: #{tpu_custom_call.1} parent=11 // pred_check_branch
          %1399 = sbr.rel (0) target = $region822
        $region821: #{tpu_custom_call.1} parent=11 // pred_region
          %1400 = vsyncadd %s445, 16
        $region822: #{tpu_custom_call.1} parent=11 // pred_fallthru
          _
        %s1401 = sadd.s32 %s981, 2
        %s1402 = smul.u32 %s1401, 128
        %s1403 = sadd.s32 %s1402, %s986
        %s1404 = sld [smem:[#allocation7 + %s1403]]
        %s1405 = scalar_lea.vmem %s3, %s1404
        %s1406 = scalar_lea.vmem [#allocation3], 19
        %p1408 = scmp.lt.u32.totalorder 1, 8
        %p1409 = pneg %p1408
        // Predicated region
        $region823: #{tpu_custom_call.1} parent=11 // pred_check
          _
        $region824: #{tpu_custom_call.1} parent=11 // pred_check_branch
          %1411 = sbr.rel (%p1408) target = $region826
        $region825: #{tpu_custom_call.1} parent=11 // pred_region
          %s1426 = sand.u32 1, 7
          %p1427 = scmp.eq.s32.totalorder %s1426, 0
          %p1428 = pneg %p1427
          // Predicated region
          $region838: #{tpu_custom_call.1} parent=825 // pred_check
            _
          $region839: #{tpu_custom_call.1} parent=825 // pred_check_branch
            %1430 = sbr.rel (%p1427) target = $region841
          $region840: #{tpu_custom_call.1} parent=825 // pred_region
            %s1431 = sand.u32 1, 7
            %s1432 = ssub.s32 1, %s1431
            %s1433 = scalar_lea.vmem %s1405, %s1432
            %s1434 = ssub.s32 1, %s1431
            %s1435 = scalar_lea.vmem %s1406, %s1434 [#allocation3]
            %s1436 = sshllo.u32 0, %s1431
            loop: start=0, step=1, limit=1
            $region842: #{tpu_custom_call.1} parent=840 // loop_pre_header
              _
            $region843: #{tpu_custom_call.1} parent=840 // loop_header
              %s1438 = sphi 0, %s1442
              %p1439 = scmp.ge.s32.totalorder %s1438, 1
              %s1443 = sphi %s1433, %s1433
              %s1444 = sphi %s1435, %s1435
            $region844: #{tpu_custom_call.1} parent=840 // loop_header_branch
              %1441 = sbr.rel (%p1439) target = $region848
            $region845: #{tpu_custom_call.1} parent=840 // loop_body
              %v1445 = vld [vmem:[%s1443] sm:%s1436]
              %1446 = vst [vmem:[%s1444] sm:%s1436] %v1445
            $region846: #{tpu_custom_call.1} parent=840 // loop_footer
              %s1442 = sadd.s32 1, %s1438
            $region847: #{tpu_custom_call.1} parent=840 // loop_footer_branch
              %1437 = sbr.rel target = $region843
            $region848: #{tpu_custom_call.1} parent=840 // loop_exit
              _
          $region841: #{tpu_custom_call.1} parent=825 // pred_fallthru
            _
        $region826: #{tpu_custom_call.1} parent=11 // pred_fallthru
          _
        // Predicated region
        $region827: #{tpu_custom_call.1} parent=11 // pred_check
          %p1412 = pneg %p1408
        $region828: #{tpu_custom_call.1} parent=11 // pred_check_branch
          %1414 = sbr.rel (%p1412) target = $region830
        $region829: #{tpu_custom_call.1} parent=11 // pred_region
          %s1415 = sshllo.u32 0, 1
          loop: start=0, step=1, limit=1
          $region831: #{tpu_custom_call.1} parent=829 // loop_pre_header
            _
          $region832: #{tpu_custom_call.1} parent=829 // loop_header
            %s1417 = sphi 0, %s1421
            %p1418 = scmp.ge.s32.totalorder %s1417, 1
            %s1422 = sphi %s1405, %s1405
            %s1423 = sphi %s1406, %s1406
          $region833: #{tpu_custom_call.1} parent=829 // loop_header_branch
            %1420 = sbr.rel (%p1418) target = $region837
          $region834: #{tpu_custom_call.1} parent=829 // loop_body
            %v1424 = vld [vmem:[%s1422] sm:%s1415]
            %1425 = vst [vmem:[%s1423] sm:%s1415] %v1424
          $region835: #{tpu_custom_call.1} parent=829 // loop_footer
            %s1421 = sadd.s32 1, %s1417
          $region836: #{tpu_custom_call.1} parent=829 // loop_footer_branch
            %1416 = sbr.rel target = $region832
          $region837: #{tpu_custom_call.1} parent=829 // loop_exit
            _
        $region830: #{tpu_custom_call.1} parent=11 // pred_fallthru
          _
        // Predicated region
        $region849: #{tpu_custom_call.1} parent=11 // pred_check
          _
        $region850: #{tpu_custom_call.1} parent=11 // pred_check_branch
          %1449 = sbr.rel (0) target = $region852
        $region851: #{tpu_custom_call.1} parent=11 // pred_region
          %1450 = vsyncadd %s445, 16
        $region852: #{tpu_custom_call.1} parent=11 // pred_fallthru
          _
        %s1451 = sadd.s32 %s1035, 2
        %s1452 = smul.u32 %s1451, 128
        %s1453 = sadd.s32 %s1452, %s1040
        %s1454 = sld [smem:[#allocation7 + %s1453]]
        %s1455 = scalar_lea.vmem %s3, %s1454
        %s1456 = scalar_lea.vmem [#allocation3], 20
        %p1458 = scmp.lt.u32.totalorder 1, 8
        %p1459 = pneg %p1458
        // Predicated region
        $region853: #{tpu_custom_call.1} parent=11 // pred_check
          _
        $region854: #{tpu_custom_call.1} parent=11 // pred_check_branch
          %1461 = sbr.rel (%p1458) target = $region856
        $region855: #{tpu_custom_call.1} parent=11 // pred_region
          %s1476 = sand.u32 1, 7
          %p1477 = scmp.eq.s32.totalorder %s1476, 0
          %p1478 = pneg %p1477
          // Predicated region
          $region868: #{tpu_custom_call.1} parent=855 // pred_check
            _
          $region869: #{tpu_custom_call.1} parent=855 // pred_check_branch
            %1480 = sbr.rel (%p1477) target = $region871
          $region870: #{tpu_custom_call.1} parent=855 // pred_region
            %s1481 = sand.u32 1, 7
            %s1482 = ssub.s32 1, %s1481
            %s1483 = scalar_lea.vmem %s1455, %s1482
            %s1484 = ssub.s32 1, %s1481
            %s1485 = scalar_lea.vmem %s1456, %s1484 [#allocation3]
            %s1486 = sshllo.u32 0, %s1481
            loop: start=0, step=1, limit=1
            $region872: #{tpu_custom_call.1} parent=870 // loop_pre_header
              _
            $region873: #{tpu_custom_call.1} parent=870 // loop_header
              %s1488 = sphi 0, %s1492
              %p1489 = scmp.ge.s32.totalorder %s1488, 1
              %s1493 = sphi %s1483, %s1483
              %s1494 = sphi %s1485, %s1485
            $region874: #{tpu_custom_call.1} parent=870 // loop_header_branch
              %1491 = sbr.rel (%p1489) target = $region878
            $region875: #{tpu_custom_call.1} parent=870 // loop_body
              %v1495 = vld [vmem:[%s1493] sm:%s1486]
              %1496 = vst [vmem:[%s1494] sm:%s1486] %v1495
            $region876: #{tpu_custom_call.1} parent=870 // loop_footer
              %s1492 = sadd.s32 1, %s1488
            $region877: #{tpu_custom_call.1} parent=870 // loop_footer_branch
              %1487 = sbr.rel target = $region873
            $region878: #{tpu_custom_call.1} parent=870 // loop_exit
              _
          $region871: #{tpu_custom_call.1} parent=855 // pred_fallthru
            _
        $region856: #{tpu_custom_call.1} parent=11 // pred_fallthru
          _
        // Predicated region
        $region857: #{tpu_custom_call.1} parent=11 // pred_check
          %p1462 = pneg %p1458
        $region858: #{tpu_custom_call.1} parent=11 // pred_check_branch
          %1464 = sbr.rel (%p1462) target = $region860
        $region859: #{tpu_custom_call.1} parent=11 // pred_region
          %s1465 = sshllo.u32 0, 1
          loop: start=0, step=1, limit=1
          $region861: #{tpu_custom_call.1} parent=859 // loop_pre_header
            _
          $region862: #{tpu_custom_call.1} parent=859 // loop_header
            %s1467 = sphi 0, %s1471
            %p1468 = scmp.ge.s32.totalorder %s1467, 1
            %s1472 = sphi %s1455, %s1455
            %s1473 = sphi %s1456, %s1456
          $region863: #{tpu_custom_call.1} parent=859 // loop_header_branch
            %1470 = sbr.rel (%p1468) target = $region867
          $region864: #{tpu_custom_call.1} parent=859 // loop_body
            %v1474 = vld [vmem:[%s1472] sm:%s1465]
            %1475 = vst [vmem:[%s1473] sm:%s1465] %v1474
          $region865: #{tpu_custom_call.1} parent=859 // loop_footer
            %s1471 = sadd.s32 1, %s1467
          $region866: #{tpu_custom_call.1} parent=859 // loop_footer_branch
            %1466 = sbr.rel target = $region862
          $region867: #{tpu_custom_call.1} parent=859 // loop_exit
            _
        $region860: #{tpu_custom_call.1} parent=11 // pred_fallthru
          _
        // Predicated region
        $region879: #{tpu_custom_call.1} parent=11 // pred_check
          _
        $region880: #{tpu_custom_call.1} parent=11 // pred_check_branch
          %1499 = sbr.rel (0) target = $region882
        $region881: #{tpu_custom_call.1} parent=11 // pred_region
          %1500 = vsyncadd %s445, 16
        $region882: #{tpu_custom_call.1} parent=11 // pred_fallthru
          _
        %s1501 = sadd.s32 %s1089, 2
        %s1502 = smul.u32 %s1501, 128
        %s1503 = sadd.s32 %s1502, %s1094
        %s1504 = sld [smem:[#allocation7 + %s1503]]
        %s1505 = scalar_lea.vmem %s3, %s1504
        %s1506 = scalar_lea.vmem [#allocation3], 21
        %p1508 = scmp.lt.u32.totalorder 1, 8
        %p1509 = pneg %p1508
        // Predicated region
        $region883: #{tpu_custom_call.1} parent=11 // pred_check
          _
        $region884: #{tpu_custom_call.1} parent=11 // pred_check_branch
          %1511 = sbr.rel (%p1508) target = $region886
        $region885: #{tpu_custom_call.1} parent=11 // pred_region
          %s1526 = sand.u32 1, 7
          %p1527 = scmp.eq.s32.totalorder %s1526, 0
          %p1528 = pneg %p1527
          // Predicated region
          $region898: #{tpu_custom_call.1} parent=885 // pred_check
            _
          $region899: #{tpu_custom_call.1} parent=885 // pred_check_branch
            %1530 = sbr.rel (%p1527) target = $region901
          $region900: #{tpu_custom_call.1} parent=885 // pred_region
            %s1531 = sand.u32 1, 7
            %s1532 = ssub.s32 1, %s1531
            %s1533 = scalar_lea.vmem %s1505, %s1532
            %s1534 = ssub.s32 1, %s1531
            %s1535 = scalar_lea.vmem %s1506, %s1534 [#allocation3]
            %s1536 = sshllo.u32 0, %s1531
            loop: start=0, step=1, limit=1
            $region902: #{tpu_custom_call.1} parent=900 // loop_pre_header
              _
            $region903: #{tpu_custom_call.1} parent=900 // loop_header
              %s1538 = sphi 0, %s1542
              %p1539 = scmp.ge.s32.totalorder %s1538, 1
              %s1543 = sphi %s1533, %s1533
              %s1544 = sphi %s1535, %s1535
            $region904: #{tpu_custom_call.1} parent=900 // loop_header_branch
              %1541 = sbr.rel (%p1539) target = $region908
            $region905: #{tpu_custom_call.1} parent=900 // loop_body
              %v1545 = vld [vmem:[%s1543] sm:%s1536]
              %1546 = vst [vmem:[%s1544] sm:%s1536] %v1545
            $region906: #{tpu_custom_call.1} parent=900 // loop_footer
              %s1542 = sadd.s32 1, %s1538
            $region907: #{tpu_custom_call.1} parent=900 // loop_footer_branch
              %1537 = sbr.rel target = $region903
            $region908: #{tpu_custom_call.1} parent=900 // loop_exit
              _
          $region901: #{tpu_custom_call.1} parent=885 // pred_fallthru
            _
        $region886: #{tpu_custom_call.1} parent=11 // pred_fallthru
          _
        // Predicated region
        $region887: #{tpu_custom_call.1} parent=11 // pred_check
          %p1512 = pneg %p1508
        $region888: #{tpu_custom_call.1} parent=11 // pred_check_branch
          %1514 = sbr.rel (%p1512) target = $region890
        $region889: #{tpu_custom_call.1} parent=11 // pred_region
          %s1515 = sshllo.u32 0, 1
          loop: start=0, step=1, limit=1
          $region891: #{tpu_custom_call.1} parent=889 // loop_pre_header
            _
          $region892: #{tpu_custom_call.1} parent=889 // loop_header
            %s1517 = sphi 0, %s1521
            %p1518 = scmp.ge.s32.totalorder %s1517, 1
            %s1522 = sphi %s1505, %s1505
            %s1523 = sphi %s1506, %s1506
          $region893: #{tpu_custom_call.1} parent=889 // loop_header_branch
            %1520 = sbr.rel (%p1518) target = $region897
          $region894: #{tpu_custom_call.1} parent=889 // loop_body
            %v1524 = vld [vmem:[%s1522] sm:%s1515]
            %1525 = vst [vmem:[%s1523] sm:%s1515] %v1524
          $region895: #{tpu_custom_call.1} parent=889 // loop_footer
            %s1521 = sadd.s32 1, %s1517
          $region896: #{tpu_custom_call.1} parent=889 // loop_footer_branch
            %1516 = sbr.rel target = $region892
          $region897: #{tpu_custom_call.1} parent=889 // loop_exit
            _
        $region890: #{tpu_custom_call.1} parent=11 // pred_fallthru
          _
        // Predicated region
        $region909: #{tpu_custom_call.1} parent=11 // pred_check
          _
        $region910: #{tpu_custom_call.1} parent=11 // pred_check_branch
          %1549 = sbr.rel (0) target = $region912
        $region911: #{tpu_custom_call.1} parent=11 // pred_region
          %1550 = vsyncadd %s445, 16
        $region912: #{tpu_custom_call.1} parent=11 // pred_fallthru
          _
        %s1551 = sadd.s32 %s1143, 2
        %s1552 = smul.u32 %s1551, 128
        %s1553 = sadd.s32 %s1552, %s1148
        %s1554 = sld [smem:[#allocation7 + %s1553]]
        %s1555 = scalar_lea.vmem %s3, %s1554
        %s1556 = scalar_lea.vmem [#allocation3], 22
        %p1558 = scmp.lt.u32.totalorder 1, 8
        %p1559 = pneg %p1558
        // Predicated region
        $region913: #{tpu_custom_call.1} parent=11 // pred_check
          _
        $region914: #{tpu_custom_call.1} parent=11 // pred_check_branch
          %1561 = sbr.rel (%p1558) target = $region916
        $region915: #{tpu_custom_call.1} parent=11 // pred_region
          %s1576 = sand.u32 1, 7
          %p1577 = scmp.eq.s32.totalorder %s1576, 0
          %p1578 = pneg %p1577
          // Predicated region
          $region928: #{tpu_custom_call.1} parent=915 // pred_check
            _
          $region929: #{tpu_custom_call.1} parent=915 // pred_check_branch
            %1580 = sbr.rel (%p1577) target = $region931
          $region930: #{tpu_custom_call.1} parent=915 // pred_region
            %s1581 = sand.u32 1, 7
            %s1582 = ssub.s32 1, %s1581
            %s1583 = scalar_lea.vmem %s1555, %s1582
            %s1584 = ssub.s32 1, %s1581
            %s1585 = scalar_lea.vmem %s1556, %s1584 [#allocation3]
            %s1586 = sshllo.u32 0, %s1581
            loop: start=0, step=1, limit=1
            $region932: #{tpu_custom_call.1} parent=930 // loop_pre_header
              _
            $region933: #{tpu_custom_call.1} parent=930 // loop_header
              %s1588 = sphi 0, %s1592
              %p1589 = scmp.ge.s32.totalorder %s1588, 1
              %s1593 = sphi %s1583, %s1583
              %s1594 = sphi %s1585, %s1585
            $region934: #{tpu_custom_call.1} parent=930 // loop_header_branch
              %1591 = sbr.rel (%p1589) target = $region938
            $region935: #{tpu_custom_call.1} parent=930 // loop_body
              %v1595 = vld [vmem:[%s1593] sm:%s1586]
              %1596 = vst [vmem:[%s1594] sm:%s1586] %v1595
            $region936: #{tpu_custom_call.1} parent=930 // loop_footer
              %s1592 = sadd.s32 1, %s1588
            $region937: #{tpu_custom_call.1} parent=930 // loop_footer_branch
              %1587 = sbr.rel target = $region933
            $region938: #{tpu_custom_call.1} parent=930 // loop_exit
              _
          $region931: #{tpu_custom_call.1} parent=915 // pred_fallthru
            _
        $region916: #{tpu_custom_call.1} parent=11 // pred_fallthru
          _
        // Predicated region
        $region917: #{tpu_custom_call.1} parent=11 // pred_check
          %p1562 = pneg %p1558
        $region918: #{tpu_custom_call.1} parent=11 // pred_check_branch
          %1564 = sbr.rel (%p1562) target = $region920
        $region919: #{tpu_custom_call.1} parent=11 // pred_region
          %s1565 = sshllo.u32 0, 1
          loop: start=0, step=1, limit=1
          $region921: #{tpu_custom_call.1} parent=919 // loop_pre_header
            _
          $region922: #{tpu_custom_call.1} parent=919 // loop_header
            %s1567 = sphi 0, %s1571
            %p1568 = scmp.ge.s32.totalorder %s1567, 1
            %s1572 = sphi %s1555, %s1555
            %s1573 = sphi %s1556, %s1556
          $region923: #{tpu_custom_call.1} parent=919 // loop_header_branch
            %1570 = sbr.rel (%p1568) target = $region927
          $region924: #{tpu_custom_call.1} parent=919 // loop_body
            %v1574 = vld [vmem:[%s1572] sm:%s1565]
            %1575 = vst [vmem:[%s1573] sm:%s1565] %v1574
          $region925: #{tpu_custom_call.1} parent=919 // loop_footer
            %s1571 = sadd.s32 1, %s1567
          $region926: #{tpu_custom_call.1} parent=919 // loop_footer_branch
            %1566 = sbr.rel target = $region922
          $region927: #{tpu_custom_call.1} parent=919 // loop_exit
            _
        $region920: #{tpu_custom_call.1} parent=11 // pred_fallthru
          _
        // Predicated region
        $region939: #{tpu_custom_call.1} parent=11 // pred_check
          _
        $region940: #{tpu_custom_call.1} parent=11 // pred_check_branch
          %1599 = sbr.rel (0) target = $region942
        $region941: #{tpu_custom_call.1} parent=11 // pred_region
          %1600 = vsyncadd %s445, 16
        $region942: #{tpu_custom_call.1} parent=11 // pred_fallthru
          _
        %s1601 = sadd.s32 %s1197, 2
        %s1602 = smul.u32 %s1601, 128
        %s1603 = sadd.s32 %s1602, %s1202
        %s1604 = sld [smem:[#allocation7 + %s1603]]
        %s1605 = scalar_lea.vmem %s3, %s1604
        %s1606 = scalar_lea.vmem [#allocation3], 23
        %p1608 = scmp.lt.u32.totalorder 1, 8
        %p1609 = pneg %p1608
        // Predicated region
        $region943: #{tpu_custom_call.1} parent=11 // pred_check
          _
        $region944: #{tpu_custom_call.1} parent=11 // pred_check_branch
          %1611 = sbr.rel (%p1608) target = $region946
        $region945: #{tpu_custom_call.1} parent=11 // pred_region
          %s1626 = sand.u32 1, 7
          %p1627 = scmp.eq.s32.totalorder %s1626, 0
          %p1628 = pneg %p1627
          // Predicated region
          $region958: #{tpu_custom_call.1} parent=945 // pred_check
            _
          $region959: #{tpu_custom_call.1} parent=945 // pred_check_branch
            %1630 = sbr.rel (%p1627) target = $region961
          $region960: #{tpu_custom_call.1} parent=945 // pred_region
            %s1631 = sand.u32 1, 7
            %s1632 = ssub.s32 1, %s1631
            %s1633 = scalar_lea.vmem %s1605, %s1632
            %s1634 = ssub.s32 1, %s1631
            %s1635 = scalar_lea.vmem %s1606, %s1634 [#allocation3]
            %s1636 = sshllo.u32 0, %s1631
            loop: start=0, step=1, limit=1
            $region962: #{tpu_custom_call.1} parent=960 // loop_pre_header
              _
            $region963: #{tpu_custom_call.1} parent=960 // loop_header
              %s1638 = sphi 0, %s1642
              %p1639 = scmp.ge.s32.totalorder %s1638, 1
              %s1643 = sphi %s1633, %s1633
              %s1644 = sphi %s1635, %s1635
            $region964: #{tpu_custom_call.1} parent=960 // loop_header_branch
              %1641 = sbr.rel (%p1639) target = $region968
            $region965: #{tpu_custom_call.1} parent=960 // loop_body
              %v1645 = vld [vmem:[%s1643] sm:%s1636]
              %1646 = vst [vmem:[%s1644] sm:%s1636] %v1645
            $region966: #{tpu_custom_call.1} parent=960 // loop_footer
              %s1642 = sadd.s32 1, %s1638
            $region967: #{tpu_custom_call.1} parent=960 // loop_footer_branch
              %1637 = sbr.rel target = $region963
            $region968: #{tpu_custom_call.1} parent=960 // loop_exit
              _
          $region961: #{tpu_custom_call.1} parent=945 // pred_fallthru
            _
        $region946: #{tpu_custom_call.1} parent=11 // pred_fallthru
          _
        // Predicated region
        $region947: #{tpu_custom_call.1} parent=11 // pred_check
          %p1612 = pneg %p1608
        $region948: #{tpu_custom_call.1} parent=11 // pred_check_branch
          %1614 = sbr.rel (%p1612) target = $region950
        $region949: #{tpu_custom_call.1} parent=11 // pred_region
          %s1615 = sshllo.u32 0, 1
          loop: start=0, step=1, limit=1
          $region951: #{tpu_custom_call.1} parent=949 // loop_pre_header
            _
          $region952: #{tpu_custom_call.1} parent=949 // loop_header
            %s1617 = sphi 0, %s1621
            %p1618 = scmp.ge.s32.totalorder %s1617, 1
            %s1622 = sphi %s1605, %s1605
            %s1623 = sphi %s1606, %s1606
          $region953: #{tpu_custom_call.1} parent=949 // loop_header_branch
            %1620 = sbr.rel (%p1618) target = $region957
          $region954: #{tpu_custom_call.1} parent=949 // loop_body
            %v1624 = vld [vmem:[%s1622] sm:%s1615]
            %1625 = vst [vmem:[%s1623] sm:%s1615] %v1624
          $region955: #{tpu_custom_call.1} parent=949 // loop_footer
            %s1621 = sadd.s32 1, %s1617
          $region956: #{tpu_custom_call.1} parent=949 // loop_footer_branch
            %1616 = sbr.rel target = $region952
          $region957: #{tpu_custom_call.1} parent=949 // loop_exit
            _
        $region950: #{tpu_custom_call.1} parent=11 // pred_fallthru
          _
        // Predicated region
        $region969: #{tpu_custom_call.1} parent=11 // pred_check
          _
        $region970: #{tpu_custom_call.1} parent=11 // pred_check_branch
          %1649 = sbr.rel (0) target = $region972
        $region971: #{tpu_custom_call.1} parent=11 // pred_region
          %1650 = vsyncadd %s445, 16
        $region972: #{tpu_custom_call.1} parent=11 // pred_fallthru
          _
        %s1651 = sadd.s32 %s819, 3
        %s1652 = smul.u32 %s1651, 128
        %s1653 = sadd.s32 %s1652, %s824
        %s1654 = sld [smem:[#allocation7 + %s1653]]
        %s1655 = scalar_lea.vmem %s3, %s1654
        %s1656 = scalar_lea.vmem [#allocation3], 24
        %p1658 = scmp.lt.u32.totalorder 1, 8
        %p1659 = pneg %p1658
        // Predicated region
        $region973: #{tpu_custom_call.1} parent=11 // pred_check
          _
        $region974: #{tpu_custom_call.1} parent=11 // pred_check_branch
          %1661 = sbr.rel (%p1658) target = $region976
        $region975: #{tpu_custom_call.1} parent=11 // pred_region
          %s1676 = sand.u32 1, 7
          %p1677 = scmp.eq.s32.totalorder %s1676, 0
          %p1678 = pneg %p1677
          // Predicated region
          $region988: #{tpu_custom_call.1} parent=975 // pred_check
            _
          $region989: #{tpu_custom_call.1} parent=975 // pred_check_branch
            %1680 = sbr.rel (%p1677) target = $region991
          $region990: #{tpu_custom_call.1} parent=975 // pred_region
            %s1681 = sand.u32 1, 7
            %s1682 = ssub.s32 1, %s1681
            %s1683 = scalar_lea.vmem %s1655, %s1682
            %s1684 = ssub.s32 1, %s1681
            %s1685 = scalar_lea.vmem %s1656, %s1684 [#allocation3]
            %s1686 = sshllo.u32 0, %s1681
            loop: start=0, step=1, limit=1
            $region992: #{tpu_custom_call.1} parent=990 // loop_pre_header
              _
            $region993: #{tpu_custom_call.1} parent=990 // loop_header
              %s1688 = sphi 0, %s1692
              %p1689 = scmp.ge.s32.totalorder %s1688, 1
              %s1693 = sphi %s1683, %s1683
              %s1694 = sphi %s1685, %s1685
            $region994: #{tpu_custom_call.1} parent=990 // loop_header_branch
              %1691 = sbr.rel (%p1689) target = $region998
            $region995: #{tpu_custom_call.1} parent=990 // loop_body
              %v1695 = vld [vmem:[%s1693] sm:%s1686]
              %1696 = vst [vmem:[%s1694] sm:%s1686] %v1695
            $region996: #{tpu_custom_call.1} parent=990 // loop_footer
              %s1692 = sadd.s32 1, %s1688
            $region997: #{tpu_custom_call.1} parent=990 // loop_footer_branch
              %1687 = sbr.rel target = $region993
            $region998: #{tpu_custom_call.1} parent=990 // loop_exit
              _
          $region991: #{tpu_custom_call.1} parent=975 // pred_fallthru
            _
        $region976: #{tpu_custom_call.1} parent=11 // pred_fallthru
          _
        // Predicated region
        $region977: #{tpu_custom_call.1} parent=11 // pred_check
          %p1662 = pneg %p1658
        $region978: #{tpu_custom_call.1} parent=11 // pred_check_branch
          %1664 = sbr.rel (%p1662) target = $region980
        $region979: #{tpu_custom_call.1} parent=11 // pred_region
          %s1665 = sshllo.u32 0, 1
          loop: start=0, step=1, limit=1
          $region981: #{tpu_custom_call.1} parent=979 // loop_pre_header
            _
          $region982: #{tpu_custom_call.1} parent=979 // loop_header
            %s1667 = sphi 0, %s1671
            %p1668 = scmp.ge.s32.totalorder %s1667, 1
            %s1672 = sphi %s1655, %s1655
            %s1673 = sphi %s1656, %s1656
          $region983: #{tpu_custom_call.1} parent=979 // loop_header_branch
            %1670 = sbr.rel (%p1668) target = $region987
          $region984: #{tpu_custom_call.1} parent=979 // loop_body
            %v1674 = vld [vmem:[%s1672] sm:%s1665]
            %1675 = vst [vmem:[%s1673] sm:%s1665] %v1674
          $region985: #{tpu_custom_call.1} parent=979 // loop_footer
            %s1671 = sadd.s32 1, %s1667
          $region986: #{tpu_custom_call.1} parent=979 // loop_footer_branch
            %1666 = sbr.rel target = $region982
          $region987: #{tpu_custom_call.1} parent=979 // loop_exit
            _
        $region980: #{tpu_custom_call.1} parent=11 // pred_fallthru
          _
        // Predicated region
        $region999: #{tpu_custom_call.1} parent=11 // pred_check
          _
        $region1000: #{tpu_custom_call.1} parent=11 // pred_check_branch
          %1699 = sbr.rel (0) target = $region1002
        $region1001: #{tpu_custom_call.1} parent=11 // pred_region
          %1700 = vsyncadd %s445, 16
        $region1002: #{tpu_custom_call.1} parent=11 // pred_fallthru
          _
        %s1701 = sadd.s32 %s873, 3
        %s1702 = smul.u32 %s1701, 128
        %s1703 = sadd.s32 %s1702, %s878
        %s1704 = sld [smem:[#allocation7 + %s1703]]
        %s1705 = scalar_lea.vmem %s3, %s1704
        %s1706 = scalar_lea.vmem [#allocation3], 25
        %p1708 = scmp.lt.u32.totalorder 1, 8
        %p1709 = pneg %p1708
        // Predicated region
        $region1003: #{tpu_custom_call.1} parent=11 // pred_check
          _
        $region1004: #{tpu_custom_call.1} parent=11 // pred_check_branch
          %1711 = sbr.rel (%p1708) target = $region1006
        $region1005: #{tpu_custom_call.1} parent=11 // pred_region
          %s1726 = sand.u32 1, 7
          %p1727 = scmp.eq.s32.totalorder %s1726, 0
          %p1728 = pneg %p1727
          // Predicated region
          $region1018: #{tpu_custom_call.1} parent=1005 // pred_check
            _
          $region1019: #{tpu_custom_call.1} parent=1005 // pred_check_branch
            %1730 = sbr.rel (%p1727) target = $region1021
          $region1020: #{tpu_custom_call.1} parent=1005 // pred_region
            %s1731 = sand.u32 1, 7
            %s1732 = ssub.s32 1, %s1731
            %s1733 = scalar_lea.vmem %s1705, %s1732
            %s1734 = ssub.s32 1, %s1731
            %s1735 = scalar_lea.vmem %s1706, %s1734 [#allocation3]
            %s1736 = sshllo.u32 0, %s1731
            loop: start=0, step=1, limit=1
            $region1022: #{tpu_custom_call.1} parent=1020 // loop_pre_header
              _
            $region1023: #{tpu_custom_call.1} parent=1020 // loop_header
              %s1738 = sphi 0, %s1742
              %p1739 = scmp.ge.s32.totalorder %s1738, 1
              %s1743 = sphi %s1733, %s1733
              %s1744 = sphi %s1735, %s1735
            $region1024: #{tpu_custom_call.1} parent=1020 // loop_header_branch
              %1741 = sbr.rel (%p1739) target = $region1028
            $region1025: #{tpu_custom_call.1} parent=1020 // loop_body
              %v1745 = vld [vmem:[%s1743] sm:%s1736]
              %1746 = vst [vmem:[%s1744] sm:%s1736] %v1745
            $region1026: #{tpu_custom_call.1} parent=1020 // loop_footer
              %s1742 = sadd.s32 1, %s1738
            $region1027: #{tpu_custom_call.1} parent=1020 // loop_footer_branch
              %1737 = sbr.rel target = $region1023
            $region1028: #{tpu_custom_call.1} parent=1020 // loop_exit
              _
          $region1021: #{tpu_custom_call.1} parent=1005 // pred_fallthru
            _
        $region1006: #{tpu_custom_call.1} parent=11 // pred_fallthru
          _
        // Predicated region
        $region1007: #{tpu_custom_call.1} parent=11 // pred_check
          %p1712 = pneg %p1708
        $region1008: #{tpu_custom_call.1} parent=11 // pred_check_branch
          %1714 = sbr.rel (%p1712) target = $region1010
        $region1009: #{tpu_custom_call.1} parent=11 // pred_region
          %s1715 = sshllo.u32 0, 1
          loop: start=0, step=1, limit=1
          $region1011: #{tpu_custom_call.1} parent=1009 // loop_pre_header
            _
          $region1012: #{tpu_custom_call.1} parent=1009 // loop_header
            %s1717 = sphi 0, %s1721
            %p1718 = scmp.ge.s32.totalorder %s1717, 1
            %s1722 = sphi %s1705, %s1705
            %s1723 = sphi %s1706, %s1706
          $region1013: #{tpu_custom_call.1} parent=1009 // loop_header_branch
            %1720 = sbr.rel (%p1718) target = $region1017
          $region1014: #{tpu_custom_call.1} parent=1009 // loop_body
            %v1724 = vld [vmem:[%s1722] sm:%s1715]
            %1725 = vst [vmem:[%s1723] sm:%s1715] %v1724
          $region1015: #{tpu_custom_call.1} parent=1009 // loop_footer
            %s1721 = sadd.s32 1, %s1717
          $region1016: #{tpu_custom_call.1} parent=1009 // loop_footer_branch
            %1716 = sbr.rel target = $region1012
          $region1017: #{tpu_custom_call.1} parent=1009 // loop_exit
            _
        $region1010: #{tpu_custom_call.1} parent=11 // pred_fallthru
          _
        // Predicated region
        $region1029: #{tpu_custom_call.1} parent=11 // pred_check
          _
        $region1030: #{tpu_custom_call.1} parent=11 // pred_check_branch
          %1749 = sbr.rel (0) target = $region1032
        $region1031: #{tpu_custom_call.1} parent=11 // pred_region
          %1750 = vsyncadd %s445, 16
        $region1032: #{tpu_custom_call.1} parent=11 // pred_fallthru
          _
        %s1751 = sadd.s32 %s927, 3
        %s1752 = smul.u32 %s1751, 128
        %s1753 = sadd.s32 %s1752, %s932
        %s1754 = sld [smem:[#allocation7 + %s1753]]
        %s1755 = scalar_lea.vmem %s3, %s1754
        %s1756 = scalar_lea.vmem [#allocation3], 26
        %p1758 = scmp.lt.u32.totalorder 1, 8
        %p1759 = pneg %p1758
        // Predicated region
        $region1033: #{tpu_custom_call.1} parent=11 // pred_check
          _
        $region1034: #{tpu_custom_call.1} parent=11 // pred_check_branch
          %1761 = sbr.rel (%p1758) target = $region1036
        $region1035: #{tpu_custom_call.1} parent=11 // pred_region
          %s1776 = sand.u32 1, 7
          %p1777 = scmp.eq.s32.totalorder %s1776, 0
          %p1778 = pneg %p1777
          // Predicated region
          $region1048: #{tpu_custom_call.1} parent=1035 // pred_check
            _
          $region1049: #{tpu_custom_call.1} parent=1035 // pred_check_branch
            %1780 = sbr.rel (%p1777) target = $region1051
          $region1050: #{tpu_custom_call.1} parent=1035 // pred_region
            %s1781 = sand.u32 1, 7
            %s1782 = ssub.s32 1, %s1781
            %s1783 = scalar_lea.vmem %s1755, %s1782
            %s1784 = ssub.s32 1, %s1781
            %s1785 = scalar_lea.vmem %s1756, %s1784 [#allocation3]
            %s1786 = sshllo.u32 0, %s1781
            loop: start=0, step=1, limit=1
            $region1052: #{tpu_custom_call.1} parent=1050 // loop_pre_header
              _
            $region1053: #{tpu_custom_call.1} parent=1050 // loop_header
              %s1788 = sphi 0, %s1792
              %p1789 = scmp.ge.s32.totalorder %s1788, 1
              %s1793 = sphi %s1783, %s1783
              %s1794 = sphi %s1785, %s1785
            $region1054: #{tpu_custom_call.1} parent=1050 // loop_header_branch
              %1791 = sbr.rel (%p1789) target = $region1058
            $region1055: #{tpu_custom_call.1} parent=1050 // loop_body
              %v1795 = vld [vmem:[%s1793] sm:%s1786]
              %1796 = vst [vmem:[%s1794] sm:%s1786] %v1795
            $region1056: #{tpu_custom_call.1} parent=1050 // loop_footer
              %s1792 = sadd.s32 1, %s1788
            $region1057: #{tpu_custom_call.1} parent=1050 // loop_footer_branch
              %1787 = sbr.rel target = $region1053
            $region1058: #{tpu_custom_call.1} parent=1050 // loop_exit
              _
          $region1051: #{tpu_custom_call.1} parent=1035 // pred_fallthru
            _
        $region1036: #{tpu_custom_call.1} parent=11 // pred_fallthru
          _
        // Predicated region
        $region1037: #{tpu_custom_call.1} parent=11 // pred_check
          %p1762 = pneg %p1758
        $region1038: #{tpu_custom_call.1} parent=11 // pred_check_branch
          %1764 = sbr.rel (%p1762) target = $region1040
        $region1039: #{tpu_custom_call.1} parent=11 // pred_region
          %s1765 = sshllo.u32 0, 1
          loop: start=0, step=1, limit=1
          $region1041: #{tpu_custom_call.1} parent=1039 // loop_pre_header
            _
          $region1042: #{tpu_custom_call.1} parent=1039 // loop_header
            %s1767 = sphi 0, %s1771
            %p1768 = scmp.ge.s32.totalorder %s1767, 1
            %s1772 = sphi %s1755, %s1755
            %s1773 = sphi %s1756, %s1756
          $region1043: #{tpu_custom_call.1} parent=1039 // loop_header_branch
            %1770 = sbr.rel (%p1768) target = $region1047
          $region1044: #{tpu_custom_call.1} parent=1039 // loop_body
            %v1774 = vld [vmem:[%s1772] sm:%s1765]
            %1775 = vst [vmem:[%s1773] sm:%s1765] %v1774
          $region1045: #{tpu_custom_call.1} parent=1039 // loop_footer
            %s1771 = sadd.s32 1, %s1767
          $region1046: #{tpu_custom_call.1} parent=1039 // loop_footer_branch
            %1766 = sbr.rel target = $region1042
          $region1047: #{tpu_custom_call.1} parent=1039 // loop_exit
            _
        $region1040: #{tpu_custom_call.1} parent=11 // pred_fallthru
          _
        // Predicated region
        $region1059: #{tpu_custom_call.1} parent=11 // pred_check
          _
        $region1060: #{tpu_custom_call.1} parent=11 // pred_check_branch
          %1799 = sbr.rel (0) target = $region1062
        $region1061: #{tpu_custom_call.1} parent=11 // pred_region
          %1800 = vsyncadd %s445, 16
        $region1062: #{tpu_custom_call.1} parent=11 // pred_fallthru
          _
        %s1801 = sadd.s32 %s981, 3
        %s1802 = smul.u32 %s1801, 128
        %s1803 = sadd.s32 %s1802, %s986
        %s1804 = sld [smem:[#allocation7 + %s1803]]
        %s1805 = scalar_lea.vmem %s3, %s1804
        %s1806 = scalar_lea.vmem [#allocation3], 27
        %p1808 = scmp.lt.u32.totalorder 1, 8
        %p1809 = pneg %p1808
        // Predicated region
        $region1063: #{tpu_custom_call.1} parent=11 // pred_check
          _
        $region1064: #{tpu_custom_call.1} parent=11 // pred_check_branch
          %1811 = sbr.rel (%p1808) target = $region1066
        $region1065: #{tpu_custom_call.1} parent=11 // pred_region
          %s1826 = sand.u32 1, 7
          %p1827 = scmp.eq.s32.totalorder %s1826, 0
          %p1828 = pneg %p1827
          // Predicated region
          $region1078: #{tpu_custom_call.1} parent=1065 // pred_check
            _
          $region1079: #{tpu_custom_call.1} parent=1065 // pred_check_branch
            %1830 = sbr.rel (%p1827) target = $region1081
          $region1080: #{tpu_custom_call.1} parent=1065 // pred_region
            %s1831 = sand.u32 1, 7
            %s1832 = ssub.s32 1, %s1831
            %s1833 = scalar_lea.vmem %s1805, %s1832
            %s1834 = ssub.s32 1, %s1831
            %s1835 = scalar_lea.vmem %s1806, %s1834 [#allocation3]
            %s1836 = sshllo.u32 0, %s1831
            loop: start=0, step=1, limit=1
            $region1082: #{tpu_custom_call.1} parent=1080 // loop_pre_header
              _
            $region1083: #{tpu_custom_call.1} parent=1080 // loop_header
              %s1838 = sphi 0, %s1842
              %p1839 = scmp.ge.s32.totalorder %s1838, 1
              %s1843 = sphi %s1833, %s1833
              %s1844 = sphi %s1835, %s1835
            $region1084: #{tpu_custom_call.1} parent=1080 // loop_header_branch
              %1841 = sbr.rel (%p1839) target = $region1088
            $region1085: #{tpu_custom_call.1} parent=1080 // loop_body
              %v1845 = vld [vmem:[%s1843] sm:%s1836]
              %1846 = vst [vmem:[%s1844] sm:%s1836] %v1845
            $region1086: #{tpu_custom_call.1} parent=1080 // loop_footer
              %s1842 = sadd.s32 1, %s1838
            $region1087: #{tpu_custom_call.1} parent=1080 // loop_footer_branch
              %1837 = sbr.rel target = $region1083
            $region1088: #{tpu_custom_call.1} parent=1080 // loop_exit
              _
          $region1081: #{tpu_custom_call.1} parent=1065 // pred_fallthru
            _
        $region1066: #{tpu_custom_call.1} parent=11 // pred_fallthru
          _
        // Predicated region
        $region1067: #{tpu_custom_call.1} parent=11 // pred_check
          %p1812 = pneg %p1808
        $region1068: #{tpu_custom_call.1} parent=11 // pred_check_branch
          %1814 = sbr.rel (%p1812) target = $region1070
        $region1069: #{tpu_custom_call.1} parent=11 // pred_region
          %s1815 = sshllo.u32 0, 1
          loop: start=0, step=1, limit=1
          $region1071: #{tpu_custom_call.1} parent=1069 // loop_pre_header
            _
          $region1072: #{tpu_custom_call.1} parent=1069 // loop_header
            %s1817 = sphi 0, %s1821
            %p1818 = scmp.ge.s32.totalorder %s1817, 1
            %s1822 = sphi %s1805, %s1805
            %s1823 = sphi %s1806, %s1806
          $region1073: #{tpu_custom_call.1} parent=1069 // loop_header_branch
            %1820 = sbr.rel (%p1818) target = $region1077
          $region1074: #{tpu_custom_call.1} parent=1069 // loop_body
            %v1824 = vld [vmem:[%s1822] sm:%s1815]
            %1825 = vst [vmem:[%s1823] sm:%s1815] %v1824
          $region1075: #{tpu_custom_call.1} parent=1069 // loop_footer
            %s1821 = sadd.s32 1, %s1817
          $region1076: #{tpu_custom_call.1} parent=1069 // loop_footer_branch
            %1816 = sbr.rel target = $region1072
          $region1077: #{tpu_custom_call.1} parent=1069 // loop_exit
            _
        $region1070: #{tpu_custom_call.1} parent=11 // pred_fallthru
          _
        // Predicated region
        $region1089: #{tpu_custom_call.1} parent=11 // pred_check
          _
        $region1090: #{tpu_custom_call.1} parent=11 // pred_check_branch
          %1849 = sbr.rel (0) target = $region1092
        $region1091: #{tpu_custom_call.1} parent=11 // pred_region
          %1850 = vsyncadd %s445, 16
        $region1092: #{tpu_custom_call.1} parent=11 // pred_fallthru
          _
        %s1851 = sadd.s32 %s1035, 3
        %s1852 = smul.u32 %s1851, 128
        %s1853 = sadd.s32 %s1852, %s1040
        %s1854 = sld [smem:[#allocation7 + %s1853]]
        %s1855 = scalar_lea.vmem %s3, %s1854
        %s1856 = scalar_lea.vmem [#allocation3], 28
        %p1858 = scmp.lt.u32.totalorder 1, 8
        %p1859 = pneg %p1858
        // Predicated region
        $region1093: #{tpu_custom_call.1} parent=11 // pred_check
          _
        $region1094: #{tpu_custom_call.1} parent=11 // pred_check_branch
          %1861 = sbr.rel (%p1858) target = $region1096
        $region1095: #{tpu_custom_call.1} parent=11 // pred_region
          %s1876 = sand.u32 1, 7
          %p1877 = scmp.eq.s32.totalorder %s1876, 0
          %p1878 = pneg %p1877
          // Predicated region
          $region1108: #{tpu_custom_call.1} parent=1095 // pred_check
            _
          $region1109: #{tpu_custom_call.1} parent=1095 // pred_check_branch
            %1880 = sbr.rel (%p1877) target = $region1111
          $region1110: #{tpu_custom_call.1} parent=1095 // pred_region
            %s1881 = sand.u32 1, 7
            %s1882 = ssub.s32 1, %s1881
            %s1883 = scalar_lea.vmem %s1855, %s1882
            %s1884 = ssub.s32 1, %s1881
            %s1885 = scalar_lea.vmem %s1856, %s1884 [#allocation3]
            %s1886 = sshllo.u32 0, %s1881
            loop: start=0, step=1, limit=1
            $region1112: #{tpu_custom_call.1} parent=1110 // loop_pre_header
              _
            $region1113: #{tpu_custom_call.1} parent=1110 // loop_header
              %s1888 = sphi 0, %s1892
              %p1889 = scmp.ge.s32.totalorder %s1888, 1
              %s1893 = sphi %s1883, %s1883
              %s1894 = sphi %s1885, %s1885
            $region1114: #{tpu_custom_call.1} parent=1110 // loop_header_branch
              %1891 = sbr.rel (%p1889) target = $region1118
            $region1115: #{tpu_custom_call.1} parent=1110 // loop_body
              %v1895 = vld [vmem:[%s1893] sm:%s1886]
              %1896 = vst [vmem:[%s1894] sm:%s1886] %v1895
            $region1116: #{tpu_custom_call.1} parent=1110 // loop_footer
              %s1892 = sadd.s32 1, %s1888
            $region1117: #{tpu_custom_call.1} parent=1110 // loop_footer_branch
              %1887 = sbr.rel target = $region1113
            $region1118: #{tpu_custom_call.1} parent=1110 // loop_exit
              _
          $region1111: #{tpu_custom_call.1} parent=1095 // pred_fallthru
            _
        $region1096: #{tpu_custom_call.1} parent=11 // pred_fallthru
          _
        // Predicated region
        $region1097: #{tpu_custom_call.1} parent=11 // pred_check
          %p1862 = pneg %p1858
        $region1098: #{tpu_custom_call.1} parent=11 // pred_check_branch
          %1864 = sbr.rel (%p1862) target = $region1100
        $region1099: #{tpu_custom_call.1} parent=11 // pred_region
          %s1865 = sshllo.u32 0, 1
          loop: start=0, step=1, limit=1
          $region1101: #{tpu_custom_call.1} parent=1099 // loop_pre_header
            _
          $region1102: #{tpu_custom_call.1} parent=1099 // loop_header
            %s1867 = sphi 0, %s1871
            %p1868 = scmp.ge.s32.totalorder %s1867, 1
            %s1872 = sphi %s1855, %s1855
            %s1873 = sphi %s1856, %s1856
          $region1103: #{tpu_custom_call.1} parent=1099 // loop_header_branch
            %1870 = sbr.rel (%p1868) target = $region1107
          $region1104: #{tpu_custom_call.1} parent=1099 // loop_body
            %v1874 = vld [vmem:[%s1872] sm:%s1865]
            %1875 = vst [vmem:[%s1873] sm:%s1865] %v1874
          $region1105: #{tpu_custom_call.1} parent=1099 // loop_footer
            %s1871 = sadd.s32 1, %s1867
          $region1106: #{tpu_custom_call.1} parent=1099 // loop_footer_branch
            %1866 = sbr.rel target = $region1102
          $region1107: #{tpu_custom_call.1} parent=1099 // loop_exit
            _
        $region1100: #{tpu_custom_call.1} parent=11 // pred_fallthru
          _
        // Predicated region
        $region1119: #{tpu_custom_call.1} parent=11 // pred_check
          _
        $region1120: #{tpu_custom_call.1} parent=11 // pred_check_branch
          %1899 = sbr.rel (0) target = $region1122
        $region1121: #{tpu_custom_call.1} parent=11 // pred_region
          %1900 = vsyncadd %s445, 16
        $region1122: #{tpu_custom_call.1} parent=11 // pred_fallthru
          _
        %s1901 = sadd.s32 %s1089, 3
        %s1902 = smul.u32 %s1901, 128
        %s1903 = sadd.s32 %s1902, %s1094
        %s1904 = sld [smem:[#allocation7 + %s1903]]
        %s1905 = scalar_lea.vmem %s3, %s1904
        %s1906 = scalar_lea.vmem [#allocation3], 29
        %p1908 = scmp.lt.u32.totalorder 1, 8
        %p1909 = pneg %p1908
        // Predicated region
        $region1123: #{tpu_custom_call.1} parent=11 // pred_check
          _
        $region1124: #{tpu_custom_call.1} parent=11 // pred_check_branch
          %1911 = sbr.rel (%p1908) target = $region1126
        $region1125: #{tpu_custom_call.1} parent=11 // pred_region
          %s1926 = sand.u32 1, 7
          %p1927 = scmp.eq.s32.totalorder %s1926, 0
          %p1928 = pneg %p1927
          // Predicated region
          $region1138: #{tpu_custom_call.1} parent=1125 // pred_check
            _
          $region1139: #{tpu_custom_call.1} parent=1125 // pred_check_branch
            %1930 = sbr.rel (%p1927) target = $region1141
          $region1140: #{tpu_custom_call.1} parent=1125 // pred_region
            %s1931 = sand.u32 1, 7
            %s1932 = ssub.s32 1, %s1931
            %s1933 = scalar_lea.vmem %s1905, %s1932
            %s1934 = ssub.s32 1, %s1931
            %s1935 = scalar_lea.vmem %s1906, %s1934 [#allocation3]
            %s1936 = sshllo.u32 0, %s1931
            loop: start=0, step=1, limit=1
            $region1142: #{tpu_custom_call.1} parent=1140 // loop_pre_header
              _
            $region1143: #{tpu_custom_call.1} parent=1140 // loop_header
              %s1938 = sphi 0, %s1942
              %p1939 = scmp.ge.s32.totalorder %s1938, 1
              %s1943 = sphi %s1933, %s1933
              %s1944 = sphi %s1935, %s1935
            $region1144: #{tpu_custom_call.1} parent=1140 // loop_header_branch
              %1941 = sbr.rel (%p1939) target = $region1148
            $region1145: #{tpu_custom_call.1} parent=1140 // loop_body
              %v1945 = vld [vmem:[%s1943] sm:%s1936]
              %1946 = vst [vmem:[%s1944] sm:%s1936] %v1945
            $region1146: #{tpu_custom_call.1} parent=1140 // loop_footer
              %s1942 = sadd.s32 1, %s1938
            $region1147: #{tpu_custom_call.1} parent=1140 // loop_footer_branch
              %1937 = sbr.rel target = $region1143
            $region1148: #{tpu_custom_call.1} parent=1140 // loop_exit
              _
          $region1141: #{tpu_custom_call.1} parent=1125 // pred_fallthru
            _
        $region1126: #{tpu_custom_call.1} parent=11 // pred_fallthru
          _
        // Predicated region
        $region1127: #{tpu_custom_call.1} parent=11 // pred_check
          %p1912 = pneg %p1908
        $region1128: #{tpu_custom_call.1} parent=11 // pred_check_branch
          %1914 = sbr.rel (%p1912) target = $region1130
        $region1129: #{tpu_custom_call.1} parent=11 // pred_region
          %s1915 = sshllo.u32 0, 1
          loop: start=0, step=1, limit=1
          $region1131: #{tpu_custom_call.1} parent=1129 // loop_pre_header
            _
          $region1132: #{tpu_custom_call.1} parent=1129 // loop_header
            %s1917 = sphi 0, %s1921
            %p1918 = scmp.ge.s32.totalorder %s1917, 1
            %s1922 = sphi %s1905, %s1905
            %s1923 = sphi %s1906, %s1906
          $region1133: #{tpu_custom_call.1} parent=1129 // loop_header_branch
            %1920 = sbr.rel (%p1918) target = $region1137
          $region1134: #{tpu_custom_call.1} parent=1129 // loop_body
            %v1924 = vld [vmem:[%s1922] sm:%s1915]
            %1925 = vst [vmem:[%s1923] sm:%s1915] %v1924
          $region1135: #{tpu_custom_call.1} parent=1129 // loop_footer
            %s1921 = sadd.s32 1, %s1917
          $region1136: #{tpu_custom_call.1} parent=1129 // loop_footer_branch
            %1916 = sbr.rel target = $region1132
          $region1137: #{tpu_custom_call.1} parent=1129 // loop_exit
            _
        $region1130: #{tpu_custom_call.1} parent=11 // pred_fallthru
          _
        // Predicated region
        $region1149: #{tpu_custom_call.1} parent=11 // pred_check
          _
        $region1150: #{tpu_custom_call.1} parent=11 // pred_check_branch
          %1949 = sbr.rel (0) target = $region1152
        $region1151: #{tpu_custom_call.1} parent=11 // pred_region
          %1950 = vsyncadd %s445, 16
        $region1152: #{tpu_custom_call.1} parent=11 // pred_fallthru
          _
        %s1951 = sadd.s32 %s1143, 3
        %s1952 = smul.u32 %s1951, 128
        %s1953 = sadd.s32 %s1952, %s1148
        %s1954 = sld [smem:[#allocation7 + %s1953]]
        %s1955 = scalar_lea.vmem %s3, %s1954
        %s1956 = scalar_lea.vmem [#allocation3], 30
        %p1958 = scmp.lt.u32.totalorder 1, 8
        %p1959 = pneg %p1958
        // Predicated region
        $region1153: #{tpu_custom_call.1} parent=11 // pred_check
          _
        $region1154: #{tpu_custom_call.1} parent=11 // pred_check_branch
          %1961 = sbr.rel (%p1958) target = $region1156
        $region1155: #{tpu_custom_call.1} parent=11 // pred_region
          %s1976 = sand.u32 1, 7
          %p1977 = scmp.eq.s32.totalorder %s1976, 0
          %p1978 = pneg %p1977
          // Predicated region
          $region1168: #{tpu_custom_call.1} parent=1155 // pred_check
            _
          $region1169: #{tpu_custom_call.1} parent=1155 // pred_check_branch
            %1980 = sbr.rel (%p1977) target = $region1171
          $region1170: #{tpu_custom_call.1} parent=1155 // pred_region
            %s1981 = sand.u32 1, 7
            %s1982 = ssub.s32 1, %s1981
            %s1983 = scalar_lea.vmem %s1955, %s1982
            %s1984 = ssub.s32 1, %s1981
            %s1985 = scalar_lea.vmem %s1956, %s1984 [#allocation3]
            %s1986 = sshllo.u32 0, %s1981
            loop: start=0, step=1, limit=1
            $region1172: #{tpu_custom_call.1} parent=1170 // loop_pre_header
              _
            $region1173: #{tpu_custom_call.1} parent=1170 // loop_header
              %s1988 = sphi 0, %s1992
              %p1989 = scmp.ge.s32.totalorder %s1988, 1
              %s1993 = sphi %s1983, %s1983
              %s1994 = sphi %s1985, %s1985
            $region1174: #{tpu_custom_call.1} parent=1170 // loop_header_branch
              %1991 = sbr.rel (%p1989) target = $region1178
            $region1175: #{tpu_custom_call.1} parent=1170 // loop_body
              %v1995 = vld [vmem:[%s1993] sm:%s1986]
              %1996 = vst [vmem:[%s1994] sm:%s1986] %v1995
            $region1176: #{tpu_custom_call.1} parent=1170 // loop_footer
              %s1992 = sadd.s32 1, %s1988
            $region1177: #{tpu_custom_call.1} parent=1170 // loop_footer_branch
              %1987 = sbr.rel target = $region1173
            $region1178: #{tpu_custom_call.1} parent=1170 // loop_exit
              _
          $region1171: #{tpu_custom_call.1} parent=1155 // pred_fallthru
            _
        $region1156: #{tpu_custom_call.1} parent=11 // pred_fallthru
          _
        // Predicated region
        $region1157: #{tpu_custom_call.1} parent=11 // pred_check
          %p1962 = pneg %p1958
        $region1158: #{tpu_custom_call.1} parent=11 // pred_check_branch
          %1964 = sbr.rel (%p1962) target = $region1160
        $region1159: #{tpu_custom_call.1} parent=11 // pred_region
          %s1965 = sshllo.u32 0, 1
          loop: start=0, step=1, limit=1
          $region1161: #{tpu_custom_call.1} parent=1159 // loop_pre_header
            _
          $region1162: #{tpu_custom_call.1} parent=1159 // loop_header
            %s1967 = sphi 0, %s1971
            %p1968 = scmp.ge.s32.totalorder %s1967, 1
            %s1972 = sphi %s1955, %s1955
            %s1973 = sphi %s1956, %s1956
          $region1163: #{tpu_custom_call.1} parent=1159 // loop_header_branch
            %1970 = sbr.rel (%p1968) target = $region1167
          $region1164: #{tpu_custom_call.1} parent=1159 // loop_body
            %v1974 = vld [vmem:[%s1972] sm:%s1965]
            %1975 = vst [vmem:[%s1973] sm:%s1965] %v1974
          $region1165: #{tpu_custom_call.1} parent=1159 // loop_footer
            %s1971 = sadd.s32 1, %s1967
          $region1166: #{tpu_custom_call.1} parent=1159 // loop_footer_branch
            %1966 = sbr.rel target = $region1162
          $region1167: #{tpu_custom_call.1} parent=1159 // loop_exit
            _
        $region1160: #{tpu_custom_call.1} parent=11 // pred_fallthru
          _
        // Predicated region
        $region1179: #{tpu_custom_call.1} parent=11 // pred_check
          _
        $region1180: #{tpu_custom_call.1} parent=11 // pred_check_branch
          %1999 = sbr.rel (0) target = $region1182
        $region1181: #{tpu_custom_call.1} parent=11 // pred_region
          %2000 = vsyncadd %s445, 16
        $region1182: #{tpu_custom_call.1} parent=11 // pred_fallthru
          _
        %s2001 = sadd.s32 %s1197, 3
        %s2002 = smul.u32 %s2001, 128
        %s2003 = sadd.s32 %s2002, %s1202
        %s2004 = sld [smem:[#allocation7 + %s2003]]
        %s2005 = scalar_lea.vmem %s3, %s2004
        %s2006 = scalar_lea.vmem [#allocation3], 31
        %p2008 = scmp.lt.u32.totalorder 1, 8
        %p2009 = pneg %p2008
        // Predicated region
        $region1183: #{tpu_custom_call.1} parent=11 // pred_check
          _
        $region1184: #{tpu_custom_call.1} parent=11 // pred_check_branch
          %2011 = sbr.rel (%p2008) target = $region1186
        $region1185: #{tpu_custom_call.1} parent=11 // pred_region
          %s2026 = sand.u32 1, 7
          %p2027 = scmp.eq.s32.totalorder %s2026, 0
          %p2028 = pneg %p2027
          // Predicated region
          $region1198: #{tpu_custom_call.1} parent=1185 // pred_check
            _
          $region1199: #{tpu_custom_call.1} parent=1185 // pred_check_branch
            %2030 = sbr.rel (%p2027) target = $region1201
          $region1200: #{tpu_custom_call.1} parent=1185 // pred_region
            %s2031 = sand.u32 1, 7
            %s2032 = ssub.s32 1, %s2031
            %s2033 = scalar_lea.vmem %s2005, %s2032
            %s2034 = ssub.s32 1, %s2031
            %s2035 = scalar_lea.vmem %s2006, %s2034 [#allocation3]
            %s2036 = sshllo.u32 0, %s2031
            loop: start=0, step=1, limit=1
            $region1202: #{tpu_custom_call.1} parent=1200 // loop_pre_header
              _
            $region1203: #{tpu_custom_call.1} parent=1200 // loop_header
              %s2038 = sphi 0, %s2042
              %p2039 = scmp.ge.s32.totalorder %s2038, 1
              %s2043 = sphi %s2033, %s2033
              %s2044 = sphi %s2035, %s2035
            $region1204: #{tpu_custom_call.1} parent=1200 // loop_header_branch
              %2041 = sbr.rel (%p2039) target = $region1208
            $region1205: #{tpu_custom_call.1} parent=1200 // loop_body
              %v2045 = vld [vmem:[%s2043] sm:%s2036]
              %2046 = vst [vmem:[%s2044] sm:%s2036] %v2045
            $region1206: #{tpu_custom_call.1} parent=1200 // loop_footer
              %s2042 = sadd.s32 1, %s2038
            $region1207: #{tpu_custom_call.1} parent=1200 // loop_footer_branch
              %2037 = sbr.rel target = $region1203
            $region1208: #{tpu_custom_call.1} parent=1200 // loop_exit
              _
          $region1201: #{tpu_custom_call.1} parent=1185 // pred_fallthru
            _
        $region1186: #{tpu_custom_call.1} parent=11 // pred_fallthru
          _
        // Predicated region
        $region1187: #{tpu_custom_call.1} parent=11 // pred_check
          %p2012 = pneg %p2008
        $region1188: #{tpu_custom_call.1} parent=11 // pred_check_branch
          %2014 = sbr.rel (%p2012) target = $region1190
        $region1189: #{tpu_custom_call.1} parent=11 // pred_region
          %s2015 = sshllo.u32 0, 1
          loop: start=0, step=1, limit=1
          $region1191: #{tpu_custom_call.1} parent=1189 // loop_pre_header
            _
          $region1192: #{tpu_custom_call.1} parent=1189 // loop_header
            %s2017 = sphi 0, %s2021
            %p2018 = scmp.ge.s32.totalorder %s2017, 1
            %s2022 = sphi %s2005, %s2005
            %s2023 = sphi %s2006, %s2006
          $region1193: #{tpu_custom_call.1} parent=1189 // loop_header_branch
            %2020 = sbr.rel (%p2018) target = $region1197
          $region1194: #{tpu_custom_call.1} parent=1189 // loop_body
            %v2024 = vld [vmem:[%s2022] sm:%s2015]
            %2025 = vst [vmem:[%s2023] sm:%s2015] %v2024
          $region1195: #{tpu_custom_call.1} parent=1189 // loop_footer
            %s2021 = sadd.s32 1, %s2017
          $region1196: #{tpu_custom_call.1} parent=1189 // loop_footer_branch
            %2016 = sbr.rel target = $region1192
          $region1197: #{tpu_custom_call.1} parent=1189 // loop_exit
            _
        $region1190: #{tpu_custom_call.1} parent=11 // pred_fallthru
          _
        // Predicated region
        $region1209: #{tpu_custom_call.1} parent=11 // pred_check
          _
        $region1210: #{tpu_custom_call.1} parent=11 // pred_check_branch
          %2049 = sbr.rel (0) target = $region1212
        $region1211: #{tpu_custom_call.1} parent=11 // pred_region
          %2050 = vsyncadd %s445, 16
        $region1212: #{tpu_custom_call.1} parent=11 // pred_fallthru
          _
        %s2051 = sadd.s32 %s819, 4
        %s2052 = smul.u32 %s2051, 128
        %s2053 = sadd.s32 %s2052, %s824
        %s2054 = sld [smem:[#allocation7 + %s2053]]
        %s2055 = scalar_lea.vmem %s3, %s2054
        %s2056 = scalar_lea.vmem [#allocation3], 32
        %p2058 = scmp.lt.u32.totalorder 1, 8
        %p2059 = pneg %p2058
        // Predicated region
        $region1213: #{tpu_custom_call.1} parent=11 // pred_check
          _
        $region1214: #{tpu_custom_call.1} parent=11 // pred_check_branch
          %2061 = sbr.rel (%p2058) target = $region1216
        $region1215: #{tpu_custom_call.1} parent=11 // pred_region
          %s2076 = sand.u32 1, 7
          %p2077 = scmp.eq.s32.totalorder %s2076, 0
          %p2078 = pneg %p2077
          // Predicated region
          $region1228: #{tpu_custom_call.1} parent=1215 // pred_check
            _
          $region1229: #{tpu_custom_call.1} parent=1215 // pred_check_branch
            %2080 = sbr.rel (%p2077) target = $region1231
          $region1230: #{tpu_custom_call.1} parent=1215 // pred_region
            %s2081 = sand.u32 1, 7
            %s2082 = ssub.s32 1, %s2081
            %s2083 = scalar_lea.vmem %s2055, %s2082
            %s2084 = ssub.s32 1, %s2081
            %s2085 = scalar_lea.vmem %s2056, %s2084 [#allocation3]
            %s2086 = sshllo.u32 0, %s2081
            loop: start=0, step=1, limit=1
            $region1232: #{tpu_custom_call.1} parent=1230 // loop_pre_header
              _
            $region1233: #{tpu_custom_call.1} parent=1230 // loop_header
              %s2088 = sphi 0, %s2092
              %p2089 = scmp.ge.s32.totalorder %s2088, 1
              %s2093 = sphi %s2083, %s2083
              %s2094 = sphi %s2085, %s2085
            $region1234: #{tpu_custom_call.1} parent=1230 // loop_header_branch
              %2091 = sbr.rel (%p2089) target = $region1238
            $region1235: #{tpu_custom_call.1} parent=1230 // loop_body
              %v2095 = vld [vmem:[%s2093] sm:%s2086]
              %2096 = vst [vmem:[%s2094] sm:%s2086] %v2095
            $region1236: #{tpu_custom_call.1} parent=1230 // loop_footer
              %s2092 = sadd.s32 1, %s2088
            $region1237: #{tpu_custom_call.1} parent=1230 // loop_footer_branch
              %2087 = sbr.rel target = $region1233
            $region1238: #{tpu_custom_call.1} parent=1230 // loop_exit
              _
          $region1231: #{tpu_custom_call.1} parent=1215 // pred_fallthru
            _
        $region1216: #{tpu_custom_call.1} parent=11 // pred_fallthru
          _
        // Predicated region
        $region1217: #{tpu_custom_call.1} parent=11 // pred_check
          %p2062 = pneg %p2058
        $region1218: #{tpu_custom_call.1} parent=11 // pred_check_branch
          %2064 = sbr.rel (%p2062) target = $region1220
        $region1219: #{tpu_custom_call.1} parent=11 // pred_region
          %s2065 = sshllo.u32 0, 1
          loop: start=0, step=1, limit=1
          $region1221: #{tpu_custom_call.1} parent=1219 // loop_pre_header
            _
          $region1222: #{tpu_custom_call.1} parent=1219 // loop_header
            %s2067 = sphi 0, %s2071
            %p2068 = scmp.ge.s32.totalorder %s2067, 1
            %s2072 = sphi %s2055, %s2055
            %s2073 = sphi %s2056, %s2056
          $region1223: #{tpu_custom_call.1} parent=1219 // loop_header_branch
            %2070 = sbr.rel (%p2068) target = $region1227
          $region1224: #{tpu_custom_call.1} parent=1219 // loop_body
            %v2074 = vld [vmem:[%s2072] sm:%s2065]
            %2075 = vst [vmem:[%s2073] sm:%s2065] %v2074
          $region1225: #{tpu_custom_call.1} parent=1219 // loop_footer
            %s2071 = sadd.s32 1, %s2067
          $region1226: #{tpu_custom_call.1} parent=1219 // loop_footer_branch
            %2066 = sbr.rel target = $region1222
          $region1227: #{tpu_custom_call.1} parent=1219 // loop_exit
            _
        $region1220: #{tpu_custom_call.1} parent=11 // pred_fallthru
          _
        // Predicated region
        $region1239: #{tpu_custom_call.1} parent=11 // pred_check
          _
        $region1240: #{tpu_custom_call.1} parent=11 // pred_check_branch
          %2099 = sbr.rel (0) target = $region1242
        $region1241: #{tpu_custom_call.1} parent=11 // pred_region
          %2100 = vsyncadd %s445, 16
        $region1242: #{tpu_custom_call.1} parent=11 // pred_fallthru
          _
        %s2101 = sadd.s32 %s873, 4
        %s2102 = smul.u32 %s2101, 128
        %s2103 = sadd.s32 %s2102, %s878
        %s2104 = sld [smem:[#allocation7 + %s2103]]
        %s2105 = scalar_lea.vmem %s3, %s2104
        %s2106 = scalar_lea.vmem [#allocation3], 33
        %p2108 = scmp.lt.u32.totalorder 1, 8
        %p2109 = pneg %p2108
        // Predicated region
        $region1243: #{tpu_custom_call.1} parent=11 // pred_check
          _
        $region1244: #{tpu_custom_call.1} parent=11 // pred_check_branch
          %2111 = sbr.rel (%p2108) target = $region1246
        $region1245: #{tpu_custom_call.1} parent=11 // pred_region
          %s2126 = sand.u32 1, 7
          %p2127 = scmp.eq.s32.totalorder %s2126, 0
          %p2128 = pneg %p2127
          // Predicated region
          $region1258: #{tpu_custom_call.1} parent=1245 // pred_check
            _
          $region1259: #{tpu_custom_call.1} parent=1245 // pred_check_branch
            %2130 = sbr.rel (%p2127) target = $region1261
          $region1260: #{tpu_custom_call.1} parent=1245 // pred_region
            %s2131 = sand.u32 1, 7
            %s2132 = ssub.s32 1, %s2131
            %s2133 = scalar_lea.vmem %s2105, %s2132
            %s2134 = ssub.s32 1, %s2131
            %s2135 = scalar_lea.vmem %s2106, %s2134 [#allocation3]
            %s2136 = sshllo.u32 0, %s2131
            loop: start=0, step=1, limit=1
            $region1262: #{tpu_custom_call.1} parent=1260 // loop_pre_header
              _
            $region1263: #{tpu_custom_call.1} parent=1260 // loop_header
              %s2138 = sphi 0, %s2142
              %p2139 = scmp.ge.s32.totalorder %s2138, 1
              %s2143 = sphi %s2133, %s2133
              %s2144 = sphi %s2135, %s2135
            $region1264: #{tpu_custom_call.1} parent=1260 // loop_header_branch
              %2141 = sbr.rel (%p2139) target = $region1268
            $region1265: #{tpu_custom_call.1} parent=1260 // loop_body
              %v2145 = vld [vmem:[%s2143] sm:%s2136]
              %2146 = vst [vmem:[%s2144] sm:%s2136] %v2145
            $region1266: #{tpu_custom_call.1} parent=1260 // loop_footer
              %s2142 = sadd.s32 1, %s2138
            $region1267: #{tpu_custom_call.1} parent=1260 // loop_footer_branch
              %2137 = sbr.rel target = $region1263
            $region1268: #{tpu_custom_call.1} parent=1260 // loop_exit
              _
          $region1261: #{tpu_custom_call.1} parent=1245 // pred_fallthru
            _
        $region1246: #{tpu_custom_call.1} parent=11 // pred_fallthru
          _
        // Predicated region
        $region1247: #{tpu_custom_call.1} parent=11 // pred_check
          %p2112 = pneg %p2108
        $region1248: #{tpu_custom_call.1} parent=11 // pred_check_branch
          %2114 = sbr.rel (%p2112) target = $region1250
        $region1249: #{tpu_custom_call.1} parent=11 // pred_region
          %s2115 = sshllo.u32 0, 1
          loop: start=0, step=1, limit=1
          $region1251: #{tpu_custom_call.1} parent=1249 // loop_pre_header
            _
          $region1252: #{tpu_custom_call.1} parent=1249 // loop_header
            %s2117 = sphi 0, %s2121
            %p2118 = scmp.ge.s32.totalorder %s2117, 1
            %s2122 = sphi %s2105, %s2105
            %s2123 = sphi %s2106, %s2106
          $region1253: #{tpu_custom_call.1} parent=1249 // loop_header_branch
            %2120 = sbr.rel (%p2118) target = $region1257
          $region1254: #{tpu_custom_call.1} parent=1249 // loop_body
            %v2124 = vld [vmem:[%s2122] sm:%s2115]
            %2125 = vst [vmem:[%s2123] sm:%s2115] %v2124
          $region1255: #{tpu_custom_call.1} parent=1249 // loop_footer
            %s2121 = sadd.s32 1, %s2117
          $region1256: #{tpu_custom_call.1} parent=1249 // loop_footer_branch
            %2116 = sbr.rel target = $region1252
          $region1257: #{tpu_custom_call.1} parent=1249 // loop_exit
            _
        $region1250: #{tpu_custom_call.1} parent=11 // pred_fallthru
          _
        // Predicated region
        $region1269: #{tpu_custom_call.1} parent=11 // pred_check
          _
        $region1270: #{tpu_custom_call.1} parent=11 // pred_check_branch
          %2149 = sbr.rel (0) target = $region1272
        $region1271: #{tpu_custom_call.1} parent=11 // pred_region
          %2150 = vsyncadd %s445, 16
        $region1272: #{tpu_custom_call.1} parent=11 // pred_fallthru
          _
        %s2151 = sadd.s32 %s927, 4
        %s2152 = smul.u32 %s2151, 128
        %s2153 = sadd.s32 %s2152, %s932
        %s2154 = sld [smem:[#allocation7 + %s2153]]
        %s2155 = scalar_lea.vmem %s3, %s2154
        %s2156 = scalar_lea.vmem [#allocation3], 34
        %p2158 = scmp.lt.u32.totalorder 1, 8
        %p2159 = pneg %p2158
        // Predicated region
        $region1273: #{tpu_custom_call.1} parent=11 // pred_check
          _
        $region1274: #{tpu_custom_call.1} parent=11 // pred_check_branch
          %2161 = sbr.rel (%p2158) target = $region1276
        $region1275: #{tpu_custom_call.1} parent=11 // pred_region
          %s2176 = sand.u32 1, 7
          %p2177 = scmp.eq.s32.totalorder %s2176, 0
          %p2178 = pneg %p2177
          // Predicated region
          $region1288: #{tpu_custom_call.1} parent=1275 // pred_check
            _
          $region1289: #{tpu_custom_call.1} parent=1275 // pred_check_branch
            %2180 = sbr.rel (%p2177) target = $region1291
          $region1290: #{tpu_custom_call.1} parent=1275 // pred_region
            %s2181 = sand.u32 1, 7
            %s2182 = ssub.s32 1, %s2181
            %s2183 = scalar_lea.vmem %s2155, %s2182
            %s2184 = ssub.s32 1, %s2181
            %s2185 = scalar_lea.vmem %s2156, %s2184 [#allocation3]
            %s2186 = sshllo.u32 0, %s2181
            loop: start=0, step=1, limit=1
            $region1292: #{tpu_custom_call.1} parent=1290 // loop_pre_header
              _
            $region1293: #{tpu_custom_call.1} parent=1290 // loop_header
              %s2188 = sphi 0, %s2192
              %p2189 = scmp.ge.s32.totalorder %s2188, 1
              %s2193 = sphi %s2183, %s2183
              %s2194 = sphi %s2185, %s2185
            $region1294: #{tpu_custom_call.1} parent=1290 // loop_header_branch
              %2191 = sbr.rel (%p2189) target = $region1298
            $region1295: #{tpu_custom_call.1} parent=1290 // loop_body
              %v2195 = vld [vmem:[%s2193] sm:%s2186]
              %2196 = vst [vmem:[%s2194] sm:%s2186] %v2195
            $region1296: #{tpu_custom_call.1} parent=1290 // loop_footer
              %s2192 = sadd.s32 1, %s2188
            $region1297: #{tpu_custom_call.1} parent=1290 // loop_footer_branch
              %2187 = sbr.rel target = $region1293
            $region1298: #{tpu_custom_call.1} parent=1290 // loop_exit
              _
          $region1291: #{tpu_custom_call.1} parent=1275 // pred_fallthru
            _
        $region1276: #{tpu_custom_call.1} parent=11 // pred_fallthru
          _
        // Predicated region
        $region1277: #{tpu_custom_call.1} parent=11 // pred_check
          %p2162 = pneg %p2158
        $region1278: #{tpu_custom_call.1} parent=11 // pred_check_branch
          %2164 = sbr.rel (%p2162) target = $region1280
        $region1279: #{tpu_custom_call.1} parent=11 // pred_region
          %s2165 = sshllo.u32 0, 1
          loop: start=0, step=1, limit=1
          $region1281: #{tpu_custom_call.1} parent=1279 // loop_pre_header
            _
          $region1282: #{tpu_custom_call.1} parent=1279 // loop_header
            %s2167 = sphi 0, %s2171
            %p2168 = scmp.ge.s32.totalorder %s2167, 1
            %s2172 = sphi %s2155, %s2155
            %s2173 = sphi %s2156, %s2156
          $region1283: #{tpu_custom_call.1} parent=1279 // loop_header_branch
            %2170 = sbr.rel (%p2168) target = $region1287
          $region1284: #{tpu_custom_call.1} parent=1279 // loop_body
            %v2174 = vld [vmem:[%s2172] sm:%s2165]
            %2175 = vst [vmem:[%s2173] sm:%s2165] %v2174
          $region1285: #{tpu_custom_call.1} parent=1279 // loop_footer
            %s2171 = sadd.s32 1, %s2167
          $region1286: #{tpu_custom_call.1} parent=1279 // loop_footer_branch
            %2166 = sbr.rel target = $region1282
          $region1287: #{tpu_custom_call.1} parent=1279 // loop_exit
            _
        $region1280: #{tpu_custom_call.1} parent=11 // pred_fallthru
          _
        // Predicated region
        $region1299: #{tpu_custom_call.1} parent=11 // pred_check
          _
        $region1300: #{tpu_custom_call.1} parent=11 // pred_check_branch
          %2199 = sbr.rel (0) target = $region1302
        $region1301: #{tpu_custom_call.1} parent=11 // pred_region
          %2200 = vsyncadd %s445, 16
        $region1302: #{tpu_custom_call.1} parent=11 // pred_fallthru
          _
        %s2201 = sadd.s32 %s981, 4
        %s2202 = smul.u32 %s2201, 128
        %s2203 = sadd.s32 %s2202, %s986
        %s2204 = sld [smem:[#allocation7 + %s2203]]
        %s2205 = scalar_lea.vmem %s3, %s2204
        %s2206 = scalar_lea.vmem [#allocation3], 35
        %p2208 = scmp.lt.u32.totalorder 1, 8
        %p2209 = pneg %p2208
        // Predicated region
        $region1303: #{tpu_custom_call.1} parent=11 // pred_check
          _
        $region1304: #{tpu_custom_call.1} parent=11 // pred_check_branch
          %2211 = sbr.rel (%p2208) target = $region1306
        $region1305: #{tpu_custom_call.1} parent=11 // pred_region
          %s2226 = sand.u32 1, 7
          %p2227 = scmp.eq.s32.totalorder %s2226, 0
          %p2228 = pneg %p2227
          // Predicated region
          $region1318: #{tpu_custom_call.1} parent=1305 // pred_check
            _
          $region1319: #{tpu_custom_call.1} parent=1305 // pred_check_branch
            %2230 = sbr.rel (%p2227) target = $region1321
          $region1320: #{tpu_custom_call.1} parent=1305 // pred_region
            %s2231 = sand.u32 1, 7
            %s2232 = ssub.s32 1, %s2231
            %s2233 = scalar_lea.vmem %s2205, %s2232
            %s2234 = ssub.s32 1, %s2231
            %s2235 = scalar_lea.vmem %s2206, %s2234 [#allocation3]
            %s2236 = sshllo.u32 0, %s2231
            loop: start=0, step=1, limit=1
            $region1322: #{tpu_custom_call.1} parent=1320 // loop_pre_header
              _
            $region1323: #{tpu_custom_call.1} parent=1320 // loop_header
              %s2238 = sphi 0, %s2242
              %p2239 = scmp.ge.s32.totalorder %s2238, 1
              %s2243 = sphi %s2233, %s2233
              %s2244 = sphi %s2235, %s2235
            $region1324: #{tpu_custom_call.1} parent=1320 // loop_header_branch
              %2241 = sbr.rel (%p2239) target = $region1328
            $region1325: #{tpu_custom_call.1} parent=1320 // loop_body
              %v2245 = vld [vmem:[%s2243] sm:%s2236]
              %2246 = vst [vmem:[%s2244] sm:%s2236] %v2245
            $region1326: #{tpu_custom_call.1} parent=1320 // loop_footer
              %s2242 = sadd.s32 1, %s2238
            $region1327: #{tpu_custom_call.1} parent=1320 // loop_footer_branch
              %2237 = sbr.rel target = $region1323
            $region1328: #{tpu_custom_call.1} parent=1320 // loop_exit
              _
          $region1321: #{tpu_custom_call.1} parent=1305 // pred_fallthru
            _
        $region1306: #{tpu_custom_call.1} parent=11 // pred_fallthru
          _
        // Predicated region
        $region1307: #{tpu_custom_call.1} parent=11 // pred_check
          %p2212 = pneg %p2208
        $region1308: #{tpu_custom_call.1} parent=11 // pred_check_branch
          %2214 = sbr.rel (%p2212) target = $region1310
        $region1309: #{tpu_custom_call.1} parent=11 // pred_region
          %s2215 = sshllo.u32 0, 1
          loop: start=0, step=1, limit=1
          $region1311: #{tpu_custom_call.1} parent=1309 // loop_pre_header
            _
          $region1312: #{tpu_custom_call.1} parent=1309 // loop_header
            %s2217 = sphi 0, %s2221
            %p2218 = scmp.ge.s32.totalorder %s2217, 1
            %s2222 = sphi %s2205, %s2205
            %s2223 = sphi %s2206, %s2206
          $region1313: #{tpu_custom_call.1} parent=1309 // loop_header_branch
            %2220 = sbr.rel (%p2218) target = $region1317
          $region1314: #{tpu_custom_call.1} parent=1309 // loop_body
            %v2224 = vld [vmem:[%s2222] sm:%s2215]
            %2225 = vst [vmem:[%s2223] sm:%s2215] %v2224
          $region1315: #{tpu_custom_call.1} parent=1309 // loop_footer
            %s2221 = sadd.s32 1, %s2217
          $region1316: #{tpu_custom_call.1} parent=1309 // loop_footer_branch
            %2216 = sbr.rel target = $region1312
          $region1317: #{tpu_custom_call.1} parent=1309 // loop_exit
            _
        $region1310: #{tpu_custom_call.1} parent=11 // pred_fallthru
          _
        // Predicated region
        $region1329: #{tpu_custom_call.1} parent=11 // pred_check
          _
        $region1330: #{tpu_custom_call.1} parent=11 // pred_check_branch
          %2249 = sbr.rel (0) target = $region1332
        $region1331: #{tpu_custom_call.1} parent=11 // pred_region
          %2250 = vsyncadd %s445, 16
        $region1332: #{tpu_custom_call.1} parent=11 // pred_fallthru
          _
        %s2251 = sadd.s32 %s1035, 4
        %s2252 = smul.u32 %s2251, 128
        %s2253 = sadd.s32 %s2252, %s1040
        %s2254 = sld [smem:[#allocation7 + %s2253]]
        %s2255 = scalar_lea.vmem %s3, %s2254
        %s2256 = scalar_lea.vmem [#allocation3], 36
        %p2258 = scmp.lt.u32.totalorder 1, 8
        %p2259 = pneg %p2258
        // Predicated region
        $region1333: #{tpu_custom_call.1} parent=11 // pred_check
          _
        $region1334: #{tpu_custom_call.1} parent=11 // pred_check_branch
          %2261 = sbr.rel (%p2258) target = $region1336
        $region1335: #{tpu_custom_call.1} parent=11 // pred_region
          %s2276 = sand.u32 1, 7
          %p2277 = scmp.eq.s32.totalorder %s2276, 0
          %p2278 = pneg %p2277
          // Predicated region
          $region1348: #{tpu_custom_call.1} parent=1335 // pred_check
            _
          $region1349: #{tpu_custom_call.1} parent=1335 // pred_check_branch
            %2280 = sbr.rel (%p2277) target = $region1351
          $region1350: #{tpu_custom_call.1} parent=1335 // pred_region
            %s2281 = sand.u32 1, 7
            %s2282 = ssub.s32 1, %s2281
            %s2283 = scalar_lea.vmem %s2255, %s2282
            %s2284 = ssub.s32 1, %s2281
            %s2285 = scalar_lea.vmem %s2256, %s2284 [#allocation3]
            %s2286 = sshllo.u32 0, %s2281
            loop: start=0, step=1, limit=1
            $region1352: #{tpu_custom_call.1} parent=1350 // loop_pre_header
              _
            $region1353: #{tpu_custom_call.1} parent=1350 // loop_header
              %s2288 = sphi 0, %s2292
              %p2289 = scmp.ge.s32.totalorder %s2288, 1
              %s2293 = sphi %s2283, %s2283
              %s2294 = sphi %s2285, %s2285
            $region1354: #{tpu_custom_call.1} parent=1350 // loop_header_branch
              %2291 = sbr.rel (%p2289) target = $region1358
            $region1355: #{tpu_custom_call.1} parent=1350 // loop_body
              %v2295 = vld [vmem:[%s2293] sm:%s2286]
              %2296 = vst [vmem:[%s2294] sm:%s2286] %v2295
            $region1356: #{tpu_custom_call.1} parent=1350 // loop_footer
              %s2292 = sadd.s32 1, %s2288
            $region1357: #{tpu_custom_call.1} parent=1350 // loop_footer_branch
              %2287 = sbr.rel target = $region1353
            $region1358: #{tpu_custom_call.1} parent=1350 // loop_exit
              _
          $region1351: #{tpu_custom_call.1} parent=1335 // pred_fallthru
            _
        $region1336: #{tpu_custom_call.1} parent=11 // pred_fallthru
          _
        // Predicated region
        $region1337: #{tpu_custom_call.1} parent=11 // pred_check
          %p2262 = pneg %p2258
        $region1338: #{tpu_custom_call.1} parent=11 // pred_check_branch
          %2264 = sbr.rel (%p2262) target = $region1340
        $region1339: #{tpu_custom_call.1} parent=11 // pred_region
          %s2265 = sshllo.u32 0, 1
          loop: start=0, step=1, limit=1
          $region1341: #{tpu_custom_call.1} parent=1339 // loop_pre_header
            _
          $region1342: #{tpu_custom_call.1} parent=1339 // loop_header
            %s2267 = sphi 0, %s2271
            %p2268 = scmp.ge.s32.totalorder %s2267, 1
            %s2272 = sphi %s2255, %s2255
            %s2273 = sphi %s2256, %s2256
          $region1343: #{tpu_custom_call.1} parent=1339 // loop_header_branch
            %2270 = sbr.rel (%p2268) target = $region1347
          $region1344: #{tpu_custom_call.1} parent=1339 // loop_body
            %v2274 = vld [vmem:[%s2272] sm:%s2265]
            %2275 = vst [vmem:[%s2273] sm:%s2265] %v2274
          $region1345: #{tpu_custom_call.1} parent=1339 // loop_footer
            %s2271 = sadd.s32 1, %s2267
          $region1346: #{tpu_custom_call.1} parent=1339 // loop_footer_branch
            %2266 = sbr.rel target = $region1342
          $region1347: #{tpu_custom_call.1} parent=1339 // loop_exit
            _
        $region1340: #{tpu_custom_call.1} parent=11 // pred_fallthru
          _
        // Predicated region
        $region1359: #{tpu_custom_call.1} parent=11 // pred_check
          _
        $region1360: #{tpu_custom_call.1} parent=11 // pred_check_branch
          %2299 = sbr.rel (0) target = $region1362
        $region1361: #{tpu_custom_call.1} parent=11 // pred_region
          %2300 = vsyncadd %s445, 16
        $region1362: #{tpu_custom_call.1} parent=11 // pred_fallthru
          _
        %s2301 = sadd.s32 %s1089, 4
        %s2302 = smul.u32 %s2301, 128
        %s2303 = sadd.s32 %s2302, %s1094
        %s2304 = sld [smem:[#allocation7 + %s2303]]
        %s2305 = scalar_lea.vmem %s3, %s2304
        %s2306 = scalar_lea.vmem [#allocation3], 37
        %p2308 = scmp.lt.u32.totalorder 1, 8
        %p2309 = pneg %p2308
        // Predicated region
        $region1363: #{tpu_custom_call.1} parent=11 // pred_check
          _
        $region1364: #{tpu_custom_call.1} parent=11 // pred_check_branch
          %2311 = sbr.rel (%p2308) target = $region1366
        $region1365: #{tpu_custom_call.1} parent=11 // pred_region
          %s2326 = sand.u32 1, 7
          %p2327 = scmp.eq.s32.totalorder %s2326, 0
          %p2328 = pneg %p2327
          // Predicated region
          $region1378: #{tpu_custom_call.1} parent=1365 // pred_check
            _
          $region1379: #{tpu_custom_call.1} parent=1365 // pred_check_branch
            %2330 = sbr.rel (%p2327) target = $region1381
          $region1380: #{tpu_custom_call.1} parent=1365 // pred_region
            %s2331 = sand.u32 1, 7
            %s2332 = ssub.s32 1, %s2331
            %s2333 = scalar_lea.vmem %s2305, %s2332
            %s2334 = ssub.s32 1, %s2331
            %s2335 = scalar_lea.vmem %s2306, %s2334 [#allocation3]
            %s2336 = sshllo.u32 0, %s2331
            loop: start=0, step=1, limit=1
            $region1382: #{tpu_custom_call.1} parent=1380 // loop_pre_header
              _
            $region1383: #{tpu_custom_call.1} parent=1380 // loop_header
              %s2338 = sphi 0, %s2342
              %p2339 = scmp.ge.s32.totalorder %s2338, 1
              %s2343 = sphi %s2333, %s2333
              %s2344 = sphi %s2335, %s2335
            $region1384: #{tpu_custom_call.1} parent=1380 // loop_header_branch
              %2341 = sbr.rel (%p2339) target = $region1388
            $region1385: #{tpu_custom_call.1} parent=1380 // loop_body
              %v2345 = vld [vmem:[%s2343] sm:%s2336]
              %2346 = vst [vmem:[%s2344] sm:%s2336] %v2345
            $region1386: #{tpu_custom_call.1} parent=1380 // loop_footer
              %s2342 = sadd.s32 1, %s2338
            $region1387: #{tpu_custom_call.1} parent=1380 // loop_footer_branch
              %2337 = sbr.rel target = $region1383
            $region1388: #{tpu_custom_call.1} parent=1380 // loop_exit
              _
          $region1381: #{tpu_custom_call.1} parent=1365 // pred_fallthru
            _
        $region1366: #{tpu_custom_call.1} parent=11 // pred_fallthru
          _
        // Predicated region
        $region1367: #{tpu_custom_call.1} parent=11 // pred_check
          %p2312 = pneg %p2308
        $region1368: #{tpu_custom_call.1} parent=11 // pred_check_branch
          %2314 = sbr.rel (%p2312) target = $region1370
        $region1369: #{tpu_custom_call.1} parent=11 // pred_region
          %s2315 = sshllo.u32 0, 1
          loop: start=0, step=1, limit=1
          $region1371: #{tpu_custom_call.1} parent=1369 // loop_pre_header
            _
          $region1372: #{tpu_custom_call.1} parent=1369 // loop_header
            %s2317 = sphi 0, %s2321
            %p2318 = scmp.ge.s32.totalorder %s2317, 1
            %s2322 = sphi %s2305, %s2305
            %s2323 = sphi %s2306, %s2306
          $region1373: #{tpu_custom_call.1} parent=1369 // loop_header_branch
            %2320 = sbr.rel (%p2318) target = $region1377
          $region1374: #{tpu_custom_call.1} parent=1369 // loop_body
            %v2324 = vld [vmem:[%s2322] sm:%s2315]
            %2325 = vst [vmem:[%s2323] sm:%s2315] %v2324
          $region1375: #{tpu_custom_call.1} parent=1369 // loop_footer
            %s2321 = sadd.s32 1, %s2317
          $region1376: #{tpu_custom_call.1} parent=1369 // loop_footer_branch
            %2316 = sbr.rel target = $region1372
          $region1377: #{tpu_custom_call.1} parent=1369 // loop_exit
            _
        $region1370: #{tpu_custom_call.1} parent=11 // pred_fallthru
          _
        // Predicated region
        $region1389: #{tpu_custom_call.1} parent=11 // pred_check
          _
        $region1390: #{tpu_custom_call.1} parent=11 // pred_check_branch
          %2349 = sbr.rel (0) target = $region1392
        $region1391: #{tpu_custom_call.1} parent=11 // pred_region
          %2350 = vsyncadd %s445, 16
        $region1392: #{tpu_custom_call.1} parent=11 // pred_fallthru
          _
        %s2351 = sadd.s32 %s1143, 4
        %s2352 = smul.u32 %s2351, 128
        %s2353 = sadd.s32 %s2352, %s1148
        %s2354 = sld [smem:[#allocation7 + %s2353]]
        %s2355 = scalar_lea.vmem %s3, %s2354
        %s2356 = scalar_lea.vmem [#allocation3], 38
        %p2358 = scmp.lt.u32.totalorder 1, 8
        %p2359 = pneg %p2358
        // Predicated region
        $region1393: #{tpu_custom_call.1} parent=11 // pred_check
          _
        $region1394: #{tpu_custom_call.1} parent=11 // pred_check_branch
          %2361 = sbr.rel (%p2358) target = $region1396
        $region1395: #{tpu_custom_call.1} parent=11 // pred_region
          %s2376 = sand.u32 1, 7
          %p2377 = scmp.eq.s32.totalorder %s2376, 0
          %p2378 = pneg %p2377
          // Predicated region
          $region1408: #{tpu_custom_call.1} parent=1395 // pred_check
            _
          $region1409: #{tpu_custom_call.1} parent=1395 // pred_check_branch
            %2380 = sbr.rel (%p2377) target = $region1411
          $region1410: #{tpu_custom_call.1} parent=1395 // pred_region
            %s2381 = sand.u32 1, 7
            %s2382 = ssub.s32 1, %s2381
            %s2383 = scalar_lea.vmem %s2355, %s2382
            %s2384 = ssub.s32 1, %s2381
            %s2385 = scalar_lea.vmem %s2356, %s2384 [#allocation3]
            %s2386 = sshllo.u32 0, %s2381
            loop: start=0, step=1, limit=1
            $region1412: #{tpu_custom_call.1} parent=1410 // loop_pre_header
              _
            $region1413: #{tpu_custom_call.1} parent=1410 // loop_header
              %s2388 = sphi 0, %s2392
              %p2389 = scmp.ge.s32.totalorder %s2388, 1
              %s2393 = sphi %s2383, %s2383
              %s2394 = sphi %s2385, %s2385
            $region1414: #{tpu_custom_call.1} parent=1410 // loop_header_branch
              %2391 = sbr.rel (%p2389) target = $region1418
            $region1415: #{tpu_custom_call.1} parent=1410 // loop_body
              %v2395 = vld [vmem:[%s2393] sm:%s2386]
              %2396 = vst [vmem:[%s2394] sm:%s2386] %v2395
            $region1416: #{tpu_custom_call.1} parent=1410 // loop_footer
              %s2392 = sadd.s32 1, %s2388
            $region1417: #{tpu_custom_call.1} parent=1410 // loop_footer_branch
              %2387 = sbr.rel target = $region1413
            $region1418: #{tpu_custom_call.1} parent=1410 // loop_exit
              _
          $region1411: #{tpu_custom_call.1} parent=1395 // pred_fallthru
            _
        $region1396: #{tpu_custom_call.1} parent=11 // pred_fallthru
          _
        // Predicated region
        $region1397: #{tpu_custom_call.1} parent=11 // pred_check
          %p2362 = pneg %p2358
        $region1398: #{tpu_custom_call.1} parent=11 // pred_check_branch
          %2364 = sbr.rel (%p2362) target = $region1400
        $region1399: #{tpu_custom_call.1} parent=11 // pred_region
          %s2365 = sshllo.u32 0, 1
          loop: start=0, step=1, limit=1
          $region1401: #{tpu_custom_call.1} parent=1399 // loop_pre_header
            _
          $region1402: #{tpu_custom_call.1} parent=1399 // loop_header
            %s2367 = sphi 0, %s2371
            %p2368 = scmp.ge.s32.totalorder %s2367, 1
            %s2372 = sphi %s2355, %s2355
            %s2373 = sphi %s2356, %s2356
          $region1403: #{tpu_custom_call.1} parent=1399 // loop_header_branch
            %2370 = sbr.rel (%p2368) target = $region1407
          $region1404: #{tpu_custom_call.1} parent=1399 // loop_body
            %v2374 = vld [vmem:[%s2372] sm:%s2365]
            %2375 = vst [vmem:[%s2373] sm:%s2365] %v2374
          $region1405: #{tpu_custom_call.1} parent=1399 // loop_footer
            %s2371 = sadd.s32 1, %s2367
          $region1406: #{tpu_custom_call.1} parent=1399 // loop_footer_branch
            %2366 = sbr.rel target = $region1402
          $region1407: #{tpu_custom_call.1} parent=1399 // loop_exit
            _
        $region1400: #{tpu_custom_call.1} parent=11 // pred_fallthru
          _
        // Predicated region
        $region1419: #{tpu_custom_call.1} parent=11 // pred_check
          _
        $region1420: #{tpu_custom_call.1} parent=11 // pred_check_branch
          %2399 = sbr.rel (0) target = $region1422
        $region1421: #{tpu_custom_call.1} parent=11 // pred_region
          %2400 = vsyncadd %s445, 16
        $region1422: #{tpu_custom_call.1} parent=11 // pred_fallthru
          _
        %s2401 = sadd.s32 %s1197, 4
        %s2402 = smul.u32 %s2401, 128
        %s2403 = sadd.s32 %s2402, %s1202
        %s2404 = sld [smem:[#allocation7 + %s2403]]
        %s2405 = scalar_lea.vmem %s3, %s2404
        %s2406 = scalar_lea.vmem [#allocation3], 39
        %p2408 = scmp.lt.u32.totalorder 1, 8
        %p2409 = pneg %p2408
        // Predicated region
        $region1423: #{tpu_custom_call.1} parent=11 // pred_check
          _
        $region1424: #{tpu_custom_call.1} parent=11 // pred_check_branch
          %2411 = sbr.rel (%p2408) target = $region1426
        $region1425: #{tpu_custom_call.1} parent=11 // pred_region
          %s2426 = sand.u32 1, 7
          %p2427 = scmp.eq.s32.totalorder %s2426, 0
          %p2428 = pneg %p2427
          // Predicated region
          $region1438: #{tpu_custom_call.1} parent=1425 // pred_check
            _
          $region1439: #{tpu_custom_call.1} parent=1425 // pred_check_branch
            %2430 = sbr.rel (%p2427) target = $region1441
          $region1440: #{tpu_custom_call.1} parent=1425 // pred_region
            %s2431 = sand.u32 1, 7
            %s2432 = ssub.s32 1, %s2431
            %s2433 = scalar_lea.vmem %s2405, %s2432
            %s2434 = ssub.s32 1, %s2431
            %s2435 = scalar_lea.vmem %s2406, %s2434 [#allocation3]
            %s2436 = sshllo.u32 0, %s2431
            loop: start=0, step=1, limit=1
            $region1442: #{tpu_custom_call.1} parent=1440 // loop_pre_header
              _
            $region1443: #{tpu_custom_call.1} parent=1440 // loop_header
              %s2438 = sphi 0, %s2442
              %p2439 = scmp.ge.s32.totalorder %s2438, 1
              %s2443 = sphi %s2433, %s2433
              %s2444 = sphi %s2435, %s2435
            $region1444: #{tpu_custom_call.1} parent=1440 // loop_header_branch
              %2441 = sbr.rel (%p2439) target = $region1448
            $region1445: #{tpu_custom_call.1} parent=1440 // loop_body
              %v2445 = vld [vmem:[%s2443] sm:%s2436]
              %2446 = vst [vmem:[%s2444] sm:%s2436] %v2445
            $region1446: #{tpu_custom_call.1} parent=1440 // loop_footer
              %s2442 = sadd.s32 1, %s2438
            $region1447: #{tpu_custom_call.1} parent=1440 // loop_footer_branch
              %2437 = sbr.rel target = $region1443
            $region1448: #{tpu_custom_call.1} parent=1440 // loop_exit
              _
          $region1441: #{tpu_custom_call.1} parent=1425 // pred_fallthru
            _
        $region1426: #{tpu_custom_call.1} parent=11 // pred_fallthru
          _
        // Predicated region
        $region1427: #{tpu_custom_call.1} parent=11 // pred_check
          %p2412 = pneg %p2408
        $region1428: #{tpu_custom_call.1} parent=11 // pred_check_branch
          %2414 = sbr.rel (%p2412) target = $region1430
        $region1429: #{tpu_custom_call.1} parent=11 // pred_region
          %s2415 = sshllo.u32 0, 1
          loop: start=0, step=1, limit=1
          $region1431: #{tpu_custom_call.1} parent=1429 // loop_pre_header
            _
          $region1432: #{tpu_custom_call.1} parent=1429 // loop_header
            %s2417 = sphi 0, %s2421
            %p2418 = scmp.ge.s32.totalorder %s2417, 1
            %s2422 = sphi %s2405, %s2405
            %s2423 = sphi %s2406, %s2406
          $region1433: #{tpu_custom_call.1} parent=1429 // loop_header_branch
            %2420 = sbr.rel (%p2418) target = $region1437
          $region1434: #{tpu_custom_call.1} parent=1429 // loop_body
            %v2424 = vld [vmem:[%s2422] sm:%s2415]
            %2425 = vst [vmem:[%s2423] sm:%s2415] %v2424
          $region1435: #{tpu_custom_call.1} parent=1429 // loop_footer
            %s2421 = sadd.s32 1, %s2417
          $region1436: #{tpu_custom_call.1} parent=1429 // loop_footer_branch
            %2416 = sbr.rel target = $region1432
          $region1437: #{tpu_custom_call.1} parent=1429 // loop_exit
            _
        $region1430: #{tpu_custom_call.1} parent=11 // pred_fallthru
          _
        // Predicated region
        $region1449: #{tpu_custom_call.1} parent=11 // pred_check
          _
        $region1450: #{tpu_custom_call.1} parent=11 // pred_check_branch
          %2449 = sbr.rel (0) target = $region1452
        $region1451: #{tpu_custom_call.1} parent=11 // pred_region
          %2450 = vsyncadd %s445, 16
        $region1452: #{tpu_custom_call.1} parent=11 // pred_fallthru
          _
        %s2451 = smul.u32 1, 1
        %s2452 = sshll.u32 %s2451, 4
        %2453 = dma.done [#allocation4], %s2452
        %s2454 = sshll.u32 %s2451, 4
        %2455 = dma.done [#allocation4], %s2454
        %s2456 = sshll.u32 %s2451, 4
        %2457 = dma.done [#allocation4], %s2456
        %s2458 = sshll.u32 %s2451, 4
        %2459 = dma.done [#allocation4], %s2458
        %s2460 = sshll.u32 %s2451, 4
        %2461 = dma.done [#allocation4], %s2460
        %s2462 = sshll.u32 %s2451, 4
        %2463 = dma.done [#allocation4], %s2462
        %s2464 = sshll.u32 %s2451, 4
        %2465 = dma.done [#allocation4], %s2464
        %s2466 = sshll.u32 %s2451, 4
        %2467 = dma.done [#allocation4], %s2466
        %s2468 = sshll.u32 %s2451, 4
        %2469 = dma.done %s445, %s2468
        %s2470 = sshll.u32 %s2451, 4
        %2471 = dma.done %s445, %s2470
        %s2472 = sshll.u32 %s2451, 4
        %2473 = dma.done %s445, %s2472
        %s2474 = sshll.u32 %s2451, 4
        %2475 = dma.done %s445, %s2474
        %s2476 = sshll.u32 %s2451, 4
        %2477 = dma.done %s445, %s2476
        %s2478 = sshll.u32 %s2451, 4
        %2479 = dma.done %s445, %s2478
        %s2480 = sshll.u32 %s2451, 4
        %2481 = dma.done %s445, %s2480
        %s2482 = sshll.u32 %s2451, 4
        %2483 = dma.done %s445, %s2482
        %s2484 = sshll.u32 %s2451, 4
        %2485 = dma.done %s445, %s2484
        %s2486 = sshll.u32 %s2451, 4
        %2487 = dma.done %s445, %s2486
        %s2488 = sshll.u32 %s2451, 4
        %2489 = dma.done %s445, %s2488
        %s2490 = sshll.u32 %s2451, 4
        %2491 = dma.done %s445, %s2490
        %s2492 = sshll.u32 %s2451, 4
        %2493 = dma.done %s445, %s2492
        %s2494 = sshll.u32 %s2451, 4
        %2495 = dma.done %s445, %s2494
        %s2496 = sshll.u32 %s2451, 4
        %2497 = dma.done %s445, %s2496
        %s2498 = sshll.u32 %s2451, 4
        %2499 = dma.done %s445, %s2498
        %s2500 = sshll.u32 %s2451, 4
        %2501 = dma.done %s445, %s2500
        %s2502 = sshll.u32 %s2451, 4
        %2503 = dma.done %s445, %s2502
        %s2504 = sshll.u32 %s2451, 4
        %2505 = dma.done %s445, %s2504
        %s2506 = sshll.u32 %s2451, 4
        %2507 = dma.done %s445, %s2506
        %s2508 = sshll.u32 %s2451, 4
        %2509 = dma.done %s445, %s2508
        %s2510 = sshll.u32 %s2451, 4
        %2511 = dma.done %s445, %s2510
        %s2512 = sshll.u32 %s2451, 4
        %2513 = dma.done %s445, %s2512
        %s2514 = sshll.u32 %s2451, 4
        %2515 = dma.done %s445, %s2514
        %s2516 = sshll.u32 %s2451, 4
        %2517 = dma.done %s445, %s2516
        %s2518 = sshll.u32 %s2451, 4
        %2519 = dma.done %s445, %s2518
        %s2520 = sshll.u32 %s2451, 4
        %2521 = dma.done %s445, %s2520
        %s2522 = sshll.u32 %s2451, 4
        %2523 = dma.done %s445, %s2522
        %s2524 = sshll.u32 %s2451, 4
        %2525 = dma.done %s445, %s2524
        %s2526 = sshll.u32 %s2451, 4
        %2527 = dma.done %s445, %s2526
        %s2528 = sshll.u32 %s2451, 4
        %2529 = dma.done %s445, %s2528
        %s2530 = sshll.u32 %s2451, 4
        %2531 = dma.done %s445, %s2530
        %s2532 = sshll.u32 %s2451, 4
        %2533 = dma.done %s445, %s2532
        %s2534 = sshll.u32 %s2451, 4
        %2535 = dma.done %s445, %s2534
        %s2536 = sshll.u32 %s2451, 4
        %2537 = dma.done %s445, %s2536
        %s2538 = sshll.u32 %s2451, 4
        %2539 = dma.done %s445, %s2538
        %s2540 = sshll.u32 %s2451, 4
        %2541 = dma.done %s445, %s2540
        %s2542 = sshll.u32 %s2451, 4
        %2543 = dma.done %s445, %s2542
        %s2544 = sshll.u32 %s2451, 4
        %2545 = dma.done %s445, %s2544
        %s2546 = sshll.u32 %s2451, 4
        %2547 = dma.done %s445, %s2546
        %v2548 = vld [vmem:[#allocation2] sm:$0xff]
        %v2549 = vld [vmem:[#allocation3] sm:$0xff]
        %v2550 = vld [vmem:[#allocation3 + $0x8] sm:$0xff]
        %v2551 = vld [vmem:[#allocation3 + $0x10] sm:$0xff]
        %v2552 = vld [vmem:[#allocation3 + $0x18] sm:$0xff]
        %v2553 = vld [vmem:[#allocation3 + $0x20] sm:$0xff]
        %v2554 = vmul.f32 %v2549, %v2548
        %v2555 = vmul.f32 %v2550, %v2548
        %v2556 = vmul.f32 %v2551, %v2548
        %v2557 = vmul.f32 %v2552, %v2548
        %v2558 = vmul.f32 %v2553, %v2548
        %vm2559 = vcmask 261120
        %v2560 = vsel %vm2559, %v2554, 0.0
        %2561 = vadd.xlane.f32.xlu0 %v2560
        %v2562 = vpop.xlane.xlu0 %2561
        %v2563 = vsel %vm2559, %v2555, 0.0
        %2564 = vadd.xlane.f32.xlu0 %v2563
        %v2565 = vpop.xlane.xlu0 %2564
        %v2566 = vsel %vm2559, %v2556, 0.0
        %2567 = vadd.xlane.f32.xlu0 %v2566
        %v2568 = vpop.xlane.xlu0 %2567
        %v2569 = vsel %vm2559, %v2557, 0.0
        %2570 = vadd.xlane.f32.xlu0 %v2569
        %v2571 = vpop.xlane.xlu0 %2570
        %v2572 = vsel %vm2559, %v2558, 0.0
        %2573 = vadd.xlane.f32.xlu0 %v2572
        %v2574 = vpop.xlane.xlu0 %2573
        %v2575 = vlaneseq
        %v2576 = vand.u32 %v2575, 127
        %vm2577 = vcmp.eq.s32.totalorder %v2576, 0
        %v2578 = vsel %vm2577, %v2562, 0.0
        %v2579 = vadd.f32 %v2578, 0.0
        %vm2580 = vcmp.eq.s32.totalorder %v2576, 1
        %v2581 = vsel %vm2580, %v2565, 0.0
        %v2582 = vadd.f32 %v2579, %v2581
        %vm2583 = vcmp.eq.s32.totalorder %v2576, 2
        %v2584 = vsel %vm2583, %v2568, 0.0
        %v2585 = vadd.f32 %v2582, %v2584
        %vm2586 = vcmp.eq.s32.totalorder %v2576, 3
        %v2587 = vsel %vm2586, %v2571, 0.0
        %v2588 = vadd.f32 %v2585, %v2587
        %vm2589 = vcmp.eq.s32.totalorder %v2576, 4
        %v2590 = vsel %vm2589, %v2574, 0.0
        %v2591 = vadd.f32 %v2588, %v2590
        %vm2592 = vcmp.lt.s32.totalorder %v2576, 5
        %v2593 = vsel %vm2577, 1.0, -1.0
        %v2594 = vmul.f32 %v2593, %v2591
        %v2595 = vsub.f32 0.0, %v2594
        %v2596 = vmax.f32 %v2595, 0.0
        %v2597 = vand.u32 2147483647, %v2594
        %v2598 = vsub.f32 0.0, %v2597
        %v2599 = vmul.f32 %v2598, 1.442695
        %v2600 = vpow.pop %v2599
        %v2601 = vadd.f32 %v2600, 1.0
        %v2602 = vlog2.pop %v2601
        %v2603 = vmul.f32 %v2602, 0.6931472
        %v2604 = vmul.f32 -0.5, %v2600
        %v2605 = vadd.f32 %v2604, 1.0
        %v2606 = vmul.f32 %v2605, %v2600
        %v2607 = vand.u32 2147483647, %v2600
        %vm2608 = vcmp.lt.f32.partialorder %v2607, 0.0004427343
        %v2609 = vsel %vm2608, %v2606, %v2603
        %v2610 = vadd.f32 %v2596, %v2609
        %v2611 = vsub.f32 0.0, %v2610
        %v2612 = vsub.f32 0.0, %v2611
        %v2613 = vsel %vm2592, %v2612, 0.0
        %2614 = vadd.xlane.f32.xlu0 %v2613
        %v2615 = vpop.xlane.xlu0 %2614
        %vm2616 = vcmp.eq.s32.totalorder %v2576, 5
        %v2617 = vsel %vm2616, %v2615, 0.0
        %v2618 = vadd.f32 %v2591, %v2617
        %2619 = vst [vmem:[%s59] sm:$0xff] %v2618
        %s2620 = sand.u32 %s32, 1
        %s2621 = scalar_lea.sflag [#allocation9], %s2620
        %s2622 = sand.u32 %s32, 1
        %s2623 = smul.addr %s2622, 8
        %s2624 = scalar_lea.vmem [#allocation8], %s2623
        // Predicated region
        $region1453: #{tpu_custom_call.1} parent=11 // pred_check
          %p2625 = pneg %p38
        $region1454: #{tpu_custom_call.1} parent=11 // pred_check_branch
          %2627 = sbr.rel (%p2625) target = $region1456
        $region1455: #{tpu_custom_call.1} parent=11 // pred_region
          %s2629 = ssub.s32 128, 128
          %2630 = vsyncadd %s2621, %s2629
          %s2631 = smul.addr %s23, 128
          %s2632 = scalar_lea.hbm %s4, %s2631
          %s2634 = sshll.u32 %s2624, 4
          %s2635 = int_to_ptr.vmem [resolvable:$true] %s2634
          %2637 = dma.vmem_to_hbm [thread:$0]  %s2635, 128, %s2632, %s2621
        $region1456: #{tpu_custom_call.1} parent=11 // pred_fallthru
          _
      $region12: #{tpu_custom_call.1} parent=5 // pred_fallthru
        _
      %p2638 = scmp.le.s32.totalorder 1, %s23
      // Predicated region
      $region1457: #{tpu_custom_call.1} parent=5 // pred_check
        %p2639 = pneg %p2638
      $region1458: #{tpu_custom_call.1} parent=5 // pred_check_branch
        %2641 = sbr.rel (%p2639) target = $region1460
      $region1459: #{tpu_custom_call.1} parent=5 // pred_region
        %s2642 = ssub.s32 %s23, 1
        // Predicated region
        $region1461: #{tpu_custom_call.1} parent=1459 // pred_check
          %p2643 = pneg %p44
        $region1462: #{tpu_custom_call.1} parent=1459 // pred_check_branch
          %2645 = sbr.rel (%p2643) target = $region1464
        $region1463: #{tpu_custom_call.1} parent=1459 // pred_region
          %s2646 = sand.u32 %s35, 1
          %s2647 = scalar_lea.sflag [#allocation9], %s2646
          %s2648 = sand.u32 %s35, 1
          %s2649 = smul.addr %s2648, 8
          %s2650 = scalar_lea.vmem [#allocation8], %s2649
          %2651 = dma.done %s2647, 128
        $region1464: #{tpu_custom_call.1} parent=1459 // pred_fallthru
          _
      $region1460: #{tpu_custom_call.1} parent=5 // pred_fallthru
        _
    $region6: #{tpu_custom_call.1} parent=1 // loop_footer
      %s27 = sadd.s32 1, %s23
    $region7: #{tpu_custom_call.1} parent=1 // loop_footer_branch
      %22 = sbr.rel target = $region3
    $region8: #{tpu_custom_call.1} parent=1 // loop_exit
      _
    %2652 = vsyncpa [#allocation9], 1
    %s2653 = scalar_lea.sflag [#allocation9], 1
    %2654 = vsyncpa %s2653, 1
  %2655 = vsyncmov [#allocation4]
  %s2656 = vpop.sfrf %2655
  %p2657 = scmp.eq.s32.totalorder %s2656, 0
  %p2658 = pneg %p2657
  %2660 = shalt.err (%p2658)
  %s2661 = scalar_lea.sflag [#allocation4], 1
  %2662 = vsyncmov %s2661
  %s2663 = vpop.sfrf %2662
  %p2664 = scmp.eq.s32.totalorder %s2663, 0
  %p2665 = pneg %p2664
  %2667 = shalt.err (%p2665)

</llo_original>
